<compile_context>
chip_gen: v7x
topology: tpu7x:2x2x1
jax: 0.10.0
libtpu: 0.0.40
codegen_flags: <defaults>
</compile_context>

<pallas_src>
import functools

import numpy as np
import jax
import jax.numpy as jnp
from jax.experimental import pallas as pl
from jax.experimental.pallas import tpu as pltpu

_HP = 128          # every hidden size (128 / 64 / 32) is padded to one 128-lane tile
_BN_EPS = 1e-5
_HIGH = jax.lax.Precision.HIGHEST


# ------------------------------ fused kernel --------------------------------

def _fused_kernel(*refs, T, Bp, B):
    """Whole CombinedEncoderLSTM forward (eval mode) in one kernel invocation.

    refs layout (inputs, output, scratch):
      [0]      x        (T*Bp, 1) f32   time-major flattened input, zero-padded batch rows
      [1..18]  6 LSTM layers x (wih (Din_p, 4*HP), whh (HP, 4*HP), bias (1, 4*HP));
               fused gate order (i, f, o, g); wih/whh bf16 (layer-0 wih f32: Din==1 uses a
               VPU broadcast); BN1/BN2 pre-folded into the following layer's wih/bias.
      [19..23] head: w1a (HP,32) bf16, w1b (HP,32) bf16, b1 (1,32) f32,
               w23 (32,HP) bf16, b23 (1,HP) f32   (BN3/BN4 pre-folded)
      [24]     out      (B, 128) f32   lane-dense slab: col0 = dense_2, cols 1:3 = dense_3
      [25]     xw scratch   VMEM (T*Bp, 4*HP) f32  hoisted input->gate pre-activations
      [26..27] seq scratch  VMEM (T*Bp, HP) f32 x2 layer-to-layer sequence ping-pong
    """
    HP = _HP
    x_ref = refs[0]
    layers = [(refs[1 + 3 * l], refs[2 + 3 * l], refs[3 + 3 * l]) for l in range(6)]
    w1a_ref, w1b_ref, b1_ref, w23_ref, b23_ref = refs[19:24]
    out_ref = refs[24]
    xw_ref, seq_a, seq_b = refs[25:28]

    def run_layer(wih_ref, whh_ref, b_ref, in_ref, out_seq_ref, din_is_one):
        # Hoisted, gate-fused input->gate transform for ALL time steps (one dot, off the
        # serial path), parked in VMEM scratch so the unrolled recurrence reads aligned
        # (Bp, 4*HP) slabs instead of holding them as SSA values across 8 steps.
        if din_is_one:
            xw_ref[...] = in_ref[...] * wih_ref[...] + b_ref[...]      # VPU outer product
        else:
            xw_ref[...] = jnp.dot(in_ref[...].astype(jnp.bfloat16), wih_ref[...],
                                  preferred_element_type=jnp.float32) + b_ref[...]

        whh = whh_ref[...]                                   # (HP, 4*HP) bf16, hoisted
        h = jnp.zeros((Bp, HP), jnp.float32)
        c = jnp.zeros((Bp, HP), jnp.float32)
        # Fully unrolled time recurrence (T static).  Only ONE fused bf16 MXU dot plus two
        # wide EUP calls sit on the per-step critical path.
        for t in range(T):
            r0 = t * Bp                                      # Bp == 8 -> sublane-tile aligned
            z = xw_ref[r0:r0 + Bp, :]                        # (Bp, 4*HP) f32
            if t > 0:                                        # h0 == 0 -> skip the t==0 dot
                z = z + jnp.dot(h.astype(jnp.bfloat16), whh,
                                preferred_element_type=jnp.float32)
            sfo = jax.nn.sigmoid(z[:, 0:3 * HP])             # i | f | o : one wide EUP call
            g = jnp.tanh(z[:, 3 * HP:4 * HP])                # g         : second EUP call
            c = sfo[:, HP:2 * HP] * c + sfo[:, 0:HP] * g     # f*c + i*g (f32 VPU)
            h = sfo[:, 2 * HP:3 * HP] * jnp.tanh(c)          # o*tanh(c)
            if out_seq_ref is not None:
                out_seq_ref[r0:r0 + Bp, :] = h               # aligned full-tile store
        return h

    # 3 stacked LSTM blocks (2 layers each); BN1/BN2 already folded into layers 2 / 4.
    run_layer(*layers[0], x_ref, seq_a, True)
    run_layer(*layers[1], seq_a, seq_b, False)
    run_layer(*layers[2], seq_b, seq_a, False)
    run_layer(*layers[3], seq_a, seq_b, False)
    run_layer(*layers[4], seq_b, seq_a, False)
    last = run_layer(*layers[5], seq_a, None, False)         # (Bp, HP), last time step only

    # Head. concat(gauss, wind) is expressed as two row-sliced matmuls; padded batch rows
    # (>= 2B) and padded lanes never reach the output.  BN3/BN4 are pre-folded.
    enc_g = last[0:B, :].astype(jnp.bfloat16)                # gauss rows
    enc_w = last[B:2 * B, :].astype(jnp.bfloat16)            # wind rows
    hh = (jnp.dot(enc_g, w1a_ref[...], preferred_element_type=jnp.float32)
          + jnp.dot(enc_w, w1b_ref[...], preferred_element_type=jnp.float32)
          + b1_ref[...])
    hh = jnp.maximum(hh, 0.0)                                # ReLU; dropout_1 = identity (eval)
    logits = jnp.dot(hh.astype(jnp.bfloat16), w23_ref[...],
                     preferred_element_type=jnp.float32) + b23_ref[...]   # (B, 128)
    out_ref[...] = jax.nn.sigmoid(logits)                    # single lane-dense store


# ------------------------------ parameter init ------------------------------

def _uniform(key, shape, scale):
    return jax.random.uniform(key, shape, jnp.float32, -scale, scale)


def init_lstm_stack(key, din, h, num_layers=2):
    """Raw PyTorch-layout nn.LSTM parameters (gates stacked in order i, f, g, o)."""
    layers = []
    s = 1.0 / np.sqrt(h)
    for layer_idx in range(num_layers):
        key, k1, k2, k3, k4 = jax.random.split(key, 5)
        in_dim = din if layer_idx == 0 else h
        layers.append(dict(wih=_uniform(k1, (4 * h, in_dim), s),
                           whh=_uniform(k2, (4 * h, h), s),
                           bih=_uniform(k3, (4 * h,), s),
                           bhh=_uniform(k4, (4 * h,), s)))
    return layers, key


def init_bn(key, c):
    """Eval-mode BatchNorm1d folded to a per-channel affine (scale, shift)."""
    key, k1, k2, k3, k4 = jax.random.split(key, 5)
    gamma = jax.random.uniform(k1, (c,), jnp.float32, 0.5, 1.5)
    beta = jax.random.uniform(k2, (c,), jnp.float32, -0.1, 0.1)
    rmean = jax.random.uniform(k3, (c,), jnp.float32, -0.1, 0.1)
    rvar = jax.random.uniform(k4, (c,), jnp.float32, 0.5, 1.5)
    scale = gamma / jnp.sqrt(rvar + _BN_EPS)
    shift = beta - rmean * scale
    return (scale, shift), key


def init_encoder(key):
    p = {}
    p['lstm1'], key = init_lstm_stack(key, 1, 128)
    p['lstm2'], key = init_lstm_stack(key, 128, 64)
    p['lstm3'], key = init_lstm_stack(key, 64, 32)
    p['bn1'], key = init_bn(key, 128)
    p['bn2'], key = init_bn(key, 64)
    p['bn3'], key = init_bn(key, 32)
    return p, key


def init_combined(key):
    params = {}
    params['gauss_enc'], key = init_encoder(key)
    params['wind_enc'], key = init_encoder(key)  # constructed in __init__ but unused in forward
    key, k1, k2, k3, k4, k5, k6 = jax.random.split(key, 7)
    s1 = 1.0 / np.sqrt(64)
    params['dense1'] = (_uniform(k1, (32, 64), s1), _uniform(k2, (32,), s1))
    s2 = 1.0 / np.sqrt(32)
    params['dense2'] = (_uniform(k3, (1, 32), s2), _uniform(k4, (1,), s2))
    params['dense3'] = (_uniform(k5, (2, 32), s2), _uniform(k6, (2,), s2))
    params['bn4'], key = init_bn(key, 32)
    return params


# --------------------------- kernel weight prep -----------------------------

def _prep_lstm_layer(layer, in_dim, h, pre_bn=None):
    """Torch-layout LSTM layer -> fused / padded / bf16 kernel weights.

    Fused gate order is (i, f, o, g); each gate's output is zero-padded to a 128-lane
    tile so all in-kernel gate slices are lane-aligned.  Padded lanes/rows are zero, so
    the padded hidden lanes stay exactly 0 through the recurrence.  `pre_bn` (scale,
    shift of length in_dim) is an eval-mode BatchNorm on the layer INPUT, folded into
    wih and the bias.
    """
    wih, whh = layer['wih'], layer['whh']
    b_all = layer['bih'] + layer['bhh']
    order = (0, 1, 3, 2)                       # torch (i,f,g,o) -> fused (i,f,o,g)
    wih_g = wih.reshape(4, h, in_dim)
    whh_g = whh.reshape(4, h, h)
    b_g = b_all.reshape(4, h)
    in_pad = 1 if in_dim == 1 else _HP
    wih_f = jnp.zeros((in_pad, 4 * _HP), jnp.float32)
    whh_f = jnp.zeros((_HP, 4 * _HP), jnp.float32)
    b_f = jnp.zeros((1, 4 * _HP), jnp.float32)
    for slot, gi in enumerate(order):
        w_in = wih_g[gi].T                     # (in_dim, h)
        bias = b_g[gi]
        if pre_bn is not None:
            scale, shift = pre_bn
            bias = bias + shift @ w_in
            w_in = scale[:, None] * w_in
        c0 = slot * _HP
        wih_f = wih_f.at[0:in_dim, c0:c0 + h].set(w_in)
        whh_f = whh_f.at[0:h, c0:c0 + h].set(whh_g[gi].T)
        b_f = b_f.at[0, c0:c0 + h].set(bias)
    wih_out = wih_f if in_dim == 1 else wih_f.astype(jnp.bfloat16)
    return wih_out, whh_f.astype(jnp.bfloat16), b_f


def _prep_head(params, bn3, bn4):
    """Fold eval-mode BN3 (before dense_1) and BN4 (after ReLU) into the head weights."""
    s3, t3 = bn3
    s4, t4 = bn4
    w1, b1 = params['dense1']                  # (32, 64), (32,)
    w2, b2 = params['dense2']                  # (1, 32),  (1,)
    w3, b3 = params['dense3']                  # (2, 32),  (2,)
    w1g = w1[:, 0:32].T                        # gauss half of the concat
    w1w = w1[:, 32:64].T                       # wind half
    b1_eff = b1 + t3 @ w1g + t3 @ w1w
    w1a = jnp.zeros((_HP, 32), jnp.float32).at[0:32, :].set(s3[:, None] * w1g)
    w1b = jnp.zeros((_HP, 32), jnp.float32).at[0:32, :].set(s3[:, None] * w1w)
    w23 = jnp.concatenate([w2.T, w3.T], axis=1)            # (32, 3): [dense_2 | dense_3]
    b23_eff = jnp.concatenate([b2, b3]) + t4 @ w23
    w23_pad = jnp.zeros((32, _HP), jnp.float32).at[:, 0:3].set(s4[:, None] * w23)
    b23_pad = jnp.zeros((1, _HP), jnp.float32).at[0, 0:3].set(b23_eff)
    return (w1a.astype(jnp.bfloat16), w1b.astype(jnp.bfloat16), b1_eff.reshape(1, 32),
            w23_pad.astype(jnp.bfloat16), b23_pad)


# ------------------------------ forward wrapper ------------------------------

def combined_forward(params, gauss_input, wind_input):
    """CombinedEncoderLSTM.forward (eval). Inputs (B, T, 1) -> ((B,1), (B,2))."""
    B, T, _ = gauss_input.shape
    B2 = 2 * B
    Bp = ((B2 + 7) // 8) * 8                   # pad flattened batch to a full sublane tile

    # Faithful quirk: the PyTorch forward routes BOTH inputs through gauss_enc -> batch them
    # (gauss rows first, then wind rows; padded rows are zero and ignored at the head).
    x = jnp.concatenate([gauss_input, wind_input], axis=0).astype(jnp.float32)   # (2B, T, 1)
    x = jnp.transpose(x, (1, 0, 2))                                              # (T, 2B, 1)
    x = jnp.pad(x, ((0, 0), (0, Bp - B2), (0, 0)))                               # (T, Bp, 1)
    x_flat = x.reshape(T * Bp, 1)

    enc = params['gauss_enc']
    layer_specs = [                            # (layer params, in_dim, hidden, BN on input)
        (enc['lstm1'][0], 1, 128, None),
        (enc['lstm1'][1], 128, 128, None),
        (enc['lstm2'][0], 128, 64, enc['bn1']),
        (enc['lstm2'][1], 64, 64, None),
        (enc['lstm3'][0], 64, 32, enc['bn2']),
        (enc['lstm3'][1], 32, 32, None),
    ]
    args = [x_flat]
    for layer, din, h, pre_bn in layer_specs:
        args += list(_prep_lstm_layer(layer, din, h, pre_bn))
    args += list(_prep_head(params, enc['bn3'], params['bn4']))

    out_slab = pl.pallas_call(
        functools.partial(_fused_kernel, T=T, Bp=Bp, B=B),
        out_shape=jax.ShapeDtypeStruct((B, _HP), jnp.float32),
        scratch_shapes=[
            pltpu.VMEM((T * Bp, 4 * _HP), jnp.float32),   # hoisted gate pre-activations
            pltpu.VMEM((T * Bp, _HP), jnp.float32),       # layer-to-layer sequence (ping)
            pltpu.VMEM((T * Bp, _HP), jnp.float32),       # layer-to-layer sequence (pong)
        ],
    )(*args)
    return out_slab[:, 0:1], out_slab[:, 1:3]


# --------------------------- pure-JAX reference ------------------------------

def _lstm_layer_ref(x_tbd, layer):
    wih, whh = layer['wih'], layer['whh']
    b = layer['bih'] + layer['bhh']
    T, B, _ = x_tbd.shape
    H = whh.shape[1]
    h = jnp.zeros((B, H), jnp.float32)
    c = jnp.zeros((B, H), jnp.float32)
    outs = []
    for t in range(T):
        z = (jnp.dot(x_tbd[t], wih.T, precision=_HIGH)
             + jnp.dot(h, whh.T, precision=_HIGH) + b)
        i = jax.nn.sigmoid(z[:, 0:H])
        f = jax.nn.sigmoid(z[:, H:2 * H])
        g = jnp.tanh(z[:, 2 * H:3 * H])
        o = jax.nn.sigmoid(z[:, 3 * H:4 * H])
        c = f * c + i * g
        h = o * jnp.tanh(c)
        outs.append(h)
    return jnp.stack(outs, axis=0)


def _encoder_ref(enc, x_bt1):
    h = jnp.transpose(x_bt1, (1, 0, 2)).astype(jnp.float32)
    for layer in enc['lstm1']:
        h = _lstm_layer_ref(h, layer)
    s, sh = enc['bn1']; h = h * s + sh
    for layer in enc['lstm2']:
        h = _lstm_layer_ref(h, layer)
    s, sh = enc['bn2']; h = h * s + sh
    for layer in enc['lstm3']:
        h = _lstm_layer_ref(h, layer)
    last = h[-1]
    s, sh = enc['bn3']
    return last * s + sh


def combined_forward_ref(params, gauss_input, wind_input):
    enc = params['gauss_enc']
    g = _encoder_ref(enc, gauss_input)
    w = _encoder_ref(enc, wind_input)
    cat = jnp.concatenate([g, w], axis=1)
    w1, b1 = params['dense1']; w2, b2 = params['dense2']; w3, b3 = params['dense3']
    s4, t4 = params['bn4']
    h = jnp.maximum(jnp.dot(cat, w1.T, precision=_HIGH) + b1, 0.0)
    h = h * s4 + t4
    o1 = jax.nn.sigmoid(jnp.dot(h, w2.T, precision=_HIGH) + b2)
    o2 = jax.nn.sigmoid(jnp.dot(h, w3.T, precision=_HIGH) + b3)
    return o1, o2


# ----------------------------------- main -----------------------------------

if __name__ == "__main__":
    key = jax.random.PRNGKey(0)
    pkey, gkey, wkey = jax.random.split(key, 3)
    params = init_combined(pkey)

    B, T = 2, 8
    gauss_input = jax.random.normal(gkey, (B, T, 1), jnp.float32)
    wind_input = jax.random.normal(wkey, (B, T, 1), jnp.float32)

    fwd = jax.jit(combined_forward)
    out_one_dim, out_two_dim = fwd(params, gauss_input, wind_input)
    jax.block_until_ready((out_one_dim, out_two_dim))

    # Shape / range sanity
    assert out_one_dim.shape == (B, 1) and out_two_dim.shape == (B, 2)
    assert bool(jnp.all(jnp.isfinite(out_one_dim))) and bool(jnp.all(jnp.isfinite(out_two_dim)))
    assert bool(jnp.all((out_one_dim >= 0) & (out_one_dim <= 1)))
    assert bool(jnp.all((out_two_dim >= 0) & (out_two_dim <= 1)))

    # Numerical check against a pure-JAX (highest-precision) reference of the same forward.
    ref1, ref2 = jax.jit(combined_forward_ref)(params, gauss_input, wind_input)
    np.testing.assert_allclose(np.asarray(out_one_dim), np.asarray(ref1), atol=5e-3, rtol=5e-3)
    np.testing.assert_allclose(np.asarray(out_two_dim), np.asarray(ref2), atol=5e-3, rtol=5e-3)

    print("KERNEL_OK")
</pallas_src>

<mosaic_0001>
module attributes {stable_mosaic.version = 11 : i64} {
  func.func @_fused_kernel(%arg0: memref<64x1xf32, #tpu.memory_space<vmem>>, %arg1: memref<1x512xf32, #tpu.memory_space<vmem>>, %arg2: memref<128x512xbf16, #tpu.memory_space<vmem>>, %arg3: memref<1x512xf32, #tpu.memory_space<vmem>>, %arg4: memref<128x512xbf16, #tpu.memory_space<vmem>>, %arg5: memref<128x512xbf16, #tpu.memory_space<vmem>>, %arg6: memref<1x512xf32, #tpu.memory_space<vmem>>, %arg7: memref<128x512xbf16, #tpu.memory_space<vmem>>, %arg8: memref<128x512xbf16, #tpu.memory_space<vmem>>, %arg9: memref<1x512xf32, #tpu.memory_space<vmem>>, %arg10: memref<128x512xbf16, #tpu.memory_space<vmem>>, %arg11: memref<128x512xbf16, #tpu.memory_space<vmem>>, %arg12: memref<1x512xf32, #tpu.memory_space<vmem>>, %arg13: memref<128x512xbf16, #tpu.memory_space<vmem>>, %arg14: memref<128x512xbf16, #tpu.memory_space<vmem>>, %arg15: memref<1x512xf32, #tpu.memory_space<vmem>>, %arg16: memref<128x512xbf16, #tpu.memory_space<vmem>>, %arg17: memref<128x512xbf16, #tpu.memory_space<vmem>>, %arg18: memref<1x512xf32, #tpu.memory_space<vmem>>, %arg19: memref<128x32xbf16, #tpu.memory_space<vmem>>, %arg20: memref<128x32xbf16, #tpu.memory_space<vmem>>, %arg21: memref<1x32xf32, #tpu.memory_space<vmem>>, %arg22: memref<32x128xbf16, #tpu.memory_space<vmem>>, %arg23: memref<1x128xf32, #tpu.memory_space<vmem>>, %arg24: memref<2x128xf32, #tpu.memory_space<vmem>>, %arg25: memref<64x512xf32, #tpu.memory_space<vmem>>, %arg26: memref<64x128xf32, #tpu.memory_space<vmem>>, %arg27: memref<64x128xf32, #tpu.memory_space<vmem>>) attributes {dimension_semantics = [], scalar_prefetch = 0 : i64, scratch_operands = 3 : i64, tpu.core_type = #tpu.core_type<tc>} {
    %c0 = arith.constant 0 : index
    %c0_0 = arith.constant 0 : index
    %0 = vector.load %arg0[%c0, %c0_0] : memref<64x1xf32, #tpu.memory_space<vmem>>, vector<64x1xf32>
    %c0_1 = arith.constant 0 : index
    %c0_2 = arith.constant 0 : index
    %1 = vector.load %arg1[%c0_1, %c0_2] : memref<1x512xf32, #tpu.memory_space<vmem>>, vector<1x512xf32>
    %2 = vector.broadcast %0 : vector<64x1xf32> to vector<64x512xf32>
    %3 = vector.broadcast %1 : vector<1x512xf32> to vector<64x512xf32>
    %4 = arith.mulf %2, %3 : vector<64x512xf32>
    %c0_3 = arith.constant 0 : index
    %c0_4 = arith.constant 0 : index
    %5 = vector.load %arg3[%c0_3, %c0_4] : memref<1x512xf32, #tpu.memory_space<vmem>>, vector<1x512xf32>
    %6 = vector.broadcast %5 : vector<1x512xf32> to vector<64x512xf32>
    %7 = arith.addf %4, %6 : vector<64x512xf32>
    %c0_5 = arith.constant 0 : index
    %c0_6 = arith.constant 0 : index
    %8 = vector.load %arg25[%c0_5, %c0_6] : memref<64x512xf32, #tpu.memory_space<vmem>>, vector<64x512xf32>
    tpu.vector_store %arg25[%c0_5, %c0_6], %7 {strides = array<i32>} : memref<64x512xf32, #tpu.memory_space<vmem>>, vector<64x512xf32>,
    %c0_7 = arith.constant 0 : index
    %c0_8 = arith.constant 0 : index
    %9 = vector.load %arg2[%c0_7, %c0_8] : memref<128x512xbf16, #tpu.memory_space<vmem>>, vector<128x512xbf16>
    %cst = arith.constant 0.000000e+00 : f32
    %10 = vector.broadcast %cst : f32 to vector<8x128xf32>
    %c0_9 = arith.constant 0 : index
    %c0_10 = arith.constant 0 : index
    %11 = vector.load %arg25[%c0_9, %c0_10] : memref<64x512xf32, #tpu.memory_space<vmem>>, vector<8x512xf32>
    %12 = vector.extract_strided_slice %11 {offsets = [0, 0], sizes = [8, 384], strides = [1, 1]} : vector<8x512xf32> to vector<8x384xf32>
    %13 = arith.negf %12 : vector<8x384xf32>
    %14 = math.exp %13 : vector<8x384xf32>
    %cst_11 = arith.constant 1.000000e+00 : f32
    %15 = vector.broadcast %cst_11 : f32 to vector<8x384xf32>
    %16 = arith.addf %15, %14 : vector<8x384xf32>
    %17 = arith.divf %15, %16 : vector<8x384xf32>
    %18 = vector.extract_strided_slice %11 {offsets = [0, 384], sizes = [8, 128], strides = [1, 1]} : vector<8x512xf32> to vector<8x128xf32>
    %19 = math.tanh %18 : vector<8x128xf32>
    %20 = vector.extract_strided_slice %17 {offsets = [0, 128], sizes = [8, 128], strides = [1, 1]} : vector<8x384xf32> to vector<8x128xf32>
    %21 = arith.mulf %20, %10 : vector<8x128xf32>
    %22 = vector.extract_strided_slice %17 {offsets = [0, 0], sizes = [8, 128], strides = [1, 1]} : vector<8x384xf32> to vector<8x128xf32>
    %23 = arith.mulf %22, %19 : vector<8x128xf32>
    %24 = arith.addf %21, %23 : vector<8x128xf32>
    %25 = vector.extract_strided_slice %17 {offsets = [0, 256], sizes = [8, 128], strides = [1, 1]} : vector<8x384xf32> to vector<8x128xf32>
    %26 = math.tanh %24 : vector<8x128xf32>
    %27 = arith.mulf %25, %26 : vector<8x128xf32>
    %c0_12 = arith.constant 0 : index
    %c0_13 = arith.constant 0 : index
    %28 = vector.load %arg26[%c0_12, %c0_13] : memref<64x128xf32, #tpu.memory_space<vmem>>, vector<8x128xf32>
    tpu.vector_store %arg26[%c0_12, %c0_13], %27 {strides = array<i32>} : memref<64x128xf32, #tpu.memory_space<vmem>>, vector<8x128xf32>,
    %c8 = arith.constant 8 : index
    %c0_14 = arith.constant 0 : index
    %29 = vector.load %arg25[%c8, %c0_14] : memref<64x512xf32, #tpu.memory_space<vmem>>, vector<8x512xf32>
    %30 = arith.truncf %27 : vector<8x128xf32> to vector<8x128xbf16>
    %cst_15 = arith.constant dense<0.000000e+00> : vector<8x512xf32>
    %31 = tpu.matmul %30, %9, %cst_15 {dimension_numbers = #tpu.dot_dimension_numbers<[1], [0], [0], [1], [0, 0, 1, 1], [], []>} : vector<8x128xbf16>, vector<128x512xbf16>, vector<8x512xf32> -> vector<8x512xf32>
    %32 = arith.addf %29, %31 : vector<8x512xf32>
    %33 = vector.extract_strided_slice %32 {offsets = [0, 0], sizes = [8, 384], strides = [1, 1]} : vector<8x512xf32> to vector<8x384xf32>
    %34 = arith.negf %33 : vector<8x384xf32>
    %35 = math.exp %34 : vector<8x384xf32>
    %cst_16 = arith.constant 1.000000e+00 : f32
    %36 = vector.broadcast %cst_16 : f32 to vector<8x384xf32>
    %37 = arith.addf %36, %35 : vector<8x384xf32>
    %38 = arith.divf %36, %37 : vector<8x384xf32>
    %39 = vector.extract_strided_slice %32 {offsets = [0, 384], sizes = [8, 128], strides = [1, 1]} : vector<8x512xf32> to vector<8x128xf32>
    %40 = math.tanh %39 : vector<8x128xf32>
    %41 = vector.extract_strided_slice %38 {offsets = [0, 128], sizes = [8, 128], strides = [1, 1]} : vector<8x384xf32> to vector<8x128xf32>
    %42 = arith.mulf %41, %24 : vector<8x128xf32>
    %43 = vector.extract_strided_slice %38 {offsets = [0, 0], sizes = [8, 128], strides = [1, 1]} : vector<8x384xf32> to vector<8x128xf32>
    %44 = arith.mulf %43, %40 : vector<8x128xf32>
    %45 = arith.addf %42, %44 : vector<8x128xf32>
    %46 = vector.extract_strided_slice %38 {offsets = [0, 256], sizes = [8, 128], strides = [1, 1]} : vector<8x384xf32> to vector<8x128xf32>
    %47 = math.tanh %45 : vector<8x128xf32>
    %48 = arith.mulf %46, %47 : vector<8x128xf32>
    %c8_17 = arith.constant 8 : index
    %c0_18 = arith.constant 0 : index
    %49 = vector.load %arg26[%c8_17, %c0_18] : memref<64x128xf32, #tpu.memory_space<vmem>>, vector<8x128xf32>
    tpu.vector_store %arg26[%c8_17, %c0_18], %48 {strides = array<i32>} : memref<64x128xf32, #tpu.memory_space<vmem>>, vector<8x128xf32>,
    %c16 = arith.constant 16 : index
    %c0_19 = arith.constant 0 : index
    %50 = vector.load %arg25[%c16, %c0_19] : memref<64x512xf32, #tpu.memory_space<vmem>>, vector<8x512xf32>
    %51 = arith.truncf %48 : vector<8x128xf32> to vector<8x128xbf16>
    %cst_20 = arith.constant dense<0.000000e+00> : vector<8x512xf32>
    %52 = tpu.matmul %51, %9, %cst_20 {dimension_numbers = #tpu.dot_dimension_numbers<[1], [0], [0], [1], [0, 0, 1, 1], [], []>} : vector<8x128xbf16>, vector<128x512xbf16>, vector<8x512xf32> -> vector<8x512xf32>
    %53 = arith.addf %50, %52 : vector<8x512xf32>
    %54 = vector.extract_strided_slice %53 {offsets = [0, 0], sizes = [8, 384], strides = [1, 1]} : vector<8x512xf32> to vector<8x384xf32>
    %55 = arith.negf %54 : vector<8x384xf32>
    %56 = math.exp %55 : vector<8x384xf32>
    %cst_21 = arith.constant 1.000000e+00 : f32
    %57 = vector.broadcast %cst_21 : f32 to vector<8x384xf32>
    %58 = arith.addf %57, %56 : vector<8x384xf32>
    %59 = arith.divf %57, %58 : vector<8x384xf32>
    %60 = vector.extract_strided_slice %53 {offsets = [0, 384], sizes = [8, 128], strides = [1, 1]} : vector<8x512xf32> to vector<8x128xf32>
    %61 = math.tanh %60 : vector<8x128xf32>
    %62 = vector.extract_strided_slice %59 {offsets = [0, 128], sizes = [8, 128], strides = [1, 1]} : vector<8x384xf32> to vector<8x128xf32>
    %63 = arith.mulf %62, %45 : vector<8x128xf32>
    %64 = vector.extract_strided_slice %59 {offsets = [0, 0], sizes = [8, 128], strides = [1, 1]} : vector<8x384xf32> to vector<8x128xf32>
    %65 = arith.mulf %64, %61 : vector<8x128xf32>
    %66 = arith.addf %63, %65 : vector<8x128xf32>
    %67 = vector.extract_strided_slice %59 {offsets = [0, 256], sizes = [8, 128], strides = [1, 1]} : vector<8x384xf32> to vector<8x128xf32>
    %68 = math.tanh %66 : vector<8x128xf32>
    %69 = arith.mulf %67, %68 : vector<8x128xf32>
    %c16_22 = arith.constant 16 : index
    %c0_23 = arith.constant 0 : index
    %70 = vector.load %arg26[%c16_22, %c0_23] : memref<64x128xf32, #tpu.memory_space<vmem>>, vector<8x128xf32>
    tpu.vector_store %arg26[%c16_22, %c0_23], %69 {strides = array<i32>} : memref<64x128xf32, #tpu.memory_space<vmem>>, vector<8x128xf32>,
    %c24 = arith.constant 24 : index
    %c0_24 = arith.constant 0 : index
    %71 = vector.load %arg25[%c24, %c0_24] : memref<64x512xf32, #tpu.memory_space<vmem>>, vector<8x512xf32>
    %72 = arith.truncf %69 : vector<8x128xf32> to vector<8x128xbf16>
    %cst_25 = arith.constant dense<0.000000e+00> : vector<8x512xf32>
    %73 = tpu.matmul %72, %9, %cst_25 {dimension_numbers = #tpu.dot_dimension_numbers<[1], [0], [0], [1], [0, 0, 1, 1], [], []>} : vector<8x128xbf16>, vector<128x512xbf16>, vector<8x512xf32> -> vector<8x512xf32>
    %74 = arith.addf %71, %73 : vector<8x512xf32>
    %75 = vector.extract_strided_slice %74 {offsets = [0, 0], sizes = [8, 384], strides = [1, 1]} : vector<8x512xf32> to vector<8x384xf32>
    %76 = arith.negf %75 : vector<8x384xf32>
    %77 = math.exp %76 : vector<8x384xf32>
    %cst_26 = arith.constant 1.000000e+00 : f32
    %78 = vector.broadcast %cst_26 : f32 to vector<8x384xf32>
    %79 = arith.addf %78, %77 : vector<8x384xf32>
    %80 = arith.divf %78, %79 : vector<8x384xf32>
    %81 = vector.extract_strided_slice %74 {offsets = [0, 384], sizes = [8, 128], strides = [1, 1]} : vector<8x512xf32> to vector<8x128xf32>
    %82 = math.tanh %81 : vector<8x128xf32>
    %83 = vector.extract_strided_slice %80 {offsets = [0, 128], sizes = [8, 128], strides = [1, 1]} : vector<8x384xf32> to vector<8x128xf32>
    %84 = arith.mulf %83, %66 : vector<8x128xf32>
    %85 = vector.extract_strided_slice %80 {offsets = [0, 0], sizes = [8, 128], strides = [1, 1]} : vector<8x384xf32> to vector<8x128xf32>
    %86 = arith.mulf %85, %82 : vector<8x128xf32>
    %87 = arith.addf %84, %86 : vector<8x128xf32>
    %88 = vector.extract_strided_slice %80 {offsets = [0, 256], sizes = [8, 128], strides = [1, 1]} : vector<8x384xf32> to vector<8x128xf32>
    %89 = math.tanh %87 : vector<8x128xf32>
    %90 = arith.mulf %88, %89 : vector<8x128xf32>
    %c24_27 = arith.constant 24 : index
    %c0_28 = arith.constant 0 : index
    %91 = vector.load %arg26[%c24_27, %c0_28] : memref<64x128xf32, #tpu.memory_space<vmem>>, vector<8x128xf32>
    tpu.vector_store %arg26[%c24_27, %c0_28], %90 {strides = array<i32>} : memref<64x128xf32, #tpu.memory_space<vmem>>, vector<8x128xf32>,
    %c32 = arith.constant 32 : index
    %c0_29 = arith.constant 0 : index
    %92 = vector.load %arg25[%c32, %c0_29] : memref<64x512xf32, #tpu.memory_space<vmem>>, vector<8x512xf32>
    %93 = arith.truncf %90 : vector<8x128xf32> to vector<8x128xbf16>
    %cst_30 = arith.constant dense<0.000000e+00> : vector<8x512xf32>
    %94 = tpu.matmul %93, %9, %cst_30 {dimension_numbers = #tpu.dot_dimension_numbers<[1], [0], [0], [1], [0, 0, 1, 1], [], []>} : vector<8x128xbf16>, vector<128x512xbf16>, vector<8x512xf32> -> vector<8x512xf32>
    %95 = arith.addf %92, %94 : vector<8x512xf32>
    %96 = vector.extract_strided_slice %95 {offsets = [0, 0], sizes = [8, 384], strides = [1, 1]} : vector<8x512xf32> to vector<8x384xf32>
    %97 = arith.negf %96 : vector<8x384xf32>
    %98 = math.exp %97 : vector<8x384xf32>
    %cst_31 = arith.constant 1.000000e+00 : f32
    %99 = vector.broadcast %cst_31 : f32 to vector<8x384xf32>
    %100 = arith.addf %99, %98 : vector<8x384xf32>
    %101 = arith.divf %99, %100 : vector<8x384xf32>
    %102 = vector.extract_strided_slice %95 {offsets = [0, 384], sizes = [8, 128], strides = [1, 1]} : vector<8x512xf32> to vector<8x128xf32>
    %103 = math.tanh %102 : vector<8x128xf32>
    %104 = vector.extract_strided_slice %101 {offsets = [0, 128], sizes = [8, 128], strides = [1, 1]} : vector<8x384xf32> to vector<8x128xf32>
    %105 = arith.mulf %104, %87 : vector<8x128xf32>
    %106 = vector.extract_strided_slice %101 {offsets = [0, 0], sizes = [8, 128], strides = [1, 1]} : vector<8x384xf32> to vector<8x128xf32>
    %107 = arith.mulf %106, %103 : vector<8x128xf32>
    %108 = arith.addf %105, %107 : vector<8x128xf32>
    %109 = vector.extract_strided_slice %101 {offsets = [0, 256], sizes = [8, 128], strides = [1, 1]} : vector<8x384xf32> to vector<8x128xf32>
    %110 = math.tanh %108 : vector<8x128xf32>
    %111 = arith.mulf %109, %110 : vector<8x128xf32>
    %c32_32 = arith.constant 32 : index
    %c0_33 = arith.constant 0 : index
    %112 = vector.load %arg26[%c32_32, %c0_33] : memref<64x128xf32, #tpu.memory_space<vmem>>, vector<8x128xf32>
    tpu.vector_store %arg26[%c32_32, %c0_33], %111 {strides = array<i32>} : memref<64x128xf32, #tpu.memory_space<vmem>>, vector<8x128xf32>,
    %c40 = arith.constant 40 : index
    %c0_34 = arith.constant 0 : index
    %113 = vector.load %arg25[%c40, %c0_34] : memref<64x512xf32, #tpu.memory_space<vmem>>, vector<8x512xf32>
    %114 = arith.truncf %111 : vector<8x128xf32> to vector<8x128xbf16>
    %cst_35 = arith.constant dense<0.000000e+00> : vector<8x512xf32>
    %115 = tpu.matmul %114, %9, %cst_35 {dimension_numbers = #tpu.dot_dimension_numbers<[1], [0], [0], [1], [0, 0, 1, 1], [], []>} : vector<8x128xbf16>, vector<128x512xbf16>, vector<8x512xf32> -> vector<8x512xf32>
    %116 = arith.addf %113, %115 : vector<8x512xf32>
    %117 = vector.extract_strided_slice %116 {offsets = [0, 0], sizes = [8, 384], strides = [1, 1]} : vector<8x512xf32> to vector<8x384xf32>
    %118 = arith.negf %117 : vector<8x384xf32>
    %119 = math.exp %118 : vector<8x384xf32>
    %cst_36 = arith.constant 1.000000e+00 : f32
    %120 = vector.broadcast %cst_36 : f32 to vector<8x384xf32>
    %121 = arith.addf %120, %119 : vector<8x384xf32>
    %122 = arith.divf %120, %121 : vector<8x384xf32>
    %123 = vector.extract_strided_slice %116 {offsets = [0, 384], sizes = [8, 128], strides = [1, 1]} : vector<8x512xf32> to vector<8x128xf32>
    %124 = math.tanh %123 : vector<8x128xf32>
    %125 = vector.extract_strided_slice %122 {offsets = [0, 128], sizes = [8, 128], strides = [1, 1]} : vector<8x384xf32> to vector<8x128xf32>
    %126 = arith.mulf %125, %108 : vector<8x128xf32>
    %127 = vector.extract_strided_slice %122 {offsets = [0, 0], sizes = [8, 128], strides = [1, 1]} : vector<8x384xf32> to vector<8x128xf32>
    %128 = arith.mulf %127, %124 : vector<8x128xf32>
    %129 = arith.addf %126, %128 : vector<8x128xf32>
    %130 = vector.extract_strided_slice %122 {offsets = [0, 256], sizes = [8, 128], strides = [1, 1]} : vector<8x384xf32> to vector<8x128xf32>
    %131 = math.tanh %129 : vector<8x128xf32>
    %132 = arith.mulf %130, %131 : vector<8x128xf32>
    %c40_37 = arith.constant 40 : index
    %c0_38 = arith.constant 0 : index
    %133 = vector.load %arg26[%c40_37, %c0_38] : memref<64x128xf32, #tpu.memory_space<vmem>>, vector<8x128xf32>
    tpu.vector_store %arg26[%c40_37, %c0_38], %132 {strides = array<i32>} : memref<64x128xf32, #tpu.memory_space<vmem>>, vector<8x128xf32>,
    %c48 = arith.constant 48 : index
    %c0_39 = arith.constant 0 : index
    %134 = vector.load %arg25[%c48, %c0_39] : memref<64x512xf32, #tpu.memory_space<vmem>>, vector<8x512xf32>
    %135 = arith.truncf %132 : vector<8x128xf32> to vector<8x128xbf16>
    %cst_40 = arith.constant dense<0.000000e+00> : vector<8x512xf32>
    %136 = tpu.matmul %135, %9, %cst_40 {dimension_numbers = #tpu.dot_dimension_numbers<[1], [0], [0], [1], [0, 0, 1, 1], [], []>} : vector<8x128xbf16>, vector<128x512xbf16>, vector<8x512xf32> -> vector<8x512xf32>
    %137 = arith.addf %134, %136 : vector<8x512xf32>
    %138 = vector.extract_strided_slice %137 {offsets = [0, 0], sizes = [8, 384], strides = [1, 1]} : vector<8x512xf32> to vector<8x384xf32>
    %139 = arith.negf %138 : vector<8x384xf32>
    %140 = math.exp %139 : vector<8x384xf32>
    %cst_41 = arith.constant 1.000000e+00 : f32
    %141 = vector.broadcast %cst_41 : f32 to vector<8x384xf32>
    %142 = arith.addf %141, %140 : vector<8x384xf32>
    %143 = arith.divf %141, %142 : vector<8x384xf32>
    %144 = vector.extract_strided_slice %137 {offsets = [0, 384], sizes = [8, 128], strides = [1, 1]} : vector<8x512xf32> to vector<8x128xf32>
    %145 = math.tanh %144 : vector<8x128xf32>
    %146 = vector.extract_strided_slice %143 {offsets = [0, 128], sizes = [8, 128], strides = [1, 1]} : vector<8x384xf32> to vector<8x128xf32>
    %147 = arith.mulf %146, %129 : vector<8x128xf32>
    %148 = vector.extract_strided_slice %143 {offsets = [0, 0], sizes = [8, 128], strides = [1, 1]} : vector<8x384xf32> to vector<8x128xf32>
    %149 = arith.mulf %148, %145 : vector<8x128xf32>
    %150 = arith.addf %147, %149 : vector<8x128xf32>
    %151 = vector.extract_strided_slice %143 {offsets = [0, 256], sizes = [8, 128], strides = [1, 1]} : vector<8x384xf32> to vector<8x128xf32>
    %152 = math.tanh %150 : vector<8x128xf32>
    %153 = arith.mulf %151, %152 : vector<8x128xf32>
    %c48_42 = arith.constant 48 : index
    %c0_43 = arith.constant 0 : index
    %154 = vector.load %arg26[%c48_42, %c0_43] : memref<64x128xf32, #tpu.memory_space<vmem>>, vector<8x128xf32>
    tpu.vector_store %arg26[%c48_42, %c0_43], %153 {strides = array<i32>} : memref<64x128xf32, #tpu.memory_space<vmem>>, vector<8x128xf32>,
    %c56 = arith.constant 56 : index
    %c0_44 = arith.constant 0 : index
    %155 = vector.load %arg25[%c56, %c0_44] : memref<64x512xf32, #tpu.memory_space<vmem>>, vector<8x512xf32>
    %156 = arith.truncf %153 : vector<8x128xf32> to vector<8x128xbf16>
    %cst_45 = arith.constant dense<0.000000e+00> : vector<8x512xf32>
    %157 = tpu.matmul %156, %9, %cst_45 {dimension_numbers = #tpu.dot_dimension_numbers<[1], [0], [0], [1], [0, 0, 1, 1], [], []>} : vector<8x128xbf16>, vector<128x512xbf16>, vector<8x512xf32> -> vector<8x512xf32>
    %158 = arith.addf %155, %157 : vector<8x512xf32>
    %159 = vector.extract_strided_slice %158 {offsets = [0, 0], sizes = [8, 384], strides = [1, 1]} : vector<8x512xf32> to vector<8x384xf32>
    %160 = arith.negf %159 : vector<8x384xf32>
    %161 = math.exp %160 : vector<8x384xf32>
    %cst_46 = arith.constant 1.000000e+00 : f32
    %162 = vector.broadcast %cst_46 : f32 to vector<8x384xf32>
    %163 = arith.addf %162, %161 : vector<8x384xf32>
    %164 = arith.divf %162, %163 : vector<8x384xf32>
    %165 = vector.extract_strided_slice %158 {offsets = [0, 384], sizes = [8, 128], strides = [1, 1]} : vector<8x512xf32> to vector<8x128xf32>
    %166 = math.tanh %165 : vector<8x128xf32>
    %167 = vector.extract_strided_slice %164 {offsets = [0, 128], sizes = [8, 128], strides = [1, 1]} : vector<8x384xf32> to vector<8x128xf32>
    %168 = arith.mulf %167, %150 : vector<8x128xf32>
    %169 = vector.extract_strided_slice %164 {offsets = [0, 0], sizes = [8, 128], strides = [1, 1]} : vector<8x384xf32> to vector<8x128xf32>
    %170 = arith.mulf %169, %166 : vector<8x128xf32>
    %171 = arith.addf %168, %170 : vector<8x128xf32>
    %172 = vector.extract_strided_slice %164 {offsets = [0, 256], sizes = [8, 128], strides = [1, 1]} : vector<8x384xf32> to vector<8x128xf32>
    %173 = math.tanh %171 : vector<8x128xf32>
    %174 = arith.mulf %172, %173 : vector<8x128xf32>
    %c56_47 = arith.constant 56 : index
    %c0_48 = arith.constant 0 : index
    %175 = vector.load %arg26[%c56_47, %c0_48] : memref<64x128xf32, #tpu.memory_space<vmem>>, vector<8x128xf32>
    tpu.vector_store %arg26[%c56_47, %c0_48], %174 {strides = array<i32>} : memref<64x128xf32, #tpu.memory_space<vmem>>, vector<8x128xf32>,
    %c0_49 = arith.constant 0 : index
    %c0_50 = arith.constant 0 : index
    %176 = vector.load %arg26[%c0_49, %c0_50] : memref<64x128xf32, #tpu.memory_space<vmem>>, vector<64x128xf32>
    %177 = arith.truncf %176 : vector<64x128xf32> to vector<64x128xbf16>
    %c0_51 = arith.constant 0 : index
    %c0_52 = arith.constant 0 : index
    %178 = vector.load %arg4[%c0_51, %c0_52] : memref<128x512xbf16, #tpu.memory_space<vmem>>, vector<128x512xbf16>
    %cst_53 = arith.constant dense<0.000000e+00> : vector<64x512xf32>
    %179 = tpu.matmul %177, %178, %cst_53 {dimension_numbers = #tpu.dot_dimension_numbers<[1], [0], [0], [1], [0, 0, 1, 1], [], []>} : vector<64x128xbf16>, vector<128x512xbf16>, vector<64x512xf32> -> vector<64x512xf32>
    %c0_54 = arith.constant 0 : index
    %c0_55 = arith.constant 0 : index
    %180 = vector.load %arg6[%c0_54, %c0_55] : memref<1x512xf32, #tpu.memory_space<vmem>>, vector<1x512xf32>
    %181 = vector.broadcast %180 : vector<1x512xf32> to vector<64x512xf32>
    %182 = arith.addf %179, %181 : vector<64x512xf32>
    %c0_56 = arith.constant 0 : index
    %c0_57 = arith.constant 0 : index
    %183 = vector.load %arg25[%c0_56, %c0_57] : memref<64x512xf32, #tpu.memory_space<vmem>>, vector<64x512xf32>
    tpu.vector_store %arg25[%c0_56, %c0_57], %182 {strides = array<i32>} : memref<64x512xf32, #tpu.memory_space<vmem>>, vector<64x512xf32>,
    %c0_58 = arith.constant 0 : index
    %c0_59 = arith.constant 0 : index
    %184 = vector.load %arg5[%c0_58, %c0_59] : memref<128x512xbf16, #tpu.memory_space<vmem>>, vector<128x512xbf16>
    %cst_60 = arith.constant 0.000000e+00 : f32
    %185 = vector.broadcast %cst_60 : f32 to vector<8x128xf32>
    %c0_61 = arith.constant 0 : index
    %c0_62 = arith.constant 0 : index
    %186 = vector.load %arg25[%c0_61, %c0_62] : memref<64x512xf32, #tpu.memory_space<vmem>>, vector<8x512xf32>
    %187 = vector.extract_strided_slice %186 {offsets = [0, 0], sizes = [8, 384], strides = [1, 1]} : vector<8x512xf32> to vector<8x384xf32>
    %188 = arith.negf %187 : vector<8x384xf32>
    %189 = math.exp %188 : vector<8x384xf32>
    %cst_63 = arith.constant 1.000000e+00 : f32
    %190 = vector.broadcast %cst_63 : f32 to vector<8x384xf32>
    %191 = arith.addf %190, %189 : vector<8x384xf32>
    %192 = arith.divf %190, %191 : vector<8x384xf32>
    %193 = vector.extract_strided_slice %186 {offsets = [0, 384], sizes = [8, 128], strides = [1, 1]} : vector<8x512xf32> to vector<8x128xf32>
    %194 = math.tanh %193 : vector<8x128xf32>
    %195 = vector.extract_strided_slice %192 {offsets = [0, 128], sizes = [8, 128], strides = [1, 1]} : vector<8x384xf32> to vector<8x128xf32>
    %196 = arith.mulf %195, %185 : vector<8x128xf32>
    %197 = vector.extract_strided_slice %192 {offsets = [0, 0], sizes = [8, 128], strides = [1, 1]} : vector<8x384xf32> to vector<8x128xf32>
    %198 = arith.mulf %197, %194 : vector<8x128xf32>
    %199 = arith.addf %196, %198 : vector<8x128xf32>
    %200 = vector.extract_strided_slice %192 {offsets = [0, 256], sizes = [8, 128], strides = [1, 1]} : vector<8x384xf32> to vector<8x128xf32>
    %201 = math.tanh %199 : vector<8x128xf32>
    %202 = arith.mulf %200, %201 : vector<8x128xf32>
    %c0_64 = arith.constant 0 : index
    %c0_65 = arith.constant 0 : index
    %203 = vector.load %arg27[%c0_64, %c0_65] : memref<64x128xf32, #tpu.memory_space<vmem>>, vector<8x128xf32>
    tpu.vector_store %arg27[%c0_64, %c0_65], %202 {strides = array<i32>} : memref<64x128xf32, #tpu.memory_space<vmem>>, vector<8x128xf32>,
    %c8_66 = arith.constant 8 : index
    %c0_67 = arith.constant 0 : index
    %204 = vector.load %arg25[%c8_66, %c0_67] : memref<64x512xf32, #tpu.memory_space<vmem>>, vector<8x512xf32>
    %205 = arith.truncf %202 : vector<8x128xf32> to vector<8x128xbf16>
    %cst_68 = arith.constant dense<0.000000e+00> : vector<8x512xf32>
    %206 = tpu.matmul %205, %184, %cst_68 {dimension_numbers = #tpu.dot_dimension_numbers<[1], [0], [0], [1], [0, 0, 1, 1], [], []>} : vector<8x128xbf16>, vector<128x512xbf16>, vector<8x512xf32> -> vector<8x512xf32>
    %207 = arith.addf %204, %206 : vector<8x512xf32>
    %208 = vector.extract_strided_slice %207 {offsets = [0, 0], sizes = [8, 384], strides = [1, 1]} : vector<8x512xf32> to vector<8x384xf32>
    %209 = arith.negf %208 : vector<8x384xf32>
    %210 = math.exp %209 : vector<8x384xf32>
    %cst_69 = arith.constant 1.000000e+00 : f32
    %211 = vector.broadcast %cst_69 : f32 to vector<8x384xf32>
    %212 = arith.addf %211, %210 : vector<8x384xf32>
    %213 = arith.divf %211, %212 : vector<8x384xf32>
    %214 = vector.extract_strided_slice %207 {offsets = [0, 384], sizes = [8, 128], strides = [1, 1]} : vector<8x512xf32> to vector<8x128xf32>
    %215 = math.tanh %214 : vector<8x128xf32>
    %216 = vector.extract_strided_slice %213 {offsets = [0, 128], sizes = [8, 128], strides = [1, 1]} : vector<8x384xf32> to vector<8x128xf32>
    %217 = arith.mulf %216, %199 : vector<8x128xf32>
    %218 = vector.extract_strided_slice %213 {offsets = [0, 0], sizes = [8, 128], strides = [1, 1]} : vector<8x384xf32> to vector<8x128xf32>
    %219 = arith.mulf %218, %215 : vector<8x128xf32>
    %220 = arith.addf %217, %219 : vector<8x128xf32>
    %221 = vector.extract_strided_slice %213 {offsets = [0, 256], sizes = [8, 128], strides = [1, 1]} : vector<8x384xf32> to vector<8x128xf32>
    %222 = math.tanh %220 : vector<8x128xf32>
    %223 = arith.mulf %221, %222 : vector<8x128xf32>
    %c8_70 = arith.constant 8 : index
    %c0_71 = arith.constant 0 : index
    %224 = vector.load %arg27[%c8_70, %c0_71] : memref<64x128xf32, #tpu.memory_space<vmem>>, vector<8x128xf32>
    tpu.vector_store %arg27[%c8_70, %c0_71], %223 {strides = array<i32>} : memref<64x128xf32, #tpu.memory_space<vmem>>, vector<8x128xf32>,
    %c16_72 = arith.constant 16 : index
    %c0_73 = arith.constant 0 : index
    %225 = vector.load %arg25[%c16_72, %c0_73] : memref<64x512xf32, #tpu.memory_space<vmem>>, vector<8x512xf32>
    %226 = arith.truncf %223 : vector<8x128xf32> to vector<8x128xbf16>
    %cst_74 = arith.constant dense<0.000000e+00> : vector<8x512xf32>
    %227 = tpu.matmul %226, %184, %cst_74 {dimension_numbers = #tpu.dot_dimension_numbers<[1], [0], [0], [1], [0, 0, 1, 1], [], []>} : vector<8x128xbf16>, vector<128x512xbf16>, vector<8x512xf32> -> vector<8x512xf32>
    %228 = arith.addf %225, %227 : vector<8x512xf32>
    %229 = vector.extract_strided_slice %228 {offsets = [0, 0], sizes = [8, 384], strides = [1, 1]} : vector<8x512xf32> to vector<8x384xf32>
    %230 = arith.negf %229 : vector<8x384xf32>
    %231 = math.exp %230 : vector<8x384xf32>
    %cst_75 = arith.constant 1.000000e+00 : f32
    %232 = vector.broadcast %cst_75 : f32 to vector<8x384xf32>
    %233 = arith.addf %232, %231 : vector<8x384xf32>
    %234 = arith.divf %232, %233 : vector<8x384xf32>
    %235 = vector.extract_strided_slice %228 {offsets = [0, 384], sizes = [8, 128], strides = [1, 1]} : vector<8x512xf32> to vector<8x128xf32>
    %236 = math.tanh %235 : vector<8x128xf32>
    %237 = vector.extract_strided_slice %234 {offsets = [0, 128], sizes = [8, 128], strides = [1, 1]} : vector<8x384xf32> to vector<8x128xf32>
    %238 = arith.mulf %237, %220 : vector<8x128xf32>
    %239 = vector.extract_strided_slice %234 {offsets = [0, 0], sizes = [8, 128], strides = [1, 1]} : vector<8x384xf32> to vector<8x128xf32>
    %240 = arith.mulf %239, %236 : vector<8x128xf32>
    %241 = arith.addf %238, %240 : vector<8x128xf32>
    %242 = vector.extract_strided_slice %234 {offsets = [0, 256], sizes = [8, 128], strides = [1, 1]} : vector<8x384xf32> to vector<8x128xf32>
    %243 = math.tanh %241 : vector<8x128xf32>
    %244 = arith.mulf %242, %243 : vector<8x128xf32>
    %c16_76 = arith.constant 16 : index
    %c0_77 = arith.constant 0 : index
    %245 = vector.load %arg27[%c16_76, %c0_77] : memref<64x128xf32, #tpu.memory_space<vmem>>, vector<8x128xf32>
    tpu.vector_store %arg27[%c16_76, %c0_77], %244 {strides = array<i32>} : memref<64x128xf32, #tpu.memory_space<vmem>>, vector<8x128xf32>,
    %c24_78 = arith.constant 24 : index
    %c0_79 = arith.constant 0 : index
    %246 = vector.load %arg25[%c24_78, %c0_79] : memref<64x512xf32, #tpu.memory_space<vmem>>, vector<8x512xf32>
    %247 = arith.truncf %244 : vector<8x128xf32> to vector<8x128xbf16>
    %cst_80 = arith.constant dense<0.000000e+00> : vector<8x512xf32>
    %248 = tpu.matmul %247, %184, %cst_80 {dimension_numbers = #tpu.dot_dimension_numbers<[1], [0], [0], [1], [0, 0, 1, 1], [], []>} : vector<8x128xbf16>, vector<128x512xbf16>, vector<8x512xf32> -> vector<8x512xf32>
    %249 = arith.addf %246, %248 : vector<8x512xf32>
    %250 = vector.extract_strided_slice %249 {offsets = [0, 0], sizes = [8, 384], strides = [1, 1]} : vector<8x512xf32> to vector<8x384xf32>
    %251 = arith.negf %250 : vector<8x384xf32>
    %252 = math.exp %251 : vector<8x384xf32>
    %cst_81 = arith.constant 1.000000e+00 : f32
    %253 = vector.broadcast %cst_81 : f32 to vector<8x384xf32>
    %254 = arith.addf %253, %252 : vector<8x384xf32>
    %255 = arith.divf %253, %254 : vector<8x384xf32>
    %256 = vector.extract_strided_slice %249 {offsets = [0, 384], sizes = [8, 128], strides = [1, 1]} : vector<8x512xf32> to vector<8x128xf32>
    %257 = math.tanh %256 : vector<8x128xf32>
    %258 = vector.extract_strided_slice %255 {offsets = [0, 128], sizes = [8, 128], strides = [1, 1]} : vector<8x384xf32> to vector<8x128xf32>
    %259 = arith.mulf %258, %241 : vector<8x128xf32>
    %260 = vector.extract_strided_slice %255 {offsets = [0, 0], sizes = [8, 128], strides = [1, 1]} : vector<8x384xf32> to vector<8x128xf32>
    %261 = arith.mulf %260, %257 : vector<8x128xf32>
    %262 = arith.addf %259, %261 : vector<8x128xf32>
    %263 = vector.extract_strided_slice %255 {offsets = [0, 256], sizes = [8, 128], strides = [1, 1]} : vector<8x384xf32> to vector<8x128xf32>
    %264 = math.tanh %262 : vector<8x128xf32>
    %265 = arith.mulf %263, %264 : vector<8x128xf32>
    %c24_82 = arith.constant 24 : index
    %c0_83 = arith.constant 0 : index
    %266 = vector.load %arg27[%c24_82, %c0_83] : memref<64x128xf32, #tpu.memory_space<vmem>>, vector<8x128xf32>
    tpu.vector_store %arg27[%c24_82, %c0_83], %265 {strides = array<i32>} : memref<64x128xf32, #tpu.memory_space<vmem>>, vector<8x128xf32>,
    %c32_84 = arith.constant 32 : index
    %c0_85 = arith.constant 0 : index
    %267 = vector.load %arg25[%c32_84, %c0_85] : memref<64x512xf32, #tpu.memory_space<vmem>>, vector<8x512xf32>
    %268 = arith.truncf %265 : vector<8x128xf32> to vector<8x128xbf16>
    %cst_86 = arith.constant dense<0.000000e+00> : vector<8x512xf32>
    %269 = tpu.matmul %268, %184, %cst_86 {dimension_numbers = #tpu.dot_dimension_numbers<[1], [0], [0], [1], [0, 0, 1, 1], [], []>} : vector<8x128xbf16>, vector<128x512xbf16>, vector<8x512xf32> -> vector<8x512xf32>
    %270 = arith.addf %267, %269 : vector<8x512xf32>
    %271 = vector.extract_strided_slice %270 {offsets = [0, 0], sizes = [8, 384], strides = [1, 1]} : vector<8x512xf32> to vector<8x384xf32>
    %272 = arith.negf %271 : vector<8x384xf32>
    %273 = math.exp %272 : vector<8x384xf32>
    %cst_87 = arith.constant 1.000000e+00 : f32
    %274 = vector.broadcast %cst_87 : f32 to vector<8x384xf32>
    %275 = arith.addf %274, %273 : vector<8x384xf32>
    %276 = arith.divf %274, %275 : vector<8x384xf32>
    %277 = vector.extract_strided_slice %270 {offsets = [0, 384], sizes = [8, 128], strides = [1, 1]} : vector<8x512xf32> to vector<8x128xf32>
    %278 = math.tanh %277 : vector<8x128xf32>
    %279 = vector.extract_strided_slice %276 {offsets = [0, 128], sizes = [8, 128], strides = [1, 1]} : vector<8x384xf32> to vector<8x128xf32>
    %280 = arith.mulf %279, %262 : vector<8x128xf32>
    %281 = vector.extract_strided_slice %276 {offsets = [0, 0], sizes = [8, 128], strides = [1, 1]} : vector<8x384xf32> to vector<8x128xf32>
    %282 = arith.mulf %281, %278 : vector<8x128xf32>
    %283 = arith.addf %280, %282 : vector<8x128xf32>
    %284 = vector.extract_strided_slice %276 {offsets = [0, 256], sizes = [8, 128], strides = [1, 1]} : vector<8x384xf32> to vector<8x128xf32>
    %285 = math.tanh %283 : vector<8x128xf32>
    %286 = arith.mulf %284, %285 : vector<8x128xf32>
    %c32_88 = arith.constant 32 : index
    %c0_89 = arith.constant 0 : index
    %287 = vector.load %arg27[%c32_88, %c0_89] : memref<64x128xf32, #tpu.memory_space<vmem>>, vector<8x128xf32>
    tpu.vector_store %arg27[%c32_88, %c0_89], %286 {strides = array<i32>} : memref<64x128xf32, #tpu.memory_space<vmem>>, vector<8x128xf32>,
    %c40_90 = arith.constant 40 : index
    %c0_91 = arith.constant 0 : index
    %288 = vector.load %arg25[%c40_90, %c0_91] : memref<64x512xf32, #tpu.memory_space<vmem>>, vector<8x512xf32>
    %289 = arith.truncf %286 : vector<8x128xf32> to vector<8x128xbf16>
    %cst_92 = arith.constant dense<0.000000e+00> : vector<8x512xf32>
    %290 = tpu.matmul %289, %184, %cst_92 {dimension_numbers = #tpu.dot_dimension_numbers<[1], [0], [0], [1], [0, 0, 1, 1], [], []>} : vector<8x128xbf16>, vector<128x512xbf16>, vector<8x512xf32> -> vector<8x512xf32>
    %291 = arith.addf %288, %290 : vector<8x512xf32>
    %292 = vector.extract_strided_slice %291 {offsets = [0, 0], sizes = [8, 384], strides = [1, 1]} : vector<8x512xf32> to vector<8x384xf32>
    %293 = arith.negf %292 : vector<8x384xf32>
    %294 = math.exp %293 : vector<8x384xf32>
    %cst_93 = arith.constant 1.000000e+00 : f32
    %295 = vector.broadcast %cst_93 : f32 to vector<8x384xf32>
    %296 = arith.addf %295, %294 : vector<8x384xf32>
    %297 = arith.divf %295, %296 : vector<8x384xf32>
    %298 = vector.extract_strided_slice %291 {offsets = [0, 384], sizes = [8, 128], strides = [1, 1]} : vector<8x512xf32> to vector<8x128xf32>
    %299 = math.tanh %298 : vector<8x128xf32>
    %300 = vector.extract_strided_slice %297 {offsets = [0, 128], sizes = [8, 128], strides = [1, 1]} : vector<8x384xf32> to vector<8x128xf32>
    %301 = arith.mulf %300, %283 : vector<8x128xf32>
    %302 = vector.extract_strided_slice %297 {offsets = [0, 0], sizes = [8, 128], strides = [1, 1]} : vector<8x384xf32> to vector<8x128xf32>
    %303 = arith.mulf %302, %299 : vector<8x128xf32>
    %304 = arith.addf %301, %303 : vector<8x128xf32>
    %305 = vector.extract_strided_slice %297 {offsets = [0, 256], sizes = [8, 128], strides = [1, 1]} : vector<8x384xf32> to vector<8x128xf32>
    %306 = math.tanh %304 : vector<8x128xf32>
    %307 = arith.mulf %305, %306 : vector<8x128xf32>
    %c40_94 = arith.constant 40 : index
    %c0_95 = arith.constant 0 : index
    %308 = vector.load %arg27[%c40_94, %c0_95] : memref<64x128xf32, #tpu.memory_space<vmem>>, vector<8x128xf32>
    tpu.vector_store %arg27[%c40_94, %c0_95], %307 {strides = array<i32>} : memref<64x128xf32, #tpu.memory_space<vmem>>, vector<8x128xf32>,
    %c48_96 = arith.constant 48 : index
    %c0_97 = arith.constant 0 : index
    %309 = vector.load %arg25[%c48_96, %c0_97] : memref<64x512xf32, #tpu.memory_space<vmem>>, vector<8x512xf32>
    %310 = arith.truncf %307 : vector<8x128xf32> to vector<8x128xbf16>
    %cst_98 = arith.constant dense<0.000000e+00> : vector<8x512xf32>
    %311 = tpu.matmul %310, %184, %cst_98 {dimension_numbers = #tpu.dot_dimension_numbers<[1], [0], [0], [1], [0, 0, 1, 1], [], []>} : vector<8x128xbf16>, vector<128x512xbf16>, vector<8x512xf32> -> vector<8x512xf32>
    %312 = arith.addf %309, %311 : vector<8x512xf32>
    %313 = vector.extract_strided_slice %312 {offsets = [0, 0], sizes = [8, 384], strides = [1, 1]} : vector<8x512xf32> to vector<8x384xf32>
    %314 = arith.negf %313 : vector<8x384xf32>
    %315 = math.exp %314 : vector<8x384xf32>
    %cst_99 = arith.constant 1.000000e+00 : f32
    %316 = vector.broadcast %cst_99 : f32 to vector<8x384xf32>
    %317 = arith.addf %316, %315 : vector<8x384xf32>
    %318 = arith.divf %316, %317 : vector<8x384xf32>
    %319 = vector.extract_strided_slice %312 {offsets = [0, 384], sizes = [8, 128], strides = [1, 1]} : vector<8x512xf32> to vector<8x128xf32>
    %320 = math.tanh %319 : vector<8x128xf32>
    %321 = vector.extract_strided_slice %318 {offsets = [0, 128], sizes = [8, 128], strides = [1, 1]} : vector<8x384xf32> to vector<8x128xf32>
    %322 = arith.mulf %321, %304 : vector<8x128xf32>
    %323 = vector.extract_strided_slice %318 {offsets = [0, 0], sizes = [8, 128], strides = [1, 1]} : vector<8x384xf32> to vector<8x128xf32>
    %324 = arith.mulf %323, %320 : vector<8x128xf32>
    %325 = arith.addf %322, %324 : vector<8x128xf32>
    %326 = vector.extract_strided_slice %318 {offsets = [0, 256], sizes = [8, 128], strides = [1, 1]} : vector<8x384xf32> to vector<8x128xf32>
    %327 = math.tanh %325 : vector<8x128xf32>
    %328 = arith.mulf %326, %327 : vector<8x128xf32>
    %c48_100 = arith.constant 48 : index
    %c0_101 = arith.constant 0 : index
    %329 = vector.load %arg27[%c48_100, %c0_101] : memref<64x128xf32, #tpu.memory_space<vmem>>, vector<8x128xf32>
    tpu.vector_store %arg27[%c48_100, %c0_101], %328 {strides = array<i32>} : memref<64x128xf32, #tpu.memory_space<vmem>>, vector<8x128xf32>,
    %c56_102 = arith.constant 56 : index
    %c0_103 = arith.constant 0 : index
    %330 = vector.load %arg25[%c56_102, %c0_103] : memref<64x512xf32, #tpu.memory_space<vmem>>, vector<8x512xf32>
    %331 = arith.truncf %328 : vector<8x128xf32> to vector<8x128xbf16>
    %cst_104 = arith.constant dense<0.000000e+00> : vector<8x512xf32>
    %332 = tpu.matmul %331, %184, %cst_104 {dimension_numbers = #tpu.dot_dimension_numbers<[1], [0], [0], [1], [0, 0, 1, 1], [], []>} : vector<8x128xbf16>, vector<128x512xbf16>, vector<8x512xf32> -> vector<8x512xf32>
    %333 = arith.addf %330, %332 : vector<8x512xf32>
    %334 = vector.extract_strided_slice %333 {offsets = [0, 0], sizes = [8, 384], strides = [1, 1]} : vector<8x512xf32> to vector<8x384xf32>
    %335 = arith.negf %334 : vector<8x384xf32>
    %336 = math.exp %335 : vector<8x384xf32>
    %cst_105 = arith.constant 1.000000e+00 : f32
    %337 = vector.broadcast %cst_105 : f32 to vector<8x384xf32>
    %338 = arith.addf %337, %336 : vector<8x384xf32>
    %339 = arith.divf %337, %338 : vector<8x384xf32>
    %340 = vector.extract_strided_slice %333 {offsets = [0, 384], sizes = [8, 128], strides = [1, 1]} : vector<8x512xf32> to vector<8x128xf32>
    %341 = math.tanh %340 : vector<8x128xf32>
    %342 = vector.extract_strided_slice %339 {offsets = [0, 128], sizes = [8, 128], strides = [1, 1]} : vector<8x384xf32> to vector<8x128xf32>
    %343 = arith.mulf %342, %325 : vector<8x128xf32>
    %344 = vector.extract_strided_slice %339 {offsets = [0, 0], sizes = [8, 128], strides = [1, 1]} : vector<8x384xf32> to vector<8x128xf32>
    %345 = arith.mulf %344, %341 : vector<8x128xf32>
    %346 = arith.addf %343, %345 : vector<8x128xf32>
    %347 = vector.extract_strided_slice %339 {offsets = [0, 256], sizes = [8, 128], strides = [1, 1]} : vector<8x384xf32> to vector<8x128xf32>
    %348 = math.tanh %346 : vector<8x128xf32>
    %349 = arith.mulf %347, %348 : vector<8x128xf32>
    %c56_106 = arith.constant 56 : index
    %c0_107 = arith.constant 0 : index
    %350 = vector.load %arg27[%c56_106, %c0_107] : memref<64x128xf32, #tpu.memory_space<vmem>>, vector<8x128xf32>
    tpu.vector_store %arg27[%c56_106, %c0_107], %349 {strides = array<i32>} : memref<64x128xf32, #tpu.memory_space<vmem>>, vector<8x128xf32>,
    %c0_108 = arith.constant 0 : index
    %c0_109 = arith.constant 0 : index
    %351 = vector.load %arg27[%c0_108, %c0_109] : memref<64x128xf32, #tpu.memory_space<vmem>>, vector<64x128xf32>
    %352 = arith.truncf %351 : vector<64x128xf32> to vector<64x128xbf16>
    %c0_110 = arith.constant 0 : index
    %c0_111 = arith.constant 0 : index
    %353 = vector.load %arg7[%c0_110, %c0_111] : memref<128x512xbf16, #tpu.memory_space<vmem>>, vector<128x512xbf16>
    %cst_112 = arith.constant dense<0.000000e+00> : vector<64x512xf32>
    %354 = tpu.matmul %352, %353, %cst_112 {dimension_numbers = #tpu.dot_dimension_numbers<[1], [0], [0], [1], [0, 0, 1, 1], [], []>} : vector<64x128xbf16>, vector<128x512xbf16>, vector<64x512xf32> -> vector<64x512xf32>
    %c0_113 = arith.constant 0 : index
    %c0_114 = arith.constant 0 : index
    %355 = vector.load %arg9[%c0_113, %c0_114] : memref<1x512xf32, #tpu.memory_space<vmem>>, vector<1x512xf32>
    %356 = vector.broadcast %355 : vector<1x512xf32> to vector<64x512xf32>
    %357 = arith.addf %354, %356 : vector<64x512xf32>
    %c0_115 = arith.constant 0 : index
    %c0_116 = arith.constant 0 : index
    %358 = vector.load %arg25[%c0_115, %c0_116] : memref<64x512xf32, #tpu.memory_space<vmem>>, vector<64x512xf32>
    tpu.vector_store %arg25[%c0_115, %c0_116], %357 {strides = array<i32>} : memref<64x512xf32, #tpu.memory_space<vmem>>, vector<64x512xf32>,
    %c0_117 = arith.constant 0 : index
    %c0_118 = arith.constant 0 : index
    %359 = vector.load %arg8[%c0_117, %c0_118] : memref<128x512xbf16, #tpu.memory_space<vmem>>, vector<128x512xbf16>
    %cst_119 = arith.constant 0.000000e+00 : f32
    %360 = vector.broadcast %cst_119 : f32 to vector<8x128xf32>
    %c0_120 = arith.constant 0 : index
    %c0_121 = arith.constant 0 : index
    %361 = vector.load %arg25[%c0_120, %c0_121] : memref<64x512xf32, #tpu.memory_space<vmem>>, vector<8x512xf32>
    %362 = vector.extract_strided_slice %361 {offsets = [0, 0], sizes = [8, 384], strides = [1, 1]} : vector<8x512xf32> to vector<8x384xf32>
    %363 = arith.negf %362 : vector<8x384xf32>
    %364 = math.exp %363 : vector<8x384xf32>
    %cst_122 = arith.constant 1.000000e+00 : f32
    %365 = vector.broadcast %cst_122 : f32 to vector<8x384xf32>
    %366 = arith.addf %365, %364 : vector<8x384xf32>
    %367 = arith.divf %365, %366 : vector<8x384xf32>
    %368 = vector.extract_strided_slice %361 {offsets = [0, 384], sizes = [8, 128], strides = [1, 1]} : vector<8x512xf32> to vector<8x128xf32>
    %369 = math.tanh %368 : vector<8x128xf32>
    %370 = vector.extract_strided_slice %367 {offsets = [0, 128], sizes = [8, 128], strides = [1, 1]} : vector<8x384xf32> to vector<8x128xf32>
    %371 = arith.mulf %370, %360 : vector<8x128xf32>
    %372 = vector.extract_strided_slice %367 {offsets = [0, 0], sizes = [8, 128], strides = [1, 1]} : vector<8x384xf32> to vector<8x128xf32>
    %373 = arith.mulf %372, %369 : vector<8x128xf32>
    %374 = arith.addf %371, %373 : vector<8x128xf32>
    %375 = vector.extract_strided_slice %367 {offsets = [0, 256], sizes = [8, 128], strides = [1, 1]} : vector<8x384xf32> to vector<8x128xf32>
    %376 = math.tanh %374 : vector<8x128xf32>
    %377 = arith.mulf %375, %376 : vector<8x128xf32>
    %c0_123 = arith.constant 0 : index
    %c0_124 = arith.constant 0 : index
    %378 = vector.load %arg26[%c0_123, %c0_124] : memref<64x128xf32, #tpu.memory_space<vmem>>, vector<8x128xf32>
    tpu.vector_store %arg26[%c0_123, %c0_124], %377 {strides = array<i32>} : memref<64x128xf32, #tpu.memory_space<vmem>>, vector<8x128xf32>,
    %c8_125 = arith.constant 8 : index
    %c0_126 = arith.constant 0 : index
    %379 = vector.load %arg25[%c8_125, %c0_126] : memref<64x512xf32, #tpu.memory_space<vmem>>, vector<8x512xf32>
    %380 = arith.truncf %377 : vector<8x128xf32> to vector<8x128xbf16>
    %cst_127 = arith.constant dense<0.000000e+00> : vector<8x512xf32>
    %381 = tpu.matmul %380, %359, %cst_127 {dimension_numbers = #tpu.dot_dimension_numbers<[1], [0], [0], [1], [0, 0, 1, 1], [], []>} : vector<8x128xbf16>, vector<128x512xbf16>, vector<8x512xf32> -> vector<8x512xf32>
    %382 = arith.addf %379, %381 : vector<8x512xf32>
    %383 = vector.extract_strided_slice %382 {offsets = [0, 0], sizes = [8, 384], strides = [1, 1]} : vector<8x512xf32> to vector<8x384xf32>
    %384 = arith.negf %383 : vector<8x384xf32>
    %385 = math.exp %384 : vector<8x384xf32>
    %cst_128 = arith.constant 1.000000e+00 : f32
    %386 = vector.broadcast %cst_128 : f32 to vector<8x384xf32>
    %387 = arith.addf %386, %385 : vector<8x384xf32>
    %388 = arith.divf %386, %387 : vector<8x384xf32>
    %389 = vector.extract_strided_slice %382 {offsets = [0, 384], sizes = [8, 128], strides = [1, 1]} : vector<8x512xf32> to vector<8x128xf32>
    %390 = math.tanh %389 : vector<8x128xf32>
    %391 = vector.extract_strided_slice %388 {offsets = [0, 128], sizes = [8, 128], strides = [1, 1]} : vector<8x384xf32> to vector<8x128xf32>
    %392 = arith.mulf %391, %374 : vector<8x128xf32>
    %393 = vector.extract_strided_slice %388 {offsets = [0, 0], sizes = [8, 128], strides = [1, 1]} : vector<8x384xf32> to vector<8x128xf32>
    %394 = arith.mulf %393, %390 : vector<8x128xf32>
    %395 = arith.addf %392, %394 : vector<8x128xf32>
    %396 = vector.extract_strided_slice %388 {offsets = [0, 256], sizes = [8, 128], strides = [1, 1]} : vector<8x384xf32> to vector<8x128xf32>
    %397 = math.tanh %395 : vector<8x128xf32>
    %398 = arith.mulf %396, %397 : vector<8x128xf32>
    %c8_129 = arith.constant 8 : index
    %c0_130 = arith.constant 0 : index
    %399 = vector.load %arg26[%c8_129, %c0_130] : memref<64x128xf32, #tpu.memory_space<vmem>>, vector<8x128xf32>
    tpu.vector_store %arg26[%c8_129, %c0_130], %398 {strides = array<i32>} : memref<64x128xf32, #tpu.memory_space<vmem>>, vector<8x128xf32>,
    %c16_131 = arith.constant 16 : index
    %c0_132 = arith.constant 0 : index
    %400 = vector.load %arg25[%c16_131, %c0_132] : memref<64x512xf32, #tpu.memory_space<vmem>>, vector<8x512xf32>
    %401 = arith.truncf %398 : vector<8x128xf32> to vector<8x128xbf16>
    %cst_133 = arith.constant dense<0.000000e+00> : vector<8x512xf32>
    %402 = tpu.matmul %401, %359, %cst_133 {dimension_numbers = #tpu.dot_dimension_numbers<[1], [0], [0], [1], [0, 0, 1, 1], [], []>} : vector<8x128xbf16>, vector<128x512xbf16>, vector<8x512xf32> -> vector<8x512xf32>
    %403 = arith.addf %400, %402 : vector<8x512xf32>
    %404 = vector.extract_strided_slice %403 {offsets = [0, 0], sizes = [8, 384], strides = [1, 1]} : vector<8x512xf32> to vector<8x384xf32>
    %405 = arith.negf %404 : vector<8x384xf32>
    %406 = math.exp %405 : vector<8x384xf32>
    %cst_134 = arith.constant 1.000000e+00 : f32
    %407 = vector.broadcast %cst_134 : f32 to vector<8x384xf32>
    %408 = arith.addf %407, %406 : vector<8x384xf32>
    %409 = arith.divf %407, %408 : vector<8x384xf32>
    %410 = vector.extract_strided_slice %403 {offsets = [0, 384], sizes = [8, 128], strides = [1, 1]} : vector<8x512xf32> to vector<8x128xf32>
    %411 = math.tanh %410 : vector<8x128xf32>
    %412 = vector.extract_strided_slice %409 {offsets = [0, 128], sizes = [8, 128], strides = [1, 1]} : vector<8x384xf32> to vector<8x128xf32>
    %413 = arith.mulf %412, %395 : vector<8x128xf32>
    %414 = vector.extract_strided_slice %409 {offsets = [0, 0], sizes = [8, 128], strides = [1, 1]} : vector<8x384xf32> to vector<8x128xf32>
    %415 = arith.mulf %414, %411 : vector<8x128xf32>
    %416 = arith.addf %413, %415 : vector<8x128xf32>
    %417 = vector.extract_strided_slice %409 {offsets = [0, 256], sizes = [8, 128], strides = [1, 1]} : vector<8x384xf32> to vector<8x128xf32>
    %418 = math.tanh %416 : vector<8x128xf32>
    %419 = arith.mulf %417, %418 : vector<8x128xf32>
    %c16_135 = arith.constant 16 : index
    %c0_136 = arith.constant 0 : index
    %420 = vector.load %arg26[%c16_135, %c0_136] : memref<64x128xf32, #tpu.memory_space<vmem>>, vector<8x128xf32>
    tpu.vector_store %arg26[%c16_135, %c0_136], %419 {strides = array<i32>} : memref<64x128xf32, #tpu.memory_space<vmem>>, vector<8x128xf32>,
    %c24_137 = arith.constant 24 : index
    %c0_138 = arith.constant 0 : index
    %421 = vector.load %arg25[%c24_137, %c0_138] : memref<64x512xf32, #tpu.memory_space<vmem>>, vector<8x512xf32>
    %422 = arith.truncf %419 : vector<8x128xf32> to vector<8x128xbf16>
    %cst_139 = arith.constant dense<0.000000e+00> : vector<8x512xf32>
    %423 = tpu.matmul %422, %359, %cst_139 {dimension_numbers = #tpu.dot_dimension_numbers<[1], [0], [0], [1], [0, 0, 1, 1], [], []>} : vector<8x128xbf16>, vector<128x512xbf16>, vector<8x512xf32> -> vector<8x512xf32>
    %424 = arith.addf %421, %423 : vector<8x512xf32>
    %425 = vector.extract_strided_slice %424 {offsets = [0, 0], sizes = [8, 384], strides = [1, 1]} : vector<8x512xf32> to vector<8x384xf32>
    %426 = arith.negf %425 : vector<8x384xf32>
    %427 = math.exp %426 : vector<8x384xf32>
    %cst_140 = arith.constant 1.000000e+00 : f32
    %428 = vector.broadcast %cst_140 : f32 to vector<8x384xf32>
    %429 = arith.addf %428, %427 : vector<8x384xf32>
    %430 = arith.divf %428, %429 : vector<8x384xf32>
    %431 = vector.extract_strided_slice %424 {offsets = [0, 384], sizes = [8, 128], strides = [1, 1]} : vector<8x512xf32> to vector<8x128xf32>
    %432 = math.tanh %431 : vector<8x128xf32>
    %433 = vector.extract_strided_slice %430 {offsets = [0, 128], sizes = [8, 128], strides = [1, 1]} : vector<8x384xf32> to vector<8x128xf32>
    %434 = arith.mulf %433, %416 : vector<8x128xf32>
    %435 = vector.extract_strided_slice %430 {offsets = [0, 0], sizes = [8, 128], strides = [1, 1]} : vector<8x384xf32> to vector<8x128xf32>
    %436 = arith.mulf %435, %432 : vector<8x128xf32>
    %437 = arith.addf %434, %436 : vector<8x128xf32>
    %438 = vector.extract_strided_slice %430 {offsets = [0, 256], sizes = [8, 128], strides = [1, 1]} : vector<8x384xf32> to vector<8x128xf32>
    %439 = math.tanh %437 : vector<8x128xf32>
    %440 = arith.mulf %438, %439 : vector<8x128xf32>
    %c24_141 = arith.constant 24 : index
    %c0_142 = arith.constant 0 : index
    %441 = vector.load %arg26[%c24_141, %c0_142] : memref<64x128xf32, #tpu.memory_space<vmem>>, vector<8x128xf32>
    tpu.vector_store %arg26[%c24_141, %c0_142], %440 {strides = array<i32>} : memref<64x128xf32, #tpu.memory_space<vmem>>, vector<8x128xf32>,
    %c32_143 = arith.constant 32 : index
    %c0_144 = arith.constant 0 : index
    %442 = vector.load %arg25[%c32_143, %c0_144] : memref<64x512xf32, #tpu.memory_space<vmem>>, vector<8x512xf32>
    %443 = arith.truncf %440 : vector<8x128xf32> to vector<8x128xbf16>
    %cst_145 = arith.constant dense<0.000000e+00> : vector<8x512xf32>
    %444 = tpu.matmul %443, %359, %cst_145 {dimension_numbers = #tpu.dot_dimension_numbers<[1], [0], [0], [1], [0, 0, 1, 1], [], []>} : vector<8x128xbf16>, vector<128x512xbf16>, vector<8x512xf32> -> vector<8x512xf32>
    %445 = arith.addf %442, %444 : vector<8x512xf32>
    %446 = vector.extract_strided_slice %445 {offsets = [0, 0], sizes = [8, 384], strides = [1, 1]} : vector<8x512xf32> to vector<8x384xf32>
    %447 = arith.negf %446 : vector<8x384xf32>
    %448 = math.exp %447 : vector<8x384xf32>
    %cst_146 = arith.constant 1.000000e+00 : f32
    %449 = vector.broadcast %cst_146 : f32 to vector<8x384xf32>
    %450 = arith.addf %449, %448 : vector<8x384xf32>
    %451 = arith.divf %449, %450 : vector<8x384xf32>
    %452 = vector.extract_strided_slice %445 {offsets = [0, 384], sizes = [8, 128], strides = [1, 1]} : vector<8x512xf32> to vector<8x128xf32>
    %453 = math.tanh %452 : vector<8x128xf32>
    %454 = vector.extract_strided_slice %451 {offsets = [0, 128], sizes = [8, 128], strides = [1, 1]} : vector<8x384xf32> to vector<8x128xf32>
    %455 = arith.mulf %454, %437 : vector<8x128xf32>
    %456 = vector.extract_strided_slice %451 {offsets = [0, 0], sizes = [8, 128], strides = [1, 1]} : vector<8x384xf32> to vector<8x128xf32>
    %457 = arith.mulf %456, %453 : vector<8x128xf32>
    %458 = arith.addf %455, %457 : vector<8x128xf32>
    %459 = vector.extract_strided_slice %451 {offsets = [0, 256], sizes = [8, 128], strides = [1, 1]} : vector<8x384xf32> to vector<8x128xf32>
    %460 = math.tanh %458 : vector<8x128xf32>
    %461 = arith.mulf %459, %460 : vector<8x128xf32>
    %c32_147 = arith.constant 32 : index
    %c0_148 = arith.constant 0 : index
    %462 = vector.load %arg26[%c32_147, %c0_148] : memref<64x128xf32, #tpu.memory_space<vmem>>, vector<8x128xf32>
    tpu.vector_store %arg26[%c32_147, %c0_148], %461 {strides = array<i32>} : memref<64x128xf32, #tpu.memory_space<vmem>>, vector<8x128xf32>,
    %c40_149 = arith.constant 40 : index
    %c0_150 = arith.constant 0 : index
    %463 = vector.load %arg25[%c40_149, %c0_150] : memref<64x512xf32, #tpu.memory_space<vmem>>, vector<8x512xf32>
    %464 = arith.truncf %461 : vector<8x128xf32> to vector<8x128xbf16>
    %cst_151 = arith.constant dense<0.000000e+00> : vector<8x512xf32>
    %465 = tpu.matmul %464, %359, %cst_151 {dimension_numbers = #tpu.dot_dimension_numbers<[1], [0], [0], [1], [0, 0, 1, 1], [], []>} : vector<8x128xbf16>, vector<128x512xbf16>, vector<8x512xf32> -> vector<8x512xf32>
    %466 = arith.addf %463, %465 : vector<8x512xf32>
    %467 = vector.extract_strided_slice %466 {offsets = [0, 0], sizes = [8, 384], strides = [1, 1]} : vector<8x512xf32> to vector<8x384xf32>
    %468 = arith.negf %467 : vector<8x384xf32>
    %469 = math.exp %468 : vector<8x384xf32>
    %cst_152 = arith.constant 1.000000e+00 : f32
    %470 = vector.broadcast %cst_152 : f32 to vector<8x384xf32>
    %471 = arith.addf %470, %469 : vector<8x384xf32>
    %472 = arith.divf %470, %471 : vector<8x384xf32>
    %473 = vector.extract_strided_slice %466 {offsets = [0, 384], sizes = [8, 128], strides = [1, 1]} : vector<8x512xf32> to vector<8x128xf32>
    %474 = math.tanh %473 : vector<8x128xf32>
    %475 = vector.extract_strided_slice %472 {offsets = [0, 128], sizes = [8, 128], strides = [1, 1]} : vector<8x384xf32> to vector<8x128xf32>
    %476 = arith.mulf %475, %458 : vector<8x128xf32>
    %477 = vector.extract_strided_slice %472 {offsets = [0, 0], sizes = [8, 128], strides = [1, 1]} : vector<8x384xf32> to vector<8x128xf32>
    %478 = arith.mulf %477, %474 : vector<8x128xf32>
    %479 = arith.addf %476, %478 : vector<8x128xf32>
    %480 = vector.extract_strided_slice %472 {offsets = [0, 256], sizes = [8, 128], strides = [1, 1]} : vector<8x384xf32> to vector<8x128xf32>
    %481 = math.tanh %479 : vector<8x128xf32>
    %482 = arith.mulf %480, %481 : vector<8x128xf32>
    %c40_153 = arith.constant 40 : index
    %c0_154 = arith.constant 0 : index
    %483 = vector.load %arg26[%c40_153, %c0_154] : memref<64x128xf32, #tpu.memory_space<vmem>>, vector<8x128xf32>
    tpu.vector_store %arg26[%c40_153, %c0_154], %482 {strides = array<i32>} : memref<64x128xf32, #tpu.memory_space<vmem>>, vector<8x128xf32>,
    %c48_155 = arith.constant 48 : index
    %c0_156 = arith.constant 0 : index
    %484 = vector.load %arg25[%c48_155, %c0_156] : memref<64x512xf32, #tpu.memory_space<vmem>>, vector<8x512xf32>
    %485 = arith.truncf %482 : vector<8x128xf32> to vector<8x128xbf16>
    %cst_157 = arith.constant dense<0.000000e+00> : vector<8x512xf32>
    %486 = tpu.matmul %485, %359, %cst_157 {dimension_numbers = #tpu.dot_dimension_numbers<[1], [0], [0], [1], [0, 0, 1, 1], [], []>} : vector<8x128xbf16>, vector<128x512xbf16>, vector<8x512xf32> -> vector<8x512xf32>
    %487 = arith.addf %484, %486 : vector<8x512xf32>
    %488 = vector.extract_strided_slice %487 {offsets = [0, 0], sizes = [8, 384], strides = [1, 1]} : vector<8x512xf32> to vector<8x384xf32>
    %489 = arith.negf %488 : vector<8x384xf32>
    %490 = math.exp %489 : vector<8x384xf32>
    %cst_158 = arith.constant 1.000000e+00 : f32
    %491 = vector.broadcast %cst_158 : f32 to vector<8x384xf32>
    %492 = arith.addf %491, %490 : vector<8x384xf32>
    %493 = arith.divf %491, %492 : vector<8x384xf32>
    %494 = vector.extract_strided_slice %487 {offsets = [0, 384], sizes = [8, 128], strides = [1, 1]} : vector<8x512xf32> to vector<8x128xf32>
    %495 = math.tanh %494 : vector<8x128xf32>
    %496 = vector.extract_strided_slice %493 {offsets = [0, 128], sizes = [8, 128], strides = [1, 1]} : vector<8x384xf32> to vector<8x128xf32>
    %497 = arith.mulf %496, %479 : vector<8x128xf32>
    %498 = vector.extract_strided_slice %493 {offsets = [0, 0], sizes = [8, 128], strides = [1, 1]} : vector<8x384xf32> to vector<8x128xf32>
    %499 = arith.mulf %498, %495 : vector<8x128xf32>
    %500 = arith.addf %497, %499 : vector<8x128xf32>
    %501 = vector.extract_strided_slice %493 {offsets = [0, 256], sizes = [8, 128], strides = [1, 1]} : vector<8x384xf32> to vector<8x128xf32>
    %502 = math.tanh %500 : vector<8x128xf32>
    %503 = arith.mulf %501, %502 : vector<8x128xf32>
    %c48_159 = arith.constant 48 : index
    %c0_160 = arith.constant 0 : index
    %504 = vector.load %arg26[%c48_159, %c0_160] : memref<64x128xf32, #tpu.memory_space<vmem>>, vector<8x128xf32>
    tpu.vector_store %arg26[%c48_159, %c0_160], %503 {strides = array<i32>} : memref<64x128xf32, #tpu.memory_space<vmem>>, vector<8x128xf32>,
    %c56_161 = arith.constant 56 : index
    %c0_162 = arith.constant 0 : index
    %505 = vector.load %arg25[%c56_161, %c0_162] : memref<64x512xf32, #tpu.memory_space<vmem>>, vector<8x512xf32>
    %506 = arith.truncf %503 : vector<8x128xf32> to vector<8x128xbf16>
    %cst_163 = arith.constant dense<0.000000e+00> : vector<8x512xf32>
    %507 = tpu.matmul %506, %359, %cst_163 {dimension_numbers = #tpu.dot_dimension_numbers<[1], [0], [0], [1], [0, 0, 1, 1], [], []>} : vector<8x128xbf16>, vector<128x512xbf16>, vector<8x512xf32> -> vector<8x512xf32>
    %508 = arith.addf %505, %507 : vector<8x512xf32>
    %509 = vector.extract_strided_slice %508 {offsets = [0, 0], sizes = [8, 384], strides = [1, 1]} : vector<8x512xf32> to vector<8x384xf32>
    %510 = arith.negf %509 : vector<8x384xf32>
    %511 = math.exp %510 : vector<8x384xf32>
    %cst_164 = arith.constant 1.000000e+00 : f32
    %512 = vector.broadcast %cst_164 : f32 to vector<8x384xf32>
    %513 = arith.addf %512, %511 : vector<8x384xf32>
    %514 = arith.divf %512, %513 : vector<8x384xf32>
    %515 = vector.extract_strided_slice %508 {offsets = [0, 384], sizes = [8, 128], strides = [1, 1]} : vector<8x512xf32> to vector<8x128xf32>
    %516 = math.tanh %515 : vector<8x128xf32>
    %517 = vector.extract_strided_slice %514 {offsets = [0, 128], sizes = [8, 128], strides = [1, 1]} : vector<8x384xf32> to vector<8x128xf32>
    %518 = arith.mulf %517, %500 : vector<8x128xf32>
    %519 = vector.extract_strided_slice %514 {offsets = [0, 0], sizes = [8, 128], strides = [1, 1]} : vector<8x384xf32> to vector<8x128xf32>
    %520 = arith.mulf %519, %516 : vector<8x128xf32>
    %521 = arith.addf %518, %520 : vector<8x128xf32>
    %522 = vector.extract_strided_slice %514 {offsets = [0, 256], sizes = [8, 128], strides = [1, 1]} : vector<8x384xf32> to vector<8x128xf32>
    %523 = math.tanh %521 : vector<8x128xf32>
    %524 = arith.mulf %522, %523 : vector<8x128xf32>
    %c56_165 = arith.constant 56 : index
    %c0_166 = arith.constant 0 : index
    %525 = vector.load %arg26[%c56_165, %c0_166] : memref<64x128xf32, #tpu.memory_space<vmem>>, vector<8x128xf32>
    tpu.vector_store %arg26[%c56_165, %c0_166], %524 {strides = array<i32>} : memref<64x128xf32, #tpu.memory_space<vmem>>, vector<8x128xf32>,
    %c0_167 = arith.constant 0 : index
    %c0_168 = arith.constant 0 : index
    %526 = vector.load %arg26[%c0_167, %c0_168] : memref<64x128xf32, #tpu.memory_space<vmem>>, vector<64x128xf32>
    %527 = arith.truncf %526 : vector<64x128xf32> to vector<64x128xbf16>
    %c0_169 = arith.constant 0 : index
    %c0_170 = arith.constant 0 : index
    %528 = vector.load %arg10[%c0_169, %c0_170] : memref<128x512xbf16, #tpu.memory_space<vmem>>, vector<128x512xbf16>
    %cst_171 = arith.constant dense<0.000000e+00> : vector<64x512xf32>
    %529 = tpu.matmul %527, %528, %cst_171 {dimension_numbers = #tpu.dot_dimension_numbers<[1], [0], [0], [1], [0, 0, 1, 1], [], []>} : vector<64x128xbf16>, vector<128x512xbf16>, vector<64x512xf32> -> vector<64x512xf32>
    %c0_172 = arith.constant 0 : index
    %c0_173 = arith.constant 0 : index
    %530 = vector.load %arg12[%c0_172, %c0_173] : memref<1x512xf32, #tpu.memory_space<vmem>>, vector<1x512xf32>
    %531 = vector.broadcast %530 : vector<1x512xf32> to vector<64x512xf32>
    %532 = arith.addf %529, %531 : vector<64x512xf32>
    %c0_174 = arith.constant 0 : index
    %c0_175 = arith.constant 0 : index
    %533 = vector.load %arg25[%c0_174, %c0_175] : memref<64x512xf32, #tpu.memory_space<vmem>>, vector<64x512xf32>
    tpu.vector_store %arg25[%c0_174, %c0_175], %532 {strides = array<i32>} : memref<64x512xf32, #tpu.memory_space<vmem>>, vector<64x512xf32>,
    %c0_176 = arith.constant 0 : index
    %c0_177 = arith.constant 0 : index
    %534 = vector.load %arg11[%c0_176, %c0_177] : memref<128x512xbf16, #tpu.memory_space<vmem>>, vector<128x512xbf16>
    %cst_178 = arith.constant 0.000000e+00 : f32
    %535 = vector.broadcast %cst_178 : f32 to vector<8x128xf32>
    %c0_179 = arith.constant 0 : index
    %c0_180 = arith.constant 0 : index
    %536 = vector.load %arg25[%c0_179, %c0_180] : memref<64x512xf32, #tpu.memory_space<vmem>>, vector<8x512xf32>
    %537 = vector.extract_strided_slice %536 {offsets = [0, 0], sizes = [8, 384], strides = [1, 1]} : vector<8x512xf32> to vector<8x384xf32>
    %538 = arith.negf %537 : vector<8x384xf32>
    %539 = math.exp %538 : vector<8x384xf32>
    %cst_181 = arith.constant 1.000000e+00 : f32
    %540 = vector.broadcast %cst_181 : f32 to vector<8x384xf32>
    %541 = arith.addf %540, %539 : vector<8x384xf32>
    %542 = arith.divf %540, %541 : vector<8x384xf32>
    %543 = vector.extract_strided_slice %536 {offsets = [0, 384], sizes = [8, 128], strides = [1, 1]} : vector<8x512xf32> to vector<8x128xf32>
    %544 = math.tanh %543 : vector<8x128xf32>
    %545 = vector.extract_strided_slice %542 {offsets = [0, 128], sizes = [8, 128], strides = [1, 1]} : vector<8x384xf32> to vector<8x128xf32>
    %546 = arith.mulf %545, %535 : vector<8x128xf32>
    %547 = vector.extract_strided_slice %542 {offsets = [0, 0], sizes = [8, 128], strides = [1, 1]} : vector<8x384xf32> to vector<8x128xf32>
    %548 = arith.mulf %547, %544 : vector<8x128xf32>
    %549 = arith.addf %546, %548 : vector<8x128xf32>
    %550 = vector.extract_strided_slice %542 {offsets = [0, 256], sizes = [8, 128], strides = [1, 1]} : vector<8x384xf32> to vector<8x128xf32>
    %551 = math.tanh %549 : vector<8x128xf32>
    %552 = arith.mulf %550, %551 : vector<8x128xf32>
    %c0_182 = arith.constant 0 : index
    %c0_183 = arith.constant 0 : index
    %553 = vector.load %arg27[%c0_182, %c0_183] : memref<64x128xf32, #tpu.memory_space<vmem>>, vector<8x128xf32>
    tpu.vector_store %arg27[%c0_182, %c0_183], %552 {strides = array<i32>} : memref<64x128xf32, #tpu.memory_space<vmem>>, vector<8x128xf32>,
    %c8_184 = arith.constant 8 : index
    %c0_185 = arith.constant 0 : index
    %554 = vector.load %arg25[%c8_184, %c0_185] : memref<64x512xf32, #tpu.memory_space<vmem>>, vector<8x512xf32>
    %555 = arith.truncf %552 : vector<8x128xf32> to vector<8x128xbf16>
    %cst_186 = arith.constant dense<0.000000e+00> : vector<8x512xf32>
    %556 = tpu.matmul %555, %534, %cst_186 {dimension_numbers = #tpu.dot_dimension_numbers<[1], [0], [0], [1], [0, 0, 1, 1], [], []>} : vector<8x128xbf16>, vector<128x512xbf16>, vector<8x512xf32> -> vector<8x512xf32>
    %557 = arith.addf %554, %556 : vector<8x512xf32>
    %558 = vector.extract_strided_slice %557 {offsets = [0, 0], sizes = [8, 384], strides = [1, 1]} : vector<8x512xf32> to vector<8x384xf32>
    %559 = arith.negf %558 : vector<8x384xf32>
    %560 = math.exp %559 : vector<8x384xf32>
    %cst_187 = arith.constant 1.000000e+00 : f32
    %561 = vector.broadcast %cst_187 : f32 to vector<8x384xf32>
    %562 = arith.addf %561, %560 : vector<8x384xf32>
    %563 = arith.divf %561, %562 : vector<8x384xf32>
    %564 = vector.extract_strided_slice %557 {offsets = [0, 384], sizes = [8, 128], strides = [1, 1]} : vector<8x512xf32> to vector<8x128xf32>
    %565 = math.tanh %564 : vector<8x128xf32>
    %566 = vector.extract_strided_slice %563 {offsets = [0, 128], sizes = [8, 128], strides = [1, 1]} : vector<8x384xf32> to vector<8x128xf32>
    %567 = arith.mulf %566, %549 : vector<8x128xf32>
    %568 = vector.extract_strided_slice %563 {offsets = [0, 0], sizes = [8, 128], strides = [1, 1]} : vector<8x384xf32> to vector<8x128xf32>
    %569 = arith.mulf %568, %565 : vector<8x128xf32>
    %570 = arith.addf %567, %569 : vector<8x128xf32>
    %571 = vector.extract_strided_slice %563 {offsets = [0, 256], sizes = [8, 128], strides = [1, 1]} : vector<8x384xf32> to vector<8x128xf32>
    %572 = math.tanh %570 : vector<8x128xf32>
    %573 = arith.mulf %571, %572 : vector<8x128xf32>
    %c8_188 = arith.constant 8 : index
    %c0_189 = arith.constant 0 : index
    %574 = vector.load %arg27[%c8_188, %c0_189] : memref<64x128xf32, #tpu.memory_space<vmem>>, vector<8x128xf32>
    tpu.vector_store %arg27[%c8_188, %c0_189], %573 {strides = array<i32>} : memref<64x128xf32, #tpu.memory_space<vmem>>, vector<8x128xf32>,
    %c16_190 = arith.constant 16 : index
    %c0_191 = arith.constant 0 : index
    %575 = vector.load %arg25[%c16_190, %c0_191] : memref<64x512xf32, #tpu.memory_space<vmem>>, vector<8x512xf32>
    %576 = arith.truncf %573 : vector<8x128xf32> to vector<8x128xbf16>
    %cst_192 = arith.constant dense<0.000000e+00> : vector<8x512xf32>
    %577 = tpu.matmul %576, %534, %cst_192 {dimension_numbers = #tpu.dot_dimension_numbers<[1], [0], [0], [1], [0, 0, 1, 1], [], []>} : vector<8x128xbf16>, vector<128x512xbf16>, vector<8x512xf32> -> vector<8x512xf32>
    %578 = arith.addf %575, %577 : vector<8x512xf32>
    %579 = vector.extract_strided_slice %578 {offsets = [0, 0], sizes = [8, 384], strides = [1, 1]} : vector<8x512xf32> to vector<8x384xf32>
    %580 = arith.negf %579 : vector<8x384xf32>
    %581 = math.exp %580 : vector<8x384xf32>
    %cst_193 = arith.constant 1.000000e+00 : f32
    %582 = vector.broadcast %cst_193 : f32 to vector<8x384xf32>
    %583 = arith.addf %582, %581 : vector<8x384xf32>
    %584 = arith.divf %582, %583 : vector<8x384xf32>
    %585 = vector.extract_strided_slice %578 {offsets = [0, 384], sizes = [8, 128], strides = [1, 1]} : vector<8x512xf32> to vector<8x128xf32>
    %586 = math.tanh %585 : vector<8x128xf32>
    %587 = vector.extract_strided_slice %584 {offsets = [0, 128], sizes = [8, 128], strides = [1, 1]} : vector<8x384xf32> to vector<8x128xf32>
    %588 = arith.mulf %587, %570 : vector<8x128xf32>
    %589 = vector.extract_strided_slice %584 {offsets = [0, 0], sizes = [8, 128], strides = [1, 1]} : vector<8x384xf32> to vector<8x128xf32>
    %590 = arith.mulf %589, %586 : vector<8x128xf32>
    %591 = arith.addf %588, %590 : vector<8x128xf32>
    %592 = vector.extract_strided_slice %584 {offsets = [0, 256], sizes = [8, 128], strides = [1, 1]} : vector<8x384xf32> to vector<8x128xf32>
    %593 = math.tanh %591 : vector<8x128xf32>
    %594 = arith.mulf %592, %593 : vector<8x128xf32>
    %c16_194 = arith.constant 16 : index
    %c0_195 = arith.constant 0 : index
    %595 = vector.load %arg27[%c16_194, %c0_195] : memref<64x128xf32, #tpu.memory_space<vmem>>, vector<8x128xf32>
    tpu.vector_store %arg27[%c16_194, %c0_195], %594 {strides = array<i32>} : memref<64x128xf32, #tpu.memory_space<vmem>>, vector<8x128xf32>,
    %c24_196 = arith.constant 24 : index
    %c0_197 = arith.constant 0 : index
    %596 = vector.load %arg25[%c24_196, %c0_197] : memref<64x512xf32, #tpu.memory_space<vmem>>, vector<8x512xf32>
    %597 = arith.truncf %594 : vector<8x128xf32> to vector<8x128xbf16>
    %cst_198 = arith.constant dense<0.000000e+00> : vector<8x512xf32>
    %598 = tpu.matmul %597, %534, %cst_198 {dimension_numbers = #tpu.dot_dimension_numbers<[1], [0], [0], [1], [0, 0, 1, 1], [], []>} : vector<8x128xbf16>, vector<128x512xbf16>, vector<8x512xf32> -> vector<8x512xf32>
    %599 = arith.addf %596, %598 : vector<8x512xf32>
    %600 = vector.extract_strided_slice %599 {offsets = [0, 0], sizes = [8, 384], strides = [1, 1]} : vector<8x512xf32> to vector<8x384xf32>
    %601 = arith.negf %600 : vector<8x384xf32>
    %602 = math.exp %601 : vector<8x384xf32>
    %cst_199 = arith.constant 1.000000e+00 : f32
    %603 = vector.broadcast %cst_199 : f32 to vector<8x384xf32>
    %604 = arith.addf %603, %602 : vector<8x384xf32>
    %605 = arith.divf %603, %604 : vector<8x384xf32>
    %606 = vector.extract_strided_slice %599 {offsets = [0, 384], sizes = [8, 128], strides = [1, 1]} : vector<8x512xf32> to vector<8x128xf32>
    %607 = math.tanh %606 : vector<8x128xf32>
    %608 = vector.extract_strided_slice %605 {offsets = [0, 128], sizes = [8, 128], strides = [1, 1]} : vector<8x384xf32> to vector<8x128xf32>
    %609 = arith.mulf %608, %591 : vector<8x128xf32>
    %610 = vector.extract_strided_slice %605 {offsets = [0, 0], sizes = [8, 128], strides = [1, 1]} : vector<8x384xf32> to vector<8x128xf32>
    %611 = arith.mulf %610, %607 : vector<8x128xf32>
    %612 = arith.addf %609, %611 : vector<8x128xf32>
    %613 = vector.extract_strided_slice %605 {offsets = [0, 256], sizes = [8, 128], strides = [1, 1]} : vector<8x384xf32> to vector<8x128xf32>
    %614 = math.tanh %612 : vector<8x128xf32>
    %615 = arith.mulf %613, %614 : vector<8x128xf32>
    %c24_200 = arith.constant 24 : index
    %c0_201 = arith.constant 0 : index
    %616 = vector.load %arg27[%c24_200, %c0_201] : memref<64x128xf32, #tpu.memory_space<vmem>>, vector<8x128xf32>
    tpu.vector_store %arg27[%c24_200, %c0_201], %615 {strides = array<i32>} : memref<64x128xf32, #tpu.memory_space<vmem>>, vector<8x128xf32>,
    %c32_202 = arith.constant 32 : index
    %c0_203 = arith.constant 0 : index
    %617 = vector.load %arg25[%c32_202, %c0_203] : memref<64x512xf32, #tpu.memory_space<vmem>>, vector<8x512xf32>
    %618 = arith.truncf %615 : vector<8x128xf32> to vector<8x128xbf16>
    %cst_204 = arith.constant dense<0.000000e+00> : vector<8x512xf32>
    %619 = tpu.matmul %618, %534, %cst_204 {dimension_numbers = #tpu.dot_dimension_numbers<[1], [0], [0], [1], [0, 0, 1, 1], [], []>} : vector<8x128xbf16>, vector<128x512xbf16>, vector<8x512xf32> -> vector<8x512xf32>
    %620 = arith.addf %617, %619 : vector<8x512xf32>
    %621 = vector.extract_strided_slice %620 {offsets = [0, 0], sizes = [8, 384], strides = [1, 1]} : vector<8x512xf32> to vector<8x384xf32>
    %622 = arith.negf %621 : vector<8x384xf32>
    %623 = math.exp %622 : vector<8x384xf32>
    %cst_205 = arith.constant 1.000000e+00 : f32
    %624 = vector.broadcast %cst_205 : f32 to vector<8x384xf32>
    %625 = arith.addf %624, %623 : vector<8x384xf32>
    %626 = arith.divf %624, %625 : vector<8x384xf32>
    %627 = vector.extract_strided_slice %620 {offsets = [0, 384], sizes = [8, 128], strides = [1, 1]} : vector<8x512xf32> to vector<8x128xf32>
    %628 = math.tanh %627 : vector<8x128xf32>
    %629 = vector.extract_strided_slice %626 {offsets = [0, 128], sizes = [8, 128], strides = [1, 1]} : vector<8x384xf32> to vector<8x128xf32>
    %630 = arith.mulf %629, %612 : vector<8x128xf32>
    %631 = vector.extract_strided_slice %626 {offsets = [0, 0], sizes = [8, 128], strides = [1, 1]} : vector<8x384xf32> to vector<8x128xf32>
    %632 = arith.mulf %631, %628 : vector<8x128xf32>
    %633 = arith.addf %630, %632 : vector<8x128xf32>
    %634 = vector.extract_strided_slice %626 {offsets = [0, 256], sizes = [8, 128], strides = [1, 1]} : vector<8x384xf32> to vector<8x128xf32>
    %635 = math.tanh %633 : vector<8x128xf32>
    %636 = arith.mulf %634, %635 : vector<8x128xf32>
    %c32_206 = arith.constant 32 : index
    %c0_207 = arith.constant 0 : index
    %637 = vector.load %arg27[%c32_206, %c0_207] : memref<64x128xf32, #tpu.memory_space<vmem>>, vector<8x128xf32>
    tpu.vector_store %arg27[%c32_206, %c0_207], %636 {strides = array<i32>} : memref<64x128xf32, #tpu.memory_space<vmem>>, vector<8x128xf32>,
    %c40_208 = arith.constant 40 : index
    %c0_209 = arith.constant 0 : index
    %638 = vector.load %arg25[%c40_208, %c0_209] : memref<64x512xf32, #tpu.memory_space<vmem>>, vector<8x512xf32>
    %639 = arith.truncf %636 : vector<8x128xf32> to vector<8x128xbf16>
    %cst_210 = arith.constant dense<0.000000e+00> : vector<8x512xf32>
    %640 = tpu.matmul %639, %534, %cst_210 {dimension_numbers = #tpu.dot_dimension_numbers<[1], [0], [0], [1], [0, 0, 1, 1], [], []>} : vector<8x128xbf16>, vector<128x512xbf16>, vector<8x512xf32> -> vector<8x512xf32>
    %641 = arith.addf %638, %640 : vector<8x512xf32>
    %642 = vector.extract_strided_slice %641 {offsets = [0, 0], sizes = [8, 384], strides = [1, 1]} : vector<8x512xf32> to vector<8x384xf32>
    %643 = arith.negf %642 : vector<8x384xf32>
    %644 = math.exp %643 : vector<8x384xf32>
    %cst_211 = arith.constant 1.000000e+00 : f32
    %645 = vector.broadcast %cst_211 : f32 to vector<8x384xf32>
    %646 = arith.addf %645, %644 : vector<8x384xf32>
    %647 = arith.divf %645, %646 : vector<8x384xf32>
    %648 = vector.extract_strided_slice %641 {offsets = [0, 384], sizes = [8, 128], strides = [1, 1]} : vector<8x512xf32> to vector<8x128xf32>
    %649 = math.tanh %648 : vector<8x128xf32>
    %650 = vector.extract_strided_slice %647 {offsets = [0, 128], sizes = [8, 128], strides = [1, 1]} : vector<8x384xf32> to vector<8x128xf32>
    %651 = arith.mulf %650, %633 : vector<8x128xf32>
    %652 = vector.extract_strided_slice %647 {offsets = [0, 0], sizes = [8, 128], strides = [1, 1]} : vector<8x384xf32> to vector<8x128xf32>
    %653 = arith.mulf %652, %649 : vector<8x128xf32>
    %654 = arith.addf %651, %653 : vector<8x128xf32>
    %655 = vector.extract_strided_slice %647 {offsets = [0, 256], sizes = [8, 128], strides = [1, 1]} : vector<8x384xf32> to vector<8x128xf32>
    %656 = math.tanh %654 : vector<8x128xf32>
    %657 = arith.mulf %655, %656 : vector<8x128xf32>
    %c40_212 = arith.constant 40 : index
    %c0_213 = arith.constant 0 : index
    %658 = vector.load %arg27[%c40_212, %c0_213] : memref<64x128xf32, #tpu.memory_space<vmem>>, vector<8x128xf32>
    tpu.vector_store %arg27[%c40_212, %c0_213], %657 {strides = array<i32>} : memref<64x128xf32, #tpu.memory_space<vmem>>, vector<8x128xf32>,
    %c48_214 = arith.constant 48 : index
    %c0_215 = arith.constant 0 : index
    %659 = vector.load %arg25[%c48_214, %c0_215] : memref<64x512xf32, #tpu.memory_space<vmem>>, vector<8x512xf32>
    %660 = arith.truncf %657 : vector<8x128xf32> to vector<8x128xbf16>
    %cst_216 = arith.constant dense<0.000000e+00> : vector<8x512xf32>
    %661 = tpu.matmul %660, %534, %cst_216 {dimension_numbers = #tpu.dot_dimension_numbers<[1], [0], [0], [1], [0, 0, 1, 1], [], []>} : vector<8x128xbf16>, vector<128x512xbf16>, vector<8x512xf32> -> vector<8x512xf32>
    %662 = arith.addf %659, %661 : vector<8x512xf32>
    %663 = vector.extract_strided_slice %662 {offsets = [0, 0], sizes = [8, 384], strides = [1, 1]} : vector<8x512xf32> to vector<8x384xf32>
    %664 = arith.negf %663 : vector<8x384xf32>
    %665 = math.exp %664 : vector<8x384xf32>
    %cst_217 = arith.constant 1.000000e+00 : f32
    %666 = vector.broadcast %cst_217 : f32 to vector<8x384xf32>
    %667 = arith.addf %666, %665 : vector<8x384xf32>
    %668 = arith.divf %666, %667 : vector<8x384xf32>
    %669 = vector.extract_strided_slice %662 {offsets = [0, 384], sizes = [8, 128], strides = [1, 1]} : vector<8x512xf32> to vector<8x128xf32>
    %670 = math.tanh %669 : vector<8x128xf32>
    %671 = vector.extract_strided_slice %668 {offsets = [0, 128], sizes = [8, 128], strides = [1, 1]} : vector<8x384xf32> to vector<8x128xf32>
    %672 = arith.mulf %671, %654 : vector<8x128xf32>
    %673 = vector.extract_strided_slice %668 {offsets = [0, 0], sizes = [8, 128], strides = [1, 1]} : vector<8x384xf32> to vector<8x128xf32>
    %674 = arith.mulf %673, %670 : vector<8x128xf32>
    %675 = arith.addf %672, %674 : vector<8x128xf32>
    %676 = vector.extract_strided_slice %668 {offsets = [0, 256], sizes = [8, 128], strides = [1, 1]} : vector<8x384xf32> to vector<8x128xf32>
    %677 = math.tanh %675 : vector<8x128xf32>
    %678 = arith.mulf %676, %677 : vector<8x128xf32>
    %c48_218 = arith.constant 48 : index
    %c0_219 = arith.constant 0 : index
    %679 = vector.load %arg27[%c48_218, %c0_219] : memref<64x128xf32, #tpu.memory_space<vmem>>, vector<8x128xf32>
    tpu.vector_store %arg27[%c48_218, %c0_219], %678 {strides = array<i32>} : memref<64x128xf32, #tpu.memory_space<vmem>>, vector<8x128xf32>,
    %c56_220 = arith.constant 56 : index
    %c0_221 = arith.constant 0 : index
    %680 = vector.load %arg25[%c56_220, %c0_221] : memref<64x512xf32, #tpu.memory_space<vmem>>, vector<8x512xf32>
    %681 = arith.truncf %678 : vector<8x128xf32> to vector<8x128xbf16>
    %cst_222 = arith.constant dense<0.000000e+00> : vector<8x512xf32>
    %682 = tpu.matmul %681, %534, %cst_222 {dimension_numbers = #tpu.dot_dimension_numbers<[1], [0], [0], [1], [0, 0, 1, 1], [], []>} : vector<8x128xbf16>, vector<128x512xbf16>, vector<8x512xf32> -> vector<8x512xf32>
    %683 = arith.addf %680, %682 : vector<8x512xf32>
    %684 = vector.extract_strided_slice %683 {offsets = [0, 0], sizes = [8, 384], strides = [1, 1]} : vector<8x512xf32> to vector<8x384xf32>
    %685 = arith.negf %684 : vector<8x384xf32>
    %686 = math.exp %685 : vector<8x384xf32>
    %cst_223 = arith.constant 1.000000e+00 : f32
    %687 = vector.broadcast %cst_223 : f32 to vector<8x384xf32>
    %688 = arith.addf %687, %686 : vector<8x384xf32>
    %689 = arith.divf %687, %688 : vector<8x384xf32>
    %690 = vector.extract_strided_slice %683 {offsets = [0, 384], sizes = [8, 128], strides = [1, 1]} : vector<8x512xf32> to vector<8x128xf32>
    %691 = math.tanh %690 : vector<8x128xf32>
    %692 = vector.extract_strided_slice %689 {offsets = [0, 128], sizes = [8, 128], strides = [1, 1]} : vector<8x384xf32> to vector<8x128xf32>
    %693 = arith.mulf %692, %675 : vector<8x128xf32>
    %694 = vector.extract_strided_slice %689 {offsets = [0, 0], sizes = [8, 128], strides = [1, 1]} : vector<8x384xf32> to vector<8x128xf32>
    %695 = arith.mulf %694, %691 : vector<8x128xf32>
    %696 = arith.addf %693, %695 : vector<8x128xf32>
    %697 = vector.extract_strided_slice %689 {offsets = [0, 256], sizes = [8, 128], strides = [1, 1]} : vector<8x384xf32> to vector<8x128xf32>
    %698 = math.tanh %696 : vector<8x128xf32>
    %699 = arith.mulf %697, %698 : vector<8x128xf32>
    %c56_224 = arith.constant 56 : index
    %c0_225 = arith.constant 0 : index
    %700 = vector.load %arg27[%c56_224, %c0_225] : memref<64x128xf32, #tpu.memory_space<vmem>>, vector<8x128xf32>
    tpu.vector_store %arg27[%c56_224, %c0_225], %699 {strides = array<i32>} : memref<64x128xf32, #tpu.memory_space<vmem>>, vector<8x128xf32>,
    %c0_226 = arith.constant 0 : index
    %c0_227 = arith.constant 0 : index
    %701 = vector.load %arg27[%c0_226, %c0_227] : memref<64x128xf32, #tpu.memory_space<vmem>>, vector<64x128xf32>
    %702 = arith.truncf %701 : vector<64x128xf32> to vector<64x128xbf16>
    %c0_228 = arith.constant 0 : index
    %c0_229 = arith.constant 0 : index
    %703 = vector.load %arg13[%c0_228, %c0_229] : memref<128x512xbf16, #tpu.memory_space<vmem>>, vector<128x512xbf16>
    %cst_230 = arith.constant dense<0.000000e+00> : vector<64x512xf32>
    %704 = tpu.matmul %702, %703, %cst_230 {dimension_numbers = #tpu.dot_dimension_numbers<[1], [0], [0], [1], [0, 0, 1, 1], [], []>} : vector<64x128xbf16>, vector<128x512xbf16>, vector<64x512xf32> -> vector<64x512xf32>
    %c0_231 = arith.constant 0 : index
    %c0_232 = arith.constant 0 : index
    %705 = vector.load %arg15[%c0_231, %c0_232] : memref<1x512xf32, #tpu.memory_space<vmem>>, vector<1x512xf32>
    %706 = vector.broadcast %705 : vector<1x512xf32> to vector<64x512xf32>
    %707 = arith.addf %704, %706 : vector<64x512xf32>
    %c0_233 = arith.constant 0 : index
    %c0_234 = arith.constant 0 : index
    %708 = vector.load %arg25[%c0_233, %c0_234] : memref<64x512xf32, #tpu.memory_space<vmem>>, vector<64x512xf32>
    tpu.vector_store %arg25[%c0_233, %c0_234], %707 {strides = array<i32>} : memref<64x512xf32, #tpu.memory_space<vmem>>, vector<64x512xf32>,
    %c0_235 = arith.constant 0 : index
    %c0_236 = arith.constant 0 : index
    %709 = vector.load %arg14[%c0_235, %c0_236] : memref<128x512xbf16, #tpu.memory_space<vmem>>, vector<128x512xbf16>
    %cst_237 = arith.constant 0.000000e+00 : f32
    %710 = vector.broadcast %cst_237 : f32 to vector<8x128xf32>
    %c0_238 = arith.constant 0 : index
    %c0_239 = arith.constant 0 : index
    %711 = vector.load %arg25[%c0_238, %c0_239] : memref<64x512xf32, #tpu.memory_space<vmem>>, vector<8x512xf32>
    %712 = vector.extract_strided_slice %711 {offsets = [0, 0], sizes = [8, 384], strides = [1, 1]} : vector<8x512xf32> to vector<8x384xf32>
    %713 = arith.negf %712 : vector<8x384xf32>
    %714 = math.exp %713 : vector<8x384xf32>
    %cst_240 = arith.constant 1.000000e+00 : f32
    %715 = vector.broadcast %cst_240 : f32 to vector<8x384xf32>
    %716 = arith.addf %715, %714 : vector<8x384xf32>
    %717 = arith.divf %715, %716 : vector<8x384xf32>
    %718 = vector.extract_strided_slice %711 {offsets = [0, 384], sizes = [8, 128], strides = [1, 1]} : vector<8x512xf32> to vector<8x128xf32>
    %719 = math.tanh %718 : vector<8x128xf32>
    %720 = vector.extract_strided_slice %717 {offsets = [0, 128], sizes = [8, 128], strides = [1, 1]} : vector<8x384xf32> to vector<8x128xf32>
    %721 = arith.mulf %720, %710 : vector<8x128xf32>
    %722 = vector.extract_strided_slice %717 {offsets = [0, 0], sizes = [8, 128], strides = [1, 1]} : vector<8x384xf32> to vector<8x128xf32>
    %723 = arith.mulf %722, %719 : vector<8x128xf32>
    %724 = arith.addf %721, %723 : vector<8x128xf32>
    %725 = vector.extract_strided_slice %717 {offsets = [0, 256], sizes = [8, 128], strides = [1, 1]} : vector<8x384xf32> to vector<8x128xf32>
    %726 = math.tanh %724 : vector<8x128xf32>
    %727 = arith.mulf %725, %726 : vector<8x128xf32>
    %c0_241 = arith.constant 0 : index
    %c0_242 = arith.constant 0 : index
    %728 = vector.load %arg26[%c0_241, %c0_242] : memref<64x128xf32, #tpu.memory_space<vmem>>, vector<8x128xf32>
    tpu.vector_store %arg26[%c0_241, %c0_242], %727 {strides = array<i32>} : memref<64x128xf32, #tpu.memory_space<vmem>>, vector<8x128xf32>,
    %c8_243 = arith.constant 8 : index
    %c0_244 = arith.constant 0 : index
    %729 = vector.load %arg25[%c8_243, %c0_244] : memref<64x512xf32, #tpu.memory_space<vmem>>, vector<8x512xf32>
    %730 = arith.truncf %727 : vector<8x128xf32> to vector<8x128xbf16>
    %cst_245 = arith.constant dense<0.000000e+00> : vector<8x512xf32>
    %731 = tpu.matmul %730, %709, %cst_245 {dimension_numbers = #tpu.dot_dimension_numbers<[1], [0], [0], [1], [0, 0, 1, 1], [], []>} : vector<8x128xbf16>, vector<128x512xbf16>, vector<8x512xf32> -> vector<8x512xf32>
    %732 = arith.addf %729, %731 : vector<8x512xf32>
    %733 = vector.extract_strided_slice %732 {offsets = [0, 0], sizes = [8, 384], strides = [1, 1]} : vector<8x512xf32> to vector<8x384xf32>
    %734 = arith.negf %733 : vector<8x384xf32>
    %735 = math.exp %734 : vector<8x384xf32>
    %cst_246 = arith.constant 1.000000e+00 : f32
    %736 = vector.broadcast %cst_246 : f32 to vector<8x384xf32>
    %737 = arith.addf %736, %735 : vector<8x384xf32>
    %738 = arith.divf %736, %737 : vector<8x384xf32>
    %739 = vector.extract_strided_slice %732 {offsets = [0, 384], sizes = [8, 128], strides = [1, 1]} : vector<8x512xf32> to vector<8x128xf32>
    %740 = math.tanh %739 : vector<8x128xf32>
    %741 = vector.extract_strided_slice %738 {offsets = [0, 128], sizes = [8, 128], strides = [1, 1]} : vector<8x384xf32> to vector<8x128xf32>
    %742 = arith.mulf %741, %724 : vector<8x128xf32>
    %743 = vector.extract_strided_slice %738 {offsets = [0, 0], sizes = [8, 128], strides = [1, 1]} : vector<8x384xf32> to vector<8x128xf32>
    %744 = arith.mulf %743, %740 : vector<8x128xf32>
    %745 = arith.addf %742, %744 : vector<8x128xf32>
    %746 = vector.extract_strided_slice %738 {offsets = [0, 256], sizes = [8, 128], strides = [1, 1]} : vector<8x384xf32> to vector<8x128xf32>
    %747 = math.tanh %745 : vector<8x128xf32>
    %748 = arith.mulf %746, %747 : vector<8x128xf32>
    %c8_247 = arith.constant 8 : index
    %c0_248 = arith.constant 0 : index
    %749 = vector.load %arg26[%c8_247, %c0_248] : memref<64x128xf32, #tpu.memory_space<vmem>>, vector<8x128xf32>
    tpu.vector_store %arg26[%c8_247, %c0_248], %748 {strides = array<i32>} : memref<64x128xf32, #tpu.memory_space<vmem>>, vector<8x128xf32>,
    %c16_249 = arith.constant 16 : index
    %c0_250 = arith.constant 0 : index
    %750 = vector.load %arg25[%c16_249, %c0_250] : memref<64x512xf32, #tpu.memory_space<vmem>>, vector<8x512xf32>
    %751 = arith.truncf %748 : vector<8x128xf32> to vector<8x128xbf16>
    %cst_251 = arith.constant dense<0.000000e+00> : vector<8x512xf32>
    %752 = tpu.matmul %751, %709, %cst_251 {dimension_numbers = #tpu.dot_dimension_numbers<[1], [0], [0], [1], [0, 0, 1, 1], [], []>} : vector<8x128xbf16>, vector<128x512xbf16>, vector<8x512xf32> -> vector<8x512xf32>
    %753 = arith.addf %750, %752 : vector<8x512xf32>
    %754 = vector.extract_strided_slice %753 {offsets = [0, 0], sizes = [8, 384], strides = [1, 1]} : vector<8x512xf32> to vector<8x384xf32>
    %755 = arith.negf %754 : vector<8x384xf32>
    %756 = math.exp %755 : vector<8x384xf32>
    %cst_252 = arith.constant 1.000000e+00 : f32
    %757 = vector.broadcast %cst_252 : f32 to vector<8x384xf32>
    %758 = arith.addf %757, %756 : vector<8x384xf32>
    %759 = arith.divf %757, %758 : vector<8x384xf32>
    %760 = vector.extract_strided_slice %753 {offsets = [0, 384], sizes = [8, 128], strides = [1, 1]} : vector<8x512xf32> to vector<8x128xf32>
    %761 = math.tanh %760 : vector<8x128xf32>
    %762 = vector.extract_strided_slice %759 {offsets = [0, 128], sizes = [8, 128], strides = [1, 1]} : vector<8x384xf32> to vector<8x128xf32>
    %763 = arith.mulf %762, %745 : vector<8x128xf32>
    %764 = vector.extract_strided_slice %759 {offsets = [0, 0], sizes = [8, 128], strides = [1, 1]} : vector<8x384xf32> to vector<8x128xf32>
    %765 = arith.mulf %764, %761 : vector<8x128xf32>
    %766 = arith.addf %763, %765 : vector<8x128xf32>
    %767 = vector.extract_strided_slice %759 {offsets = [0, 256], sizes = [8, 128], strides = [1, 1]} : vector<8x384xf32> to vector<8x128xf32>
    %768 = math.tanh %766 : vector<8x128xf32>
    %769 = arith.mulf %767, %768 : vector<8x128xf32>
    %c16_253 = arith.constant 16 : index
    %c0_254 = arith.constant 0 : index
    %770 = vector.load %arg26[%c16_253, %c0_254] : memref<64x128xf32, #tpu.memory_space<vmem>>, vector<8x128xf32>
    tpu.vector_store %arg26[%c16_253, %c0_254], %769 {strides = array<i32>} : memref<64x128xf32, #tpu.memory_space<vmem>>, vector<8x128xf32>,
    %c24_255 = arith.constant 24 : index
    %c0_256 = arith.constant 0 : index
    %771 = vector.load %arg25[%c24_255, %c0_256] : memref<64x512xf32, #tpu.memory_space<vmem>>, vector<8x512xf32>
    %772 = arith.truncf %769 : vector<8x128xf32> to vector<8x128xbf16>
    %cst_257 = arith.constant dense<0.000000e+00> : vector<8x512xf32>
    %773 = tpu.matmul %772, %709, %cst_257 {dimension_numbers = #tpu.dot_dimension_numbers<[1], [0], [0], [1], [0, 0, 1, 1], [], []>} : vector<8x128xbf16>, vector<128x512xbf16>, vector<8x512xf32> -> vector<8x512xf32>
    %774 = arith.addf %771, %773 : vector<8x512xf32>
    %775 = vector.extract_strided_slice %774 {offsets = [0, 0], sizes = [8, 384], strides = [1, 1]} : vector<8x512xf32> to vector<8x384xf32>
    %776 = arith.negf %775 : vector<8x384xf32>
    %777 = math.exp %776 : vector<8x384xf32>
    %cst_258 = arith.constant 1.000000e+00 : f32
    %778 = vector.broadcast %cst_258 : f32 to vector<8x384xf32>
    %779 = arith.addf %778, %777 : vector<8x384xf32>
    %780 = arith.divf %778, %779 : vector<8x384xf32>
    %781 = vector.extract_strided_slice %774 {offsets = [0, 384], sizes = [8, 128], strides = [1, 1]} : vector<8x512xf32> to vector<8x128xf32>
    %782 = math.tanh %781 : vector<8x128xf32>
    %783 = vector.extract_strided_slice %780 {offsets = [0, 128], sizes = [8, 128], strides = [1, 1]} : vector<8x384xf32> to vector<8x128xf32>
    %784 = arith.mulf %783, %766 : vector<8x128xf32>
    %785 = vector.extract_strided_slice %780 {offsets = [0, 0], sizes = [8, 128], strides = [1, 1]} : vector<8x384xf32> to vector<8x128xf32>
    %786 = arith.mulf %785, %782 : vector<8x128xf32>
    %787 = arith.addf %784, %786 : vector<8x128xf32>
    %788 = vector.extract_strided_slice %780 {offsets = [0, 256], sizes = [8, 128], strides = [1, 1]} : vector<8x384xf32> to vector<8x128xf32>
    %789 = math.tanh %787 : vector<8x128xf32>
    %790 = arith.mulf %788, %789 : vector<8x128xf32>
    %c24_259 = arith.constant 24 : index
    %c0_260 = arith.constant 0 : index
    %791 = vector.load %arg26[%c24_259, %c0_260] : memref<64x128xf32, #tpu.memory_space<vmem>>, vector<8x128xf32>
    tpu.vector_store %arg26[%c24_259, %c0_260], %790 {strides = array<i32>} : memref<64x128xf32, #tpu.memory_space<vmem>>, vector<8x128xf32>,
    %c32_261 = arith.constant 32 : index
    %c0_262 = arith.constant 0 : index
    %792 = vector.load %arg25[%c32_261, %c0_262] : memref<64x512xf32, #tpu.memory_space<vmem>>, vector<8x512xf32>
    %793 = arith.truncf %790 : vector<8x128xf32> to vector<8x128xbf16>
    %cst_263 = arith.constant dense<0.000000e+00> : vector<8x512xf32>
    %794 = tpu.matmul %793, %709, %cst_263 {dimension_numbers = #tpu.dot_dimension_numbers<[1], [0], [0], [1], [0, 0, 1, 1], [], []>} : vector<8x128xbf16>, vector<128x512xbf16>, vector<8x512xf32> -> vector<8x512xf32>
    %795 = arith.addf %792, %794 : vector<8x512xf32>
    %796 = vector.extract_strided_slice %795 {offsets = [0, 0], sizes = [8, 384], strides = [1, 1]} : vector<8x512xf32> to vector<8x384xf32>
    %797 = arith.negf %796 : vector<8x384xf32>
    %798 = math.exp %797 : vector<8x384xf32>
    %cst_264 = arith.constant 1.000000e+00 : f32
    %799 = vector.broadcast %cst_264 : f32 to vector<8x384xf32>
    %800 = arith.addf %799, %798 : vector<8x384xf32>
    %801 = arith.divf %799, %800 : vector<8x384xf32>
    %802 = vector.extract_strided_slice %795 {offsets = [0, 384], sizes = [8, 128], strides = [1, 1]} : vector<8x512xf32> to vector<8x128xf32>
    %803 = math.tanh %802 : vector<8x128xf32>
    %804 = vector.extract_strided_slice %801 {offsets = [0, 128], sizes = [8, 128], strides = [1, 1]} : vector<8x384xf32> to vector<8x128xf32>
    %805 = arith.mulf %804, %787 : vector<8x128xf32>
    %806 = vector.extract_strided_slice %801 {offsets = [0, 0], sizes = [8, 128], strides = [1, 1]} : vector<8x384xf32> to vector<8x128xf32>
    %807 = arith.mulf %806, %803 : vector<8x128xf32>
    %808 = arith.addf %805, %807 : vector<8x128xf32>
    %809 = vector.extract_strided_slice %801 {offsets = [0, 256], sizes = [8, 128], strides = [1, 1]} : vector<8x384xf32> to vector<8x128xf32>
    %810 = math.tanh %808 : vector<8x128xf32>
    %811 = arith.mulf %809, %810 : vector<8x128xf32>
    %c32_265 = arith.constant 32 : index
    %c0_266 = arith.constant 0 : index
    %812 = vector.load %arg26[%c32_265, %c0_266] : memref<64x128xf32, #tpu.memory_space<vmem>>, vector<8x128xf32>
    tpu.vector_store %arg26[%c32_265, %c0_266], %811 {strides = array<i32>} : memref<64x128xf32, #tpu.memory_space<vmem>>, vector<8x128xf32>,
    %c40_267 = arith.constant 40 : index
    %c0_268 = arith.constant 0 : index
    %813 = vector.load %arg25[%c40_267, %c0_268] : memref<64x512xf32, #tpu.memory_space<vmem>>, vector<8x512xf32>
    %814 = arith.truncf %811 : vector<8x128xf32> to vector<8x128xbf16>
    %cst_269 = arith.constant dense<0.000000e+00> : vector<8x512xf32>
    %815 = tpu.matmul %814, %709, %cst_269 {dimension_numbers = #tpu.dot_dimension_numbers<[1], [0], [0], [1], [0, 0, 1, 1], [], []>} : vector<8x128xbf16>, vector<128x512xbf16>, vector<8x512xf32> -> vector<8x512xf32>
    %816 = arith.addf %813, %815 : vector<8x512xf32>
    %817 = vector.extract_strided_slice %816 {offsets = [0, 0], sizes = [8, 384], strides = [1, 1]} : vector<8x512xf32> to vector<8x384xf32>
    %818 = arith.negf %817 : vector<8x384xf32>
    %819 = math.exp %818 : vector<8x384xf32>
    %cst_270 = arith.constant 1.000000e+00 : f32
    %820 = vector.broadcast %cst_270 : f32 to vector<8x384xf32>
    %821 = arith.addf %820, %819 : vector<8x384xf32>
    %822 = arith.divf %820, %821 : vector<8x384xf32>
    %823 = vector.extract_strided_slice %816 {offsets = [0, 384], sizes = [8, 128], strides = [1, 1]} : vector<8x512xf32> to vector<8x128xf32>
    %824 = math.tanh %823 : vector<8x128xf32>
    %825 = vector.extract_strided_slice %822 {offsets = [0, 128], sizes = [8, 128], strides = [1, 1]} : vector<8x384xf32> to vector<8x128xf32>
    %826 = arith.mulf %825, %808 : vector<8x128xf32>
    %827 = vector.extract_strided_slice %822 {offsets = [0, 0], sizes = [8, 128], strides = [1, 1]} : vector<8x384xf32> to vector<8x128xf32>
    %828 = arith.mulf %827, %824 : vector<8x128xf32>
    %829 = arith.addf %826, %828 : vector<8x128xf32>
    %830 = vector.extract_strided_slice %822 {offsets = [0, 256], sizes = [8, 128], strides = [1, 1]} : vector<8x384xf32> to vector<8x128xf32>
    %831 = math.tanh %829 : vector<8x128xf32>
    %832 = arith.mulf %830, %831 : vector<8x128xf32>
    %c40_271 = arith.constant 40 : index
    %c0_272 = arith.constant 0 : index
    %833 = vector.load %arg26[%c40_271, %c0_272] : memref<64x128xf32, #tpu.memory_space<vmem>>, vector<8x128xf32>
    tpu.vector_store %arg26[%c40_271, %c0_272], %832 {strides = array<i32>} : memref<64x128xf32, #tpu.memory_space<vmem>>, vector<8x128xf32>,
    %c48_273 = arith.constant 48 : index
    %c0_274 = arith.constant 0 : index
    %834 = vector.load %arg25[%c48_273, %c0_274] : memref<64x512xf32, #tpu.memory_space<vmem>>, vector<8x512xf32>
    %835 = arith.truncf %832 : vector<8x128xf32> to vector<8x128xbf16>
    %cst_275 = arith.constant dense<0.000000e+00> : vector<8x512xf32>
    %836 = tpu.matmul %835, %709, %cst_275 {dimension_numbers = #tpu.dot_dimension_numbers<[1], [0], [0], [1], [0, 0, 1, 1], [], []>} : vector<8x128xbf16>, vector<128x512xbf16>, vector<8x512xf32> -> vector<8x512xf32>
    %837 = arith.addf %834, %836 : vector<8x512xf32>
    %838 = vector.extract_strided_slice %837 {offsets = [0, 0], sizes = [8, 384], strides = [1, 1]} : vector<8x512xf32> to vector<8x384xf32>
    %839 = arith.negf %838 : vector<8x384xf32>
    %840 = math.exp %839 : vector<8x384xf32>
    %cst_276 = arith.constant 1.000000e+00 : f32
    %841 = vector.broadcast %cst_276 : f32 to vector<8x384xf32>
    %842 = arith.addf %841, %840 : vector<8x384xf32>
    %843 = arith.divf %841, %842 : vector<8x384xf32>
    %844 = vector.extract_strided_slice %837 {offsets = [0, 384], sizes = [8, 128], strides = [1, 1]} : vector<8x512xf32> to vector<8x128xf32>
    %845 = math.tanh %844 : vector<8x128xf32>
    %846 = vector.extract_strided_slice %843 {offsets = [0, 128], sizes = [8, 128], strides = [1, 1]} : vector<8x384xf32> to vector<8x128xf32>
    %847 = arith.mulf %846, %829 : vector<8x128xf32>
    %848 = vector.extract_strided_slice %843 {offsets = [0, 0], sizes = [8, 128], strides = [1, 1]} : vector<8x384xf32> to vector<8x128xf32>
    %849 = arith.mulf %848, %845 : vector<8x128xf32>
    %850 = arith.addf %847, %849 : vector<8x128xf32>
    %851 = vector.extract_strided_slice %843 {offsets = [0, 256], sizes = [8, 128], strides = [1, 1]} : vector<8x384xf32> to vector<8x128xf32>
    %852 = math.tanh %850 : vector<8x128xf32>
    %853 = arith.mulf %851, %852 : vector<8x128xf32>
    %c48_277 = arith.constant 48 : index
    %c0_278 = arith.constant 0 : index
    %854 = vector.load %arg26[%c48_277, %c0_278] : memref<64x128xf32, #tpu.memory_space<vmem>>, vector<8x128xf32>
    tpu.vector_store %arg26[%c48_277, %c0_278], %853 {strides = array<i32>} : memref<64x128xf32, #tpu.memory_space<vmem>>, vector<8x128xf32>,
    %c56_279 = arith.constant 56 : index
    %c0_280 = arith.constant 0 : index
    %855 = vector.load %arg25[%c56_279, %c0_280] : memref<64x512xf32, #tpu.memory_space<vmem>>, vector<8x512xf32>
    %856 = arith.truncf %853 : vector<8x128xf32> to vector<8x128xbf16>
    %cst_281 = arith.constant dense<0.000000e+00> : vector<8x512xf32>
    %857 = tpu.matmul %856, %709, %cst_281 {dimension_numbers = #tpu.dot_dimension_numbers<[1], [0], [0], [1], [0, 0, 1, 1], [], []>} : vector<8x128xbf16>, vector<128x512xbf16>, vector<8x512xf32> -> vector<8x512xf32>
    %858 = arith.addf %855, %857 : vector<8x512xf32>
    %859 = vector.extract_strided_slice %858 {offsets = [0, 0], sizes = [8, 384], strides = [1, 1]} : vector<8x512xf32> to vector<8x384xf32>
    %860 = arith.negf %859 : vector<8x384xf32>
    %861 = math.exp %860 : vector<8x384xf32>
    %cst_282 = arith.constant 1.000000e+00 : f32
    %862 = vector.broadcast %cst_282 : f32 to vector<8x384xf32>
    %863 = arith.addf %862, %861 : vector<8x384xf32>
    %864 = arith.divf %862, %863 : vector<8x384xf32>
    %865 = vector.extract_strided_slice %858 {offsets = [0, 384], sizes = [8, 128], strides = [1, 1]} : vector<8x512xf32> to vector<8x128xf32>
    %866 = math.tanh %865 : vector<8x128xf32>
    %867 = vector.extract_strided_slice %864 {offsets = [0, 128], sizes = [8, 128], strides = [1, 1]} : vector<8x384xf32> to vector<8x128xf32>
    %868 = arith.mulf %867, %850 : vector<8x128xf32>
    %869 = vector.extract_strided_slice %864 {offsets = [0, 0], sizes = [8, 128], strides = [1, 1]} : vector<8x384xf32> to vector<8x128xf32>
    %870 = arith.mulf %869, %866 : vector<8x128xf32>
    %871 = arith.addf %868, %870 : vector<8x128xf32>
    %872 = vector.extract_strided_slice %864 {offsets = [0, 256], sizes = [8, 128], strides = [1, 1]} : vector<8x384xf32> to vector<8x128xf32>
    %873 = math.tanh %871 : vector<8x128xf32>
    %874 = arith.mulf %872, %873 : vector<8x128xf32>
    %c56_283 = arith.constant 56 : index
    %c0_284 = arith.constant 0 : index
    %875 = vector.load %arg26[%c56_283, %c0_284] : memref<64x128xf32, #tpu.memory_space<vmem>>, vector<8x128xf32>
    tpu.vector_store %arg26[%c56_283, %c0_284], %874 {strides = array<i32>} : memref<64x128xf32, #tpu.memory_space<vmem>>, vector<8x128xf32>,
    %c0_285 = arith.constant 0 : index
    %c0_286 = arith.constant 0 : index
    %876 = vector.load %arg26[%c0_285, %c0_286] : memref<64x128xf32, #tpu.memory_space<vmem>>, vector<64x128xf32>
    %877 = arith.truncf %876 : vector<64x128xf32> to vector<64x128xbf16>
    %c0_287 = arith.constant 0 : index
    %c0_288 = arith.constant 0 : index
    %878 = vector.load %arg16[%c0_287, %c0_288] : memref<128x512xbf16, #tpu.memory_space<vmem>>, vector<128x512xbf16>
    %cst_289 = arith.constant dense<0.000000e+00> : vector<64x512xf32>
    %879 = tpu.matmul %877, %878, %cst_289 {dimension_numbers = #tpu.dot_dimension_numbers<[1], [0], [0], [1], [0, 0, 1, 1], [], []>} : vector<64x128xbf16>, vector<128x512xbf16>, vector<64x512xf32> -> vector<64x512xf32>
    %c0_290 = arith.constant 0 : index
    %c0_291 = arith.constant 0 : index
    %880 = vector.load %arg18[%c0_290, %c0_291] : memref<1x512xf32, #tpu.memory_space<vmem>>, vector<1x512xf32>
    %881 = vector.broadcast %880 : vector<1x512xf32> to vector<64x512xf32>
    %882 = arith.addf %879, %881 : vector<64x512xf32>
    %c0_292 = arith.constant 0 : index
    %c0_293 = arith.constant 0 : index
    %883 = vector.load %arg25[%c0_292, %c0_293] : memref<64x512xf32, #tpu.memory_space<vmem>>, vector<64x512xf32>
    tpu.vector_store %arg25[%c0_292, %c0_293], %882 {strides = array<i32>} : memref<64x512xf32, #tpu.memory_space<vmem>>, vector<64x512xf32>,
    %c0_294 = arith.constant 0 : index
    %c0_295 = arith.constant 0 : index
    %884 = vector.load %arg17[%c0_294, %c0_295] : memref<128x512xbf16, #tpu.memory_space<vmem>>, vector<128x512xbf16>
    %cst_296 = arith.constant 0.000000e+00 : f32
    %885 = vector.broadcast %cst_296 : f32 to vector<8x128xf32>
    %c0_297 = arith.constant 0 : index
    %c0_298 = arith.constant 0 : index
    %886 = vector.load %arg25[%c0_297, %c0_298] : memref<64x512xf32, #tpu.memory_space<vmem>>, vector<8x512xf32>
    %887 = vector.extract_strided_slice %886 {offsets = [0, 0], sizes = [8, 384], strides = [1, 1]} : vector<8x512xf32> to vector<8x384xf32>
    %888 = arith.negf %887 : vector<8x384xf32>
    %889 = math.exp %888 : vector<8x384xf32>
    %cst_299 = arith.constant 1.000000e+00 : f32
    %890 = vector.broadcast %cst_299 : f32 to vector<8x384xf32>
    %891 = arith.addf %890, %889 : vector<8x384xf32>
    %892 = arith.divf %890, %891 : vector<8x384xf32>
    %893 = vector.extract_strided_slice %886 {offsets = [0, 384], sizes = [8, 128], strides = [1, 1]} : vector<8x512xf32> to vector<8x128xf32>
    %894 = math.tanh %893 : vector<8x128xf32>
    %895 = vector.extract_strided_slice %892 {offsets = [0, 128], sizes = [8, 128], strides = [1, 1]} : vector<8x384xf32> to vector<8x128xf32>
    %896 = arith.mulf %895, %885 : vector<8x128xf32>
    %897 = vector.extract_strided_slice %892 {offsets = [0, 0], sizes = [8, 128], strides = [1, 1]} : vector<8x384xf32> to vector<8x128xf32>
    %898 = arith.mulf %897, %894 : vector<8x128xf32>
    %899 = arith.addf %896, %898 : vector<8x128xf32>
    %900 = vector.extract_strided_slice %892 {offsets = [0, 256], sizes = [8, 128], strides = [1, 1]} : vector<8x384xf32> to vector<8x128xf32>
    %901 = math.tanh %899 : vector<8x128xf32>
    %902 = arith.mulf %900, %901 : vector<8x128xf32>
    %c8_300 = arith.constant 8 : index
    %c0_301 = arith.constant 0 : index
    %903 = vector.load %arg25[%c8_300, %c0_301] : memref<64x512xf32, #tpu.memory_space<vmem>>, vector<8x512xf32>
    %904 = arith.truncf %902 : vector<8x128xf32> to vector<8x128xbf16>
    %cst_302 = arith.constant dense<0.000000e+00> : vector<8x512xf32>
    %905 = tpu.matmul %904, %884, %cst_302 {dimension_numbers = #tpu.dot_dimension_numbers<[1], [0], [0], [1], [0, 0, 1, 1], [], []>} : vector<8x128xbf16>, vector<128x512xbf16>, vector<8x512xf32> -> vector<8x512xf32>
    %906 = arith.addf %903, %905 : vector<8x512xf32>
    %907 = vector.extract_strided_slice %906 {offsets = [0, 0], sizes = [8, 384], strides = [1, 1]} : vector<8x512xf32> to vector<8x384xf32>
    %908 = arith.negf %907 : vector<8x384xf32>
    %909 = math.exp %908 : vector<8x384xf32>
    %cst_303 = arith.constant 1.000000e+00 : f32
    %910 = vector.broadcast %cst_303 : f32 to vector<8x384xf32>
    %911 = arith.addf %910, %909 : vector<8x384xf32>
    %912 = arith.divf %910, %911 : vector<8x384xf32>
    %913 = vector.extract_strided_slice %906 {offsets = [0, 384], sizes = [8, 128], strides = [1, 1]} : vector<8x512xf32> to vector<8x128xf32>
    %914 = math.tanh %913 : vector<8x128xf32>
    %915 = vector.extract_strided_slice %912 {offsets = [0, 128], sizes = [8, 128], strides = [1, 1]} : vector<8x384xf32> to vector<8x128xf32>
    %916 = arith.mulf %915, %899 : vector<8x128xf32>
    %917 = vector.extract_strided_slice %912 {offsets = [0, 0], sizes = [8, 128], strides = [1, 1]} : vector<8x384xf32> to vector<8x128xf32>
    %918 = arith.mulf %917, %914 : vector<8x128xf32>
    %919 = arith.addf %916, %918 : vector<8x128xf32>
    %920 = vector.extract_strided_slice %912 {offsets = [0, 256], sizes = [8, 128], strides = [1, 1]} : vector<8x384xf32> to vector<8x128xf32>
    %921 = math.tanh %919 : vector<8x128xf32>
    %922 = arith.mulf %920, %921 : vector<8x128xf32>
    %c16_304 = arith.constant 16 : index
    %c0_305 = arith.constant 0 : index
    %923 = vector.load %arg25[%c16_304, %c0_305] : memref<64x512xf32, #tpu.memory_space<vmem>>, vector<8x512xf32>
    %924 = arith.truncf %922 : vector<8x128xf32> to vector<8x128xbf16>
    %cst_306 = arith.constant dense<0.000000e+00> : vector<8x512xf32>
    %925 = tpu.matmul %924, %884, %cst_306 {dimension_numbers = #tpu.dot_dimension_numbers<[1], [0], [0], [1], [0, 0, 1, 1], [], []>} : vector<8x128xbf16>, vector<128x512xbf16>, vector<8x512xf32> -> vector<8x512xf32>
    %926 = arith.addf %923, %925 : vector<8x512xf32>
    %927 = vector.extract_strided_slice %926 {offsets = [0, 0], sizes = [8, 384], strides = [1, 1]} : vector<8x512xf32> to vector<8x384xf32>
    %928 = arith.negf %927 : vector<8x384xf32>
    %929 = math.exp %928 : vector<8x384xf32>
    %cst_307 = arith.constant 1.000000e+00 : f32
    %930 = vector.broadcast %cst_307 : f32 to vector<8x384xf32>
    %931 = arith.addf %930, %929 : vector<8x384xf32>
    %932 = arith.divf %930, %931 : vector<8x384xf32>
    %933 = vector.extract_strided_slice %926 {offsets = [0, 384], sizes = [8, 128], strides = [1, 1]} : vector<8x512xf32> to vector<8x128xf32>
    %934 = math.tanh %933 : vector<8x128xf32>
    %935 = vector.extract_strided_slice %932 {offsets = [0, 128], sizes = [8, 128], strides = [1, 1]} : vector<8x384xf32> to vector<8x128xf32>
    %936 = arith.mulf %935, %919 : vector<8x128xf32>
    %937 = vector.extract_strided_slice %932 {offsets = [0, 0], sizes = [8, 128], strides = [1, 1]} : vector<8x384xf32> to vector<8x128xf32>
    %938 = arith.mulf %937, %934 : vector<8x128xf32>
    %939 = arith.addf %936, %938 : vector<8x128xf32>
    %940 = vector.extract_strided_slice %932 {offsets = [0, 256], sizes = [8, 128], strides = [1, 1]} : vector<8x384xf32> to vector<8x128xf32>
    %941 = math.tanh %939 : vector<8x128xf32>
    %942 = arith.mulf %940, %941 : vector<8x128xf32>
    %c24_308 = arith.constant 24 : index
    %c0_309 = arith.constant 0 : index
    %943 = vector.load %arg25[%c24_308, %c0_309] : memref<64x512xf32, #tpu.memory_space<vmem>>, vector<8x512xf32>
    %944 = arith.truncf %942 : vector<8x128xf32> to vector<8x128xbf16>
    %cst_310 = arith.constant dense<0.000000e+00> : vector<8x512xf32>
    %945 = tpu.matmul %944, %884, %cst_310 {dimension_numbers = #tpu.dot_dimension_numbers<[1], [0], [0], [1], [0, 0, 1, 1], [], []>} : vector<8x128xbf16>, vector<128x512xbf16>, vector<8x512xf32> -> vector<8x512xf32>
    %946 = arith.addf %943, %945 : vector<8x512xf32>
    %947 = vector.extract_strided_slice %946 {offsets = [0, 0], sizes = [8, 384], strides = [1, 1]} : vector<8x512xf32> to vector<8x384xf32>
    %948 = arith.negf %947 : vector<8x384xf32>
    %949 = math.exp %948 : vector<8x384xf32>
    %cst_311 = arith.constant 1.000000e+00 : f32
    %950 = vector.broadcast %cst_311 : f32 to vector<8x384xf32>
    %951 = arith.addf %950, %949 : vector<8x384xf32>
    %952 = arith.divf %950, %951 : vector<8x384xf32>
    %953 = vector.extract_strided_slice %946 {offsets = [0, 384], sizes = [8, 128], strides = [1, 1]} : vector<8x512xf32> to vector<8x128xf32>
    %954 = math.tanh %953 : vector<8x128xf32>
    %955 = vector.extract_strided_slice %952 {offsets = [0, 128], sizes = [8, 128], strides = [1, 1]} : vector<8x384xf32> to vector<8x128xf32>
    %956 = arith.mulf %955, %939 : vector<8x128xf32>
    %957 = vector.extract_strided_slice %952 {offsets = [0, 0], sizes = [8, 128], strides = [1, 1]} : vector<8x384xf32> to vector<8x128xf32>
    %958 = arith.mulf %957, %954 : vector<8x128xf32>
    %959 = arith.addf %956, %958 : vector<8x128xf32>
    %960 = vector.extract_strided_slice %952 {offsets = [0, 256], sizes = [8, 128], strides = [1, 1]} : vector<8x384xf32> to vector<8x128xf32>
    %961 = math.tanh %959 : vector<8x128xf32>
    %962 = arith.mulf %960, %961 : vector<8x128xf32>
    %c32_312 = arith.constant 32 : index
    %c0_313 = arith.constant 0 : index
    %963 = vector.load %arg25[%c32_312, %c0_313] : memref<64x512xf32, #tpu.memory_space<vmem>>, vector<8x512xf32>
    %964 = arith.truncf %962 : vector<8x128xf32> to vector<8x128xbf16>
    %cst_314 = arith.constant dense<0.000000e+00> : vector<8x512xf32>
    %965 = tpu.matmul %964, %884, %cst_314 {dimension_numbers = #tpu.dot_dimension_numbers<[1], [0], [0], [1], [0, 0, 1, 1], [], []>} : vector<8x128xbf16>, vector<128x512xbf16>, vector<8x512xf32> -> vector<8x512xf32>
    %966 = arith.addf %963, %965 : vector<8x512xf32>
    %967 = vector.extract_strided_slice %966 {offsets = [0, 0], sizes = [8, 384], strides = [1, 1]} : vector<8x512xf32> to vector<8x384xf32>
    %968 = arith.negf %967 : vector<8x384xf32>
    %969 = math.exp %968 : vector<8x384xf32>
    %cst_315 = arith.constant 1.000000e+00 : f32
    %970 = vector.broadcast %cst_315 : f32 to vector<8x384xf32>
    %971 = arith.addf %970, %969 : vector<8x384xf32>
    %972 = arith.divf %970, %971 : vector<8x384xf32>
    %973 = vector.extract_strided_slice %966 {offsets = [0, 384], sizes = [8, 128], strides = [1, 1]} : vector<8x512xf32> to vector<8x128xf32>
    %974 = math.tanh %973 : vector<8x128xf32>
    %975 = vector.extract_strided_slice %972 {offsets = [0, 128], sizes = [8, 128], strides = [1, 1]} : vector<8x384xf32> to vector<8x128xf32>
    %976 = arith.mulf %975, %959 : vector<8x128xf32>
    %977 = vector.extract_strided_slice %972 {offsets = [0, 0], sizes = [8, 128], strides = [1, 1]} : vector<8x384xf32> to vector<8x128xf32>
    %978 = arith.mulf %977, %974 : vector<8x128xf32>
    %979 = arith.addf %976, %978 : vector<8x128xf32>
    %980 = vector.extract_strided_slice %972 {offsets = [0, 256], sizes = [8, 128], strides = [1, 1]} : vector<8x384xf32> to vector<8x128xf32>
    %981 = math.tanh %979 : vector<8x128xf32>
    %982 = arith.mulf %980, %981 : vector<8x128xf32>
    %c40_316 = arith.constant 40 : index
    %c0_317 = arith.constant 0 : index
    %983 = vector.load %arg25[%c40_316, %c0_317] : memref<64x512xf32, #tpu.memory_space<vmem>>, vector<8x512xf32>
    %984 = arith.truncf %982 : vector<8x128xf32> to vector<8x128xbf16>
    %cst_318 = arith.constant dense<0.000000e+00> : vector<8x512xf32>
    %985 = tpu.matmul %984, %884, %cst_318 {dimension_numbers = #tpu.dot_dimension_numbers<[1], [0], [0], [1], [0, 0, 1, 1], [], []>} : vector<8x128xbf16>, vector<128x512xbf16>, vector<8x512xf32> -> vector<8x512xf32>
    %986 = arith.addf %983, %985 : vector<8x512xf32>
    %987 = vector.extract_strided_slice %986 {offsets = [0, 0], sizes = [8, 384], strides = [1, 1]} : vector<8x512xf32> to vector<8x384xf32>
    %988 = arith.negf %987 : vector<8x384xf32>
    %989 = math.exp %988 : vector<8x384xf32>
    %cst_319 = arith.constant 1.000000e+00 : f32
    %990 = vector.broadcast %cst_319 : f32 to vector<8x384xf32>
    %991 = arith.addf %990, %989 : vector<8x384xf32>
    %992 = arith.divf %990, %991 : vector<8x384xf32>
    %993 = vector.extract_strided_slice %986 {offsets = [0, 384], sizes = [8, 128], strides = [1, 1]} : vector<8x512xf32> to vector<8x128xf32>
    %994 = math.tanh %993 : vector<8x128xf32>
    %995 = vector.extract_strided_slice %992 {offsets = [0, 128], sizes = [8, 128], strides = [1, 1]} : vector<8x384xf32> to vector<8x128xf32>
    %996 = arith.mulf %995, %979 : vector<8x128xf32>
    %997 = vector.extract_strided_slice %992 {offsets = [0, 0], sizes = [8, 128], strides = [1, 1]} : vector<8x384xf32> to vector<8x128xf32>
    %998 = arith.mulf %997, %994 : vector<8x128xf32>
    %999 = arith.addf %996, %998 : vector<8x128xf32>
    %1000 = vector.extract_strided_slice %992 {offsets = [0, 256], sizes = [8, 128], strides = [1, 1]} : vector<8x384xf32> to vector<8x128xf32>
    %1001 = math.tanh %999 : vector<8x128xf32>
    %1002 = arith.mulf %1000, %1001 : vector<8x128xf32>
    %c48_320 = arith.constant 48 : index
    %c0_321 = arith.constant 0 : index
    %1003 = vector.load %arg25[%c48_320, %c0_321] : memref<64x512xf32, #tpu.memory_space<vmem>>, vector<8x512xf32>
    %1004 = arith.truncf %1002 : vector<8x128xf32> to vector<8x128xbf16>
    %cst_322 = arith.constant dense<0.000000e+00> : vector<8x512xf32>
    %1005 = tpu.matmul %1004, %884, %cst_322 {dimension_numbers = #tpu.dot_dimension_numbers<[1], [0], [0], [1], [0, 0, 1, 1], [], []>} : vector<8x128xbf16>, vector<128x512xbf16>, vector<8x512xf32> -> vector<8x512xf32>
    %1006 = arith.addf %1003, %1005 : vector<8x512xf32>
    %1007 = vector.extract_strided_slice %1006 {offsets = [0, 0], sizes = [8, 384], strides = [1, 1]} : vector<8x512xf32> to vector<8x384xf32>
    %1008 = arith.negf %1007 : vector<8x384xf32>
    %1009 = math.exp %1008 : vector<8x384xf32>
    %cst_323 = arith.constant 1.000000e+00 : f32
    %1010 = vector.broadcast %cst_323 : f32 to vector<8x384xf32>
    %1011 = arith.addf %1010, %1009 : vector<8x384xf32>
    %1012 = arith.divf %1010, %1011 : vector<8x384xf32>
    %1013 = vector.extract_strided_slice %1006 {offsets = [0, 384], sizes = [8, 128], strides = [1, 1]} : vector<8x512xf32> to vector<8x128xf32>
    %1014 = math.tanh %1013 : vector<8x128xf32>
    %1015 = vector.extract_strided_slice %1012 {offsets = [0, 128], sizes = [8, 128], strides = [1, 1]} : vector<8x384xf32> to vector<8x128xf32>
    %1016 = arith.mulf %1015, %999 : vector<8x128xf32>
    %1017 = vector.extract_strided_slice %1012 {offsets = [0, 0], sizes = [8, 128], strides = [1, 1]} : vector<8x384xf32> to vector<8x128xf32>
    %1018 = arith.mulf %1017, %1014 : vector<8x128xf32>
    %1019 = arith.addf %1016, %1018 : vector<8x128xf32>
    %1020 = vector.extract_strided_slice %1012 {offsets = [0, 256], sizes = [8, 128], strides = [1, 1]} : vector<8x384xf32> to vector<8x128xf32>
    %1021 = math.tanh %1019 : vector<8x128xf32>
    %1022 = arith.mulf %1020, %1021 : vector<8x128xf32>
    %c56_324 = arith.constant 56 : index
    %c0_325 = arith.constant 0 : index
    %1023 = vector.load %arg25[%c56_324, %c0_325] : memref<64x512xf32, #tpu.memory_space<vmem>>, vector<8x512xf32>
    %1024 = arith.truncf %1022 : vector<8x128xf32> to vector<8x128xbf16>
    %cst_326 = arith.constant dense<0.000000e+00> : vector<8x512xf32>
    %1025 = tpu.matmul %1024, %884, %cst_326 {dimension_numbers = #tpu.dot_dimension_numbers<[1], [0], [0], [1], [0, 0, 1, 1], [], []>} : vector<8x128xbf16>, vector<128x512xbf16>, vector<8x512xf32> -> vector<8x512xf32>
    %1026 = arith.addf %1023, %1025 : vector<8x512xf32>
    %1027 = vector.extract_strided_slice %1026 {offsets = [0, 0], sizes = [8, 384], strides = [1, 1]} : vector<8x512xf32> to vector<8x384xf32>
    %1028 = arith.negf %1027 : vector<8x384xf32>
    %1029 = math.exp %1028 : vector<8x384xf32>
    %cst_327 = arith.constant 1.000000e+00 : f32
    %1030 = vector.broadcast %cst_327 : f32 to vector<8x384xf32>
    %1031 = arith.addf %1030, %1029 : vector<8x384xf32>
    %1032 = arith.divf %1030, %1031 : vector<8x384xf32>
    %1033 = vector.extract_strided_slice %1026 {offsets = [0, 384], sizes = [8, 128], strides = [1, 1]} : vector<8x512xf32> to vector<8x128xf32>
    %1034 = math.tanh %1033 : vector<8x128xf32>
    %1035 = vector.extract_strided_slice %1032 {offsets = [0, 128], sizes = [8, 128], strides = [1, 1]} : vector<8x384xf32> to vector<8x128xf32>
    %1036 = arith.mulf %1035, %1019 : vector<8x128xf32>
    %1037 = vector.extract_strided_slice %1032 {offsets = [0, 0], sizes = [8, 128], strides = [1, 1]} : vector<8x384xf32> to vector<8x128xf32>
    %1038 = arith.mulf %1037, %1034 : vector<8x128xf32>
    %1039 = arith.addf %1036, %1038 : vector<8x128xf32>
    %1040 = vector.extract_strided_slice %1032 {offsets = [0, 256], sizes = [8, 128], strides = [1, 1]} : vector<8x384xf32> to vector<8x128xf32>
    %1041 = math.tanh %1039 : vector<8x128xf32>
    %1042 = arith.mulf %1040, %1041 : vector<8x128xf32>
    %1043 = vector.extract_strided_slice %1042 {offsets = [0, 0], sizes = [2, 128], strides = [1, 1]} : vector<8x128xf32> to vector<2x128xf32>
    %1044 = arith.truncf %1043 : vector<2x128xf32> to vector<2x128xbf16>
    %1045 = vector.extract_strided_slice %1042 {offsets = [2, 0], sizes = [2, 128], strides = [1, 1]} : vector<8x128xf32> to vector<2x128xf32>
    %1046 = arith.truncf %1045 : vector<2x128xf32> to vector<2x128xbf16>
    %c0_328 = arith.constant 0 : index
    %c0_329 = arith.constant 0 : index
    %1047 = vector.load %arg19[%c0_328, %c0_329] : memref<128x32xbf16, #tpu.memory_space<vmem>>, vector<128x32xbf16>
    %cst_330 = arith.constant dense<0.000000e+00> : vector<2x32xf32>
    %1048 = tpu.matmul %1044, %1047, %cst_330 {dimension_numbers = #tpu.dot_dimension_numbers<[1], [0], [0], [1], [0, 0, 1, 1], [], []>} : vector<2x128xbf16>, vector<128x32xbf16>, vector<2x32xf32> -> vector<2x32xf32>
    %c0_331 = arith.constant 0 : index
    %c0_332 = arith.constant 0 : index
    %1049 = vector.load %arg20[%c0_331, %c0_332] : memref<128x32xbf16, #tpu.memory_space<vmem>>, vector<128x32xbf16>
    %cst_333 = arith.constant dense<0.000000e+00> : vector<2x32xf32>
    %1050 = tpu.matmul %1046, %1049, %cst_333 {dimension_numbers = #tpu.dot_dimension_numbers<[1], [0], [0], [1], [0, 0, 1, 1], [], []>} : vector<2x128xbf16>, vector<128x32xbf16>, vector<2x32xf32> -> vector<2x32xf32>
    %1051 = arith.addf %1048, %1050 : vector<2x32xf32>
    %c0_334 = arith.constant 0 : index
    %c0_335 = arith.constant 0 : index
    %1052 = vector.load %arg21[%c0_334, %c0_335] : memref<1x32xf32, #tpu.memory_space<vmem>>, vector<1x32xf32>
    %1053 = vector.broadcast %1052 : vector<1x32xf32> to vector<2x32xf32>
    %1054 = arith.addf %1051, %1053 : vector<2x32xf32>
    %cst_336 = arith.constant 0.000000e+00 : f32
    %1055 = vector.broadcast %cst_336 : f32 to vector<2x32xf32>
    %1056 = arith.maximumf %1054, %1055 : vector<2x32xf32>
    %1057 = arith.truncf %1056 : vector<2x32xf32> to vector<2x32xbf16>
    %c0_337 = arith.constant 0 : index
    %c0_338 = arith.constant 0 : index
    %1058 = vector.load %arg22[%c0_337, %c0_338] : memref<32x128xbf16, #tpu.memory_space<vmem>>, vector<32x128xbf16>
    %cst_339 = arith.constant dense<0.000000e+00> : vector<2x128xf32>
    %1059 = tpu.matmul %1057, %1058, %cst_339 {dimension_numbers = #tpu.dot_dimension_numbers<[1], [0], [0], [1], [0, 0, 1, 1], [], []>} : vector<2x32xbf16>, vector<32x128xbf16>, vector<2x128xf32> -> vector<2x128xf32>
    %c0_340 = arith.constant 0 : index
    %c0_341 = arith.constant 0 : index
    %1060 = vector.load %arg23[%c0_340, %c0_341] : memref<1x128xf32, #tpu.memory_space<vmem>>, vector<1x128xf32>
    %1061 = vector.broadcast %1060 : vector<1x128xf32> to vector<2x128xf32>
    %1062 = arith.addf %1059, %1061 : vector<2x128xf32>
    %1063 = arith.negf %1062 : vector<2x128xf32>
    %1064 = math.exp %1063 : vector<2x128xf32>
    %cst_342 = arith.constant 1.000000e+00 : f32
    %1065 = vector.broadcast %cst_342 : f32 to vector<2x128xf32>
    %1066 = arith.addf %1065, %1064 : vector<2x128xf32>
    %1067 = arith.divf %1065, %1066 : vector<2x128xf32>
    %c0_343 = arith.constant 0 : index
    %c0_344 = arith.constant 0 : index
    %1068 = vector.load %arg24[%c0_343, %c0_344] : memref<2x128xf32, #tpu.memory_space<vmem>>, vector<2x128xf32>
    tpu.vector_store %arg24[%c0_343, %c0_344], %1067 {strides = array<i32>} : memref<2x128xf32, #tpu.memory_space<vmem>>, vector<2x128xf32>,
    return
  }
}

</mosaic_0001>

<llo_original>
// kernel: combined_forward.1
$region0: #{combined_forward.1}
  #allocation0 [shape = 'u32[]', space=smem, size = 0x4, offset = 0x4, fixed_abs, tag = 'smem constant byte address 0x4 - core index']
  #allocation1 [shape = 'u32[144,128]{1,0:T(1,128)}', space=vmem, size = 0x12000, scoped, tag = 'internal scratch']
  #allocation2 [shape = 'f32[64,512]{1,0:T(8,128)}', space=vmem, size = 0x20000, scoped, tag = 'scratch operand']
  #allocation3 [shape = 'f32[64,128]{1,0:T(8,128)}', space=vmem, size = 0x8000, scoped, tag = 'scratch operand']
  #allocation4 [shape = 'f32[64,128]{1,0:T(8,128)}', space=vmem, size = 0x8000, scoped, tag = 'scratch operand']
  %s0 = inlined_call_operand.vmem [shape: f32[64,1], index: 0, kind: input, shape index: {}]
  %s1 = inlined_call_operand.vmem [shape: f32[1,512], index: 1, kind: input, shape index: {}]
  %s2 = inlined_call_operand.vmem [shape: bf16[128,512], index: 2, kind: input, shape index: {}]
  %s3 = inlined_call_operand.vmem [shape: f32[1,512], index: 3, kind: input, shape index: {}]
  %s4 = inlined_call_operand.vmem [shape: bf16[128,512], index: 4, kind: input, shape index: {}]
  %s5 = inlined_call_operand.vmem [shape: bf16[128,512], index: 5, kind: input, shape index: {}]
  %s6 = inlined_call_operand.vmem [shape: f32[1,512], index: 6, kind: input, shape index: {}]
  %s7 = inlined_call_operand.vmem [shape: bf16[128,512], index: 7, kind: input, shape index: {}]
  %s8 = inlined_call_operand.vmem [shape: bf16[128,512], index: 8, kind: input, shape index: {}]
  %s9 = inlined_call_operand.vmem [shape: f32[1,512], index: 9, kind: input, shape index: {}]
  %s10 = inlined_call_operand.vmem [shape: bf16[128,512], index: 10, kind: input, shape index: {}]
  %s11 = inlined_call_operand.vmem [shape: bf16[128,512], index: 11, kind: input, shape index: {}]
  %s12 = inlined_call_operand.vmem [shape: f32[1,512], index: 12, kind: input, shape index: {}]
  %s13 = inlined_call_operand.vmem [shape: bf16[128,512], index: 13, kind: input, shape index: {}]
  %s14 = inlined_call_operand.vmem [shape: bf16[128,512], index: 14, kind: input, shape index: {}]
  %s15 = inlined_call_operand.vmem [shape: f32[1,512], index: 15, kind: input, shape index: {}]
  %s16 = inlined_call_operand.vmem [shape: bf16[128,512], index: 16, kind: input, shape index: {}]
  %s17 = inlined_call_operand.vmem [shape: bf16[128,512], index: 17, kind: input, shape index: {}]
  %s18 = inlined_call_operand.vmem [shape: f32[1,512], index: 18, kind: input, shape index: {}]
  %s19 = inlined_call_operand.vmem [shape: bf16[128,32], index: 19, kind: input, shape index: {}]
  %s20 = inlined_call_operand.vmem [shape: bf16[128,32], index: 20, kind: input, shape index: {}]
  %s21 = inlined_call_operand.vmem [shape: f32[1,32], index: 21, kind: input, shape index: {}]
  %s22 = inlined_call_operand.vmem [shape: bf16[32,128], index: 22, kind: input, shape index: {}]
  %s23 = inlined_call_operand.vmem [shape: f32[1,128], index: 23, kind: input, shape index: {}]
  %s24 = inlined_call_operand.vmem [shape: f32[2,128], index: 24, kind: output, shape index: {}]
  %s25 = sld [smem:[#allocation0]]
  $region106: #{combined_forward.1} parent=0
    _
  %s27 = ssub.s32 1, %s25
  %s28 = scalar_select 0, %s27, %s25
  // Predicated region
  $region2: #{combined_forward.1} parent=0 // pred_check
    _
  $region3: #{combined_forward.1} parent=0 // pred_check_branch
    %30 = sbr.rel (0) target = $region5
  $region4: #{combined_forward.1} parent=0 // pred_region
    _
  $region5: #{combined_forward.1} parent=0 // pred_fallthru
    _
  // Predicated region
  $region6: #{combined_forward.1} parent=0 // pred_check
    _
  $region7: #{combined_forward.1} parent=0 // pred_check_branch
    %32 = sbr.rel (0) target = $region9
  $region8: #{combined_forward.1} parent=0 // pred_region
    _
  $region9: #{combined_forward.1} parent=0 // pred_fallthru
    _
  // Predicated region
  $region10: #{combined_forward.1} parent=0 // pred_check
    _
  $region11: #{combined_forward.1} parent=0 // pred_check_branch
    %34 = sbr.rel (0) target = $region13
  $region12: #{combined_forward.1} parent=0 // pred_region
    _
  $region13: #{combined_forward.1} parent=0 // pred_fallthru
    _
  // Predicated region
  $region14: #{combined_forward.1} parent=0 // pred_check
    _
  $region15: #{combined_forward.1} parent=0 // pred_check_branch
    %36 = sbr.rel (0) target = $region17
  $region16: #{combined_forward.1} parent=0 // pred_region
    _
  $region17: #{combined_forward.1} parent=0 // pred_fallthru
    _
  // Predicated region
  $region18: #{combined_forward.1} parent=0 // pred_check
    _
  $region19: #{combined_forward.1} parent=0 // pred_check_branch
    %38 = sbr.rel (0) target = $region21
  $region20: #{combined_forward.1} parent=0 // pred_region
    _
  $region21: #{combined_forward.1} parent=0 // pred_fallthru
    _
  // Predicated region
  $region22: #{combined_forward.1} parent=0 // pred_check
    _
  $region23: #{combined_forward.1} parent=0 // pred_check_branch
    %40 = sbr.rel (0) target = $region25
  $region24: #{combined_forward.1} parent=0 // pred_region
    _
  $region25: #{combined_forward.1} parent=0 // pred_fallthru
    _
  // Predicated region
  $region26: #{combined_forward.1} parent=0 // pred_check
    _
  $region27: #{combined_forward.1} parent=0 // pred_check_branch
    %42 = sbr.rel (0) target = $region29
  $region28: #{combined_forward.1} parent=0 // pred_region
    _
  $region29: #{combined_forward.1} parent=0 // pred_fallthru
    _
  // Predicated region
  $region30: #{combined_forward.1} parent=0 // pred_check
    _
  $region31: #{combined_forward.1} parent=0 // pred_check_branch
    %44 = sbr.rel (0) target = $region33
  $region32: #{combined_forward.1} parent=0 // pred_region
    _
  $region33: #{combined_forward.1} parent=0 // pred_fallthru
    _
  // Predicated region
  $region34: #{combined_forward.1} parent=0 // pred_check
    _
  $region35: #{combined_forward.1} parent=0 // pred_check_branch
    %46 = sbr.rel (0) target = $region37
  $region36: #{combined_forward.1} parent=0 // pred_region
    _
  $region37: #{combined_forward.1} parent=0 // pred_fallthru
    _
  // Predicated region
  $region38: #{combined_forward.1} parent=0 // pred_check
    _
  $region39: #{combined_forward.1} parent=0 // pred_check_branch
    %48 = sbr.rel (0) target = $region41
  $region40: #{combined_forward.1} parent=0 // pred_region
    _
  $region41: #{combined_forward.1} parent=0 // pred_fallthru
    _
  // Predicated region
  $region42: #{combined_forward.1} parent=0 // pred_check
    _
  $region43: #{combined_forward.1} parent=0 // pred_check_branch
    %50 = sbr.rel (0) target = $region45
  $region44: #{combined_forward.1} parent=0 // pred_region
    _
  $region45: #{combined_forward.1} parent=0 // pred_fallthru
    _
  // Predicated region
  $region46: #{combined_forward.1} parent=0 // pred_check
    _
  $region47: #{combined_forward.1} parent=0 // pred_check_branch
    %52 = sbr.rel (0) target = $region49
  $region48: #{combined_forward.1} parent=0 // pred_region
    _
  $region49: #{combined_forward.1} parent=0 // pred_fallthru
    _
  // Predicated region
  $region50: #{combined_forward.1} parent=0 // pred_check
    _
  $region51: #{combined_forward.1} parent=0 // pred_check_branch
    %54 = sbr.rel (0) target = $region53
  $region52: #{combined_forward.1} parent=0 // pred_region
    _
  $region53: #{combined_forward.1} parent=0 // pred_fallthru
    _
  // Predicated region
  $region54: #{combined_forward.1} parent=0 // pred_check
    _
  $region55: #{combined_forward.1} parent=0 // pred_check_branch
    %56 = sbr.rel (0) target = $region57
  $region56: #{combined_forward.1} parent=0 // pred_region
    _
  $region57: #{combined_forward.1} parent=0 // pred_fallthru
    _
  // Predicated region
  $region58: #{combined_forward.1} parent=0 // pred_check
    _
  $region59: #{combined_forward.1} parent=0 // pred_check_branch
    %58 = sbr.rel (0) target = $region61
  $region60: #{combined_forward.1} parent=0 // pred_region
    _
  $region61: #{combined_forward.1} parent=0 // pred_fallthru
    _
  // Predicated region
  $region62: #{combined_forward.1} parent=0 // pred_check
    _
  $region63: #{combined_forward.1} parent=0 // pred_check_branch
    %60 = sbr.rel (0) target = $region65
  $region64: #{combined_forward.1} parent=0 // pred_region
    _
  $region65: #{combined_forward.1} parent=0 // pred_fallthru
    _
  // Predicated region
  $region66: #{combined_forward.1} parent=0 // pred_check
    _
  $region67: #{combined_forward.1} parent=0 // pred_check_branch
    %62 = sbr.rel (0) target = $region69
  $region68: #{combined_forward.1} parent=0 // pred_region
    _
  $region69: #{combined_forward.1} parent=0 // pred_fallthru
    _
  // Predicated region
  $region70: #{combined_forward.1} parent=0 // pred_check
    _
  $region71: #{combined_forward.1} parent=0 // pred_check_branch
    %64 = sbr.rel (0) target = $region73
  $region72: #{combined_forward.1} parent=0 // pred_region
    _
  $region73: #{combined_forward.1} parent=0 // pred_fallthru
    _
  // Predicated region
  $region74: #{combined_forward.1} parent=0 // pred_check
    _
  $region75: #{combined_forward.1} parent=0 // pred_check_branch
    %66 = sbr.rel (0) target = $region77
  $region76: #{combined_forward.1} parent=0 // pred_region
    _
  $region77: #{combined_forward.1} parent=0 // pred_fallthru
    _
  // Predicated region
  $region78: #{combined_forward.1} parent=0 // pred_check
    _
  $region79: #{combined_forward.1} parent=0 // pred_check_branch
    %68 = sbr.rel (0) target = $region81
  $region80: #{combined_forward.1} parent=0 // pred_region
    _
  $region81: #{combined_forward.1} parent=0 // pred_fallthru
    _
  // Predicated region
  $region82: #{combined_forward.1} parent=0 // pred_check
    _
  $region83: #{combined_forward.1} parent=0 // pred_check_branch
    %70 = sbr.rel (0) target = $region85
  $region84: #{combined_forward.1} parent=0 // pred_region
    _
  $region85: #{combined_forward.1} parent=0 // pred_fallthru
    _
  // Predicated region
  $region86: #{combined_forward.1} parent=0 // pred_check
    _
  $region87: #{combined_forward.1} parent=0 // pred_check_branch
    %72 = sbr.rel (0) target = $region89
  $region88: #{combined_forward.1} parent=0 // pred_region
    _
  $region89: #{combined_forward.1} parent=0 // pred_fallthru
    _
  // Predicated region
  $region90: #{combined_forward.1} parent=0 // pred_check
    _
  $region91: #{combined_forward.1} parent=0 // pred_check_branch
    %74 = sbr.rel (0) target = $region93
  $region92: #{combined_forward.1} parent=0 // pred_region
    _
  $region93: #{combined_forward.1} parent=0 // pred_fallthru
    _
  // Predicated region
  $region94: #{combined_forward.1} parent=0 // pred_check
    _
  $region95: #{combined_forward.1} parent=0 // pred_check_branch
    %76 = sbr.rel (0) target = $region97
  $region96: #{combined_forward.1} parent=0 // pred_region
    _
  $region97: #{combined_forward.1} parent=0 // pred_fallthru
    _
  %v78 = vld [vmem:[%s0] sm:$0xff]
  %v79 = vld [vmem:[%s0 + $0x8] sm:$0xff]
  %v80 = vld [vmem:[%s0 + $0x10] sm:$0xff]
  %v81 = vld [vmem:[%s0 + $0x18] sm:$0xff]
  %v82 = vld [vmem:[%s0 + $0x20] sm:$0xff]
  %v83 = vld [vmem:[%s0 + $0x28] sm:$0xff]
  %v84 = vld [vmem:[%s0 + $0x30] sm:$0xff]
  %v85 = vld [vmem:[%s0 + $0x38] sm:$0xff]
  %v86 = vld [vmem:[%s1] sm:$0xf]
  %88 = vset.pattern.permute.xlu0 0
  %89 = vperm.xlu0 %88, %v78
  %v90 = vpop.permute.xlu0 %89
  %93 = vset.pattern.permute.xlu0 0
  %94 = vperm.xlu0 %93, %v79
  %v95 = vpop.permute.xlu0 %94
  %98 = vset.pattern.permute.xlu0 0
  %99 = vperm.xlu0 %98, %v80
  %v100 = vpop.permute.xlu0 %99
  %103 = vset.pattern.permute.xlu0 0
  %104 = vperm.xlu0 %103, %v81
  %v105 = vpop.permute.xlu0 %104
  %108 = vset.pattern.permute.xlu0 0
  %109 = vperm.xlu0 %108, %v82
  %v110 = vpop.permute.xlu0 %109
  %113 = vset.pattern.permute.xlu0 0
  %114 = vperm.xlu0 %113, %v83
  %v115 = vpop.permute.xlu0 %114
  %118 = vset.pattern.permute.xlu0 0
  %119 = vperm.xlu0 %118, %v84
  %v120 = vpop.permute.xlu0 %119
  %123 = vset.pattern.permute.xlu0 0
  %124 = vperm.xlu0 %123, %v85
  %v125 = vpop.permute.xlu0 %124
  %v128 = vlaneseq
  %v129 = vshrl.u32 %v128, 7
  %v130 = vsub.s32 0, %v129
  %v131 = vrot.slane %v86, %v130
  %v132 = vlaneseq
  %v133 = vshrl.u32 %v132, 7
  %v134 = vsub.s32 1, %v133
  %v135 = vrot.slane %v86, %v134
  %v136 = vlaneseq
  %v137 = vshrl.u32 %v136, 7
  %v138 = vsub.s32 2, %v137
  %v139 = vrot.slane %v86, %v138
  %v140 = vlaneseq
  %v141 = vshrl.u32 %v140, 7
  %v142 = vsub.s32 3, %v141
  %v143 = vrot.slane %v86, %v142
  %v148 = vmul.f32 %v90, %v131
  %v149 = vmul.f32 %v90, %v135
  %v150 = vmul.f32 %v90, %v139
  %v151 = vmul.f32 %v90, %v143
  %v152 = vmul.f32 %v95, %v131
  %v153 = vmul.f32 %v95, %v135
  %v154 = vmul.f32 %v95, %v139
  %v155 = vmul.f32 %v95, %v143
  %v156 = vmul.f32 %v100, %v131
  %v157 = vmul.f32 %v100, %v135
  %v158 = vmul.f32 %v100, %v139
  %v159 = vmul.f32 %v100, %v143
  %v160 = vmul.f32 %v105, %v131
  %v161 = vmul.f32 %v105, %v135
  %v162 = vmul.f32 %v105, %v139
  %v163 = vmul.f32 %v105, %v143
  %v164 = vmul.f32 %v110, %v131
  %v165 = vmul.f32 %v110, %v135
  %v166 = vmul.f32 %v110, %v139
  %v167 = vmul.f32 %v110, %v143
  %v168 = vmul.f32 %v115, %v131
  %v169 = vmul.f32 %v115, %v135
  %v170 = vmul.f32 %v115, %v139
  %v171 = vmul.f32 %v115, %v143
  %v172 = vmul.f32 %v120, %v131
  %v173 = vmul.f32 %v120, %v135
  %v174 = vmul.f32 %v120, %v139
  %v175 = vmul.f32 %v120, %v143
  %v176 = vmul.f32 %v125, %v131
  %v177 = vmul.f32 %v125, %v135
  %v178 = vmul.f32 %v125, %v139
  %v179 = vmul.f32 %v125, %v143
  %v180 = vld [vmem:[%s3] sm:$0xf]
  %v182 = vlaneseq
  %v183 = vshrl.u32 %v182, 7
  %v184 = vsub.s32 0, %v183
  %v185 = vrot.slane %v180, %v184
  %v186 = vlaneseq
  %v187 = vshrl.u32 %v186, 7
  %v188 = vsub.s32 1, %v187
  %v189 = vrot.slane %v180, %v188
  %v190 = vlaneseq
  %v191 = vshrl.u32 %v190, 7
  %v192 = vsub.s32 2, %v191
  %v193 = vrot.slane %v180, %v192
  %v194 = vlaneseq
  %v195 = vshrl.u32 %v194, 7
  %v196 = vsub.s32 3, %v195
  %v197 = vrot.slane %v180, %v196
  %v202 = vadd.f32 %v148, %v185
  %v203 = vadd.f32 %v149, %v189
  %v204 = vadd.f32 %v150, %v193
  %v205 = vadd.f32 %v151, %v197
  %v206 = vadd.f32 %v152, %v185
  %v207 = vadd.f32 %v153, %v189
  %v208 = vadd.f32 %v154, %v193
  %v209 = vadd.f32 %v155, %v197
  %v210 = vadd.f32 %v156, %v185
  %v211 = vadd.f32 %v157, %v189
  %v212 = vadd.f32 %v158, %v193
  %v213 = vadd.f32 %v159, %v197
  %v214 = vadd.f32 %v160, %v185
  %v215 = vadd.f32 %v161, %v189
  %v216 = vadd.f32 %v162, %v193
  %v217 = vadd.f32 %v163, %v197
  %v218 = vadd.f32 %v164, %v185
  %v219 = vadd.f32 %v165, %v189
  %v220 = vadd.f32 %v166, %v193
  %v221 = vadd.f32 %v167, %v197
  %v222 = vadd.f32 %v168, %v185
  %v223 = vadd.f32 %v169, %v189
  %v224 = vadd.f32 %v170, %v193
  %v225 = vadd.f32 %v171, %v197
  %v226 = vadd.f32 %v172, %v185
  %v227 = vadd.f32 %v173, %v189
  %v228 = vadd.f32 %v174, %v193
  %v229 = vadd.f32 %v175, %v197
  %v230 = vadd.f32 %v176, %v185
  %v231 = vadd.f32 %v177, %v189
  %v232 = vadd.f32 %v178, %v193
  %v233 = vadd.f32 %v179, %v197
  %234 = vst [vmem:[#allocation2] sm:$0xff] %v202
  %235 = vst [vmem:[#allocation2 + $0x8] sm:$0xff] %v203
  %236 = vst [vmem:[#allocation2 + $0x10] sm:$0xff] %v204
  %237 = vst [vmem:[#allocation2 + $0x18] sm:$0xff] %v205
  %238 = vst [vmem:[#allocation2 + $0x20] sm:$0xff] %v206
  %239 = vst [vmem:[#allocation2 + $0x28] sm:$0xff] %v207
  %240 = vst [vmem:[#allocation2 + $0x30] sm:$0xff] %v208
  %241 = vst [vmem:[#allocation2 + $0x38] sm:$0xff] %v209
  %242 = vst [vmem:[#allocation2 + $0x40] sm:$0xff] %v210
  %243 = vst [vmem:[#allocation2 + $0x48] sm:$0xff] %v211
  %244 = vst [vmem:[#allocation2 + $0x50] sm:$0xff] %v212
  %245 = vst [vmem:[#allocation2 + $0x58] sm:$0xff] %v213
  %246 = vst [vmem:[#allocation2 + $0x60] sm:$0xff] %v214
  %247 = vst [vmem:[#allocation2 + $0x68] sm:$0xff] %v215
  %248 = vst [vmem:[#allocation2 + $0x70] sm:$0xff] %v216
  %249 = vst [vmem:[#allocation2 + $0x78] sm:$0xff] %v217
  %250 = vst [vmem:[#allocation2 + $0x80] sm:$0xff] %v218
  %251 = vst [vmem:[#allocation2 + $0x88] sm:$0xff] %v219
  %252 = vst [vmem:[#allocation2 + $0x90] sm:$0xff] %v220
  %253 = vst [vmem:[#allocation2 + $0x98] sm:$0xff] %v221
  %254 = vst [vmem:[#allocation2 + $0xa0] sm:$0xff] %v222
  %255 = vst [vmem:[#allocation2 + $0xa8] sm:$0xff] %v223
  %256 = vst [vmem:[#allocation2 + $0xb0] sm:$0xff] %v224
  %257 = vst [vmem:[#allocation2 + $0xb8] sm:$0xff] %v225
  %258 = vst [vmem:[#allocation2 + $0xc0] sm:$0xff] %v226
  %259 = vst [vmem:[#allocation2 + $0xc8] sm:$0xff] %v227
  %260 = vst [vmem:[#allocation2 + $0xd0] sm:$0xff] %v228
  %261 = vst [vmem:[#allocation2 + $0xd8] sm:$0xff] %v229
  %262 = vst [vmem:[#allocation2 + $0xe0] sm:$0xff] %v230
  %263 = vst [vmem:[#allocation2 + $0xe8] sm:$0xff] %v231
  %264 = vst [vmem:[#allocation2 + $0xf0] sm:$0xff] %v232
  %265 = vst [vmem:[#allocation2 + $0xf8] sm:$0xff] %v233
  %v266 = vld [vmem:[%s2] sm:$0xff]
  %v267 = vld [vmem:[%s2 + $0x8] sm:$0xff]
  %v268 = vld [vmem:[%s2 + $0x10] sm:$0xff]
  %v269 = vld [vmem:[%s2 + $0x18] sm:$0xff]
  %v270 = vld [vmem:[%s2 + $0x20] sm:$0xff]
  %v271 = vld [vmem:[%s2 + $0x28] sm:$0xff]
  %v272 = vld [vmem:[%s2 + $0x30] sm:$0xff]
  %v273 = vld [vmem:[%s2 + $0x38] sm:$0xff]
  %v274 = vld [vmem:[%s2 + $0x40] sm:$0xff]
  %v275 = vld [vmem:[%s2 + $0x48] sm:$0xff]
  %v276 = vld [vmem:[%s2 + $0x50] sm:$0xff]
  %v277 = vld [vmem:[%s2 + $0x58] sm:$0xff]
  %v278 = vld [vmem:[%s2 + $0x60] sm:$0xff]
  %v279 = vld [vmem:[%s2 + $0x68] sm:$0xff]
  %v280 = vld [vmem:[%s2 + $0x70] sm:$0xff]
  %v281 = vld [vmem:[%s2 + $0x78] sm:$0xff]
  %v282 = vld [vmem:[%s2 + $0x80] sm:$0xff]
  %v283 = vld [vmem:[%s2 + $0x88] sm:$0xff]
  %v284 = vld [vmem:[%s2 + $0x90] sm:$0xff]
  %v285 = vld [vmem:[%s2 + $0x98] sm:$0xff]
  %v286 = vld [vmem:[%s2 + $0xa0] sm:$0xff]
  %v287 = vld [vmem:[%s2 + $0xa8] sm:$0xff]
  %v288 = vld [vmem:[%s2 + $0xb0] sm:$0xff]
  %v289 = vld [vmem:[%s2 + $0xb8] sm:$0xff]
  %v290 = vld [vmem:[%s2 + $0xc0] sm:$0xff]
  %v291 = vld [vmem:[%s2 + $0xc8] sm:$0xff]
  %v292 = vld [vmem:[%s2 + $0xd0] sm:$0xff]
  %v293 = vld [vmem:[%s2 + $0xd8] sm:$0xff]
  %v294 = vld [vmem:[%s2 + $0xe0] sm:$0xff]
  %v295 = vld [vmem:[%s2 + $0xe8] sm:$0xff]
  %v296 = vld [vmem:[%s2 + $0xf0] sm:$0xff]
  %v297 = vld [vmem:[%s2 + $0xf8] sm:$0xff]
  %v298 = vld [vmem:[#allocation2] sm:$0xff]
  %v299 = vld [vmem:[#allocation2 + $0x8] sm:$0xff]
  %v300 = vld [vmem:[#allocation2 + $0x10] sm:$0xff]
  %v301 = vld [vmem:[#allocation2 + $0x18] sm:$0xff]
  %v302 = vxor.u32 %v298, 2147483648
  %v303 = vxor.u32 %v299, 2147483648
  %v304 = vxor.u32 %v300, 2147483648
  %v305 = vmul.f32 %v302, 1.442695
  %v306 = vpow.pop %v305
  %v307 = vmul.f32 %v303, 1.442695
  %v308 = vpow.pop %v307
  %v309 = vmul.f32 %v304, 1.442695
  %v310 = vpow.pop %v309
  %v311 = vadd.f32 %v306, 1.0
  %v312 = vadd.f32 %v308, 1.0
  %v313 = vadd.f32 %v310, 1.0
  %v314 = vrcp.pop %v311
  %v315 = vmul.f32 1.0, %v314
  %v316 = vrcp.pop %v312
  %v317 = vmul.f32 1.0, %v316
  %v318 = vrcp.pop %v313
  %v319 = vmul.f32 1.0, %v318
  %v320 = vtanh.pop %v301
  %v321 = vmul.f32 %v317, 0.0
  %v322 = vmul.f32 %v315, %v320
  %v323 = vadd.f32 %v321, %v322
  %v324 = vtanh.pop %v323
  %v325 = vmul.f32 %v319, %v324
  %326 = vst [vmem:[#allocation3] sm:$0xff] %v325
  %v327 = vld [vmem:[#allocation2 + $0x20] sm:$0xff]
  %v328 = vld [vmem:[#allocation2 + $0x28] sm:$0xff]
  %v329 = vld [vmem:[#allocation2 + $0x30] sm:$0xff]
  %v330 = vld [vmem:[#allocation2 + $0x38] sm:$0xff]
  %v331 = vpack.c.bf16 %v325, %v325
  %v364 = vunpack.c.l.b16 %v266
  %v365 = vunpack.c.h.b16 %v266
  %v366 = vunpack.c.l.b16 %v267
  %v367 = vunpack.c.h.b16 %v267
  %v368 = vunpack.c.l.b16 %v268
  %v369 = vunpack.c.h.b16 %v268
  %v370 = vunpack.c.l.b16 %v269
  %v371 = vunpack.c.h.b16 %v269
  %v372 = vunpack.c.l.b16 %v270
  %v373 = vunpack.c.h.b16 %v270
  %v374 = vunpack.c.l.b16 %v271
  %v375 = vunpack.c.h.b16 %v271
  %v376 = vunpack.c.l.b16 %v272
  %v377 = vunpack.c.h.b16 %v272
  %v378 = vunpack.c.l.b16 %v273
  %v379 = vunpack.c.h.b16 %v273
  %v380 = vunpack.c.l.b16 %v274
  %v381 = vunpack.c.h.b16 %v274
  %v382 = vunpack.c.l.b16 %v275
  %v383 = vunpack.c.h.b16 %v275
  %v384 = vunpack.c.l.b16 %v276
  %v385 = vunpack.c.h.b16 %v276
  %v386 = vunpack.c.l.b16 %v277
  %v387 = vunpack.c.h.b16 %v277
  %v388 = vunpack.c.l.b16 %v278
  %v389 = vunpack.c.h.b16 %v278
  %v390 = vunpack.c.l.b16 %v279
  %v391 = vunpack.c.h.b16 %v279
  %v392 = vunpack.c.l.b16 %v280
  %v393 = vunpack.c.h.b16 %v280
  %v394 = vunpack.c.l.b16 %v281
  %v395 = vunpack.c.h.b16 %v281
  %v396 = vunpack.c.l.b16 %v282
  %v397 = vunpack.c.h.b16 %v282
  %v398 = vunpack.c.l.b16 %v283
  %v399 = vunpack.c.h.b16 %v283
  %v400 = vunpack.c.l.b16 %v284
  %v401 = vunpack.c.h.b16 %v284
  %v402 = vunpack.c.l.b16 %v285
  %v403 = vunpack.c.h.b16 %v285
  %v404 = vunpack.c.l.b16 %v286
  %v405 = vunpack.c.h.b16 %v286
  %v406 = vunpack.c.l.b16 %v287
  %v407 = vunpack.c.h.b16 %v287
  %v408 = vunpack.c.l.b16 %v288
  %v409 = vunpack.c.h.b16 %v288
  %v410 = vunpack.c.l.b16 %v289
  %v411 = vunpack.c.h.b16 %v289
  %v412 = vunpack.c.l.b16 %v290
  %v413 = vunpack.c.h.b16 %v290
  %v414 = vunpack.c.l.b16 %v291
  %v415 = vunpack.c.h.b16 %v291
  %v416 = vunpack.c.l.b16 %v292
  %v417 = vunpack.c.h.b16 %v292
  %v418 = vunpack.c.l.b16 %v293
  %v419 = vunpack.c.h.b16 %v293
  %v420 = vunpack.c.l.b16 %v294
  %v421 = vunpack.c.h.b16 %v294
  %v422 = vunpack.c.l.b16 %v295
  %v423 = vunpack.c.h.b16 %v295
  %v424 = vunpack.c.l.b16 %v296
  %v425 = vunpack.c.h.b16 %v296
  %v426 = vunpack.c.l.b16 %v297
  %v427 = vunpack.c.h.b16 %v297
  %v428 = vpack.c.b16 %v368, %v364
  %v429 = vpack.c.b16 %v369, %v365
  %v430 = vpack.c.b16 %v370, %v366
  %v431 = vpack.c.b16 %v371, %v367
  %v432 = vpack.c.b16 %v376, %v372
  %v433 = vpack.c.b16 %v377, %v373
  %v434 = vpack.c.b16 %v378, %v374
  %v435 = vpack.c.b16 %v379, %v375
  %v436 = vpack.c.b16 %v384, %v380
  %v437 = vpack.c.b16 %v385, %v381
  %v438 = vpack.c.b16 %v386, %v382
  %v439 = vpack.c.b16 %v387, %v383
  %v440 = vpack.c.b16 %v392, %v388
  %v441 = vpack.c.b16 %v393, %v389
  %v442 = vpack.c.b16 %v394, %v390
  %v443 = vpack.c.b16 %v395, %v391
  %v444 = vpack.c.b16 %v400, %v396
  %v445 = vpack.c.b16 %v401, %v397
  %v446 = vpack.c.b16 %v402, %v398
  %v447 = vpack.c.b16 %v403, %v399
  %v448 = vpack.c.b16 %v408, %v404
  %v449 = vpack.c.b16 %v409, %v405
  %v450 = vpack.c.b16 %v410, %v406
  %v451 = vpack.c.b16 %v411, %v407
  %v452 = vpack.c.b16 %v416, %v412
  %v453 = vpack.c.b16 %v417, %v413
  %v454 = vpack.c.b16 %v418, %v414
  %v455 = vpack.c.b16 %v419, %v415
  %v456 = vpack.c.b16 %v424, %v420
  %v457 = vpack.c.b16 %v425, %v421
  %v458 = vpack.c.b16 %v426, %v422
  %v459 = vpack.c.b16 %v427, %v423
  %492 = vmatprep.subr.bf16.mxu0 %v429
  %493 = vmatpush1.bf16.msra.mxu0 %v428
  %494 = vmatprep.subr.bf16.mxu0 %v433
  %495 = vmatpush1.bf16.msra.mxu0 %v432
  %496 = vmatprep.subr.bf16.mxu0 %v437
  %497 = vmatpush1.bf16.msra.mxu0 %v436
  %498 = vmatprep.subr.bf16.mxu0 %v441
  %499 = vmatpush1.bf16.msra.mxu0 %v440
  %500 = vmatprep.subr.bf16.mxu0 %v445
  %501 = vmatpush1.bf16.msra.mxu0 %v444
  %502 = vmatprep.subr.bf16.mxu0 %v449
  %503 = vmatpush1.bf16.msra.mxu0 %v448
  %504 = vmatprep.subr.bf16.mxu0 %v453
  %505 = vmatpush1.bf16.msra.mxu0 %v452
  %506 = vmatprep.subr.bf16.mxu0 %v457
  %507 = vmatpush1.bf16.msra.mxu0 %v456
  %508 = vmatprep.subr.bf16.mxu0 0
  %509 = vmatpush1.bf16.msra.mxu0 0
  %510 = vmatprep.subr.bf16.mxu0 0
  %511 = vmatpush1.bf16.msra.mxu0 0
  %512 = vmatprep.subr.bf16.mxu0 0
  %513 = vmatpush1.bf16.msra.mxu0 0
  %514 = vmatprep.subr.bf16.mxu0 0
  %515 = vmatpush1.bf16.msra.mxu0 0
  %516 = vmatprep.subr.bf16.mxu0 0
  %517 = vmatpush1.bf16.msra.mxu0 0
  %518 = vmatprep.subr.bf16.mxu0 0
  %519 = vmatpush1.bf16.msra.mxu0 0
  %520 = vmatprep.subr.bf16.mxu0 0
  %521 = vmatpush1.bf16.msra.mxu0 0
  %522 = vmatprep.subr.bf16.mxu0 0
  %523 = vmatpush1.bf16.msra.mxu0 0
  %524 = vmatprep.mubr.bf16.mxu0 0
  %525 = vmatmul.mubr.bf16.gmra.mrb[0].mxu0 %v331
  %v526 = vpop.f32.mrb[0].mxu0
  %v527 = vadd.f32 0.0, %v526
  %v528 = vpop.f32.mrb[0].mxu0
  %v529 = vadd.f32 0.0, %v528
  %v530 = vpop.f32.mrb[0].mxu0
  %v531 = vpop.f32.mrb[0].mxu0
  %532 = vdwg.mxu0
  %533 = vmatprep.subr.bf16.mxu0 %v431
  %534 = vmatpush1.bf16.msra.mxu0 %v430
  %535 = vmatprep.subr.bf16.mxu0 %v435
  %536 = vmatpush1.bf16.msra.mxu0 %v434
  %537 = vmatprep.subr.bf16.mxu0 %v439
  %538 = vmatpush1.bf16.msra.mxu0 %v438
  %539 = vmatprep.subr.bf16.mxu0 %v443
  %540 = vmatpush1.bf16.msra.mxu0 %v442
  %541 = vmatprep.subr.bf16.mxu0 %v447
  %542 = vmatpush1.bf16.msra.mxu0 %v446
  %543 = vmatprep.subr.bf16.mxu0 %v451
  %544 = vmatpush1.bf16.msra.mxu0 %v450
  %545 = vmatprep.subr.bf16.mxu0 %v455
  %546 = vmatpush1.bf16.msra.mxu0 %v454
  %547 = vmatprep.subr.bf16.mxu0 %v459
  %548 = vmatpush1.bf16.msra.mxu0 %v458
  %549 = vmatprep.subr.bf16.mxu0 0
  %550 = vmatpush1.bf16.msra.mxu0 0
  %551 = vmatprep.subr.bf16.mxu0 0
  %552 = vmatpush1.bf16.msra.mxu0 0
  %553 = vmatprep.subr.bf16.mxu0 0
  %554 = vmatpush1.bf16.msra.mxu0 0
  %555 = vmatprep.subr.bf16.mxu0 0
  %556 = vmatpush1.bf16.msra.mxu0 0
  %557 = vmatprep.subr.bf16.mxu0 0
  %558 = vmatpush1.bf16.msra.mxu0 0
  %559 = vmatprep.subr.bf16.mxu0 0
  %560 = vmatpush1.bf16.msra.mxu0 0
  %561 = vmatprep.subr.bf16.mxu0 0
  %562 = vmatpush1.bf16.msra.mxu0 0
  %563 = vmatprep.subr.bf16.mxu0 0
  %564 = vmatpush1.bf16.msra.mxu0 0
  %565 = vmatprep.mubr.bf16.mxu0 0
  %566 = vmatmul.mubr.bf16.gmra.mrb[0].mxu0 %v331
  %v567 = vpop.f32.mrb[0].mxu0
  %v568 = vadd.f32 0.0, %v567
  %v569 = vpop.f32.mrb[0].mxu0
  %v570 = vadd.f32 0.0, %v569
  %v571 = vpop.f32.mrb[0].mxu0
  %v572 = vpop.f32.mrb[0].mxu0
  %573 = vdwg.mxu0
  %v574 = vadd.f32 %v327, %v527
  %v575 = vadd.f32 %v328, %v529
  %v576 = vadd.f32 %v329, %v568
  %v577 = vadd.f32 %v330, %v570
  %v578 = vxor.u32 %v574, 2147483648
  %v579 = vxor.u32 %v575, 2147483648
  %v580 = vxor.u32 %v576, 2147483648
  %v581 = vmul.f32 %v578, 1.442695
  %v582 = vpow.pop %v581
  %v583 = vmul.f32 %v579, 1.442695
  %v584 = vpow.pop %v583
  %v585 = vmul.f32 %v580, 1.442695
  %v586 = vpow.pop %v585
  %v587 = vadd.f32 %v582, 1.0
  %v588 = vadd.f32 %v584, 1.0
  %v589 = vadd.f32 %v586, 1.0
  %v590 = vrcp.pop %v587
  %v591 = vmul.f32 1.0, %v590
  %v592 = vrcp.pop %v588
  %v593 = vmul.f32 1.0, %v592
  %v594 = vrcp.pop %v589
  %v595 = vmul.f32 1.0, %v594
  %v596 = vtanh.pop %v577
  %v597 = vmul.f32 %v593, %v323
  %v598 = vmul.f32 %v591, %v596
  %v599 = vadd.f32 %v597, %v598
  %v600 = vtanh.pop %v599
  %v601 = vmul.f32 %v595, %v600
  %602 = vst [vmem:[#allocation3 + $0x8] sm:$0xff] %v601
  %v603 = vld [vmem:[#allocation2 + $0x40] sm:$0xff]
  %v604 = vld [vmem:[#allocation2 + $0x48] sm:$0xff]
  %v605 = vld [vmem:[#allocation2 + $0x50] sm:$0xff]
  %v606 = vld [vmem:[#allocation2 + $0x58] sm:$0xff]
  %v607 = vpack.c.bf16 %v601, %v601
  %608 = vmatprep.subr.bf16.mxu0 %v429
  %609 = vmatpush1.bf16.msra.mxu0 %v428
  %610 = vmatprep.subr.bf16.mxu0 %v433
  %611 = vmatpush1.bf16.msra.mxu0 %v432
  %612 = vmatprep.subr.bf16.mxu0 %v437
  %613 = vmatpush1.bf16.msra.mxu0 %v436
  %614 = vmatprep.subr.bf16.mxu0 %v441
  %615 = vmatpush1.bf16.msra.mxu0 %v440
  %616 = vmatprep.subr.bf16.mxu0 %v445
  %617 = vmatpush1.bf16.msra.mxu0 %v444
  %618 = vmatprep.subr.bf16.mxu0 %v449
  %619 = vmatpush1.bf16.msra.mxu0 %v448
  %620 = vmatprep.subr.bf16.mxu0 %v453
  %621 = vmatpush1.bf16.msra.mxu0 %v452
  %622 = vmatprep.subr.bf16.mxu0 %v457
  %623 = vmatpush1.bf16.msra.mxu0 %v456
  %624 = vmatprep.subr.bf16.mxu0 0
  %625 = vmatpush1.bf16.msra.mxu0 0
  %626 = vmatprep.subr.bf16.mxu0 0
  %627 = vmatpush1.bf16.msra.mxu0 0
  %628 = vmatprep.subr.bf16.mxu0 0
  %629 = vmatpush1.bf16.msra.mxu0 0
  %630 = vmatprep.subr.bf16.mxu0 0
  %631 = vmatpush1.bf16.msra.mxu0 0
  %632 = vmatprep.subr.bf16.mxu0 0
  %633 = vmatpush1.bf16.msra.mxu0 0
  %634 = vmatprep.subr.bf16.mxu0 0
  %635 = vmatpush1.bf16.msra.mxu0 0
  %636 = vmatprep.subr.bf16.mxu0 0
  %637 = vmatpush1.bf16.msra.mxu0 0
  %638 = vmatprep.subr.bf16.mxu0 0
  %639 = vmatpush1.bf16.msra.mxu0 0
  %640 = vmatprep.mubr.bf16.mxu0 0
  %641 = vmatmul.mubr.bf16.gmra.mrb[0].mxu0 %v607
  %v642 = vpop.f32.mrb[0].mxu0
  %v643 = vadd.f32 0.0, %v642
  %v644 = vpop.f32.mrb[0].mxu0
  %v645 = vadd.f32 0.0, %v644
  %v646 = vpop.f32.mrb[0].mxu0
  %v647 = vpop.f32.mrb[0].mxu0
  %648 = vdwg.mxu0
  %649 = vmatprep.subr.bf16.mxu0 %v431
  %650 = vmatpush1.bf16.msra.mxu0 %v430
  %651 = vmatprep.subr.bf16.mxu0 %v435
  %652 = vmatpush1.bf16.msra.mxu0 %v434
  %653 = vmatprep.subr.bf16.mxu0 %v439
  %654 = vmatpush1.bf16.msra.mxu0 %v438
  %655 = vmatprep.subr.bf16.mxu0 %v443
  %656 = vmatpush1.bf16.msra.mxu0 %v442
  %657 = vmatprep.subr.bf16.mxu0 %v447
  %658 = vmatpush1.bf16.msra.mxu0 %v446
  %659 = vmatprep.subr.bf16.mxu0 %v451
  %660 = vmatpush1.bf16.msra.mxu0 %v450
  %661 = vmatprep.subr.bf16.mxu0 %v455
  %662 = vmatpush1.bf16.msra.mxu0 %v454
  %663 = vmatprep.subr.bf16.mxu0 %v459
  %664 = vmatpush1.bf16.msra.mxu0 %v458
  %665 = vmatprep.subr.bf16.mxu0 0
  %666 = vmatpush1.bf16.msra.mxu0 0
  %667 = vmatprep.subr.bf16.mxu0 0
  %668 = vmatpush1.bf16.msra.mxu0 0
  %669 = vmatprep.subr.bf16.mxu0 0
  %670 = vmatpush1.bf16.msra.mxu0 0
  %671 = vmatprep.subr.bf16.mxu0 0
  %672 = vmatpush1.bf16.msra.mxu0 0
  %673 = vmatprep.subr.bf16.mxu0 0
  %674 = vmatpush1.bf16.msra.mxu0 0
  %675 = vmatprep.subr.bf16.mxu0 0
  %676 = vmatpush1.bf16.msra.mxu0 0
  %677 = vmatprep.subr.bf16.mxu0 0
  %678 = vmatpush1.bf16.msra.mxu0 0
  %679 = vmatprep.subr.bf16.mxu0 0
  %680 = vmatpush1.bf16.msra.mxu0 0
  %681 = vmatprep.mubr.bf16.mxu0 0
  %682 = vmatmul.mubr.bf16.gmra.mrb[0].mxu0 %v607
  %v683 = vpop.f32.mrb[0].mxu0
  %v684 = vadd.f32 0.0, %v683
  %v685 = vpop.f32.mrb[0].mxu0
  %v686 = vadd.f32 0.0, %v685
  %v687 = vpop.f32.mrb[0].mxu0
  %v688 = vpop.f32.mrb[0].mxu0
  %689 = vdwg.mxu0
  %v690 = vadd.f32 %v603, %v643
  %v691 = vadd.f32 %v604, %v645
  %v692 = vadd.f32 %v605, %v684
  %v693 = vadd.f32 %v606, %v686
  %v694 = vxor.u32 %v690, 2147483648
  %v695 = vxor.u32 %v691, 2147483648
  %v696 = vxor.u32 %v692, 2147483648
  %v697 = vmul.f32 %v694, 1.442695
  %v698 = vpow.pop %v697
  %v699 = vmul.f32 %v695, 1.442695
  %v700 = vpow.pop %v699
  %v701 = vmul.f32 %v696, 1.442695
  %v702 = vpow.pop %v701
  %v703 = vadd.f32 %v698, 1.0
  %v704 = vadd.f32 %v700, 1.0
  %v705 = vadd.f32 %v702, 1.0
  %v706 = vrcp.pop %v703
  %v707 = vmul.f32 1.0, %v706
  %v708 = vrcp.pop %v704
  %v709 = vmul.f32 1.0, %v708
  %v710 = vrcp.pop %v705
  %v711 = vmul.f32 1.0, %v710
  %v712 = vtanh.pop %v693
  %v713 = vmul.f32 %v709, %v599
  %v714 = vmul.f32 %v707, %v712
  %v715 = vadd.f32 %v713, %v714
  %v716 = vtanh.pop %v715
  %v717 = vmul.f32 %v711, %v716
  %718 = vst [vmem:[#allocation3 + $0x10] sm:$0xff] %v717
  %v719 = vld [vmem:[#allocation2 + $0x60] sm:$0xff]
  %v720 = vld [vmem:[#allocation2 + $0x68] sm:$0xff]
  %v721 = vld [vmem:[#allocation2 + $0x70] sm:$0xff]
  %v722 = vld [vmem:[#allocation2 + $0x78] sm:$0xff]
  %v723 = vpack.c.bf16 %v717, %v717
  %724 = vmatprep.subr.bf16.mxu0 %v429
  %725 = vmatpush1.bf16.msra.mxu0 %v428
  %726 = vmatprep.subr.bf16.mxu0 %v433
  %727 = vmatpush1.bf16.msra.mxu0 %v432
  %728 = vmatprep.subr.bf16.mxu0 %v437
  %729 = vmatpush1.bf16.msra.mxu0 %v436
  %730 = vmatprep.subr.bf16.mxu0 %v441
  %731 = vmatpush1.bf16.msra.mxu0 %v440
  %732 = vmatprep.subr.bf16.mxu0 %v445
  %733 = vmatpush1.bf16.msra.mxu0 %v444
  %734 = vmatprep.subr.bf16.mxu0 %v449
  %735 = vmatpush1.bf16.msra.mxu0 %v448
  %736 = vmatprep.subr.bf16.mxu0 %v453
  %737 = vmatpush1.bf16.msra.mxu0 %v452
  %738 = vmatprep.subr.bf16.mxu0 %v457
  %739 = vmatpush1.bf16.msra.mxu0 %v456
  %740 = vmatprep.subr.bf16.mxu0 0
  %741 = vmatpush1.bf16.msra.mxu0 0
  %742 = vmatprep.subr.bf16.mxu0 0
  %743 = vmatpush1.bf16.msra.mxu0 0
  %744 = vmatprep.subr.bf16.mxu0 0
  %745 = vmatpush1.bf16.msra.mxu0 0
  %746 = vmatprep.subr.bf16.mxu0 0
  %747 = vmatpush1.bf16.msra.mxu0 0
  %748 = vmatprep.subr.bf16.mxu0 0
  %749 = vmatpush1.bf16.msra.mxu0 0
  %750 = vmatprep.subr.bf16.mxu0 0
  %751 = vmatpush1.bf16.msra.mxu0 0
  %752 = vmatprep.subr.bf16.mxu0 0
  %753 = vmatpush1.bf16.msra.mxu0 0
  %754 = vmatprep.subr.bf16.mxu0 0
  %755 = vmatpush1.bf16.msra.mxu0 0
  %756 = vmatprep.mubr.bf16.mxu0 0
  %757 = vmatmul.mubr.bf16.gmra.mrb[0].mxu0 %v723
  %v758 = vpop.f32.mrb[0].mxu0
  %v759 = vadd.f32 0.0, %v758
  %v760 = vpop.f32.mrb[0].mxu0
  %v761 = vadd.f32 0.0, %v760
  %v762 = vpop.f32.mrb[0].mxu0
  %v763 = vpop.f32.mrb[0].mxu0
  %764 = vdwg.mxu0
  %765 = vmatprep.subr.bf16.mxu0 %v431
  %766 = vmatpush1.bf16.msra.mxu0 %v430
  %767 = vmatprep.subr.bf16.mxu0 %v435
  %768 = vmatpush1.bf16.msra.mxu0 %v434
  %769 = vmatprep.subr.bf16.mxu0 %v439
  %770 = vmatpush1.bf16.msra.mxu0 %v438
  %771 = vmatprep.subr.bf16.mxu0 %v443
  %772 = vmatpush1.bf16.msra.mxu0 %v442
  %773 = vmatprep.subr.bf16.mxu0 %v447
  %774 = vmatpush1.bf16.msra.mxu0 %v446
  %775 = vmatprep.subr.bf16.mxu0 %v451
  %776 = vmatpush1.bf16.msra.mxu0 %v450
  %777 = vmatprep.subr.bf16.mxu0 %v455
  %778 = vmatpush1.bf16.msra.mxu0 %v454
  %779 = vmatprep.subr.bf16.mxu0 %v459
  %780 = vmatpush1.bf16.msra.mxu0 %v458
  %781 = vmatprep.subr.bf16.mxu0 0
  %782 = vmatpush1.bf16.msra.mxu0 0
  %783 = vmatprep.subr.bf16.mxu0 0
  %784 = vmatpush1.bf16.msra.mxu0 0
  %785 = vmatprep.subr.bf16.mxu0 0
  %786 = vmatpush1.bf16.msra.mxu0 0
  %787 = vmatprep.subr.bf16.mxu0 0
  %788 = vmatpush1.bf16.msra.mxu0 0
  %789 = vmatprep.subr.bf16.mxu0 0
  %790 = vmatpush1.bf16.msra.mxu0 0
  %791 = vmatprep.subr.bf16.mxu0 0
  %792 = vmatpush1.bf16.msra.mxu0 0
  %793 = vmatprep.subr.bf16.mxu0 0
  %794 = vmatpush1.bf16.msra.mxu0 0
  %795 = vmatprep.subr.bf16.mxu0 0
  %796 = vmatpush1.bf16.msra.mxu0 0
  %797 = vmatprep.mubr.bf16.mxu0 0
  %798 = vmatmul.mubr.bf16.gmra.mrb[0].mxu0 %v723
  %v799 = vpop.f32.mrb[0].mxu0
  %v800 = vadd.f32 0.0, %v799
  %v801 = vpop.f32.mrb[0].mxu0
  %v802 = vadd.f32 0.0, %v801
  %v803 = vpop.f32.mrb[0].mxu0
  %v804 = vpop.f32.mrb[0].mxu0
  %805 = vdwg.mxu0
  %v806 = vadd.f32 %v719, %v759
  %v807 = vadd.f32 %v720, %v761
  %v808 = vadd.f32 %v721, %v800
  %v809 = vadd.f32 %v722, %v802
  %v810 = vxor.u32 %v806, 2147483648
  %v811 = vxor.u32 %v807, 2147483648
  %v812 = vxor.u32 %v808, 2147483648
  %v813 = vmul.f32 %v810, 1.442695
  %v814 = vpow.pop %v813
  %v815 = vmul.f32 %v811, 1.442695
  %v816 = vpow.pop %v815
  %v817 = vmul.f32 %v812, 1.442695
  %v818 = vpow.pop %v817
  %v819 = vadd.f32 %v814, 1.0
  %v820 = vadd.f32 %v816, 1.0
  %v821 = vadd.f32 %v818, 1.0
  %v822 = vrcp.pop %v819
  %v823 = vmul.f32 1.0, %v822
  %v824 = vrcp.pop %v820
  %v825 = vmul.f32 1.0, %v824
  %v826 = vrcp.pop %v821
  %v827 = vmul.f32 1.0, %v826
  %v828 = vtanh.pop %v809
  %v829 = vmul.f32 %v825, %v715
  %v830 = vmul.f32 %v823, %v828
  %v831 = vadd.f32 %v829, %v830
  %v832 = vtanh.pop %v831
  %v833 = vmul.f32 %v827, %v832
  %834 = vst [vmem:[#allocation3 + $0x18] sm:$0xff] %v833
  %v835 = vld [vmem:[#allocation2 + $0x80] sm:$0xff]
  %v836 = vld [vmem:[#allocation2 + $0x88] sm:$0xff]
  %v837 = vld [vmem:[#allocation2 + $0x90] sm:$0xff]
  %v838 = vld [vmem:[#allocation2 + $0x98] sm:$0xff]
  %v839 = vpack.c.bf16 %v833, %v833
  %840 = vmatprep.subr.bf16.mxu0 %v429
  %841 = vmatpush1.bf16.msra.mxu0 %v428
  %842 = vmatprep.subr.bf16.mxu0 %v433
  %843 = vmatpush1.bf16.msra.mxu0 %v432
  %844 = vmatprep.subr.bf16.mxu0 %v437
  %845 = vmatpush1.bf16.msra.mxu0 %v436
  %846 = vmatprep.subr.bf16.mxu0 %v441
  %847 = vmatpush1.bf16.msra.mxu0 %v440
  %848 = vmatprep.subr.bf16.mxu0 %v445
  %849 = vmatpush1.bf16.msra.mxu0 %v444
  %850 = vmatprep.subr.bf16.mxu0 %v449
  %851 = vmatpush1.bf16.msra.mxu0 %v448
  %852 = vmatprep.subr.bf16.mxu0 %v453
  %853 = vmatpush1.bf16.msra.mxu0 %v452
  %854 = vmatprep.subr.bf16.mxu0 %v457
  %855 = vmatpush1.bf16.msra.mxu0 %v456
  %856 = vmatprep.subr.bf16.mxu0 0
  %857 = vmatpush1.bf16.msra.mxu0 0
  %858 = vmatprep.subr.bf16.mxu0 0
  %859 = vmatpush1.bf16.msra.mxu0 0
  %860 = vmatprep.subr.bf16.mxu0 0
  %861 = vmatpush1.bf16.msra.mxu0 0
  %862 = vmatprep.subr.bf16.mxu0 0
  %863 = vmatpush1.bf16.msra.mxu0 0
  %864 = vmatprep.subr.bf16.mxu0 0
  %865 = vmatpush1.bf16.msra.mxu0 0
  %866 = vmatprep.subr.bf16.mxu0 0
  %867 = vmatpush1.bf16.msra.mxu0 0
  %868 = vmatprep.subr.bf16.mxu0 0
  %869 = vmatpush1.bf16.msra.mxu0 0
  %870 = vmatprep.subr.bf16.mxu0 0
  %871 = vmatpush1.bf16.msra.mxu0 0
  %872 = vmatprep.mubr.bf16.mxu0 0
  %873 = vmatmul.mubr.bf16.gmra.mrb[0].mxu0 %v839
  %v874 = vpop.f32.mrb[0].mxu0
  %v875 = vadd.f32 0.0, %v874
  %v876 = vpop.f32.mrb[0].mxu0
  %v877 = vadd.f32 0.0, %v876
  %v878 = vpop.f32.mrb[0].mxu0
  %v879 = vpop.f32.mrb[0].mxu0
  %880 = vdwg.mxu0
  %881 = vmatprep.subr.bf16.mxu0 %v431
  %882 = vmatpush1.bf16.msra.mxu0 %v430
  %883 = vmatprep.subr.bf16.mxu0 %v435
  %884 = vmatpush1.bf16.msra.mxu0 %v434
  %885 = vmatprep.subr.bf16.mxu0 %v439
  %886 = vmatpush1.bf16.msra.mxu0 %v438
  %887 = vmatprep.subr.bf16.mxu0 %v443
  %888 = vmatpush1.bf16.msra.mxu0 %v442
  %889 = vmatprep.subr.bf16.mxu0 %v447
  %890 = vmatpush1.bf16.msra.mxu0 %v446
  %891 = vmatprep.subr.bf16.mxu0 %v451
  %892 = vmatpush1.bf16.msra.mxu0 %v450
  %893 = vmatprep.subr.bf16.mxu0 %v455
  %894 = vmatpush1.bf16.msra.mxu0 %v454
  %895 = vmatprep.subr.bf16.mxu0 %v459
  %896 = vmatpush1.bf16.msra.mxu0 %v458
  %897 = vmatprep.subr.bf16.mxu0 0
  %898 = vmatpush1.bf16.msra.mxu0 0
  %899 = vmatprep.subr.bf16.mxu0 0
  %900 = vmatpush1.bf16.msra.mxu0 0
  %901 = vmatprep.subr.bf16.mxu0 0
  %902 = vmatpush1.bf16.msra.mxu0 0
  %903 = vmatprep.subr.bf16.mxu0 0
  %904 = vmatpush1.bf16.msra.mxu0 0
  %905 = vmatprep.subr.bf16.mxu0 0
  %906 = vmatpush1.bf16.msra.mxu0 0
  %907 = vmatprep.subr.bf16.mxu0 0
  %908 = vmatpush1.bf16.msra.mxu0 0
  %909 = vmatprep.subr.bf16.mxu0 0
  %910 = vmatpush1.bf16.msra.mxu0 0
  %911 = vmatprep.subr.bf16.mxu0 0
  %912 = vmatpush1.bf16.msra.mxu0 0
  %913 = vmatprep.mubr.bf16.mxu0 0
  %914 = vmatmul.mubr.bf16.gmra.mrb[0].mxu0 %v839
  %v915 = vpop.f32.mrb[0].mxu0
  %v916 = vadd.f32 0.0, %v915
  %v917 = vpop.f32.mrb[0].mxu0
  %v918 = vadd.f32 0.0, %v917
  %v919 = vpop.f32.mrb[0].mxu0
  %v920 = vpop.f32.mrb[0].mxu0
  %921 = vdwg.mxu0
  %v922 = vadd.f32 %v835, %v875
  %v923 = vadd.f32 %v836, %v877
  %v924 = vadd.f32 %v837, %v916
  %v925 = vadd.f32 %v838, %v918
  %v926 = vxor.u32 %v922, 2147483648
  %v927 = vxor.u32 %v923, 2147483648
  %v928 = vxor.u32 %v924, 2147483648
  %v929 = vmul.f32 %v926, 1.442695
  %v930 = vpow.pop %v929
  %v931 = vmul.f32 %v927, 1.442695
  %v932 = vpow.pop %v931
  %v933 = vmul.f32 %v928, 1.442695
  %v934 = vpow.pop %v933
  %v935 = vadd.f32 %v930, 1.0
  %v936 = vadd.f32 %v932, 1.0
  %v937 = vadd.f32 %v934, 1.0
  %v938 = vrcp.pop %v935
  %v939 = vmul.f32 1.0, %v938
  %v940 = vrcp.pop %v936
  %v941 = vmul.f32 1.0, %v940
  %v942 = vrcp.pop %v937
  %v943 = vmul.f32 1.0, %v942
  %v944 = vtanh.pop %v925
  %v945 = vmul.f32 %v941, %v831
  %v946 = vmul.f32 %v939, %v944
  %v947 = vadd.f32 %v945, %v946
  %v948 = vtanh.pop %v947
  %v949 = vmul.f32 %v943, %v948
  %950 = vst [vmem:[#allocation3 + $0x20] sm:$0xff] %v949
  %v951 = vld [vmem:[#allocation2 + $0xa0] sm:$0xff]
  %v952 = vld [vmem:[#allocation2 + $0xa8] sm:$0xff]
  %v953 = vld [vmem:[#allocation2 + $0xb0] sm:$0xff]
  %v954 = vld [vmem:[#allocation2 + $0xb8] sm:$0xff]
  %v955 = vpack.c.bf16 %v949, %v949
  %956 = vmatprep.subr.bf16.mxu0 %v429
  %957 = vmatpush1.bf16.msra.mxu0 %v428
  %958 = vmatprep.subr.bf16.mxu0 %v433
  %959 = vmatpush1.bf16.msra.mxu0 %v432
  %960 = vmatprep.subr.bf16.mxu0 %v437
  %961 = vmatpush1.bf16.msra.mxu0 %v436
  %962 = vmatprep.subr.bf16.mxu0 %v441
  %963 = vmatpush1.bf16.msra.mxu0 %v440
  %964 = vmatprep.subr.bf16.mxu0 %v445
  %965 = vmatpush1.bf16.msra.mxu0 %v444
  %966 = vmatprep.subr.bf16.mxu0 %v449
  %967 = vmatpush1.bf16.msra.mxu0 %v448
  %968 = vmatprep.subr.bf16.mxu0 %v453
  %969 = vmatpush1.bf16.msra.mxu0 %v452
  %970 = vmatprep.subr.bf16.mxu0 %v457
  %971 = vmatpush1.bf16.msra.mxu0 %v456
  %972 = vmatprep.subr.bf16.mxu0 0
  %973 = vmatpush1.bf16.msra.mxu0 0
  %974 = vmatprep.subr.bf16.mxu0 0
  %975 = vmatpush1.bf16.msra.mxu0 0
  %976 = vmatprep.subr.bf16.mxu0 0
  %977 = vmatpush1.bf16.msra.mxu0 0
  %978 = vmatprep.subr.bf16.mxu0 0
  %979 = vmatpush1.bf16.msra.mxu0 0
  %980 = vmatprep.subr.bf16.mxu0 0
  %981 = vmatpush1.bf16.msra.mxu0 0
  %982 = vmatprep.subr.bf16.mxu0 0
  %983 = vmatpush1.bf16.msra.mxu0 0
  %984 = vmatprep.subr.bf16.mxu0 0
  %985 = vmatpush1.bf16.msra.mxu0 0
  %986 = vmatprep.subr.bf16.mxu0 0
  %987 = vmatpush1.bf16.msra.mxu0 0
  %988 = vmatprep.mubr.bf16.mxu0 0
  %989 = vmatmul.mubr.bf16.gmra.mrb[0].mxu0 %v955
  %v990 = vpop.f32.mrb[0].mxu0
  %v991 = vadd.f32 0.0, %v990
  %v992 = vpop.f32.mrb[0].mxu0
  %v993 = vadd.f32 0.0, %v992
  %v994 = vpop.f32.mrb[0].mxu0
  %v995 = vpop.f32.mrb[0].mxu0
  %996 = vdwg.mxu0
  %997 = vmatprep.subr.bf16.mxu0 %v431
  %998 = vmatpush1.bf16.msra.mxu0 %v430
  %999 = vmatprep.subr.bf16.mxu0 %v435
  %1000 = vmatpush1.bf16.msra.mxu0 %v434
  %1001 = vmatprep.subr.bf16.mxu0 %v439
  %1002 = vmatpush1.bf16.msra.mxu0 %v438
  %1003 = vmatprep.subr.bf16.mxu0 %v443
  %1004 = vmatpush1.bf16.msra.mxu0 %v442
  %1005 = vmatprep.subr.bf16.mxu0 %v447
  %1006 = vmatpush1.bf16.msra.mxu0 %v446
  %1007 = vmatprep.subr.bf16.mxu0 %v451
  %1008 = vmatpush1.bf16.msra.mxu0 %v450
  %1009 = vmatprep.subr.bf16.mxu0 %v455
  %1010 = vmatpush1.bf16.msra.mxu0 %v454
  %1011 = vmatprep.subr.bf16.mxu0 %v459
  %1012 = vmatpush1.bf16.msra.mxu0 %v458
  %1013 = vmatprep.subr.bf16.mxu0 0
  %1014 = vmatpush1.bf16.msra.mxu0 0
  %1015 = vmatprep.subr.bf16.mxu0 0
  %1016 = vmatpush1.bf16.msra.mxu0 0
  %1017 = vmatprep.subr.bf16.mxu0 0
  %1018 = vmatpush1.bf16.msra.mxu0 0
  %1019 = vmatprep.subr.bf16.mxu0 0
  %1020 = vmatpush1.bf16.msra.mxu0 0
  %1021 = vmatprep.subr.bf16.mxu0 0
  %1022 = vmatpush1.bf16.msra.mxu0 0
  %1023 = vmatprep.subr.bf16.mxu0 0
  %1024 = vmatpush1.bf16.msra.mxu0 0
  %1025 = vmatprep.subr.bf16.mxu0 0
  %1026 = vmatpush1.bf16.msra.mxu0 0
  %1027 = vmatprep.subr.bf16.mxu0 0
  %1028 = vmatpush1.bf16.msra.mxu0 0
  %1029 = vmatprep.mubr.bf16.mxu0 0
  %1030 = vmatmul.mubr.bf16.gmra.mrb[0].mxu0 %v955
  %v1031 = vpop.f32.mrb[0].mxu0
  %v1032 = vadd.f32 0.0, %v1031
  %v1033 = vpop.f32.mrb[0].mxu0
  %v1034 = vadd.f32 0.0, %v1033
  %v1035 = vpop.f32.mrb[0].mxu0
  %v1036 = vpop.f32.mrb[0].mxu0
  %1037 = vdwg.mxu0
  %v1038 = vadd.f32 %v951, %v991
  %v1039 = vadd.f32 %v952, %v993
  %v1040 = vadd.f32 %v953, %v1032
  %v1041 = vadd.f32 %v954, %v1034
  %v1042 = vxor.u32 %v1038, 2147483648
  %v1043 = vxor.u32 %v1039, 2147483648
  %v1044 = vxor.u32 %v1040, 2147483648
  %v1045 = vmul.f32 %v1042, 1.442695
  %v1046 = vpow.pop %v1045
  %v1047 = vmul.f32 %v1043, 1.442695
  %v1048 = vpow.pop %v1047
  %v1049 = vmul.f32 %v1044, 1.442695
  %v1050 = vpow.pop %v1049
  %v1051 = vadd.f32 %v1046, 1.0
  %v1052 = vadd.f32 %v1048, 1.0
  %v1053 = vadd.f32 %v1050, 1.0
  %v1054 = vrcp.pop %v1051
  %v1055 = vmul.f32 1.0, %v1054
  %v1056 = vrcp.pop %v1052
  %v1057 = vmul.f32 1.0, %v1056
  %v1058 = vrcp.pop %v1053
  %v1059 = vmul.f32 1.0, %v1058
  %v1060 = vtanh.pop %v1041
  %v1061 = vmul.f32 %v1057, %v947
  %v1062 = vmul.f32 %v1055, %v1060
  %v1063 = vadd.f32 %v1061, %v1062
  %v1064 = vtanh.pop %v1063
  %v1065 = vmul.f32 %v1059, %v1064
  %1066 = vst [vmem:[#allocation3 + $0x28] sm:$0xff] %v1065
  %v1067 = vld [vmem:[#allocation2 + $0xc0] sm:$0xff]
  %v1068 = vld [vmem:[#allocation2 + $0xc8] sm:$0xff]
  %v1069 = vld [vmem:[#allocation2 + $0xd0] sm:$0xff]
  %v1070 = vld [vmem:[#allocation2 + $0xd8] sm:$0xff]
  %v1071 = vpack.c.bf16 %v1065, %v1065
  %1072 = vmatprep.subr.bf16.mxu0 %v429
  %1073 = vmatpush1.bf16.msra.mxu0 %v428
  %1074 = vmatprep.subr.bf16.mxu0 %v433
  %1075 = vmatpush1.bf16.msra.mxu0 %v432
  %1076 = vmatprep.subr.bf16.mxu0 %v437
  %1077 = vmatpush1.bf16.msra.mxu0 %v436
  %1078 = vmatprep.subr.bf16.mxu0 %v441
  %1079 = vmatpush1.bf16.msra.mxu0 %v440
  %1080 = vmatprep.subr.bf16.mxu0 %v445
  %1081 = vmatpush1.bf16.msra.mxu0 %v444
  %1082 = vmatprep.subr.bf16.mxu0 %v449
  %1083 = vmatpush1.bf16.msra.mxu0 %v448
  %1084 = vmatprep.subr.bf16.mxu0 %v453
  %1085 = vmatpush1.bf16.msra.mxu0 %v452
  %1086 = vmatprep.subr.bf16.mxu0 %v457
  %1087 = vmatpush1.bf16.msra.mxu0 %v456
  %1088 = vmatprep.subr.bf16.mxu0 0
  %1089 = vmatpush1.bf16.msra.mxu0 0
  %1090 = vmatprep.subr.bf16.mxu0 0
  %1091 = vmatpush1.bf16.msra.mxu0 0
  %1092 = vmatprep.subr.bf16.mxu0 0
  %1093 = vmatpush1.bf16.msra.mxu0 0
  %1094 = vmatprep.subr.bf16.mxu0 0
  %1095 = vmatpush1.bf16.msra.mxu0 0
  %1096 = vmatprep.subr.bf16.mxu0 0
  %1097 = vmatpush1.bf16.msra.mxu0 0
  %1098 = vmatprep.subr.bf16.mxu0 0
  %1099 = vmatpush1.bf16.msra.mxu0 0
  %1100 = vmatprep.subr.bf16.mxu0 0
  %1101 = vmatpush1.bf16.msra.mxu0 0
  %1102 = vmatprep.subr.bf16.mxu0 0
  %1103 = vmatpush1.bf16.msra.mxu0 0
  %1104 = vmatprep.mubr.bf16.mxu0 0
  %1105 = vmatmul.mubr.bf16.gmra.mrb[0].mxu0 %v1071
  %v1106 = vpop.f32.mrb[0].mxu0
  %v1107 = vadd.f32 0.0, %v1106
  %v1108 = vpop.f32.mrb[0].mxu0
  %v1109 = vadd.f32 0.0, %v1108
  %v1110 = vpop.f32.mrb[0].mxu0
  %v1111 = vpop.f32.mrb[0].mxu0
  %1112 = vdwg.mxu0
  %1113 = vmatprep.subr.bf16.mxu0 %v431
  %1114 = vmatpush1.bf16.msra.mxu0 %v430
  %1115 = vmatprep.subr.bf16.mxu0 %v435
  %1116 = vmatpush1.bf16.msra.mxu0 %v434
  %1117 = vmatprep.subr.bf16.mxu0 %v439
  %1118 = vmatpush1.bf16.msra.mxu0 %v438
  %1119 = vmatprep.subr.bf16.mxu0 %v443
  %1120 = vmatpush1.bf16.msra.mxu0 %v442
  %1121 = vmatprep.subr.bf16.mxu0 %v447
  %1122 = vmatpush1.bf16.msra.mxu0 %v446
  %1123 = vmatprep.subr.bf16.mxu0 %v451
  %1124 = vmatpush1.bf16.msra.mxu0 %v450
  %1125 = vmatprep.subr.bf16.mxu0 %v455
  %1126 = vmatpush1.bf16.msra.mxu0 %v454
  %1127 = vmatprep.subr.bf16.mxu0 %v459
  %1128 = vmatpush1.bf16.msra.mxu0 %v458
  %1129 = vmatprep.subr.bf16.mxu0 0
  %1130 = vmatpush1.bf16.msra.mxu0 0
  %1131 = vmatprep.subr.bf16.mxu0 0
  %1132 = vmatpush1.bf16.msra.mxu0 0
  %1133 = vmatprep.subr.bf16.mxu0 0
  %1134 = vmatpush1.bf16.msra.mxu0 0
  %1135 = vmatprep.subr.bf16.mxu0 0
  %1136 = vmatpush1.bf16.msra.mxu0 0
  %1137 = vmatprep.subr.bf16.mxu0 0
  %1138 = vmatpush1.bf16.msra.mxu0 0
  %1139 = vmatprep.subr.bf16.mxu0 0
  %1140 = vmatpush1.bf16.msra.mxu0 0
  %1141 = vmatprep.subr.bf16.mxu0 0
  %1142 = vmatpush1.bf16.msra.mxu0 0
  %1143 = vmatprep.subr.bf16.mxu0 0
  %1144 = vmatpush1.bf16.msra.mxu0 0
  %1145 = vmatprep.mubr.bf16.mxu0 0
  %1146 = vmatmul.mubr.bf16.gmra.mrb[0].mxu0 %v1071
  %v1147 = vpop.f32.mrb[0].mxu0
  %v1148 = vadd.f32 0.0, %v1147
  %v1149 = vpop.f32.mrb[0].mxu0
  %v1150 = vadd.f32 0.0, %v1149
  %v1151 = vpop.f32.mrb[0].mxu0
  %v1152 = vpop.f32.mrb[0].mxu0
  %1153 = vdwg.mxu0
  %v1154 = vadd.f32 %v1067, %v1107
  %v1155 = vadd.f32 %v1068, %v1109
  %v1156 = vadd.f32 %v1069, %v1148
  %v1157 = vadd.f32 %v1070, %v1150
  %v1158 = vxor.u32 %v1154, 2147483648
  %v1159 = vxor.u32 %v1155, 2147483648
  %v1160 = vxor.u32 %v1156, 2147483648
  %v1161 = vmul.f32 %v1158, 1.442695
  %v1162 = vpow.pop %v1161
  %v1163 = vmul.f32 %v1159, 1.442695
  %v1164 = vpow.pop %v1163
  %v1165 = vmul.f32 %v1160, 1.442695
  %v1166 = vpow.pop %v1165
  %v1167 = vadd.f32 %v1162, 1.0
  %v1168 = vadd.f32 %v1164, 1.0
  %v1169 = vadd.f32 %v1166, 1.0
  %v1170 = vrcp.pop %v1167
  %v1171 = vmul.f32 1.0, %v1170
  %v1172 = vrcp.pop %v1168
  %v1173 = vmul.f32 1.0, %v1172
  %v1174 = vrcp.pop %v1169
  %v1175 = vmul.f32 1.0, %v1174
  %v1176 = vtanh.pop %v1157
  %v1177 = vmul.f32 %v1173, %v1063
  %v1178 = vmul.f32 %v1171, %v1176
  %v1179 = vadd.f32 %v1177, %v1178
  %v1180 = vtanh.pop %v1179
  %v1181 = vmul.f32 %v1175, %v1180
  %1182 = vst [vmem:[#allocation3 + $0x30] sm:$0xff] %v1181
  %v1183 = vld [vmem:[#allocation2 + $0xe0] sm:$0xff]
  %v1184 = vld [vmem:[#allocation2 + $0xe8] sm:$0xff]
  %v1185 = vld [vmem:[#allocation2 + $0xf0] sm:$0xff]
  %v1186 = vld [vmem:[#allocation2 + $0xf8] sm:$0xff]
  %v1187 = vpack.c.bf16 %v1181, %v1181
  %1188 = vmatprep.subr.bf16.mxu0 %v429
  %1189 = vmatpush1.bf16.msra.mxu0 %v428
  %1190 = vmatprep.subr.bf16.mxu0 %v433
  %1191 = vmatpush1.bf16.msra.mxu0 %v432
  %1192 = vmatprep.subr.bf16.mxu0 %v437
  %1193 = vmatpush1.bf16.msra.mxu0 %v436
  %1194 = vmatprep.subr.bf16.mxu0 %v441
  %1195 = vmatpush1.bf16.msra.mxu0 %v440
  %1196 = vmatprep.subr.bf16.mxu0 %v445
  %1197 = vmatpush1.bf16.msra.mxu0 %v444
  %1198 = vmatprep.subr.bf16.mxu0 %v449
  %1199 = vmatpush1.bf16.msra.mxu0 %v448
  %1200 = vmatprep.subr.bf16.mxu0 %v453
  %1201 = vmatpush1.bf16.msra.mxu0 %v452
  %1202 = vmatprep.subr.bf16.mxu0 %v457
  %1203 = vmatpush1.bf16.msra.mxu0 %v456
  %1204 = vmatprep.subr.bf16.mxu0 0
  %1205 = vmatpush1.bf16.msra.mxu0 0
  %1206 = vmatprep.subr.bf16.mxu0 0
  %1207 = vmatpush1.bf16.msra.mxu0 0
  %1208 = vmatprep.subr.bf16.mxu0 0
  %1209 = vmatpush1.bf16.msra.mxu0 0
  %1210 = vmatprep.subr.bf16.mxu0 0
  %1211 = vmatpush1.bf16.msra.mxu0 0
  %1212 = vmatprep.subr.bf16.mxu0 0
  %1213 = vmatpush1.bf16.msra.mxu0 0
  %1214 = vmatprep.subr.bf16.mxu0 0
  %1215 = vmatpush1.bf16.msra.mxu0 0
  %1216 = vmatprep.subr.bf16.mxu0 0
  %1217 = vmatpush1.bf16.msra.mxu0 0
  %1218 = vmatprep.subr.bf16.mxu0 0
  %1219 = vmatpush1.bf16.msra.mxu0 0
  %1220 = vmatprep.mubr.bf16.mxu0 0
  %1221 = vmatmul.mubr.bf16.gmra.mrb[0].mxu0 %v1187
  %v1222 = vpop.f32.mrb[0].mxu0
  %v1223 = vadd.f32 0.0, %v1222
  %v1224 = vpop.f32.mrb[0].mxu0
  %v1225 = vadd.f32 0.0, %v1224
  %v1226 = vpop.f32.mrb[0].mxu0
  %v1227 = vpop.f32.mrb[0].mxu0
  %1228 = vdwg.mxu0
  %1229 = vmatprep.subr.bf16.mxu0 %v431
  %1230 = vmatpush1.bf16.msra.mxu0 %v430
  %1231 = vmatprep.subr.bf16.mxu0 %v435
  %1232 = vmatpush1.bf16.msra.mxu0 %v434
  %1233 = vmatprep.subr.bf16.mxu0 %v439
  %1234 = vmatpush1.bf16.msra.mxu0 %v438
  %1235 = vmatprep.subr.bf16.mxu0 %v443
  %1236 = vmatpush1.bf16.msra.mxu0 %v442
  %1237 = vmatprep.subr.bf16.mxu0 %v447
  %1238 = vmatpush1.bf16.msra.mxu0 %v446
  %1239 = vmatprep.subr.bf16.mxu0 %v451
  %1240 = vmatpush1.bf16.msra.mxu0 %v450
  %1241 = vmatprep.subr.bf16.mxu0 %v455
  %1242 = vmatpush1.bf16.msra.mxu0 %v454
  %1243 = vmatprep.subr.bf16.mxu0 %v459
  %1244 = vmatpush1.bf16.msra.mxu0 %v458
  %1245 = vmatprep.subr.bf16.mxu0 0
  %1246 = vmatpush1.bf16.msra.mxu0 0
  %1247 = vmatprep.subr.bf16.mxu0 0
  %1248 = vmatpush1.bf16.msra.mxu0 0
  %1249 = vmatprep.subr.bf16.mxu0 0
  %1250 = vmatpush1.bf16.msra.mxu0 0
  %1251 = vmatprep.subr.bf16.mxu0 0
  %1252 = vmatpush1.bf16.msra.mxu0 0
  %1253 = vmatprep.subr.bf16.mxu0 0
  %1254 = vmatpush1.bf16.msra.mxu0 0
  %1255 = vmatprep.subr.bf16.mxu0 0
  %1256 = vmatpush1.bf16.msra.mxu0 0
  %1257 = vmatprep.subr.bf16.mxu0 0
  %1258 = vmatpush1.bf16.msra.mxu0 0
  %1259 = vmatprep.subr.bf16.mxu0 0
  %1260 = vmatpush1.bf16.msra.mxu0 0
  %1261 = vmatprep.mubr.bf16.mxu0 0
  %1262 = vmatmul.mubr.bf16.gmra.mrb[0].mxu0 %v1187
  %v1263 = vpop.f32.mrb[0].mxu0
  %v1264 = vadd.f32 0.0, %v1263
  %v1265 = vpop.f32.mrb[0].mxu0
  %v1266 = vadd.f32 0.0, %v1265
  %v1267 = vpop.f32.mrb[0].mxu0
  %v1268 = vpop.f32.mrb[0].mxu0
  %1269 = vdwg.mxu0
  %v1270 = vadd.f32 %v1183, %v1223
  %v1271 = vadd.f32 %v1184, %v1225
  %v1272 = vadd.f32 %v1185, %v1264
  %v1273 = vadd.f32 %v1186, %v1266
  %v1274 = vxor.u32 %v1270, 2147483648
  %v1275 = vxor.u32 %v1271, 2147483648
  %v1276 = vxor.u32 %v1272, 2147483648
  %v1277 = vmul.f32 %v1274, 1.442695
  %v1278 = vpow.pop %v1277
  %v1279 = vmul.f32 %v1275, 1.442695
  %v1280 = vpow.pop %v1279
  %v1281 = vmul.f32 %v1276, 1.442695
  %v1282 = vpow.pop %v1281
  %v1283 = vadd.f32 %v1278, 1.0
  %v1284 = vadd.f32 %v1280, 1.0
  %v1285 = vadd.f32 %v1282, 1.0
  %v1286 = vrcp.pop %v1283
  %v1287 = vmul.f32 1.0, %v1286
  %v1288 = vrcp.pop %v1284
  %v1289 = vmul.f32 1.0, %v1288
  %v1290 = vrcp.pop %v1285
  %v1291 = vmul.f32 1.0, %v1290
  %v1292 = vtanh.pop %v1273
  %v1293 = vmul.f32 %v1289, %v1179
  %v1294 = vmul.f32 %v1287, %v1292
  %v1295 = vadd.f32 %v1293, %v1294
  %v1296 = vtanh.pop %v1295
  %v1297 = vmul.f32 %v1291, %v1296
  %1298 = vst [vmem:[#allocation3 + $0x38] sm:$0xff] %v1297
  %v1299 = vld [vmem:[#allocation3] sm:$0xff]
  %v1300 = vld [vmem:[#allocation3 + $0x8] sm:$0xff]
  %v1301 = vld [vmem:[#allocation3 + $0x10] sm:$0xff]
  %v1302 = vld [vmem:[#allocation3 + $0x18] sm:$0xff]
  %v1303 = vld [vmem:[#allocation3 + $0x20] sm:$0xff]
  %v1304 = vld [vmem:[#allocation3 + $0x28] sm:$0xff]
  %v1305 = vld [vmem:[#allocation3 + $0x30] sm:$0xff]
  %v1306 = vld [vmem:[#allocation3 + $0x38] sm:$0xff]
  %v1307 = vpack.c.bf16 %v1300, %v1299
  %v1308 = vpack.c.bf16 %v1302, %v1301
  %v1309 = vpack.c.bf16 %v1304, %v1303
  %v1310 = vpack.c.bf16 %v1306, %v1305
  %v1311 = vld [vmem:[%s4] sm:$0xff]
  %v1312 = vld [vmem:[%s4 + $0x8] sm:$0xff]
  %v1313 = vld [vmem:[%s4 + $0x10] sm:$0xff]
  %v1314 = vld [vmem:[%s4 + $0x18] sm:$0xff]
  %v1315 = vld [vmem:[%s4 + $0x20] sm:$0xff]
  %v1316 = vld [vmem:[%s4 + $0x28] sm:$0xff]
  %v1317 = vld [vmem:[%s4 + $0x30] sm:$0xff]
  %v1318 = vld [vmem:[%s4 + $0x38] sm:$0xff]
  %v1319 = vld [vmem:[%s4 + $0x40] sm:$0xff]
  %v1320 = vld [vmem:[%s4 + $0x48] sm:$0xff]
  %v1321 = vld [vmem:[%s4 + $0x50] sm:$0xff]
  %v1322 = vld [vmem:[%s4 + $0x58] sm:$0xff]
  %v1323 = vld [vmem:[%s4 + $0x60] sm:$0xff]
  %v1324 = vld [vmem:[%s4 + $0x68] sm:$0xff]
  %v1325 = vld [vmem:[%s4 + $0x70] sm:$0xff]
  %v1326 = vld [vmem:[%s4 + $0x78] sm:$0xff]
  %v1327 = vld [vmem:[%s4 + $0x80] sm:$0xff]
  %v1328 = vld [vmem:[%s4 + $0x88] sm:$0xff]
  %v1329 = vld [vmem:[%s4 + $0x90] sm:$0xff]
  %v1330 = vld [vmem:[%s4 + $0x98] sm:$0xff]
  %v1331 = vld [vmem:[%s4 + $0xa0] sm:$0xff]
  %v1332 = vld [vmem:[%s4 + $0xa8] sm:$0xff]
  %v1333 = vld [vmem:[%s4 + $0xb0] sm:$0xff]
  %v1334 = vld [vmem:[%s4 + $0xb8] sm:$0xff]
  %v1335 = vld [vmem:[%s4 + $0xc0] sm:$0xff]
  %v1336 = vld [vmem:[%s4 + $0xc8] sm:$0xff]
  %v1337 = vld [vmem:[%s4 + $0xd0] sm:$0xff]
  %v1338 = vld [vmem:[%s4 + $0xd8] sm:$0xff]
  %v1339 = vld [vmem:[%s4 + $0xe0] sm:$0xff]
  %v1340 = vld [vmem:[%s4 + $0xe8] sm:$0xff]
  %v1341 = vld [vmem:[%s4 + $0xf0] sm:$0xff]
  %v1342 = vld [vmem:[%s4 + $0xf8] sm:$0xff]
  %v1343 = vld [vmem:[%s6] sm:$0xf]
  %v1345 = vlaneseq
  %v1346 = vshrl.u32 %v1345, 7
  %v1347 = vsub.s32 0, %v1346
  %v1348 = vrot.slane %v1343, %v1347
  %v1349 = vlaneseq
  %v1350 = vshrl.u32 %v1349, 7
  %v1351 = vsub.s32 1, %v1350
  %v1352 = vrot.slane %v1343, %v1351
  %v1353 = vlaneseq
  %v1354 = vshrl.u32 %v1353, 7
  %v1355 = vsub.s32 2, %v1354
  %v1356 = vrot.slane %v1343, %v1355
  %v1357 = vlaneseq
  %v1358 = vshrl.u32 %v1357, 7
  %v1359 = vsub.s32 3, %v1358
  %v1360 = vrot.slane %v1343, %v1359
  %v1397 = vunpack.c.l.b16 %v1311
  %v1398 = vunpack.c.h.b16 %v1311
  %v1399 = vunpack.c.l.b16 %v1312
  %v1400 = vunpack.c.h.b16 %v1312
  %v1401 = vunpack.c.l.b16 %v1313
  %v1402 = vunpack.c.h.b16 %v1313
  %v1403 = vunpack.c.l.b16 %v1314
  %v1404 = vunpack.c.h.b16 %v1314
  %v1405 = vunpack.c.l.b16 %v1315
  %v1406 = vunpack.c.h.b16 %v1315
  %v1407 = vunpack.c.l.b16 %v1316
  %v1408 = vunpack.c.h.b16 %v1316
  %v1409 = vunpack.c.l.b16 %v1317
  %v1410 = vunpack.c.h.b16 %v1317
  %v1411 = vunpack.c.l.b16 %v1318
  %v1412 = vunpack.c.h.b16 %v1318
  %v1413 = vunpack.c.l.b16 %v1319
  %v1414 = vunpack.c.h.b16 %v1319
  %v1415 = vunpack.c.l.b16 %v1320
  %v1416 = vunpack.c.h.b16 %v1320
  %v1417 = vunpack.c.l.b16 %v1321
  %v1418 = vunpack.c.h.b16 %v1321
  %v1419 = vunpack.c.l.b16 %v1322
  %v1420 = vunpack.c.h.b16 %v1322
  %v1421 = vunpack.c.l.b16 %v1323
  %v1422 = vunpack.c.h.b16 %v1323
  %v1423 = vunpack.c.l.b16 %v1324
  %v1424 = vunpack.c.h.b16 %v1324
  %v1425 = vunpack.c.l.b16 %v1325
  %v1426 = vunpack.c.h.b16 %v1325
  %v1427 = vunpack.c.l.b16 %v1326
  %v1428 = vunpack.c.h.b16 %v1326
  %v1429 = vunpack.c.l.b16 %v1327
  %v1430 = vunpack.c.h.b16 %v1327
  %v1431 = vunpack.c.l.b16 %v1328
  %v1432 = vunpack.c.h.b16 %v1328
  %v1433 = vunpack.c.l.b16 %v1329
  %v1434 = vunpack.c.h.b16 %v1329
  %v1435 = vunpack.c.l.b16 %v1330
  %v1436 = vunpack.c.h.b16 %v1330
  %v1437 = vunpack.c.l.b16 %v1331
  %v1438 = vunpack.c.h.b16 %v1331
  %v1439 = vunpack.c.l.b16 %v1332
  %v1440 = vunpack.c.h.b16 %v1332
  %v1441 = vunpack.c.l.b16 %v1333
  %v1442 = vunpack.c.h.b16 %v1333
  %v1443 = vunpack.c.l.b16 %v1334
  %v1444 = vunpack.c.h.b16 %v1334
  %v1445 = vunpack.c.l.b16 %v1335
  %v1446 = vunpack.c.h.b16 %v1335
  %v1447 = vunpack.c.l.b16 %v1336
  %v1448 = vunpack.c.h.b16 %v1336
  %v1449 = vunpack.c.l.b16 %v1337
  %v1450 = vunpack.c.h.b16 %v1337
  %v1451 = vunpack.c.l.b16 %v1338
  %v1452 = vunpack.c.h.b16 %v1338
  %v1453 = vunpack.c.l.b16 %v1339
  %v1454 = vunpack.c.h.b16 %v1339
  %v1455 = vunpack.c.l.b16 %v1340
  %v1456 = vunpack.c.h.b16 %v1340
  %v1457 = vunpack.c.l.b16 %v1341
  %v1458 = vunpack.c.h.b16 %v1341
  %v1459 = vunpack.c.l.b16 %v1342
  %v1460 = vunpack.c.h.b16 %v1342
  %v1461 = vpack.c.b16 %v1401, %v1397
  %v1462 = vpack.c.b16 %v1402, %v1398
  %v1463 = vpack.c.b16 %v1403, %v1399
  %v1464 = vpack.c.b16 %v1404, %v1400
  %v1465 = vpack.c.b16 %v1409, %v1405
  %v1466 = vpack.c.b16 %v1410, %v1406
  %v1467 = vpack.c.b16 %v1411, %v1407
  %v1468 = vpack.c.b16 %v1412, %v1408
  %v1469 = vpack.c.b16 %v1417, %v1413
  %v1470 = vpack.c.b16 %v1418, %v1414
  %v1471 = vpack.c.b16 %v1419, %v1415
  %v1472 = vpack.c.b16 %v1420, %v1416
  %v1473 = vpack.c.b16 %v1425, %v1421
  %v1474 = vpack.c.b16 %v1426, %v1422
  %v1475 = vpack.c.b16 %v1427, %v1423
  %v1476 = vpack.c.b16 %v1428, %v1424
  %v1477 = vpack.c.b16 %v1433, %v1429
  %v1478 = vpack.c.b16 %v1434, %v1430
  %v1479 = vpack.c.b16 %v1435, %v1431
  %v1480 = vpack.c.b16 %v1436, %v1432
  %v1481 = vpack.c.b16 %v1441, %v1437
  %v1482 = vpack.c.b16 %v1442, %v1438
  %v1483 = vpack.c.b16 %v1443, %v1439
  %v1484 = vpack.c.b16 %v1444, %v1440
  %v1485 = vpack.c.b16 %v1449, %v1445
  %v1486 = vpack.c.b16 %v1450, %v1446
  %v1487 = vpack.c.b16 %v1451, %v1447
  %v1488 = vpack.c.b16 %v1452, %v1448
  %v1489 = vpack.c.b16 %v1457, %v1453
  %v1490 = vpack.c.b16 %v1458, %v1454
  %v1491 = vpack.c.b16 %v1459, %v1455
  %v1492 = vpack.c.b16 %v1460, %v1456
  %1525 = vmatprep.subr.bf16.mxu0 %v1462
  %1526 = vmatpush1.bf16.msra.mxu0 %v1461
  %1527 = vmatprep.subr.bf16.mxu0 %v1466
  %1528 = vmatpush1.bf16.msra.mxu0 %v1465
  %1529 = vmatprep.subr.bf16.mxu0 %v1470
  %1530 = vmatpush1.bf16.msra.mxu0 %v1469
  %1531 = vmatprep.subr.bf16.mxu0 %v1474
  %1532 = vmatpush1.bf16.msra.mxu0 %v1473
  %1533 = vmatprep.subr.bf16.mxu0 %v1478
  %1534 = vmatpush1.bf16.msra.mxu0 %v1477
  %1535 = vmatprep.subr.bf16.mxu0 %v1482
  %1536 = vmatpush1.bf16.msra.mxu0 %v1481
  %1537 = vmatprep.subr.bf16.mxu0 %v1486
  %1538 = vmatpush1.bf16.msra.mxu0 %v1485
  %1539 = vmatprep.subr.bf16.mxu0 %v1490
  %1540 = vmatpush1.bf16.msra.mxu0 %v1489
  %1541 = vmatprep.subr.bf16.mxu0 0
  %1542 = vmatpush1.bf16.msra.mxu0 0
  %1543 = vmatprep.subr.bf16.mxu0 0
  %1544 = vmatpush1.bf16.msra.mxu0 0
  %1545 = vmatprep.subr.bf16.mxu0 0
  %1546 = vmatpush1.bf16.msra.mxu0 0
  %1547 = vmatprep.subr.bf16.mxu0 0
  %1548 = vmatpush1.bf16.msra.mxu0 0
  %1549 = vmatprep.subr.bf16.mxu0 0
  %1550 = vmatpush1.bf16.msra.mxu0 0
  %1551 = vmatprep.subr.bf16.mxu0 0
  %1552 = vmatpush1.bf16.msra.mxu0 0
  %1553 = vmatprep.subr.bf16.mxu0 0
  %1554 = vmatpush1.bf16.msra.mxu0 0
  %1555 = vmatprep.subr.bf16.mxu0 0
  %1556 = vmatpush1.bf16.msra.mxu0 0
  %1557 = vmatprep.mubr.bf16.mxu0 0
  %1558 = vmatmul.mubr.bf16.gmra.mrb[0].mxu0 %v1307
  %v1559 = vpop.f32.mrb[0].mxu0
  %v1560 = vadd.f32 %v1348, %v1559
  %v1561 = vpop.f32.mrb[0].mxu0
  %v1562 = vadd.f32 %v1352, %v1561
  %v1563 = vpop.f32.mrb[0].mxu0
  %v1564 = vadd.f32 %v1348, %v1563
  %v1565 = vpop.f32.mrb[0].mxu0
  %v1566 = vadd.f32 %v1352, %v1565
  %1567 = vmatprep.mubr.bf16.mxu0 0
  %1568 = vmatmul.mubr.bf16.gmra.mrb[0].mxu0 %v1308
  %v1569 = vpop.f32.mrb[0].mxu0
  %v1570 = vadd.f32 %v1348, %v1569
  %v1571 = vpop.f32.mrb[0].mxu0
  %v1572 = vadd.f32 %v1352, %v1571
  %v1573 = vpop.f32.mrb[0].mxu0
  %v1574 = vadd.f32 %v1348, %v1573
  %v1575 = vpop.f32.mrb[0].mxu0
  %v1576 = vadd.f32 %v1352, %v1575
  %1577 = vmatprep.mubr.bf16.mxu0 0
  %1578 = vmatmul.mubr.bf16.gmra.mrb[0].mxu0 %v1309
  %v1579 = vpop.f32.mrb[0].mxu0
  %v1580 = vadd.f32 %v1348, %v1579
  %v1581 = vpop.f32.mrb[0].mxu0
  %v1582 = vadd.f32 %v1352, %v1581
  %v1583 = vpop.f32.mrb[0].mxu0
  %v1584 = vadd.f32 %v1348, %v1583
  %v1585 = vpop.f32.mrb[0].mxu0
  %v1586 = vadd.f32 %v1352, %v1585
  %1587 = vmatprep.mubr.bf16.mxu0 0
  %1588 = vmatmul.mubr.bf16.gmra.mrb[0].mxu0 %v1310
  %v1589 = vpop.f32.mrb[0].mxu0
  %v1590 = vadd.f32 %v1348, %v1589
  %v1591 = vpop.f32.mrb[0].mxu0
  %v1592 = vadd.f32 %v1352, %v1591
  %v1593 = vpop.f32.mrb[0].mxu0
  %v1594 = vadd.f32 %v1348, %v1593
  %v1595 = vpop.f32.mrb[0].mxu0
  %v1596 = vadd.f32 %v1352, %v1595
  %1597 = vdwg.mxu0
  %1598 = vmatprep.subr.bf16.mxu0 %v1464
  %1599 = vmatpush1.bf16.msra.mxu0 %v1463
  %1600 = vmatprep.subr.bf16.mxu0 %v1468
  %1601 = vmatpush1.bf16.msra.mxu0 %v1467
  %1602 = vmatprep.subr.bf16.mxu0 %v1472
  %1603 = vmatpush1.bf16.msra.mxu0 %v1471
  %1604 = vmatprep.subr.bf16.mxu0 %v1476
  %1605 = vmatpush1.bf16.msra.mxu0 %v1475
  %1606 = vmatprep.subr.bf16.mxu0 %v1480
  %1607 = vmatpush1.bf16.msra.mxu0 %v1479
  %1608 = vmatprep.subr.bf16.mxu0 %v1484
  %1609 = vmatpush1.bf16.msra.mxu0 %v1483
  %1610 = vmatprep.subr.bf16.mxu0 %v1488
  %1611 = vmatpush1.bf16.msra.mxu0 %v1487
  %1612 = vmatprep.subr.bf16.mxu0 %v1492
  %1613 = vmatpush1.bf16.msra.mxu0 %v1491
  %1614 = vmatprep.subr.bf16.mxu0 0
  %1615 = vmatpush1.bf16.msra.mxu0 0
  %1616 = vmatprep.subr.bf16.mxu0 0
  %1617 = vmatpush1.bf16.msra.mxu0 0
  %1618 = vmatprep.subr.bf16.mxu0 0
  %1619 = vmatpush1.bf16.msra.mxu0 0
  %1620 = vmatprep.subr.bf16.mxu0 0
  %1621 = vmatpush1.bf16.msra.mxu0 0
  %1622 = vmatprep.subr.bf16.mxu0 0
  %1623 = vmatpush1.bf16.msra.mxu0 0
  %1624 = vmatprep.subr.bf16.mxu0 0
  %1625 = vmatpush1.bf16.msra.mxu0 0
  %1626 = vmatprep.subr.bf16.mxu0 0
  %1627 = vmatpush1.bf16.msra.mxu0 0
  %1628 = vmatprep.subr.bf16.mxu0 0
  %1629 = vmatpush1.bf16.msra.mxu0 0
  %1630 = vmatprep.mubr.bf16.mxu0 0
  %1631 = vmatmul.mubr.bf16.gmra.mrb[0].mxu0 %v1307
  %v1632 = vpop.f32.mrb[0].mxu0
  %v1633 = vadd.f32 %v1356, %v1632
  %v1634 = vpop.f32.mrb[0].mxu0
  %v1635 = vadd.f32 %v1360, %v1634
  %v1636 = vpop.f32.mrb[0].mxu0
  %v1637 = vadd.f32 %v1356, %v1636
  %v1638 = vpop.f32.mrb[0].mxu0
  %v1639 = vadd.f32 %v1360, %v1638
  %1640 = vmatprep.mubr.bf16.mxu0 0
  %1641 = vmatmul.mubr.bf16.gmra.mrb[0].mxu0 %v1308
  %v1642 = vpop.f32.mrb[0].mxu0
  %v1643 = vadd.f32 %v1356, %v1642
  %v1644 = vpop.f32.mrb[0].mxu0
  %v1645 = vadd.f32 %v1360, %v1644
  %v1646 = vpop.f32.mrb[0].mxu0
  %v1647 = vadd.f32 %v1356, %v1646
  %v1648 = vpop.f32.mrb[0].mxu0
  %v1649 = vadd.f32 %v1360, %v1648
  %1650 = vmatprep.mubr.bf16.mxu0 0
  %1651 = vmatmul.mubr.bf16.gmra.mrb[0].mxu0 %v1309
  %v1652 = vpop.f32.mrb[0].mxu0
  %v1653 = vadd.f32 %v1356, %v1652
  %v1654 = vpop.f32.mrb[0].mxu0
  %v1655 = vadd.f32 %v1360, %v1654
  %v1656 = vpop.f32.mrb[0].mxu0
  %v1657 = vadd.f32 %v1356, %v1656
  %v1658 = vpop.f32.mrb[0].mxu0
  %v1659 = vadd.f32 %v1360, %v1658
  %1660 = vmatprep.mubr.bf16.mxu0 0
  %1661 = vmatmul.mubr.bf16.gmra.mrb[0].mxu0 %v1310
  %v1662 = vpop.f32.mrb[0].mxu0
  %v1663 = vadd.f32 %v1356, %v1662
  %v1664 = vpop.f32.mrb[0].mxu0
  %v1665 = vadd.f32 %v1360, %v1664
  %v1666 = vpop.f32.mrb[0].mxu0
  %v1667 = vadd.f32 %v1356, %v1666
  %v1668 = vpop.f32.mrb[0].mxu0
  %v1669 = vadd.f32 %v1360, %v1668
  %1670 = vdwg.mxu0
  %1671 = vst [vmem:[#allocation2] sm:$0xff] %v1560
  %1672 = vst [vmem:[#allocation2 + $0x8] sm:$0xff] %v1562
  %1673 = vst [vmem:[#allocation2 + $0x10] sm:$0xff] %v1633
  %1674 = vst [vmem:[#allocation2 + $0x18] sm:$0xff] %v1635
  %1675 = vst [vmem:[#allocation2 + $0x20] sm:$0xff] %v1564
  %1676 = vst [vmem:[#allocation2 + $0x28] sm:$0xff] %v1566
  %1677 = vst [vmem:[#allocation2 + $0x30] sm:$0xff] %v1637
  %1678 = vst [vmem:[#allocation2 + $0x38] sm:$0xff] %v1639
  %1679 = vst [vmem:[#allocation2 + $0x40] sm:$0xff] %v1570
  %1680 = vst [vmem:[#allocation2 + $0x48] sm:$0xff] %v1572
  %1681 = vst [vmem:[#allocation2 + $0x50] sm:$0xff] %v1643
  %1682 = vst [vmem:[#allocation2 + $0x58] sm:$0xff] %v1645
  %1683 = vst [vmem:[#allocation2 + $0x60] sm:$0xff] %v1574
  %1684 = vst [vmem:[#allocation2 + $0x68] sm:$0xff] %v1576
  %1685 = vst [vmem:[#allocation2 + $0x70] sm:$0xff] %v1647
  %1686 = vst [vmem:[#allocation2 + $0x78] sm:$0xff] %v1649
  %1687 = vst [vmem:[#allocation2 + $0x80] sm:$0xff] %v1580
  %1688 = vst [vmem:[#allocation2 + $0x88] sm:$0xff] %v1582
  %1689 = vst [vmem:[#allocation2 + $0x90] sm:$0xff] %v1653
  %1690 = vst [vmem:[#allocation2 + $0x98] sm:$0xff] %v1655
  %1691 = vst [vmem:[#allocation2 + $0xa0] sm:$0xff] %v1584
  %1692 = vst [vmem:[#allocation2 + $0xa8] sm:$0xff] %v1586
  %1693 = vst [vmem:[#allocation2 + $0xb0] sm:$0xff] %v1657
  %1694 = vst [vmem:[#allocation2 + $0xb8] sm:$0xff] %v1659
  %1695 = vst [vmem:[#allocation2 + $0xc0] sm:$0xff] %v1590
  %1696 = vst [vmem:[#allocation2 + $0xc8] sm:$0xff] %v1592
  %1697 = vst [vmem:[#allocation2 + $0xd0] sm:$0xff] %v1663
  %1698 = vst [vmem:[#allocation2 + $0xd8] sm:$0xff] %v1665
  %1699 = vst [vmem:[#allocation2 + $0xe0] sm:$0xff] %v1594
  %1700 = vst [vmem:[#allocation2 + $0xe8] sm:$0xff] %v1596
  %1701 = vst [vmem:[#allocation2 + $0xf0] sm:$0xff] %v1667
  %1702 = vst [vmem:[#allocation2 + $0xf8] sm:$0xff] %v1669
  %v1703 = vld [vmem:[%s5] sm:$0xff]
  %v1704 = vld [vmem:[%s5 + $0x8] sm:$0xff]
  %v1705 = vld [vmem:[%s5 + $0x10] sm:$0xff]
  %v1706 = vld [vmem:[%s5 + $0x18] sm:$0xff]
  %v1707 = vld [vmem:[%s5 + $0x20] sm:$0xff]
  %v1708 = vld [vmem:[%s5 + $0x28] sm:$0xff]
  %v1709 = vld [vmem:[%s5 + $0x30] sm:$0xff]
  %v1710 = vld [vmem:[%s5 + $0x38] sm:$0xff]
  %v1711 = vld [vmem:[%s5 + $0x40] sm:$0xff]
  %v1712 = vld [vmem:[%s5 + $0x48] sm:$0xff]
  %v1713 = vld [vmem:[%s5 + $0x50] sm:$0xff]
  %v1714 = vld [vmem:[%s5 + $0x58] sm:$0xff]
  %v1715 = vld [vmem:[%s5 + $0x60] sm:$0xff]
  %v1716 = vld [vmem:[%s5 + $0x68] sm:$0xff]
  %v1717 = vld [vmem:[%s5 + $0x70] sm:$0xff]
  %v1718 = vld [vmem:[%s5 + $0x78] sm:$0xff]
  %v1719 = vld [vmem:[%s5 + $0x80] sm:$0xff]
  %v1720 = vld [vmem:[%s5 + $0x88] sm:$0xff]
  %v1721 = vld [vmem:[%s5 + $0x90] sm:$0xff]
  %v1722 = vld [vmem:[%s5 + $0x98] sm:$0xff]
  %v1723 = vld [vmem:[%s5 + $0xa0] sm:$0xff]
  %v1724 = vld [vmem:[%s5 + $0xa8] sm:$0xff]
  %v1725 = vld [vmem:[%s5 + $0xb0] sm:$0xff]
  %v1726 = vld [vmem:[%s5 + $0xb8] sm:$0xff]
  %v1727 = vld [vmem:[%s5 + $0xc0] sm:$0xff]
  %v1728 = vld [vmem:[%s5 + $0xc8] sm:$0xff]
  %v1729 = vld [vmem:[%s5 + $0xd0] sm:$0xff]
  %v1730 = vld [vmem:[%s5 + $0xd8] sm:$0xff]
  %v1731 = vld [vmem:[%s5 + $0xe0] sm:$0xff]
  %v1732 = vld [vmem:[%s5 + $0xe8] sm:$0xff]
  %v1733 = vld [vmem:[%s5 + $0xf0] sm:$0xff]
  %v1734 = vld [vmem:[%s5 + $0xf8] sm:$0xff]
  %v1735 = vld [vmem:[#allocation2] sm:$0xff]
  %v1736 = vld [vmem:[#allocation2 + $0x8] sm:$0xff]
  %v1737 = vld [vmem:[#allocation2 + $0x10] sm:$0xff]
  %v1738 = vld [vmem:[#allocation2 + $0x18] sm:$0xff]
  %v1739 = vxor.u32 %v1735, 2147483648
  %v1740 = vxor.u32 %v1736, 2147483648
  %v1741 = vxor.u32 %v1737, 2147483648
  %v1742 = vmul.f32 %v1739, 1.442695
  %v1743 = vpow.pop %v1742
  %v1744 = vmul.f32 %v1740, 1.442695
  %v1745 = vpow.pop %v1744
  %v1746 = vmul.f32 %v1741, 1.442695
  %v1747 = vpow.pop %v1746
  %v1748 = vadd.f32 %v1743, 1.0
  %v1749 = vadd.f32 %v1745, 1.0
  %v1750 = vadd.f32 %v1747, 1.0
  %v1751 = vrcp.pop %v1748
  %v1752 = vmul.f32 1.0, %v1751
  %v1753 = vrcp.pop %v1749
  %v1754 = vmul.f32 1.0, %v1753
  %v1755 = vrcp.pop %v1750
  %v1756 = vmul.f32 1.0, %v1755
  %v1757 = vtanh.pop %v1738
  %v1758 = vmul.f32 %v1754, 0.0
  %v1759 = vmul.f32 %v1752, %v1757
  %v1760 = vadd.f32 %v1758, %v1759
  %v1761 = vtanh.pop %v1760
  %v1762 = vmul.f32 %v1756, %v1761
  %1763 = vst [vmem:[#allocation4] sm:$0xff] %v1762
  %v1764 = vld [vmem:[#allocation2 + $0x20] sm:$0xff]
  %v1765 = vld [vmem:[#allocation2 + $0x28] sm:$0xff]
  %v1766 = vld [vmem:[#allocation2 + $0x30] sm:$0xff]
  %v1767 = vld [vmem:[#allocation2 + $0x38] sm:$0xff]
  %v1768 = vpack.c.bf16 %v1762, %v1762
  %v1801 = vunpack.c.l.b16 %v1703
  %v1802 = vunpack.c.h.b16 %v1703
  %v1803 = vunpack.c.l.b16 %v1704
  %v1804 = vunpack.c.h.b16 %v1704
  %v1805 = vunpack.c.l.b16 %v1705
  %v1806 = vunpack.c.h.b16 %v1705
  %v1807 = vunpack.c.l.b16 %v1706
  %v1808 = vunpack.c.h.b16 %v1706
  %v1809 = vunpack.c.l.b16 %v1707
  %v1810 = vunpack.c.h.b16 %v1707
  %v1811 = vunpack.c.l.b16 %v1708
  %v1812 = vunpack.c.h.b16 %v1708
  %v1813 = vunpack.c.l.b16 %v1709
  %v1814 = vunpack.c.h.b16 %v1709
  %v1815 = vunpack.c.l.b16 %v1710
  %v1816 = vunpack.c.h.b16 %v1710
  %v1817 = vunpack.c.l.b16 %v1711
  %v1818 = vunpack.c.h.b16 %v1711
  %v1819 = vunpack.c.l.b16 %v1712
  %v1820 = vunpack.c.h.b16 %v1712
  %v1821 = vunpack.c.l.b16 %v1713
  %v1822 = vunpack.c.h.b16 %v1713
  %v1823 = vunpack.c.l.b16 %v1714
  %v1824 = vunpack.c.h.b16 %v1714
  %v1825 = vunpack.c.l.b16 %v1715
  %v1826 = vunpack.c.h.b16 %v1715
  %v1827 = vunpack.c.l.b16 %v1716
  %v1828 = vunpack.c.h.b16 %v1716
  %v1829 = vunpack.c.l.b16 %v1717
  %v1830 = vunpack.c.h.b16 %v1717
  %v1831 = vunpack.c.l.b16 %v1718
  %v1832 = vunpack.c.h.b16 %v1718
  %v1833 = vunpack.c.l.b16 %v1719
  %v1834 = vunpack.c.h.b16 %v1719
  %v1835 = vunpack.c.l.b16 %v1720
  %v1836 = vunpack.c.h.b16 %v1720
  %v1837 = vunpack.c.l.b16 %v1721
  %v1838 = vunpack.c.h.b16 %v1721
  %v1839 = vunpack.c.l.b16 %v1722
  %v1840 = vunpack.c.h.b16 %v1722
  %v1841 = vunpack.c.l.b16 %v1723
  %v1842 = vunpack.c.h.b16 %v1723
  %v1843 = vunpack.c.l.b16 %v1724
  %v1844 = vunpack.c.h.b16 %v1724
  %v1845 = vunpack.c.l.b16 %v1725
  %v1846 = vunpack.c.h.b16 %v1725
  %v1847 = vunpack.c.l.b16 %v1726
  %v1848 = vunpack.c.h.b16 %v1726
  %v1849 = vunpack.c.l.b16 %v1727
  %v1850 = vunpack.c.h.b16 %v1727
  %v1851 = vunpack.c.l.b16 %v1728
  %v1852 = vunpack.c.h.b16 %v1728
  %v1853 = vunpack.c.l.b16 %v1729
  %v1854 = vunpack.c.h.b16 %v1729
  %v1855 = vunpack.c.l.b16 %v1730
  %v1856 = vunpack.c.h.b16 %v1730
  %v1857 = vunpack.c.l.b16 %v1731
  %v1858 = vunpack.c.h.b16 %v1731
  %v1859 = vunpack.c.l.b16 %v1732
  %v1860 = vunpack.c.h.b16 %v1732
  %v1861 = vunpack.c.l.b16 %v1733
  %v1862 = vunpack.c.h.b16 %v1733
  %v1863 = vunpack.c.l.b16 %v1734
  %v1864 = vunpack.c.h.b16 %v1734
  %v1865 = vpack.c.b16 %v1805, %v1801
  %v1866 = vpack.c.b16 %v1806, %v1802
  %v1867 = vpack.c.b16 %v1807, %v1803
  %v1868 = vpack.c.b16 %v1808, %v1804
  %v1869 = vpack.c.b16 %v1813, %v1809
  %v1870 = vpack.c.b16 %v1814, %v1810
  %v1871 = vpack.c.b16 %v1815, %v1811
  %v1872 = vpack.c.b16 %v1816, %v1812
  %v1873 = vpack.c.b16 %v1821, %v1817
  %v1874 = vpack.c.b16 %v1822, %v1818
  %v1875 = vpack.c.b16 %v1823, %v1819
  %v1876 = vpack.c.b16 %v1824, %v1820
  %v1877 = vpack.c.b16 %v1829, %v1825
  %v1878 = vpack.c.b16 %v1830, %v1826
  %v1879 = vpack.c.b16 %v1831, %v1827
  %v1880 = vpack.c.b16 %v1832, %v1828
  %v1881 = vpack.c.b16 %v1837, %v1833
  %v1882 = vpack.c.b16 %v1838, %v1834
  %v1883 = vpack.c.b16 %v1839, %v1835
  %v1884 = vpack.c.b16 %v1840, %v1836
  %v1885 = vpack.c.b16 %v1845, %v1841
  %v1886 = vpack.c.b16 %v1846, %v1842
  %v1887 = vpack.c.b16 %v1847, %v1843
  %v1888 = vpack.c.b16 %v1848, %v1844
  %v1889 = vpack.c.b16 %v1853, %v1849
  %v1890 = vpack.c.b16 %v1854, %v1850
  %v1891 = vpack.c.b16 %v1855, %v1851
  %v1892 = vpack.c.b16 %v1856, %v1852
  %v1893 = vpack.c.b16 %v1861, %v1857
  %v1894 = vpack.c.b16 %v1862, %v1858
  %v1895 = vpack.c.b16 %v1863, %v1859
  %v1896 = vpack.c.b16 %v1864, %v1860
  %1929 = vmatprep.subr.bf16.mxu0 %v1866
  %1930 = vmatpush1.bf16.msra.mxu0 %v1865
  %1931 = vmatprep.subr.bf16.mxu0 %v1870
  %1932 = vmatpush1.bf16.msra.mxu0 %v1869
  %1933 = vmatprep.subr.bf16.mxu0 %v1874
  %1934 = vmatpush1.bf16.msra.mxu0 %v1873
  %1935 = vmatprep.subr.bf16.mxu0 %v1878
  %1936 = vmatpush1.bf16.msra.mxu0 %v1877
  %1937 = vmatprep.subr.bf16.mxu0 %v1882
  %1938 = vmatpush1.bf16.msra.mxu0 %v1881
  %1939 = vmatprep.subr.bf16.mxu0 %v1886
  %1940 = vmatpush1.bf16.msra.mxu0 %v1885
  %1941 = vmatprep.subr.bf16.mxu0 %v1890
  %1942 = vmatpush1.bf16.msra.mxu0 %v1889
  %1943 = vmatprep.subr.bf16.mxu0 %v1894
  %1944 = vmatpush1.bf16.msra.mxu0 %v1893
  %1945 = vmatprep.subr.bf16.mxu0 0
  %1946 = vmatpush1.bf16.msra.mxu0 0
  %1947 = vmatprep.subr.bf16.mxu0 0
  %1948 = vmatpush1.bf16.msra.mxu0 0
  %1949 = vmatprep.subr.bf16.mxu0 0
  %1950 = vmatpush1.bf16.msra.mxu0 0
  %1951 = vmatprep.subr.bf16.mxu0 0
  %1952 = vmatpush1.bf16.msra.mxu0 0
  %1953 = vmatprep.subr.bf16.mxu0 0
  %1954 = vmatpush1.bf16.msra.mxu0 0
  %1955 = vmatprep.subr.bf16.mxu0 0
  %1956 = vmatpush1.bf16.msra.mxu0 0
  %1957 = vmatprep.subr.bf16.mxu0 0
  %1958 = vmatpush1.bf16.msra.mxu0 0
  %1959 = vmatprep.subr.bf16.mxu0 0
  %1960 = vmatpush1.bf16.msra.mxu0 0
  %1961 = vmatprep.mubr.bf16.mxu0 0
  %1962 = vmatmul.mubr.bf16.gmra.mrb[0].mxu0 %v1768
  %v1963 = vpop.f32.mrb[0].mxu0
  %v1964 = vadd.f32 0.0, %v1963
  %v1965 = vpop.f32.mrb[0].mxu0
  %v1966 = vadd.f32 0.0, %v1965
  %v1967 = vpop.f32.mrb[0].mxu0
  %v1968 = vpop.f32.mrb[0].mxu0
  %1969 = vdwg.mxu0
  %1970 = vmatprep.subr.bf16.mxu0 %v1868
  %1971 = vmatpush1.bf16.msra.mxu0 %v1867
  %1972 = vmatprep.subr.bf16.mxu0 %v1872
  %1973 = vmatpush1.bf16.msra.mxu0 %v1871
  %1974 = vmatprep.subr.bf16.mxu0 %v1876
  %1975 = vmatpush1.bf16.msra.mxu0 %v1875
  %1976 = vmatprep.subr.bf16.mxu0 %v1880
  %1977 = vmatpush1.bf16.msra.mxu0 %v1879
  %1978 = vmatprep.subr.bf16.mxu0 %v1884
  %1979 = vmatpush1.bf16.msra.mxu0 %v1883
  %1980 = vmatprep.subr.bf16.mxu0 %v1888
  %1981 = vmatpush1.bf16.msra.mxu0 %v1887
  %1982 = vmatprep.subr.bf16.mxu0 %v1892
  %1983 = vmatpush1.bf16.msra.mxu0 %v1891
  %1984 = vmatprep.subr.bf16.mxu0 %v1896
  %1985 = vmatpush1.bf16.msra.mxu0 %v1895
  %1986 = vmatprep.subr.bf16.mxu0 0
  %1987 = vmatpush1.bf16.msra.mxu0 0
  %1988 = vmatprep.subr.bf16.mxu0 0
  %1989 = vmatpush1.bf16.msra.mxu0 0
  %1990 = vmatprep.subr.bf16.mxu0 0
  %1991 = vmatpush1.bf16.msra.mxu0 0
  %1992 = vmatprep.subr.bf16.mxu0 0
  %1993 = vmatpush1.bf16.msra.mxu0 0
  %1994 = vmatprep.subr.bf16.mxu0 0
  %1995 = vmatpush1.bf16.msra.mxu0 0
  %1996 = vmatprep.subr.bf16.mxu0 0
  %1997 = vmatpush1.bf16.msra.mxu0 0
  %1998 = vmatprep.subr.bf16.mxu0 0
  %1999 = vmatpush1.bf16.msra.mxu0 0
  %2000 = vmatprep.subr.bf16.mxu0 0
  %2001 = vmatpush1.bf16.msra.mxu0 0
  %2002 = vmatprep.mubr.bf16.mxu0 0
  %2003 = vmatmul.mubr.bf16.gmra.mrb[0].mxu0 %v1768
  %v2004 = vpop.f32.mrb[0].mxu0
  %v2005 = vadd.f32 0.0, %v2004
  %v2006 = vpop.f32.mrb[0].mxu0
  %v2007 = vadd.f32 0.0, %v2006
  %v2008 = vpop.f32.mrb[0].mxu0
  %v2009 = vpop.f32.mrb[0].mxu0
  %2010 = vdwg.mxu0
  %v2011 = vadd.f32 %v1764, %v1964
  %v2012 = vadd.f32 %v1765, %v1966
  %v2013 = vadd.f32 %v1766, %v2005
  %v2014 = vadd.f32 %v1767, %v2007
  %v2015 = vxor.u32 %v2011, 2147483648
  %v2016 = vxor.u32 %v2012, 2147483648
  %v2017 = vxor.u32 %v2013, 2147483648
  %v2018 = vmul.f32 %v2015, 1.442695
  %v2019 = vpow.pop %v2018
  %v2020 = vmul.f32 %v2016, 1.442695
  %v2021 = vpow.pop %v2020
  %v2022 = vmul.f32 %v2017, 1.442695
  %v2023 = vpow.pop %v2022
  %v2024 = vadd.f32 %v2019, 1.0
  %v2025 = vadd.f32 %v2021, 1.0
  %v2026 = vadd.f32 %v2023, 1.0
  %v2027 = vrcp.pop %v2024
  %v2028 = vmul.f32 1.0, %v2027
  %v2029 = vrcp.pop %v2025
  %v2030 = vmul.f32 1.0, %v2029
  %v2031 = vrcp.pop %v2026
  %v2032 = vmul.f32 1.0, %v2031
  %v2033 = vtanh.pop %v2014
  %v2034 = vmul.f32 %v2030, %v1760
  %v2035 = vmul.f32 %v2028, %v2033
  %v2036 = vadd.f32 %v2034, %v2035
  %v2037 = vtanh.pop %v2036
  %v2038 = vmul.f32 %v2032, %v2037
  %2039 = vst [vmem:[#allocation4 + $0x8] sm:$0xff] %v2038
  %v2040 = vld [vmem:[#allocation2 + $0x40] sm:$0xff]
  %v2041 = vld [vmem:[#allocation2 + $0x48] sm:$0xff]
  %v2042 = vld [vmem:[#allocation2 + $0x50] sm:$0xff]
  %v2043 = vld [vmem:[#allocation2 + $0x58] sm:$0xff]
  %v2044 = vpack.c.bf16 %v2038, %v2038
  %2045 = vmatprep.subr.bf16.mxu0 %v1866
  %2046 = vmatpush1.bf16.msra.mxu0 %v1865
  %2047 = vmatprep.subr.bf16.mxu0 %v1870
  %2048 = vmatpush1.bf16.msra.mxu0 %v1869
  %2049 = vmatprep.subr.bf16.mxu0 %v1874
  %2050 = vmatpush1.bf16.msra.mxu0 %v1873
  %2051 = vmatprep.subr.bf16.mxu0 %v1878
  %2052 = vmatpush1.bf16.msra.mxu0 %v1877
  %2053 = vmatprep.subr.bf16.mxu0 %v1882
  %2054 = vmatpush1.bf16.msra.mxu0 %v1881
  %2055 = vmatprep.subr.bf16.mxu0 %v1886
  %2056 = vmatpush1.bf16.msra.mxu0 %v1885
  %2057 = vmatprep.subr.bf16.mxu0 %v1890
  %2058 = vmatpush1.bf16.msra.mxu0 %v1889
  %2059 = vmatprep.subr.bf16.mxu0 %v1894
  %2060 = vmatpush1.bf16.msra.mxu0 %v1893
  %2061 = vmatprep.subr.bf16.mxu0 0
  %2062 = vmatpush1.bf16.msra.mxu0 0
  %2063 = vmatprep.subr.bf16.mxu0 0
  %2064 = vmatpush1.bf16.msra.mxu0 0
  %2065 = vmatprep.subr.bf16.mxu0 0
  %2066 = vmatpush1.bf16.msra.mxu0 0
  %2067 = vmatprep.subr.bf16.mxu0 0
  %2068 = vmatpush1.bf16.msra.mxu0 0
  %2069 = vmatprep.subr.bf16.mxu0 0
  %2070 = vmatpush1.bf16.msra.mxu0 0
  %2071 = vmatprep.subr.bf16.mxu0 0
  %2072 = vmatpush1.bf16.msra.mxu0 0
  %2073 = vmatprep.subr.bf16.mxu0 0
  %2074 = vmatpush1.bf16.msra.mxu0 0
  %2075 = vmatprep.subr.bf16.mxu0 0
  %2076 = vmatpush1.bf16.msra.mxu0 0
  %2077 = vmatprep.mubr.bf16.mxu0 0
  %2078 = vmatmul.mubr.bf16.gmra.mrb[0].mxu0 %v2044
  %v2079 = vpop.f32.mrb[0].mxu0
  %v2080 = vadd.f32 0.0, %v2079
  %v2081 = vpop.f32.mrb[0].mxu0
  %v2082 = vadd.f32 0.0, %v2081
  %v2083 = vpop.f32.mrb[0].mxu0
  %v2084 = vpop.f32.mrb[0].mxu0
  %2085 = vdwg.mxu0
  %2086 = vmatprep.subr.bf16.mxu0 %v1868
  %2087 = vmatpush1.bf16.msra.mxu0 %v1867
  %2088 = vmatprep.subr.bf16.mxu0 %v1872
  %2089 = vmatpush1.bf16.msra.mxu0 %v1871
  %2090 = vmatprep.subr.bf16.mxu0 %v1876
  %2091 = vmatpush1.bf16.msra.mxu0 %v1875
  %2092 = vmatprep.subr.bf16.mxu0 %v1880
  %2093 = vmatpush1.bf16.msra.mxu0 %v1879
  %2094 = vmatprep.subr.bf16.mxu0 %v1884
  %2095 = vmatpush1.bf16.msra.mxu0 %v1883
  %2096 = vmatprep.subr.bf16.mxu0 %v1888
  %2097 = vmatpush1.bf16.msra.mxu0 %v1887
  %2098 = vmatprep.subr.bf16.mxu0 %v1892
  %2099 = vmatpush1.bf16.msra.mxu0 %v1891
  %2100 = vmatprep.subr.bf16.mxu0 %v1896
  %2101 = vmatpush1.bf16.msra.mxu0 %v1895
  %2102 = vmatprep.subr.bf16.mxu0 0
  %2103 = vmatpush1.bf16.msra.mxu0 0
  %2104 = vmatprep.subr.bf16.mxu0 0
  %2105 = vmatpush1.bf16.msra.mxu0 0
  %2106 = vmatprep.subr.bf16.mxu0 0
  %2107 = vmatpush1.bf16.msra.mxu0 0
  %2108 = vmatprep.subr.bf16.mxu0 0
  %2109 = vmatpush1.bf16.msra.mxu0 0
  %2110 = vmatprep.subr.bf16.mxu0 0
  %2111 = vmatpush1.bf16.msra.mxu0 0
  %2112 = vmatprep.subr.bf16.mxu0 0
  %2113 = vmatpush1.bf16.msra.mxu0 0
  %2114 = vmatprep.subr.bf16.mxu0 0
  %2115 = vmatpush1.bf16.msra.mxu0 0
  %2116 = vmatprep.subr.bf16.mxu0 0
  %2117 = vmatpush1.bf16.msra.mxu0 0
  %2118 = vmatprep.mubr.bf16.mxu0 0
  %2119 = vmatmul.mubr.bf16.gmra.mrb[0].mxu0 %v2044
  %v2120 = vpop.f32.mrb[0].mxu0
  %v2121 = vadd.f32 0.0, %v2120
  %v2122 = vpop.f32.mrb[0].mxu0
  %v2123 = vadd.f32 0.0, %v2122
  %v2124 = vpop.f32.mrb[0].mxu0
  %v2125 = vpop.f32.mrb[0].mxu0
  %2126 = vdwg.mxu0
  %v2127 = vadd.f32 %v2040, %v2080
  %v2128 = vadd.f32 %v2041, %v2082
  %v2129 = vadd.f32 %v2042, %v2121
  %v2130 = vadd.f32 %v2043, %v2123
  %v2131 = vxor.u32 %v2127, 2147483648
  %v2132 = vxor.u32 %v2128, 2147483648
  %v2133 = vxor.u32 %v2129, 2147483648
  %v2134 = vmul.f32 %v2131, 1.442695
  %v2135 = vpow.pop %v2134
  %v2136 = vmul.f32 %v2132, 1.442695
  %v2137 = vpow.pop %v2136
  %v2138 = vmul.f32 %v2133, 1.442695
  %v2139 = vpow.pop %v2138
  %v2140 = vadd.f32 %v2135, 1.0
  %v2141 = vadd.f32 %v2137, 1.0
  %v2142 = vadd.f32 %v2139, 1.0
  %v2143 = vrcp.pop %v2140
  %v2144 = vmul.f32 1.0, %v2143
  %v2145 = vrcp.pop %v2141
  %v2146 = vmul.f32 1.0, %v2145
  %v2147 = vrcp.pop %v2142
  %v2148 = vmul.f32 1.0, %v2147
  %v2149 = vtanh.pop %v2130
  %v2150 = vmul.f32 %v2146, %v2036
  %v2151 = vmul.f32 %v2144, %v2149
  %v2152 = vadd.f32 %v2150, %v2151
  %v2153 = vtanh.pop %v2152
  %v2154 = vmul.f32 %v2148, %v2153
  %2155 = vst [vmem:[#allocation4 + $0x10] sm:$0xff] %v2154
  %v2156 = vld [vmem:[#allocation2 + $0x60] sm:$0xff]
  %v2157 = vld [vmem:[#allocation2 + $0x68] sm:$0xff]
  %v2158 = vld [vmem:[#allocation2 + $0x70] sm:$0xff]
  %v2159 = vld [vmem:[#allocation2 + $0x78] sm:$0xff]
  %v2160 = vpack.c.bf16 %v2154, %v2154
  %2161 = vmatprep.subr.bf16.mxu0 %v1866
  %2162 = vmatpush1.bf16.msra.mxu0 %v1865
  %2163 = vmatprep.subr.bf16.mxu0 %v1870
  %2164 = vmatpush1.bf16.msra.mxu0 %v1869
  %2165 = vmatprep.subr.bf16.mxu0 %v1874
  %2166 = vmatpush1.bf16.msra.mxu0 %v1873
  %2167 = vmatprep.subr.bf16.mxu0 %v1878
  %2168 = vmatpush1.bf16.msra.mxu0 %v1877
  %2169 = vmatprep.subr.bf16.mxu0 %v1882
  %2170 = vmatpush1.bf16.msra.mxu0 %v1881
  %2171 = vmatprep.subr.bf16.mxu0 %v1886
  %2172 = vmatpush1.bf16.msra.mxu0 %v1885
  %2173 = vmatprep.subr.bf16.mxu0 %v1890
  %2174 = vmatpush1.bf16.msra.mxu0 %v1889
  %2175 = vmatprep.subr.bf16.mxu0 %v1894
  %2176 = vmatpush1.bf16.msra.mxu0 %v1893
  %2177 = vmatprep.subr.bf16.mxu0 0
  %2178 = vmatpush1.bf16.msra.mxu0 0
  %2179 = vmatprep.subr.bf16.mxu0 0
  %2180 = vmatpush1.bf16.msra.mxu0 0
  %2181 = vmatprep.subr.bf16.mxu0 0
  %2182 = vmatpush1.bf16.msra.mxu0 0
  %2183 = vmatprep.subr.bf16.mxu0 0
  %2184 = vmatpush1.bf16.msra.mxu0 0
  %2185 = vmatprep.subr.bf16.mxu0 0
  %2186 = vmatpush1.bf16.msra.mxu0 0
  %2187 = vmatprep.subr.bf16.mxu0 0
  %2188 = vmatpush1.bf16.msra.mxu0 0
  %2189 = vmatprep.subr.bf16.mxu0 0
  %2190 = vmatpush1.bf16.msra.mxu0 0
  %2191 = vmatprep.subr.bf16.mxu0 0
  %2192 = vmatpush1.bf16.msra.mxu0 0
  %2193 = vmatprep.mubr.bf16.mxu0 0
  %2194 = vmatmul.mubr.bf16.gmra.mrb[0].mxu0 %v2160
  %v2195 = vpop.f32.mrb[0].mxu0
  %v2196 = vadd.f32 0.0, %v2195
  %v2197 = vpop.f32.mrb[0].mxu0
  %v2198 = vadd.f32 0.0, %v2197
  %v2199 = vpop.f32.mrb[0].mxu0
  %v2200 = vpop.f32.mrb[0].mxu0
  %2201 = vdwg.mxu0
  %2202 = vmatprep.subr.bf16.mxu0 %v1868
  %2203 = vmatpush1.bf16.msra.mxu0 %v1867
  %2204 = vmatprep.subr.bf16.mxu0 %v1872
  %2205 = vmatpush1.bf16.msra.mxu0 %v1871
  %2206 = vmatprep.subr.bf16.mxu0 %v1876
  %2207 = vmatpush1.bf16.msra.mxu0 %v1875
  %2208 = vmatprep.subr.bf16.mxu0 %v1880
  %2209 = vmatpush1.bf16.msra.mxu0 %v1879
  %2210 = vmatprep.subr.bf16.mxu0 %v1884
  %2211 = vmatpush1.bf16.msra.mxu0 %v1883
  %2212 = vmatprep.subr.bf16.mxu0 %v1888
  %2213 = vmatpush1.bf16.msra.mxu0 %v1887
  %2214 = vmatprep.subr.bf16.mxu0 %v1892
  %2215 = vmatpush1.bf16.msra.mxu0 %v1891
  %2216 = vmatprep.subr.bf16.mxu0 %v1896
  %2217 = vmatpush1.bf16.msra.mxu0 %v1895
  %2218 = vmatprep.subr.bf16.mxu0 0
  %2219 = vmatpush1.bf16.msra.mxu0 0
  %2220 = vmatprep.subr.bf16.mxu0 0
  %2221 = vmatpush1.bf16.msra.mxu0 0
  %2222 = vmatprep.subr.bf16.mxu0 0
  %2223 = vmatpush1.bf16.msra.mxu0 0
  %2224 = vmatprep.subr.bf16.mxu0 0
  %2225 = vmatpush1.bf16.msra.mxu0 0
  %2226 = vmatprep.subr.bf16.mxu0 0
  %2227 = vmatpush1.bf16.msra.mxu0 0
  %2228 = vmatprep.subr.bf16.mxu0 0
  %2229 = vmatpush1.bf16.msra.mxu0 0
  %2230 = vmatprep.subr.bf16.mxu0 0
  %2231 = vmatpush1.bf16.msra.mxu0 0
  %2232 = vmatprep.subr.bf16.mxu0 0
  %2233 = vmatpush1.bf16.msra.mxu0 0
  %2234 = vmatprep.mubr.bf16.mxu0 0
  %2235 = vmatmul.mubr.bf16.gmra.mrb[0].mxu0 %v2160
  %v2236 = vpop.f32.mrb[0].mxu0
  %v2237 = vadd.f32 0.0, %v2236
  %v2238 = vpop.f32.mrb[0].mxu0
  %v2239 = vadd.f32 0.0, %v2238
  %v2240 = vpop.f32.mrb[0].mxu0
  %v2241 = vpop.f32.mrb[0].mxu0
  %2242 = vdwg.mxu0
  %v2243 = vadd.f32 %v2156, %v2196
  %v2244 = vadd.f32 %v2157, %v2198
  %v2245 = vadd.f32 %v2158, %v2237
  %v2246 = vadd.f32 %v2159, %v2239
  %v2247 = vxor.u32 %v2243, 2147483648
  %v2248 = vxor.u32 %v2244, 2147483648
  %v2249 = vxor.u32 %v2245, 2147483648
  %v2250 = vmul.f32 %v2247, 1.442695
  %v2251 = vpow.pop %v2250
  %v2252 = vmul.f32 %v2248, 1.442695
  %v2253 = vpow.pop %v2252
  %v2254 = vmul.f32 %v2249, 1.442695
  %v2255 = vpow.pop %v2254
  %v2256 = vadd.f32 %v2251, 1.0
  %v2257 = vadd.f32 %v2253, 1.0
  %v2258 = vadd.f32 %v2255, 1.0
  %v2259 = vrcp.pop %v2256
  %v2260 = vmul.f32 1.0, %v2259
  %v2261 = vrcp.pop %v2257
  %v2262 = vmul.f32 1.0, %v2261
  %v2263 = vrcp.pop %v2258
  %v2264 = vmul.f32 1.0, %v2263
  %v2265 = vtanh.pop %v2246
  %v2266 = vmul.f32 %v2262, %v2152
  %v2267 = vmul.f32 %v2260, %v2265
  %v2268 = vadd.f32 %v2266, %v2267
  %v2269 = vtanh.pop %v2268
  %v2270 = vmul.f32 %v2264, %v2269
  %2271 = vst [vmem:[#allocation4 + $0x18] sm:$0xff] %v2270
  %v2272 = vld [vmem:[#allocation2 + $0x80] sm:$0xff]
  %v2273 = vld [vmem:[#allocation2 + $0x88] sm:$0xff]
  %v2274 = vld [vmem:[#allocation2 + $0x90] sm:$0xff]
  %v2275 = vld [vmem:[#allocation2 + $0x98] sm:$0xff]
  %v2276 = vpack.c.bf16 %v2270, %v2270
  %2277 = vmatprep.subr.bf16.mxu0 %v1866
  %2278 = vmatpush1.bf16.msra.mxu0 %v1865
  %2279 = vmatprep.subr.bf16.mxu0 %v1870
  %2280 = vmatpush1.bf16.msra.mxu0 %v1869
  %2281 = vmatprep.subr.bf16.mxu0 %v1874
  %2282 = vmatpush1.bf16.msra.mxu0 %v1873
  %2283 = vmatprep.subr.bf16.mxu0 %v1878
  %2284 = vmatpush1.bf16.msra.mxu0 %v1877
  %2285 = vmatprep.subr.bf16.mxu0 %v1882
  %2286 = vmatpush1.bf16.msra.mxu0 %v1881
  %2287 = vmatprep.subr.bf16.mxu0 %v1886
  %2288 = vmatpush1.bf16.msra.mxu0 %v1885
  %2289 = vmatprep.subr.bf16.mxu0 %v1890
  %2290 = vmatpush1.bf16.msra.mxu0 %v1889
  %2291 = vmatprep.subr.bf16.mxu0 %v1894
  %2292 = vmatpush1.bf16.msra.mxu0 %v1893
  %2293 = vmatprep.subr.bf16.mxu0 0
  %2294 = vmatpush1.bf16.msra.mxu0 0
  %2295 = vmatprep.subr.bf16.mxu0 0
  %2296 = vmatpush1.bf16.msra.mxu0 0
  %2297 = vmatprep.subr.bf16.mxu0 0
  %2298 = vmatpush1.bf16.msra.mxu0 0
  %2299 = vmatprep.subr.bf16.mxu0 0
  %2300 = vmatpush1.bf16.msra.mxu0 0
  %2301 = vmatprep.subr.bf16.mxu0 0
  %2302 = vmatpush1.bf16.msra.mxu0 0
  %2303 = vmatprep.subr.bf16.mxu0 0
  %2304 = vmatpush1.bf16.msra.mxu0 0
  %2305 = vmatprep.subr.bf16.mxu0 0
  %2306 = vmatpush1.bf16.msra.mxu0 0
  %2307 = vmatprep.subr.bf16.mxu0 0
  %2308 = vmatpush1.bf16.msra.mxu0 0
  %2309 = vmatprep.mubr.bf16.mxu0 0
  %2310 = vmatmul.mubr.bf16.gmra.mrb[0].mxu0 %v2276
  %v2311 = vpop.f32.mrb[0].mxu0
  %v2312 = vadd.f32 0.0, %v2311
  %v2313 = vpop.f32.mrb[0].mxu0
  %v2314 = vadd.f32 0.0, %v2313
  %v2315 = vpop.f32.mrb[0].mxu0
  %v2316 = vpop.f32.mrb[0].mxu0
  %2317 = vdwg.mxu0
  %2318 = vmatprep.subr.bf16.mxu0 %v1868
  %2319 = vmatpush1.bf16.msra.mxu0 %v1867
  %2320 = vmatprep.subr.bf16.mxu0 %v1872
  %2321 = vmatpush1.bf16.msra.mxu0 %v1871
  %2322 = vmatprep.subr.bf16.mxu0 %v1876
  %2323 = vmatpush1.bf16.msra.mxu0 %v1875
  %2324 = vmatprep.subr.bf16.mxu0 %v1880
  %2325 = vmatpush1.bf16.msra.mxu0 %v1879
  %2326 = vmatprep.subr.bf16.mxu0 %v1884
  %2327 = vmatpush1.bf16.msra.mxu0 %v1883
  %2328 = vmatprep.subr.bf16.mxu0 %v1888
  %2329 = vmatpush1.bf16.msra.mxu0 %v1887
  %2330 = vmatprep.subr.bf16.mxu0 %v1892
  %2331 = vmatpush1.bf16.msra.mxu0 %v1891
  %2332 = vmatprep.subr.bf16.mxu0 %v1896
  %2333 = vmatpush1.bf16.msra.mxu0 %v1895
  %2334 = vmatprep.subr.bf16.mxu0 0
  %2335 = vmatpush1.bf16.msra.mxu0 0
  %2336 = vmatprep.subr.bf16.mxu0 0
  %2337 = vmatpush1.bf16.msra.mxu0 0
  %2338 = vmatprep.subr.bf16.mxu0 0
  %2339 = vmatpush1.bf16.msra.mxu0 0
  %2340 = vmatprep.subr.bf16.mxu0 0
  %2341 = vmatpush1.bf16.msra.mxu0 0
  %2342 = vmatprep.subr.bf16.mxu0 0
  %2343 = vmatpush1.bf16.msra.mxu0 0
  %2344 = vmatprep.subr.bf16.mxu0 0
  %2345 = vmatpush1.bf16.msra.mxu0 0
  %2346 = vmatprep.subr.bf16.mxu0 0
  %2347 = vmatpush1.bf16.msra.mxu0 0
  %2348 = vmatprep.subr.bf16.mxu0 0
  %2349 = vmatpush1.bf16.msra.mxu0 0
  %2350 = vmatprep.mubr.bf16.mxu0 0
  %2351 = vmatmul.mubr.bf16.gmra.mrb[0].mxu0 %v2276
  %v2352 = vpop.f32.mrb[0].mxu0
  %v2353 = vadd.f32 0.0, %v2352
  %v2354 = vpop.f32.mrb[0].mxu0
  %v2355 = vadd.f32 0.0, %v2354
  %v2356 = vpop.f32.mrb[0].mxu0
  %v2357 = vpop.f32.mrb[0].mxu0
  %2358 = vdwg.mxu0
  %v2359 = vadd.f32 %v2272, %v2312
  %v2360 = vadd.f32 %v2273, %v2314
  %v2361 = vadd.f32 %v2274, %v2353
  %v2362 = vadd.f32 %v2275, %v2355
  %v2363 = vxor.u32 %v2359, 2147483648
  %v2364 = vxor.u32 %v2360, 2147483648
  %v2365 = vxor.u32 %v2361, 2147483648
  %v2366 = vmul.f32 %v2363, 1.442695
  %v2367 = vpow.pop %v2366
  %v2368 = vmul.f32 %v2364, 1.442695
  %v2369 = vpow.pop %v2368
  %v2370 = vmul.f32 %v2365, 1.442695
  %v2371 = vpow.pop %v2370
  %v2372 = vadd.f32 %v2367, 1.0
  %v2373 = vadd.f32 %v2369, 1.0
  %v2374 = vadd.f32 %v2371, 1.0
  %v2375 = vrcp.pop %v2372
  %v2376 = vmul.f32 1.0, %v2375
  %v2377 = vrcp.pop %v2373
  %v2378 = vmul.f32 1.0, %v2377
  %v2379 = vrcp.pop %v2374
  %v2380 = vmul.f32 1.0, %v2379
  %v2381 = vtanh.pop %v2362
  %v2382 = vmul.f32 %v2378, %v2268
  %v2383 = vmul.f32 %v2376, %v2381
  %v2384 = vadd.f32 %v2382, %v2383
  %v2385 = vtanh.pop %v2384
  %v2386 = vmul.f32 %v2380, %v2385
  %2387 = vst [vmem:[#allocation4 + $0x20] sm:$0xff] %v2386
  %v2388 = vld [vmem:[#allocation2 + $0xa0] sm:$0xff]
  %v2389 = vld [vmem:[#allocation2 + $0xa8] sm:$0xff]
  %v2390 = vld [vmem:[#allocation2 + $0xb0] sm:$0xff]
  %v2391 = vld [vmem:[#allocation2 + $0xb8] sm:$0xff]
  %v2392 = vpack.c.bf16 %v2386, %v2386
  %2393 = vmatprep.subr.bf16.mxu0 %v1866
  %2394 = vmatpush1.bf16.msra.mxu0 %v1865
  %2395 = vmatprep.subr.bf16.mxu0 %v1870
  %2396 = vmatpush1.bf16.msra.mxu0 %v1869
  %2397 = vmatprep.subr.bf16.mxu0 %v1874
  %2398 = vmatpush1.bf16.msra.mxu0 %v1873
  %2399 = vmatprep.subr.bf16.mxu0 %v1878
  %2400 = vmatpush1.bf16.msra.mxu0 %v1877
  %2401 = vmatprep.subr.bf16.mxu0 %v1882
  %2402 = vmatpush1.bf16.msra.mxu0 %v1881
  %2403 = vmatprep.subr.bf16.mxu0 %v1886
  %2404 = vmatpush1.bf16.msra.mxu0 %v1885
  %2405 = vmatprep.subr.bf16.mxu0 %v1890
  %2406 = vmatpush1.bf16.msra.mxu0 %v1889
  %2407 = vmatprep.subr.bf16.mxu0 %v1894
  %2408 = vmatpush1.bf16.msra.mxu0 %v1893
  %2409 = vmatprep.subr.bf16.mxu0 0
  %2410 = vmatpush1.bf16.msra.mxu0 0
  %2411 = vmatprep.subr.bf16.mxu0 0
  %2412 = vmatpush1.bf16.msra.mxu0 0
  %2413 = vmatprep.subr.bf16.mxu0 0
  %2414 = vmatpush1.bf16.msra.mxu0 0
  %2415 = vmatprep.subr.bf16.mxu0 0
  %2416 = vmatpush1.bf16.msra.mxu0 0
  %2417 = vmatprep.subr.bf16.mxu0 0
  %2418 = vmatpush1.bf16.msra.mxu0 0
  %2419 = vmatprep.subr.bf16.mxu0 0
  %2420 = vmatpush1.bf16.msra.mxu0 0
  %2421 = vmatprep.subr.bf16.mxu0 0
  %2422 = vmatpush1.bf16.msra.mxu0 0
  %2423 = vmatprep.subr.bf16.mxu0 0
  %2424 = vmatpush1.bf16.msra.mxu0 0
  %2425 = vmatprep.mubr.bf16.mxu0 0
  %2426 = vmatmul.mubr.bf16.gmra.mrb[0].mxu0 %v2392
  %v2427 = vpop.f32.mrb[0].mxu0
  %v2428 = vadd.f32 0.0, %v2427
  %v2429 = vpop.f32.mrb[0].mxu0
  %v2430 = vadd.f32 0.0, %v2429
  %v2431 = vpop.f32.mrb[0].mxu0
  %v2432 = vpop.f32.mrb[0].mxu0
  %2433 = vdwg.mxu0
  %2434 = vmatprep.subr.bf16.mxu0 %v1868
  %2435 = vmatpush1.bf16.msra.mxu0 %v1867
  %2436 = vmatprep.subr.bf16.mxu0 %v1872
  %2437 = vmatpush1.bf16.msra.mxu0 %v1871
  %2438 = vmatprep.subr.bf16.mxu0 %v1876
  %2439 = vmatpush1.bf16.msra.mxu0 %v1875
  %2440 = vmatprep.subr.bf16.mxu0 %v1880
  %2441 = vmatpush1.bf16.msra.mxu0 %v1879
  %2442 = vmatprep.subr.bf16.mxu0 %v1884
  %2443 = vmatpush1.bf16.msra.mxu0 %v1883
  %2444 = vmatprep.subr.bf16.mxu0 %v1888
  %2445 = vmatpush1.bf16.msra.mxu0 %v1887
  %2446 = vmatprep.subr.bf16.mxu0 %v1892
  %2447 = vmatpush1.bf16.msra.mxu0 %v1891
  %2448 = vmatprep.subr.bf16.mxu0 %v1896
  %2449 = vmatpush1.bf16.msra.mxu0 %v1895
  %2450 = vmatprep.subr.bf16.mxu0 0
  %2451 = vmatpush1.bf16.msra.mxu0 0
  %2452 = vmatprep.subr.bf16.mxu0 0
  %2453 = vmatpush1.bf16.msra.mxu0 0
  %2454 = vmatprep.subr.bf16.mxu0 0
  %2455 = vmatpush1.bf16.msra.mxu0 0
  %2456 = vmatprep.subr.bf16.mxu0 0
  %2457 = vmatpush1.bf16.msra.mxu0 0
  %2458 = vmatprep.subr.bf16.mxu0 0
  %2459 = vmatpush1.bf16.msra.mxu0 0
  %2460 = vmatprep.subr.bf16.mxu0 0
  %2461 = vmatpush1.bf16.msra.mxu0 0
  %2462 = vmatprep.subr.bf16.mxu0 0
  %2463 = vmatpush1.bf16.msra.mxu0 0
  %2464 = vmatprep.subr.bf16.mxu0 0
  %2465 = vmatpush1.bf16.msra.mxu0 0
  %2466 = vmatprep.mubr.bf16.mxu0 0
  %2467 = vmatmul.mubr.bf16.gmra.mrb[0].mxu0 %v2392
  %v2468 = vpop.f32.mrb[0].mxu0
  %v2469 = vadd.f32 0.0, %v2468
  %v2470 = vpop.f32.mrb[0].mxu0
  %v2471 = vadd.f32 0.0, %v2470
  %v2472 = vpop.f32.mrb[0].mxu0
  %v2473 = vpop.f32.mrb[0].mxu0
  %2474 = vdwg.mxu0
  %v2475 = vadd.f32 %v2388, %v2428
  %v2476 = vadd.f32 %v2389, %v2430
  %v2477 = vadd.f32 %v2390, %v2469
  %v2478 = vadd.f32 %v2391, %v2471
  %v2479 = vxor.u32 %v2475, 2147483648
  %v2480 = vxor.u32 %v2476, 2147483648
  %v2481 = vxor.u32 %v2477, 2147483648
  %v2482 = vmul.f32 %v2479, 1.442695
  %v2483 = vpow.pop %v2482
  %v2484 = vmul.f32 %v2480, 1.442695
  %v2485 = vpow.pop %v2484
  %v2486 = vmul.f32 %v2481, 1.442695
  %v2487 = vpow.pop %v2486
  %v2488 = vadd.f32 %v2483, 1.0
  %v2489 = vadd.f32 %v2485, 1.0
  %v2490 = vadd.f32 %v2487, 1.0
  %v2491 = vrcp.pop %v2488
  %v2492 = vmul.f32 1.0, %v2491
  %v2493 = vrcp.pop %v2489
  %v2494 = vmul.f32 1.0, %v2493
  %v2495 = vrcp.pop %v2490
  %v2496 = vmul.f32 1.0, %v2495
  %v2497 = vtanh.pop %v2478
  %v2498 = vmul.f32 %v2494, %v2384
  %v2499 = vmul.f32 %v2492, %v2497
  %v2500 = vadd.f32 %v2498, %v2499
  %v2501 = vtanh.pop %v2500
  %v2502 = vmul.f32 %v2496, %v2501
  %2503 = vst [vmem:[#allocation4 + $0x28] sm:$0xff] %v2502
  %v2504 = vld [vmem:[#allocation2 + $0xc0] sm:$0xff]
  %v2505 = vld [vmem:[#allocation2 + $0xc8] sm:$0xff]
  %v2506 = vld [vmem:[#allocation2 + $0xd0] sm:$0xff]
  %v2507 = vld [vmem:[#allocation2 + $0xd8] sm:$0xff]
  %v2508 = vpack.c.bf16 %v2502, %v2502
  %2509 = vmatprep.subr.bf16.mxu0 %v1866
  %2510 = vmatpush1.bf16.msra.mxu0 %v1865
  %2511 = vmatprep.subr.bf16.mxu0 %v1870
  %2512 = vmatpush1.bf16.msra.mxu0 %v1869
  %2513 = vmatprep.subr.bf16.mxu0 %v1874
  %2514 = vmatpush1.bf16.msra.mxu0 %v1873
  %2515 = vmatprep.subr.bf16.mxu0 %v1878
  %2516 = vmatpush1.bf16.msra.mxu0 %v1877
  %2517 = vmatprep.subr.bf16.mxu0 %v1882
  %2518 = vmatpush1.bf16.msra.mxu0 %v1881
  %2519 = vmatprep.subr.bf16.mxu0 %v1886
  %2520 = vmatpush1.bf16.msra.mxu0 %v1885
  %2521 = vmatprep.subr.bf16.mxu0 %v1890
  %2522 = vmatpush1.bf16.msra.mxu0 %v1889
  %2523 = vmatprep.subr.bf16.mxu0 %v1894
  %2524 = vmatpush1.bf16.msra.mxu0 %v1893
  %2525 = vmatprep.subr.bf16.mxu0 0
  %2526 = vmatpush1.bf16.msra.mxu0 0
  %2527 = vmatprep.subr.bf16.mxu0 0
  %2528 = vmatpush1.bf16.msra.mxu0 0
  %2529 = vmatprep.subr.bf16.mxu0 0
  %2530 = vmatpush1.bf16.msra.mxu0 0
  %2531 = vmatprep.subr.bf16.mxu0 0
  %2532 = vmatpush1.bf16.msra.mxu0 0
  %2533 = vmatprep.subr.bf16.mxu0 0
  %2534 = vmatpush1.bf16.msra.mxu0 0
  %2535 = vmatprep.subr.bf16.mxu0 0
  %2536 = vmatpush1.bf16.msra.mxu0 0
  %2537 = vmatprep.subr.bf16.mxu0 0
  %2538 = vmatpush1.bf16.msra.mxu0 0
  %2539 = vmatprep.subr.bf16.mxu0 0
  %2540 = vmatpush1.bf16.msra.mxu0 0
  %2541 = vmatprep.mubr.bf16.mxu0 0
  %2542 = vmatmul.mubr.bf16.gmra.mrb[0].mxu0 %v2508
  %v2543 = vpop.f32.mrb[0].mxu0
  %v2544 = vadd.f32 0.0, %v2543
  %v2545 = vpop.f32.mrb[0].mxu0
  %v2546 = vadd.f32 0.0, %v2545
  %v2547 = vpop.f32.mrb[0].mxu0
  %v2548 = vpop.f32.mrb[0].mxu0
  %2549 = vdwg.mxu0
  %2550 = vmatprep.subr.bf16.mxu0 %v1868
  %2551 = vmatpush1.bf16.msra.mxu0 %v1867
  %2552 = vmatprep.subr.bf16.mxu0 %v1872
  %2553 = vmatpush1.bf16.msra.mxu0 %v1871
  %2554 = vmatprep.subr.bf16.mxu0 %v1876
  %2555 = vmatpush1.bf16.msra.mxu0 %v1875
  %2556 = vmatprep.subr.bf16.mxu0 %v1880
  %2557 = vmatpush1.bf16.msra.mxu0 %v1879
  %2558 = vmatprep.subr.bf16.mxu0 %v1884
  %2559 = vmatpush1.bf16.msra.mxu0 %v1883
  %2560 = vmatprep.subr.bf16.mxu0 %v1888
  %2561 = vmatpush1.bf16.msra.mxu0 %v1887
  %2562 = vmatprep.subr.bf16.mxu0 %v1892
  %2563 = vmatpush1.bf16.msra.mxu0 %v1891
  %2564 = vmatprep.subr.bf16.mxu0 %v1896
  %2565 = vmatpush1.bf16.msra.mxu0 %v1895
  %2566 = vmatprep.subr.bf16.mxu0 0
  %2567 = vmatpush1.bf16.msra.mxu0 0
  %2568 = vmatprep.subr.bf16.mxu0 0
  %2569 = vmatpush1.bf16.msra.mxu0 0
  %2570 = vmatprep.subr.bf16.mxu0 0
  %2571 = vmatpush1.bf16.msra.mxu0 0
  %2572 = vmatprep.subr.bf16.mxu0 0
  %2573 = vmatpush1.bf16.msra.mxu0 0
  %2574 = vmatprep.subr.bf16.mxu0 0
  %2575 = vmatpush1.bf16.msra.mxu0 0
  %2576 = vmatprep.subr.bf16.mxu0 0
  %2577 = vmatpush1.bf16.msra.mxu0 0
  %2578 = vmatprep.subr.bf16.mxu0 0
  %2579 = vmatpush1.bf16.msra.mxu0 0
  %2580 = vmatprep.subr.bf16.mxu0 0
  %2581 = vmatpush1.bf16.msra.mxu0 0
  %2582 = vmatprep.mubr.bf16.mxu0 0
  %2583 = vmatmul.mubr.bf16.gmra.mrb[0].mxu0 %v2508
  %v2584 = vpop.f32.mrb[0].mxu0
  %v2585 = vadd.f32 0.0, %v2584
  %v2586 = vpop.f32.mrb[0].mxu0
  %v2587 = vadd.f32 0.0, %v2586
  %v2588 = vpop.f32.mrb[0].mxu0
  %v2589 = vpop.f32.mrb[0].mxu0
  %2590 = vdwg.mxu0
  %v2591 = vadd.f32 %v2504, %v2544
  %v2592 = vadd.f32 %v2505, %v2546
  %v2593 = vadd.f32 %v2506, %v2585
  %v2594 = vadd.f32 %v2507, %v2587
  %v2595 = vxor.u32 %v2591, 2147483648
  %v2596 = vxor.u32 %v2592, 2147483648
  %v2597 = vxor.u32 %v2593, 2147483648
  %v2598 = vmul.f32 %v2595, 1.442695
  %v2599 = vpow.pop %v2598
  %v2600 = vmul.f32 %v2596, 1.442695
  %v2601 = vpow.pop %v2600
  %v2602 = vmul.f32 %v2597, 1.442695
  %v2603 = vpow.pop %v2602
  %v2604 = vadd.f32 %v2599, 1.0
  %v2605 = vadd.f32 %v2601, 1.0
  %v2606 = vadd.f32 %v2603, 1.0
  %v2607 = vrcp.pop %v2604
  %v2608 = vmul.f32 1.0, %v2607
  %v2609 = vrcp.pop %v2605
  %v2610 = vmul.f32 1.0, %v2609
  %v2611 = vrcp.pop %v2606
  %v2612 = vmul.f32 1.0, %v2611
  %v2613 = vtanh.pop %v2594
  %v2614 = vmul.f32 %v2610, %v2500
  %v2615 = vmul.f32 %v2608, %v2613
  %v2616 = vadd.f32 %v2614, %v2615
  %v2617 = vtanh.pop %v2616
  %v2618 = vmul.f32 %v2612, %v2617
  %2619 = vst [vmem:[#allocation4 + $0x30] sm:$0xff] %v2618
  %v2620 = vld [vmem:[#allocation2 + $0xe0] sm:$0xff]
  %v2621 = vld [vmem:[#allocation2 + $0xe8] sm:$0xff]
  %v2622 = vld [vmem:[#allocation2 + $0xf0] sm:$0xff]
  %v2623 = vld [vmem:[#allocation2 + $0xf8] sm:$0xff]
  %v2624 = vpack.c.bf16 %v2618, %v2618
  %2625 = vmatprep.subr.bf16.mxu0 %v1866
  %2626 = vmatpush1.bf16.msra.mxu0 %v1865
  %2627 = vmatprep.subr.bf16.mxu0 %v1870
  %2628 = vmatpush1.bf16.msra.mxu0 %v1869
  %2629 = vmatprep.subr.bf16.mxu0 %v1874
  %2630 = vmatpush1.bf16.msra.mxu0 %v1873
  %2631 = vmatprep.subr.bf16.mxu0 %v1878
  %2632 = vmatpush1.bf16.msra.mxu0 %v1877
  %2633 = vmatprep.subr.bf16.mxu0 %v1882
  %2634 = vmatpush1.bf16.msra.mxu0 %v1881
  %2635 = vmatprep.subr.bf16.mxu0 %v1886
  %2636 = vmatpush1.bf16.msra.mxu0 %v1885
  %2637 = vmatprep.subr.bf16.mxu0 %v1890
  %2638 = vmatpush1.bf16.msra.mxu0 %v1889
  %2639 = vmatprep.subr.bf16.mxu0 %v1894
  %2640 = vmatpush1.bf16.msra.mxu0 %v1893
  %2641 = vmatprep.subr.bf16.mxu0 0
  %2642 = vmatpush1.bf16.msra.mxu0 0
  %2643 = vmatprep.subr.bf16.mxu0 0
  %2644 = vmatpush1.bf16.msra.mxu0 0
  %2645 = vmatprep.subr.bf16.mxu0 0
  %2646 = vmatpush1.bf16.msra.mxu0 0
  %2647 = vmatprep.subr.bf16.mxu0 0
  %2648 = vmatpush1.bf16.msra.mxu0 0
  %2649 = vmatprep.subr.bf16.mxu0 0
  %2650 = vmatpush1.bf16.msra.mxu0 0
  %2651 = vmatprep.subr.bf16.mxu0 0
  %2652 = vmatpush1.bf16.msra.mxu0 0
  %2653 = vmatprep.subr.bf16.mxu0 0
  %2654 = vmatpush1.bf16.msra.mxu0 0
  %2655 = vmatprep.subr.bf16.mxu0 0
  %2656 = vmatpush1.bf16.msra.mxu0 0
  %2657 = vmatprep.mubr.bf16.mxu0 0
  %2658 = vmatmul.mubr.bf16.gmra.mrb[0].mxu0 %v2624
  %v2659 = vpop.f32.mrb[0].mxu0
  %v2660 = vadd.f32 0.0, %v2659
  %v2661 = vpop.f32.mrb[0].mxu0
  %v2662 = vadd.f32 0.0, %v2661
  %v2663 = vpop.f32.mrb[0].mxu0
  %v2664 = vpop.f32.mrb[0].mxu0
  %2665 = vdwg.mxu0
  %2666 = vmatprep.subr.bf16.mxu0 %v1868
  %2667 = vmatpush1.bf16.msra.mxu0 %v1867
  %2668 = vmatprep.subr.bf16.mxu0 %v1872
  %2669 = vmatpush1.bf16.msra.mxu0 %v1871
  %2670 = vmatprep.subr.bf16.mxu0 %v1876
  %2671 = vmatpush1.bf16.msra.mxu0 %v1875
  %2672 = vmatprep.subr.bf16.mxu0 %v1880
  %2673 = vmatpush1.bf16.msra.mxu0 %v1879
  %2674 = vmatprep.subr.bf16.mxu0 %v1884
  %2675 = vmatpush1.bf16.msra.mxu0 %v1883
  %2676 = vmatprep.subr.bf16.mxu0 %v1888
  %2677 = vmatpush1.bf16.msra.mxu0 %v1887
  %2678 = vmatprep.subr.bf16.mxu0 %v1892
  %2679 = vmatpush1.bf16.msra.mxu0 %v1891
  %2680 = vmatprep.subr.bf16.mxu0 %v1896
  %2681 = vmatpush1.bf16.msra.mxu0 %v1895
  %2682 = vmatprep.subr.bf16.mxu0 0
  %2683 = vmatpush1.bf16.msra.mxu0 0
  %2684 = vmatprep.subr.bf16.mxu0 0
  %2685 = vmatpush1.bf16.msra.mxu0 0
  %2686 = vmatprep.subr.bf16.mxu0 0
  %2687 = vmatpush1.bf16.msra.mxu0 0
  %2688 = vmatprep.subr.bf16.mxu0 0
  %2689 = vmatpush1.bf16.msra.mxu0 0
  %2690 = vmatprep.subr.bf16.mxu0 0
  %2691 = vmatpush1.bf16.msra.mxu0 0
  %2692 = vmatprep.subr.bf16.mxu0 0
  %2693 = vmatpush1.bf16.msra.mxu0 0
  %2694 = vmatprep.subr.bf16.mxu0 0
  %2695 = vmatpush1.bf16.msra.mxu0 0
  %2696 = vmatprep.subr.bf16.mxu0 0
  %2697 = vmatpush1.bf16.msra.mxu0 0
  %2698 = vmatprep.mubr.bf16.mxu0 0
  %2699 = vmatmul.mubr.bf16.gmra.mrb[0].mxu0 %v2624
  %v2700 = vpop.f32.mrb[0].mxu0
  %v2701 = vadd.f32 0.0, %v2700
  %v2702 = vpop.f32.mrb[0].mxu0
  %v2703 = vadd.f32 0.0, %v2702
  %v2704 = vpop.f32.mrb[0].mxu0
  %v2705 = vpop.f32.mrb[0].mxu0
  %2706 = vdwg.mxu0
  %v2707 = vadd.f32 %v2620, %v2660
  %v2708 = vadd.f32 %v2621, %v2662
  %v2709 = vadd.f32 %v2622, %v2701
  %v2710 = vadd.f32 %v2623, %v2703
  %v2711 = vxor.u32 %v2707, 2147483648
  %v2712 = vxor.u32 %v2708, 2147483648
  %v2713 = vxor.u32 %v2709, 2147483648
  %v2714 = vmul.f32 %v2711, 1.442695
  %v2715 = vpow.pop %v2714
  %v2716 = vmul.f32 %v2712, 1.442695
  %v2717 = vpow.pop %v2716
  %v2718 = vmul.f32 %v2713, 1.442695
  %v2719 = vpow.pop %v2718
  %v2720 = vadd.f32 %v2715, 1.0
  %v2721 = vadd.f32 %v2717, 1.0
  %v2722 = vadd.f32 %v2719, 1.0
  %v2723 = vrcp.pop %v2720
  %v2724 = vmul.f32 1.0, %v2723
  %v2725 = vrcp.pop %v2721
  %v2726 = vmul.f32 1.0, %v2725
  %v2727 = vrcp.pop %v2722
  %v2728 = vmul.f32 1.0, %v2727
  %v2729 = vtanh.pop %v2710
  %v2730 = vmul.f32 %v2726, %v2616
  %v2731 = vmul.f32 %v2724, %v2729
  %v2732 = vadd.f32 %v2730, %v2731
  %v2733 = vtanh.pop %v2732
  %v2734 = vmul.f32 %v2728, %v2733
  %2735 = vst [vmem:[#allocation4 + $0x38] sm:$0xff] %v2734
  %v2736 = vld [vmem:[#allocation4] sm:$0xff]
  %v2737 = vld [vmem:[#allocation4 + $0x8] sm:$0xff]
  %v2738 = vld [vmem:[#allocation4 + $0x10] sm:$0xff]
  %v2739 = vld [vmem:[#allocation4 + $0x18] sm:$0xff]
  %v2740 = vld [vmem:[#allocation4 + $0x20] sm:$0xff]
  %v2741 = vld [vmem:[#allocation4 + $0x28] sm:$0xff]
  %v2742 = vld [vmem:[#allocation4 + $0x30] sm:$0xff]
  %v2743 = vld [vmem:[#allocation4 + $0x38] sm:$0xff]
  %v2744 = vpack.c.bf16 %v2737, %v2736
  %v2745 = vpack.c.bf16 %v2739, %v2738
  %v2746 = vpack.c.bf16 %v2741, %v2740
  %v2747 = vpack.c.bf16 %v2743, %v2742
  %v2748 = vld [vmem:[%s7] sm:$0xff]
  %v2749 = vld [vmem:[%s7 + $0x8] sm:$0xff]
  %v2750 = vld [vmem:[%s7 + $0x10] sm:$0xff]
  %v2751 = vld [vmem:[%s7 + $0x18] sm:$0xff]
  %v2752 = vld [vmem:[%s7 + $0x20] sm:$0xff]
  %v2753 = vld [vmem:[%s7 + $0x28] sm:$0xff]
  %v2754 = vld [vmem:[%s7 + $0x30] sm:$0xff]
  %v2755 = vld [vmem:[%s7 + $0x38] sm:$0xff]
  %v2756 = vld [vmem:[%s7 + $0x40] sm:$0xff]
  %v2757 = vld [vmem:[%s7 + $0x48] sm:$0xff]
  %v2758 = vld [vmem:[%s7 + $0x50] sm:$0xff]
  %v2759 = vld [vmem:[%s7 + $0x58] sm:$0xff]
  %v2760 = vld [vmem:[%s7 + $0x60] sm:$0xff]
  %v2761 = vld [vmem:[%s7 + $0x68] sm:$0xff]
  %v2762 = vld [vmem:[%s7 + $0x70] sm:$0xff]
  %v2763 = vld [vmem:[%s7 + $0x78] sm:$0xff]
  %v2764 = vld [vmem:[%s7 + $0x80] sm:$0xff]
  %v2765 = vld [vmem:[%s7 + $0x88] sm:$0xff]
  %v2766 = vld [vmem:[%s7 + $0x90] sm:$0xff]
  %v2767 = vld [vmem:[%s7 + $0x98] sm:$0xff]
  %v2768 = vld [vmem:[%s7 + $0xa0] sm:$0xff]
  %v2769 = vld [vmem:[%s7 + $0xa8] sm:$0xff]
  %v2770 = vld [vmem:[%s7 + $0xb0] sm:$0xff]
  %v2771 = vld [vmem:[%s7 + $0xb8] sm:$0xff]
  %v2772 = vld [vmem:[%s7 + $0xc0] sm:$0xff]
  %v2773 = vld [vmem:[%s7 + $0xc8] sm:$0xff]
  %v2774 = vld [vmem:[%s7 + $0xd0] sm:$0xff]
  %v2775 = vld [vmem:[%s7 + $0xd8] sm:$0xff]
  %v2776 = vld [vmem:[%s7 + $0xe0] sm:$0xff]
  %v2777 = vld [vmem:[%s7 + $0xe8] sm:$0xff]
  %v2778 = vld [vmem:[%s7 + $0xf0] sm:$0xff]
  %v2779 = vld [vmem:[%s7 + $0xf8] sm:$0xff]
  %v2780 = vld [vmem:[%s9] sm:$0xf]
  %v2782 = vlaneseq
  %v2783 = vshrl.u32 %v2782, 7
  %v2784 = vsub.s32 0, %v2783
  %v2785 = vrot.slane %v2780, %v2784
  %v2786 = vlaneseq
  %v2787 = vshrl.u32 %v2786, 7
  %v2788 = vsub.s32 1, %v2787
  %v2789 = vrot.slane %v2780, %v2788
  %v2790 = vlaneseq
  %v2791 = vshrl.u32 %v2790, 7
  %v2792 = vsub.s32 2, %v2791
  %v2793 = vrot.slane %v2780, %v2792
  %v2794 = vlaneseq
  %v2795 = vshrl.u32 %v2794, 7
  %v2796 = vsub.s32 3, %v2795
  %v2797 = vrot.slane %v2780, %v2796
  %v2834 = vunpack.c.l.b16 %v2748
  %v2835 = vunpack.c.h.b16 %v2748
  %v2836 = vunpack.c.l.b16 %v2749
  %v2837 = vunpack.c.h.b16 %v2749
  %v2838 = vunpack.c.l.b16 %v2750
  %v2839 = vunpack.c.h.b16 %v2750
  %v2840 = vunpack.c.l.b16 %v2751
  %v2841 = vunpack.c.h.b16 %v2751
  %v2842 = vunpack.c.l.b16 %v2752
  %v2843 = vunpack.c.h.b16 %v2752
  %v2844 = vunpack.c.l.b16 %v2753
  %v2845 = vunpack.c.h.b16 %v2753
  %v2846 = vunpack.c.l.b16 %v2754
  %v2847 = vunpack.c.h.b16 %v2754
  %v2848 = vunpack.c.l.b16 %v2755
  %v2849 = vunpack.c.h.b16 %v2755
  %v2850 = vunpack.c.l.b16 %v2756
  %v2851 = vunpack.c.h.b16 %v2756
  %v2852 = vunpack.c.l.b16 %v2757
  %v2853 = vunpack.c.h.b16 %v2757
  %v2854 = vunpack.c.l.b16 %v2758
  %v2855 = vunpack.c.h.b16 %v2758
  %v2856 = vunpack.c.l.b16 %v2759
  %v2857 = vunpack.c.h.b16 %v2759
  %v2858 = vunpack.c.l.b16 %v2760
  %v2859 = vunpack.c.h.b16 %v2760
  %v2860 = vunpack.c.l.b16 %v2761
  %v2861 = vunpack.c.h.b16 %v2761
  %v2862 = vunpack.c.l.b16 %v2762
  %v2863 = vunpack.c.h.b16 %v2762
  %v2864 = vunpack.c.l.b16 %v2763
  %v2865 = vunpack.c.h.b16 %v2763
  %v2866 = vunpack.c.l.b16 %v2764
  %v2867 = vunpack.c.h.b16 %v2764
  %v2868 = vunpack.c.l.b16 %v2765
  %v2869 = vunpack.c.h.b16 %v2765
  %v2870 = vunpack.c.l.b16 %v2766
  %v2871 = vunpack.c.h.b16 %v2766
  %v2872 = vunpack.c.l.b16 %v2767
  %v2873 = vunpack.c.h.b16 %v2767
  %v2874 = vunpack.c.l.b16 %v2768
  %v2875 = vunpack.c.h.b16 %v2768
  %v2876 = vunpack.c.l.b16 %v2769
  %v2877 = vunpack.c.h.b16 %v2769
  %v2878 = vunpack.c.l.b16 %v2770
  %v2879 = vunpack.c.h.b16 %v2770
  %v2880 = vunpack.c.l.b16 %v2771
  %v2881 = vunpack.c.h.b16 %v2771
  %v2882 = vunpack.c.l.b16 %v2772
  %v2883 = vunpack.c.h.b16 %v2772
  %v2884 = vunpack.c.l.b16 %v2773
  %v2885 = vunpack.c.h.b16 %v2773
  %v2886 = vunpack.c.l.b16 %v2774
  %v2887 = vunpack.c.h.b16 %v2774
  %v2888 = vunpack.c.l.b16 %v2775
  %v2889 = vunpack.c.h.b16 %v2775
  %v2890 = vunpack.c.l.b16 %v2776
  %v2891 = vunpack.c.h.b16 %v2776
  %v2892 = vunpack.c.l.b16 %v2777
  %v2893 = vunpack.c.h.b16 %v2777
  %v2894 = vunpack.c.l.b16 %v2778
  %v2895 = vunpack.c.h.b16 %v2778
  %v2896 = vunpack.c.l.b16 %v2779
  %v2897 = vunpack.c.h.b16 %v2779
  %v2898 = vpack.c.b16 %v2838, %v2834
  %v2899 = vpack.c.b16 %v2839, %v2835
  %v2900 = vpack.c.b16 %v2840, %v2836
  %v2901 = vpack.c.b16 %v2841, %v2837
  %v2902 = vpack.c.b16 %v2846, %v2842
  %v2903 = vpack.c.b16 %v2847, %v2843
  %v2904 = vpack.c.b16 %v2848, %v2844
  %v2905 = vpack.c.b16 %v2849, %v2845
  %v2906 = vpack.c.b16 %v2854, %v2850
  %v2907 = vpack.c.b16 %v2855, %v2851
  %v2908 = vpack.c.b16 %v2856, %v2852
  %v2909 = vpack.c.b16 %v2857, %v2853
  %v2910 = vpack.c.b16 %v2862, %v2858
  %v2911 = vpack.c.b16 %v2863, %v2859
  %v2912 = vpack.c.b16 %v2864, %v2860
  %v2913 = vpack.c.b16 %v2865, %v2861
  %v2914 = vpack.c.b16 %v2870, %v2866
  %v2915 = vpack.c.b16 %v2871, %v2867
  %v2916 = vpack.c.b16 %v2872, %v2868
  %v2917 = vpack.c.b16 %v2873, %v2869
  %v2918 = vpack.c.b16 %v2878, %v2874
  %v2919 = vpack.c.b16 %v2879, %v2875
  %v2920 = vpack.c.b16 %v2880, %v2876
  %v2921 = vpack.c.b16 %v2881, %v2877
  %v2922 = vpack.c.b16 %v2886, %v2882
  %v2923 = vpack.c.b16 %v2887, %v2883
  %v2924 = vpack.c.b16 %v2888, %v2884
  %v2925 = vpack.c.b16 %v2889, %v2885
  %v2926 = vpack.c.b16 %v2894, %v2890
  %v2927 = vpack.c.b16 %v2895, %v2891
  %v2928 = vpack.c.b16 %v2896, %v2892
  %v2929 = vpack.c.b16 %v2897, %v2893
  %2962 = vmatprep.subr.bf16.mxu0 %v2899
  %2963 = vmatpush1.bf16.msra.mxu0 %v2898
  %2964 = vmatprep.subr.bf16.mxu0 %v2903
  %2965 = vmatpush1.bf16.msra.mxu0 %v2902
  %2966 = vmatprep.subr.bf16.mxu0 %v2907
  %2967 = vmatpush1.bf16.msra.mxu0 %v2906
  %2968 = vmatprep.subr.bf16.mxu0 %v2911
  %2969 = vmatpush1.bf16.msra.mxu0 %v2910
  %2970 = vmatprep.subr.bf16.mxu0 %v2915
  %2971 = vmatpush1.bf16.msra.mxu0 %v2914
  %2972 = vmatprep.subr.bf16.mxu0 %v2919
  %2973 = vmatpush1.bf16.msra.mxu0 %v2918
  %2974 = vmatprep.subr.bf16.mxu0 %v2923
  %2975 = vmatpush1.bf16.msra.mxu0 %v2922
  %2976 = vmatprep.subr.bf16.mxu0 %v2927
  %2977 = vmatpush1.bf16.msra.mxu0 %v2926
  %2978 = vmatprep.subr.bf16.mxu0 0
  %2979 = vmatpush1.bf16.msra.mxu0 0
  %2980 = vmatprep.subr.bf16.mxu0 0
  %2981 = vmatpush1.bf16.msra.mxu0 0
  %2982 = vmatprep.subr.bf16.mxu0 0
  %2983 = vmatpush1.bf16.msra.mxu0 0
  %2984 = vmatprep.subr.bf16.mxu0 0
  %2985 = vmatpush1.bf16.msra.mxu0 0
  %2986 = vmatprep.subr.bf16.mxu0 0
  %2987 = vmatpush1.bf16.msra.mxu0 0
  %2988 = vmatprep.subr.bf16.mxu0 0
  %2989 = vmatpush1.bf16.msra.mxu0 0
  %2990 = vmatprep.subr.bf16.mxu0 0
  %2991 = vmatpush1.bf16.msra.mxu0 0
  %2992 = vmatprep.subr.bf16.mxu0 0
  %2993 = vmatpush1.bf16.msra.mxu0 0
  %2994 = vmatprep.mubr.bf16.mxu0 0
  %2995 = vmatmul.mubr.bf16.gmra.mrb[0].mxu0 %v2744
  %v2996 = vpop.f32.mrb[0].mxu0
  %v2997 = vadd.f32 %v2785, %v2996
  %v2998 = vpop.f32.mrb[0].mxu0
  %v2999 = vadd.f32 %v2789, %v2998
  %v3000 = vpop.f32.mrb[0].mxu0
  %v3001 = vadd.f32 %v2785, %v3000
  %v3002 = vpop.f32.mrb[0].mxu0
  %v3003 = vadd.f32 %v2789, %v3002
  %3004 = vmatprep.mubr.bf16.mxu0 0
  %3005 = vmatmul.mubr.bf16.gmra.mrb[0].mxu0 %v2745
  %v3006 = vpop.f32.mrb[0].mxu0
  %v3007 = vadd.f32 %v2785, %v3006
  %v3008 = vpop.f32.mrb[0].mxu0
  %v3009 = vadd.f32 %v2789, %v3008
  %v3010 = vpop.f32.mrb[0].mxu0
  %v3011 = vadd.f32 %v2785, %v3010
  %v3012 = vpop.f32.mrb[0].mxu0
  %v3013 = vadd.f32 %v2789, %v3012
  %3014 = vmatprep.mubr.bf16.mxu0 0
  %3015 = vmatmul.mubr.bf16.gmra.mrb[0].mxu0 %v2746
  %v3016 = vpop.f32.mrb[0].mxu0
  %v3017 = vadd.f32 %v2785, %v3016
  %v3018 = vpop.f32.mrb[0].mxu0
  %v3019 = vadd.f32 %v2789, %v3018
  %v3020 = vpop.f32.mrb[0].mxu0
  %v3021 = vadd.f32 %v2785, %v3020
  %v3022 = vpop.f32.mrb[0].mxu0
  %v3023 = vadd.f32 %v2789, %v3022
  %3024 = vmatprep.mubr.bf16.mxu0 0
  %3025 = vmatmul.mubr.bf16.gmra.mrb[0].mxu0 %v2747
  %v3026 = vpop.f32.mrb[0].mxu0
  %v3027 = vadd.f32 %v2785, %v3026
  %v3028 = vpop.f32.mrb[0].mxu0
  %v3029 = vadd.f32 %v2789, %v3028
  %v3030 = vpop.f32.mrb[0].mxu0
  %v3031 = vadd.f32 %v2785, %v3030
  %v3032 = vpop.f32.mrb[0].mxu0
  %v3033 = vadd.f32 %v2789, %v3032
  %3034 = vdwg.mxu0
  %3035 = vmatprep.subr.bf16.mxu0 %v2901
  %3036 = vmatpush1.bf16.msra.mxu0 %v2900
  %3037 = vmatprep.subr.bf16.mxu0 %v2905
  %3038 = vmatpush1.bf16.msra.mxu0 %v2904
  %3039 = vmatprep.subr.bf16.mxu0 %v2909
  %3040 = vmatpush1.bf16.msra.mxu0 %v2908
  %3041 = vmatprep.subr.bf16.mxu0 %v2913
  %3042 = vmatpush1.bf16.msra.mxu0 %v2912
  %3043 = vmatprep.subr.bf16.mxu0 %v2917
  %3044 = vmatpush1.bf16.msra.mxu0 %v2916
  %3045 = vmatprep.subr.bf16.mxu0 %v2921
  %3046 = vmatpush1.bf16.msra.mxu0 %v2920
  %3047 = vmatprep.subr.bf16.mxu0 %v2925
  %3048 = vmatpush1.bf16.msra.mxu0 %v2924
  %3049 = vmatprep.subr.bf16.mxu0 %v2929
  %3050 = vmatpush1.bf16.msra.mxu0 %v2928
  %3051 = vmatprep.subr.bf16.mxu0 0
  %3052 = vmatpush1.bf16.msra.mxu0 0
  %3053 = vmatprep.subr.bf16.mxu0 0
  %3054 = vmatpush1.bf16.msra.mxu0 0
  %3055 = vmatprep.subr.bf16.mxu0 0
  %3056 = vmatpush1.bf16.msra.mxu0 0
  %3057 = vmatprep.subr.bf16.mxu0 0
  %3058 = vmatpush1.bf16.msra.mxu0 0
  %3059 = vmatprep.subr.bf16.mxu0 0
  %3060 = vmatpush1.bf16.msra.mxu0 0
  %3061 = vmatprep.subr.bf16.mxu0 0
  %3062 = vmatpush1.bf16.msra.mxu0 0
  %3063 = vmatprep.subr.bf16.mxu0 0
  %3064 = vmatpush1.bf16.msra.mxu0 0
  %3065 = vmatprep.subr.bf16.mxu0 0
  %3066 = vmatpush1.bf16.msra.mxu0 0
  %3067 = vmatprep.mubr.bf16.mxu0 0
  %3068 = vmatmul.mubr.bf16.gmra.mrb[0].mxu0 %v2744
  %v3069 = vpop.f32.mrb[0].mxu0
  %v3070 = vadd.f32 %v2793, %v3069
  %v3071 = vpop.f32.mrb[0].mxu0
  %v3072 = vadd.f32 %v2797, %v3071
  %v3073 = vpop.f32.mrb[0].mxu0
  %v3074 = vadd.f32 %v2793, %v3073
  %v3075 = vpop.f32.mrb[0].mxu0
  %v3076 = vadd.f32 %v2797, %v3075
  %3077 = vmatprep.mubr.bf16.mxu0 0
  %3078 = vmatmul.mubr.bf16.gmra.mrb[0].mxu0 %v2745
  %v3079 = vpop.f32.mrb[0].mxu0
  %v3080 = vadd.f32 %v2793, %v3079
  %v3081 = vpop.f32.mrb[0].mxu0
  %v3082 = vadd.f32 %v2797, %v3081
  %v3083 = vpop.f32.mrb[0].mxu0
  %v3084 = vadd.f32 %v2793, %v3083
  %v3085 = vpop.f32.mrb[0].mxu0
  %v3086 = vadd.f32 %v2797, %v3085
  %3087 = vmatprep.mubr.bf16.mxu0 0
  %3088 = vmatmul.mubr.bf16.gmra.mrb[0].mxu0 %v2746
  %v3089 = vpop.f32.mrb[0].mxu0
  %v3090 = vadd.f32 %v2793, %v3089
  %v3091 = vpop.f32.mrb[0].mxu0
  %v3092 = vadd.f32 %v2797, %v3091
  %v3093 = vpop.f32.mrb[0].mxu0
  %v3094 = vadd.f32 %v2793, %v3093
  %v3095 = vpop.f32.mrb[0].mxu0
  %v3096 = vadd.f32 %v2797, %v3095
  %3097 = vmatprep.mubr.bf16.mxu0 0
  %3098 = vmatmul.mubr.bf16.gmra.mrb[0].mxu0 %v2747
  %v3099 = vpop.f32.mrb[0].mxu0
  %v3100 = vadd.f32 %v2793, %v3099
  %v3101 = vpop.f32.mrb[0].mxu0
  %v3102 = vadd.f32 %v2797, %v3101
  %v3103 = vpop.f32.mrb[0].mxu0
  %v3104 = vadd.f32 %v2793, %v3103
  %v3105 = vpop.f32.mrb[0].mxu0
  %v3106 = vadd.f32 %v2797, %v3105
  %3107 = vdwg.mxu0
  %3108 = vst [vmem:[#allocation2] sm:$0xff] %v2997
  %3109 = vst [vmem:[#allocation2 + $0x8] sm:$0xff] %v2999
  %3110 = vst [vmem:[#allocation2 + $0x10] sm:$0xff] %v3070
  %3111 = vst [vmem:[#allocation2 + $0x18] sm:$0xff] %v3072
  %3112 = vst [vmem:[#allocation2 + $0x20] sm:$0xff] %v3001
  %3113 = vst [vmem:[#allocation2 + $0x28] sm:$0xff] %v3003
  %3114 = vst [vmem:[#allocation2 + $0x30] sm:$0xff] %v3074
  %3115 = vst [vmem:[#allocation2 + $0x38] sm:$0xff] %v3076
  %3116 = vst [vmem:[#allocation2 + $0x40] sm:$0xff] %v3007
  %3117 = vst [vmem:[#allocation2 + $0x48] sm:$0xff] %v3009
  %3118 = vst [vmem:[#allocation2 + $0x50] sm:$0xff] %v3080
  %3119 = vst [vmem:[#allocation2 + $0x58] sm:$0xff] %v3082
  %3120 = vst [vmem:[#allocation2 + $0x60] sm:$0xff] %v3011
  %3121 = vst [vmem:[#allocation2 + $0x68] sm:$0xff] %v3013
  %3122 = vst [vmem:[#allocation2 + $0x70] sm:$0xff] %v3084
  %3123 = vst [vmem:[#allocation2 + $0x78] sm:$0xff] %v3086
  %3124 = vst [vmem:[#allocation2 + $0x80] sm:$0xff] %v3017
  %3125 = vst [vmem:[#allocation2 + $0x88] sm:$0xff] %v3019
  %3126 = vst [vmem:[#allocation2 + $0x90] sm:$0xff] %v3090
  %3127 = vst [vmem:[#allocation2 + $0x98] sm:$0xff] %v3092
  %3128 = vst [vmem:[#allocation2 + $0xa0] sm:$0xff] %v3021
  %3129 = vst [vmem:[#allocation2 + $0xa8] sm:$0xff] %v3023
  %3130 = vst [vmem:[#allocation2 + $0xb0] sm:$0xff] %v3094
  %3131 = vst [vmem:[#allocation2 + $0xb8] sm:$0xff] %v3096
  %3132 = vst [vmem:[#allocation2 + $0xc0] sm:$0xff] %v3027
  %3133 = vst [vmem:[#allocation2 + $0xc8] sm:$0xff] %v3029
  %3134 = vst [vmem:[#allocation2 + $0xd0] sm:$0xff] %v3100
  %3135 = vst [vmem:[#allocation2 + $0xd8] sm:$0xff] %v3102
  %3136 = vst [vmem:[#allocation2 + $0xe0] sm:$0xff] %v3031
  %3137 = vst [vmem:[#allocation2 + $0xe8] sm:$0xff] %v3033
  %3138 = vst [vmem:[#allocation2 + $0xf0] sm:$0xff] %v3104
  %3139 = vst [vmem:[#allocation2 + $0xf8] sm:$0xff] %v3106
  %v3140 = vld [vmem:[%s8] sm:$0xff]
  %v3141 = vld [vmem:[%s8 + $0x8] sm:$0xff]
  %v3142 = vld [vmem:[%s8 + $0x10] sm:$0xff]
  %v3143 = vld [vmem:[%s8 + $0x18] sm:$0xff]
  %v3144 = vld [vmem:[%s8 + $0x20] sm:$0xff]
  %v3145 = vld [vmem:[%s8 + $0x28] sm:$0xff]
  %v3146 = vld [vmem:[%s8 + $0x30] sm:$0xff]
  %v3147 = vld [vmem:[%s8 + $0x38] sm:$0xff]
  %v3148 = vld [vmem:[%s8 + $0x40] sm:$0xff]
  %v3149 = vld [vmem:[%s8 + $0x48] sm:$0xff]
  %v3150 = vld [vmem:[%s8 + $0x50] sm:$0xff]
  %v3151 = vld [vmem:[%s8 + $0x58] sm:$0xff]
  %v3152 = vld [vmem:[%s8 + $0x60] sm:$0xff]
  %v3153 = vld [vmem:[%s8 + $0x68] sm:$0xff]
  %v3154 = vld [vmem:[%s8 + $0x70] sm:$0xff]
  %v3155 = vld [vmem:[%s8 + $0x78] sm:$0xff]
  %v3156 = vld [vmem:[%s8 + $0x80] sm:$0xff]
  %v3157 = vld [vmem:[%s8 + $0x88] sm:$0xff]
  %v3158 = vld [vmem:[%s8 + $0x90] sm:$0xff]
  %v3159 = vld [vmem:[%s8 + $0x98] sm:$0xff]
  %v3160 = vld [vmem:[%s8 + $0xa0] sm:$0xff]
  %v3161 = vld [vmem:[%s8 + $0xa8] sm:$0xff]
  %v3162 = vld [vmem:[%s8 + $0xb0] sm:$0xff]
  %v3163 = vld [vmem:[%s8 + $0xb8] sm:$0xff]
  %v3164 = vld [vmem:[%s8 + $0xc0] sm:$0xff]
  %v3165 = vld [vmem:[%s8 + $0xc8] sm:$0xff]
  %v3166 = vld [vmem:[%s8 + $0xd0] sm:$0xff]
  %v3167 = vld [vmem:[%s8 + $0xd8] sm:$0xff]
  %v3168 = vld [vmem:[%s8 + $0xe0] sm:$0xff]
  %v3169 = vld [vmem:[%s8 + $0xe8] sm:$0xff]
  %v3170 = vld [vmem:[%s8 + $0xf0] sm:$0xff]
  %v3171 = vld [vmem:[%s8 + $0xf8] sm:$0xff]
  %v3172 = vld [vmem:[#allocation2] sm:$0xff]
  %v3173 = vld [vmem:[#allocation2 + $0x8] sm:$0xff]
  %v3174 = vld [vmem:[#allocation2 + $0x10] sm:$0xff]
  %v3175 = vld [vmem:[#allocation2 + $0x18] sm:$0xff]
  %v3176 = vxor.u32 %v3172, 2147483648
  %v3177 = vxor.u32 %v3173, 2147483648
  %v3178 = vxor.u32 %v3174, 2147483648
  %v3179 = vmul.f32 %v3176, 1.442695
  %v3180 = vpow.pop %v3179
  %v3181 = vmul.f32 %v3177, 1.442695
  %v3182 = vpow.pop %v3181
  %v3183 = vmul.f32 %v3178, 1.442695
  %v3184 = vpow.pop %v3183
  %v3185 = vadd.f32 %v3180, 1.0
  %v3186 = vadd.f32 %v3182, 1.0
  %v3187 = vadd.f32 %v3184, 1.0
  %v3188 = vrcp.pop %v3185
  %v3189 = vmul.f32 1.0, %v3188
  %v3190 = vrcp.pop %v3186
  %v3191 = vmul.f32 1.0, %v3190
  %v3192 = vrcp.pop %v3187
  %v3193 = vmul.f32 1.0, %v3192
  %v3194 = vtanh.pop %v3175
  %v3195 = vmul.f32 %v3191, 0.0
  %v3196 = vmul.f32 %v3189, %v3194
  %v3197 = vadd.f32 %v3195, %v3196
  %v3198 = vtanh.pop %v3197
  %v3199 = vmul.f32 %v3193, %v3198
  %3200 = vst [vmem:[#allocation3] sm:$0xff] %v3199
  %v3201 = vld [vmem:[#allocation2 + $0x20] sm:$0xff]
  %v3202 = vld [vmem:[#allocation2 + $0x28] sm:$0xff]
  %v3203 = vld [vmem:[#allocation2 + $0x30] sm:$0xff]
  %v3204 = vld [vmem:[#allocation2 + $0x38] sm:$0xff]
  %v3205 = vpack.c.bf16 %v3199, %v3199
  %v3238 = vunpack.c.l.b16 %v3140
  %v3239 = vunpack.c.h.b16 %v3140
  %v3240 = vunpack.c.l.b16 %v3141
  %v3241 = vunpack.c.h.b16 %v3141
  %v3242 = vunpack.c.l.b16 %v3142
  %v3243 = vunpack.c.h.b16 %v3142
  %v3244 = vunpack.c.l.b16 %v3143
  %v3245 = vunpack.c.h.b16 %v3143
  %v3246 = vunpack.c.l.b16 %v3144
  %v3247 = vunpack.c.h.b16 %v3144
  %v3248 = vunpack.c.l.b16 %v3145
  %v3249 = vunpack.c.h.b16 %v3145
  %v3250 = vunpack.c.l.b16 %v3146
  %v3251 = vunpack.c.h.b16 %v3146
  %v3252 = vunpack.c.l.b16 %v3147
  %v3253 = vunpack.c.h.b16 %v3147
  %v3254 = vunpack.c.l.b16 %v3148
  %v3255 = vunpack.c.h.b16 %v3148
  %v3256 = vunpack.c.l.b16 %v3149
  %v3257 = vunpack.c.h.b16 %v3149
  %v3258 = vunpack.c.l.b16 %v3150
  %v3259 = vunpack.c.h.b16 %v3150
  %v3260 = vunpack.c.l.b16 %v3151
  %v3261 = vunpack.c.h.b16 %v3151
  %v3262 = vunpack.c.l.b16 %v3152
  %v3263 = vunpack.c.h.b16 %v3152
  %v3264 = vunpack.c.l.b16 %v3153
  %v3265 = vunpack.c.h.b16 %v3153
  %v3266 = vunpack.c.l.b16 %v3154
  %v3267 = vunpack.c.h.b16 %v3154
  %v3268 = vunpack.c.l.b16 %v3155
  %v3269 = vunpack.c.h.b16 %v3155
  %v3270 = vunpack.c.l.b16 %v3156
  %v3271 = vunpack.c.h.b16 %v3156
  %v3272 = vunpack.c.l.b16 %v3157
  %v3273 = vunpack.c.h.b16 %v3157
  %v3274 = vunpack.c.l.b16 %v3158
  %v3275 = vunpack.c.h.b16 %v3158
  %v3276 = vunpack.c.l.b16 %v3159
  %v3277 = vunpack.c.h.b16 %v3159
  %v3278 = vunpack.c.l.b16 %v3160
  %v3279 = vunpack.c.h.b16 %v3160
  %v3280 = vunpack.c.l.b16 %v3161
  %v3281 = vunpack.c.h.b16 %v3161
  %v3282 = vunpack.c.l.b16 %v3162
  %v3283 = vunpack.c.h.b16 %v3162
  %v3284 = vunpack.c.l.b16 %v3163
  %v3285 = vunpack.c.h.b16 %v3163
  %v3286 = vunpack.c.l.b16 %v3164
  %v3287 = vunpack.c.h.b16 %v3164
  %v3288 = vunpack.c.l.b16 %v3165
  %v3289 = vunpack.c.h.b16 %v3165
  %v3290 = vunpack.c.l.b16 %v3166
  %v3291 = vunpack.c.h.b16 %v3166
  %v3292 = vunpack.c.l.b16 %v3167
  %v3293 = vunpack.c.h.b16 %v3167
  %v3294 = vunpack.c.l.b16 %v3168
  %v3295 = vunpack.c.h.b16 %v3168
  %v3296 = vunpack.c.l.b16 %v3169
  %v3297 = vunpack.c.h.b16 %v3169
  %v3298 = vunpack.c.l.b16 %v3170
  %v3299 = vunpack.c.h.b16 %v3170
  %v3300 = vunpack.c.l.b16 %v3171
  %v3301 = vunpack.c.h.b16 %v3171
  %v3302 = vpack.c.b16 %v3242, %v3238
  %v3303 = vpack.c.b16 %v3243, %v3239
  %v3304 = vpack.c.b16 %v3244, %v3240
  %v3305 = vpack.c.b16 %v3245, %v3241
  %v3306 = vpack.c.b16 %v3250, %v3246
  %v3307 = vpack.c.b16 %v3251, %v3247
  %v3308 = vpack.c.b16 %v3252, %v3248
  %v3309 = vpack.c.b16 %v3253, %v3249
  %v3310 = vpack.c.b16 %v3258, %v3254
  %v3311 = vpack.c.b16 %v3259, %v3255
  %v3312 = vpack.c.b16 %v3260, %v3256
  %v3313 = vpack.c.b16 %v3261, %v3257
  %v3314 = vpack.c.b16 %v3266, %v3262
  %v3315 = vpack.c.b16 %v3267, %v3263
  %v3316 = vpack.c.b16 %v3268, %v3264
  %v3317 = vpack.c.b16 %v3269, %v3265
  %v3318 = vpack.c.b16 %v3274, %v3270
  %v3319 = vpack.c.b16 %v3275, %v3271
  %v3320 = vpack.c.b16 %v3276, %v3272
  %v3321 = vpack.c.b16 %v3277, %v3273
  %v3322 = vpack.c.b16 %v3282, %v3278
  %v3323 = vpack.c.b16 %v3283, %v3279
  %v3324 = vpack.c.b16 %v3284, %v3280
  %v3325 = vpack.c.b16 %v3285, %v3281
  %v3326 = vpack.c.b16 %v3290, %v3286
  %v3327 = vpack.c.b16 %v3291, %v3287
  %v3328 = vpack.c.b16 %v3292, %v3288
  %v3329 = vpack.c.b16 %v3293, %v3289
  %v3330 = vpack.c.b16 %v3298, %v3294
  %v3331 = vpack.c.b16 %v3299, %v3295
  %v3332 = vpack.c.b16 %v3300, %v3296
  %v3333 = vpack.c.b16 %v3301, %v3297
  %3366 = vmatprep.subr.bf16.mxu0 %v3303
  %3367 = vmatpush1.bf16.msra.mxu0 %v3302
  %3368 = vmatprep.subr.bf16.mxu0 %v3307
  %3369 = vmatpush1.bf16.msra.mxu0 %v3306
  %3370 = vmatprep.subr.bf16.mxu0 %v3311
  %3371 = vmatpush1.bf16.msra.mxu0 %v3310
  %3372 = vmatprep.subr.bf16.mxu0 %v3315
  %3373 = vmatpush1.bf16.msra.mxu0 %v3314
  %3374 = vmatprep.subr.bf16.mxu0 %v3319
  %3375 = vmatpush1.bf16.msra.mxu0 %v3318
  %3376 = vmatprep.subr.bf16.mxu0 %v3323
  %3377 = vmatpush1.bf16.msra.mxu0 %v3322
  %3378 = vmatprep.subr.bf16.mxu0 %v3327
  %3379 = vmatpush1.bf16.msra.mxu0 %v3326
  %3380 = vmatprep.subr.bf16.mxu0 %v3331
  %3381 = vmatpush1.bf16.msra.mxu0 %v3330
  %3382 = vmatprep.subr.bf16.mxu0 0
  %3383 = vmatpush1.bf16.msra.mxu0 0
  %3384 = vmatprep.subr.bf16.mxu0 0
  %3385 = vmatpush1.bf16.msra.mxu0 0
  %3386 = vmatprep.subr.bf16.mxu0 0
  %3387 = vmatpush1.bf16.msra.mxu0 0
  %3388 = vmatprep.subr.bf16.mxu0 0
  %3389 = vmatpush1.bf16.msra.mxu0 0
  %3390 = vmatprep.subr.bf16.mxu0 0
  %3391 = vmatpush1.bf16.msra.mxu0 0
  %3392 = vmatprep.subr.bf16.mxu0 0
  %3393 = vmatpush1.bf16.msra.mxu0 0
  %3394 = vmatprep.subr.bf16.mxu0 0
  %3395 = vmatpush1.bf16.msra.mxu0 0
  %3396 = vmatprep.subr.bf16.mxu0 0
  %3397 = vmatpush1.bf16.msra.mxu0 0
  %3398 = vmatprep.mubr.bf16.mxu0 0
  %3399 = vmatmul.mubr.bf16.gmra.mrb[0].mxu0 %v3205
  %v3400 = vpop.f32.mrb[0].mxu0
  %v3401 = vadd.f32 0.0, %v3400
  %v3402 = vpop.f32.mrb[0].mxu0
  %v3403 = vadd.f32 0.0, %v3402
  %v3404 = vpop.f32.mrb[0].mxu0
  %v3405 = vpop.f32.mrb[0].mxu0
  %3406 = vdwg.mxu0
  %3407 = vmatprep.subr.bf16.mxu0 %v3305
  %3408 = vmatpush1.bf16.msra.mxu0 %v3304
  %3409 = vmatprep.subr.bf16.mxu0 %v3309
  %3410 = vmatpush1.bf16.msra.mxu0 %v3308
  %3411 = vmatprep.subr.bf16.mxu0 %v3313
  %3412 = vmatpush1.bf16.msra.mxu0 %v3312
  %3413 = vmatprep.subr.bf16.mxu0 %v3317
  %3414 = vmatpush1.bf16.msra.mxu0 %v3316
  %3415 = vmatprep.subr.bf16.mxu0 %v3321
  %3416 = vmatpush1.bf16.msra.mxu0 %v3320
  %3417 = vmatprep.subr.bf16.mxu0 %v3325
  %3418 = vmatpush1.bf16.msra.mxu0 %v3324
  %3419 = vmatprep.subr.bf16.mxu0 %v3329
  %3420 = vmatpush1.bf16.msra.mxu0 %v3328
  %3421 = vmatprep.subr.bf16.mxu0 %v3333
  %3422 = vmatpush1.bf16.msra.mxu0 %v3332
  %3423 = vmatprep.subr.bf16.mxu0 0
  %3424 = vmatpush1.bf16.msra.mxu0 0
  %3425 = vmatprep.subr.bf16.mxu0 0
  %3426 = vmatpush1.bf16.msra.mxu0 0
  %3427 = vmatprep.subr.bf16.mxu0 0
  %3428 = vmatpush1.bf16.msra.mxu0 0
  %3429 = vmatprep.subr.bf16.mxu0 0
  %3430 = vmatpush1.bf16.msra.mxu0 0
  %3431 = vmatprep.subr.bf16.mxu0 0
  %3432 = vmatpush1.bf16.msra.mxu0 0
  %3433 = vmatprep.subr.bf16.mxu0 0
  %3434 = vmatpush1.bf16.msra.mxu0 0
  %3435 = vmatprep.subr.bf16.mxu0 0
  %3436 = vmatpush1.bf16.msra.mxu0 0
  %3437 = vmatprep.subr.bf16.mxu0 0
  %3438 = vmatpush1.bf16.msra.mxu0 0
  %3439 = vmatprep.mubr.bf16.mxu0 0
  %3440 = vmatmul.mubr.bf16.gmra.mrb[0].mxu0 %v3205
  %v3441 = vpop.f32.mrb[0].mxu0
  %v3442 = vadd.f32 0.0, %v3441
  %v3443 = vpop.f32.mrb[0].mxu0
  %v3444 = vadd.f32 0.0, %v3443
  %v3445 = vpop.f32.mrb[0].mxu0
  %v3446 = vpop.f32.mrb[0].mxu0
  %3447 = vdwg.mxu0
  %v3448 = vadd.f32 %v3201, %v3401
  %v3449 = vadd.f32 %v3202, %v3403
  %v3450 = vadd.f32 %v3203, %v3442
  %v3451 = vadd.f32 %v3204, %v3444
  %v3452 = vxor.u32 %v3448, 2147483648
  %v3453 = vxor.u32 %v3449, 2147483648
  %v3454 = vxor.u32 %v3450, 2147483648
  %v3455 = vmul.f32 %v3452, 1.442695
  %v3456 = vpow.pop %v3455
  %v3457 = vmul.f32 %v3453, 1.442695
  %v3458 = vpow.pop %v3457
  %v3459 = vmul.f32 %v3454, 1.442695
  %v3460 = vpow.pop %v3459
  %v3461 = vadd.f32 %v3456, 1.0
  %v3462 = vadd.f32 %v3458, 1.0
  %v3463 = vadd.f32 %v3460, 1.0
  %v3464 = vrcp.pop %v3461
  %v3465 = vmul.f32 1.0, %v3464
  %v3466 = vrcp.pop %v3462
  %v3467 = vmul.f32 1.0, %v3466
  %v3468 = vrcp.pop %v3463
  %v3469 = vmul.f32 1.0, %v3468
  %v3470 = vtanh.pop %v3451
  %v3471 = vmul.f32 %v3467, %v3197
  %v3472 = vmul.f32 %v3465, %v3470
  %v3473 = vadd.f32 %v3471, %v3472
  %v3474 = vtanh.pop %v3473
  %v3475 = vmul.f32 %v3469, %v3474
  %3476 = vst [vmem:[#allocation3 + $0x8] sm:$0xff] %v3475
  %v3477 = vld [vmem:[#allocation2 + $0x40] sm:$0xff]
  %v3478 = vld [vmem:[#allocation2 + $0x48] sm:$0xff]
  %v3479 = vld [vmem:[#allocation2 + $0x50] sm:$0xff]
  %v3480 = vld [vmem:[#allocation2 + $0x58] sm:$0xff]
  %v3481 = vpack.c.bf16 %v3475, %v3475
  %3482 = vmatprep.subr.bf16.mxu0 %v3303
  %3483 = vmatpush1.bf16.msra.mxu0 %v3302
  %3484 = vmatprep.subr.bf16.mxu0 %v3307
  %3485 = vmatpush1.bf16.msra.mxu0 %v3306
  %3486 = vmatprep.subr.bf16.mxu0 %v3311
  %3487 = vmatpush1.bf16.msra.mxu0 %v3310
  %3488 = vmatprep.subr.bf16.mxu0 %v3315
  %3489 = vmatpush1.bf16.msra.mxu0 %v3314
  %3490 = vmatprep.subr.bf16.mxu0 %v3319
  %3491 = vmatpush1.bf16.msra.mxu0 %v3318
  %3492 = vmatprep.subr.bf16.mxu0 %v3323
  %3493 = vmatpush1.bf16.msra.mxu0 %v3322
  %3494 = vmatprep.subr.bf16.mxu0 %v3327
  %3495 = vmatpush1.bf16.msra.mxu0 %v3326
  %3496 = vmatprep.subr.bf16.mxu0 %v3331
  %3497 = vmatpush1.bf16.msra.mxu0 %v3330
  %3498 = vmatprep.subr.bf16.mxu0 0
  %3499 = vmatpush1.bf16.msra.mxu0 0
  %3500 = vmatprep.subr.bf16.mxu0 0
  %3501 = vmatpush1.bf16.msra.mxu0 0
  %3502 = vmatprep.subr.bf16.mxu0 0
  %3503 = vmatpush1.bf16.msra.mxu0 0
  %3504 = vmatprep.subr.bf16.mxu0 0
  %3505 = vmatpush1.bf16.msra.mxu0 0
  %3506 = vmatprep.subr.bf16.mxu0 0
  %3507 = vmatpush1.bf16.msra.mxu0 0
  %3508 = vmatprep.subr.bf16.mxu0 0
  %3509 = vmatpush1.bf16.msra.mxu0 0
  %3510 = vmatprep.subr.bf16.mxu0 0
  %3511 = vmatpush1.bf16.msra.mxu0 0
  %3512 = vmatprep.subr.bf16.mxu0 0
  %3513 = vmatpush1.bf16.msra.mxu0 0
  %3514 = vmatprep.mubr.bf16.mxu0 0
  %3515 = vmatmul.mubr.bf16.gmra.mrb[0].mxu0 %v3481
  %v3516 = vpop.f32.mrb[0].mxu0
  %v3517 = vadd.f32 0.0, %v3516
  %v3518 = vpop.f32.mrb[0].mxu0
  %v3519 = vadd.f32 0.0, %v3518
  %v3520 = vpop.f32.mrb[0].mxu0
  %v3521 = vpop.f32.mrb[0].mxu0
  %3522 = vdwg.mxu0
  %3523 = vmatprep.subr.bf16.mxu0 %v3305
  %3524 = vmatpush1.bf16.msra.mxu0 %v3304
  %3525 = vmatprep.subr.bf16.mxu0 %v3309
  %3526 = vmatpush1.bf16.msra.mxu0 %v3308
  %3527 = vmatprep.subr.bf16.mxu0 %v3313
  %3528 = vmatpush1.bf16.msra.mxu0 %v3312
  %3529 = vmatprep.subr.bf16.mxu0 %v3317
  %3530 = vmatpush1.bf16.msra.mxu0 %v3316
  %3531 = vmatprep.subr.bf16.mxu0 %v3321
  %3532 = vmatpush1.bf16.msra.mxu0 %v3320
  %3533 = vmatprep.subr.bf16.mxu0 %v3325
  %3534 = vmatpush1.bf16.msra.mxu0 %v3324
  %3535 = vmatprep.subr.bf16.mxu0 %v3329
  %3536 = vmatpush1.bf16.msra.mxu0 %v3328
  %3537 = vmatprep.subr.bf16.mxu0 %v3333
  %3538 = vmatpush1.bf16.msra.mxu0 %v3332
  %3539 = vmatprep.subr.bf16.mxu0 0
  %3540 = vmatpush1.bf16.msra.mxu0 0
  %3541 = vmatprep.subr.bf16.mxu0 0
  %3542 = vmatpush1.bf16.msra.mxu0 0
  %3543 = vmatprep.subr.bf16.mxu0 0
  %3544 = vmatpush1.bf16.msra.mxu0 0
  %3545 = vmatprep.subr.bf16.mxu0 0
  %3546 = vmatpush1.bf16.msra.mxu0 0
  %3547 = vmatprep.subr.bf16.mxu0 0
  %3548 = vmatpush1.bf16.msra.mxu0 0
  %3549 = vmatprep.subr.bf16.mxu0 0
  %3550 = vmatpush1.bf16.msra.mxu0 0
  %3551 = vmatprep.subr.bf16.mxu0 0
  %3552 = vmatpush1.bf16.msra.mxu0 0
  %3553 = vmatprep.subr.bf16.mxu0 0
  %3554 = vmatpush1.bf16.msra.mxu0 0
  %3555 = vmatprep.mubr.bf16.mxu0 0
  %3556 = vmatmul.mubr.bf16.gmra.mrb[0].mxu0 %v3481
  %v3557 = vpop.f32.mrb[0].mxu0
  %v3558 = vadd.f32 0.0, %v3557
  %v3559 = vpop.f32.mrb[0].mxu0
  %v3560 = vadd.f32 0.0, %v3559
  %v3561 = vpop.f32.mrb[0].mxu0
  %v3562 = vpop.f32.mrb[0].mxu0
  %3563 = vdwg.mxu0
  %v3564 = vadd.f32 %v3477, %v3517
  %v3565 = vadd.f32 %v3478, %v3519
  %v3566 = vadd.f32 %v3479, %v3558
  %v3567 = vadd.f32 %v3480, %v3560
  %v3568 = vxor.u32 %v3564, 2147483648
  %v3569 = vxor.u32 %v3565, 2147483648
  %v3570 = vxor.u32 %v3566, 2147483648
  %v3571 = vmul.f32 %v3568, 1.442695
  %v3572 = vpow.pop %v3571
  %v3573 = vmul.f32 %v3569, 1.442695
  %v3574 = vpow.pop %v3573
  %v3575 = vmul.f32 %v3570, 1.442695
  %v3576 = vpow.pop %v3575
  %v3577 = vadd.f32 %v3572, 1.0
  %v3578 = vadd.f32 %v3574, 1.0
  %v3579 = vadd.f32 %v3576, 1.0
  %v3580 = vrcp.pop %v3577
  %v3581 = vmul.f32 1.0, %v3580
  %v3582 = vrcp.pop %v3578
  %v3583 = vmul.f32 1.0, %v3582
  %v3584 = vrcp.pop %v3579
  %v3585 = vmul.f32 1.0, %v3584
  %v3586 = vtanh.pop %v3567
  %v3587 = vmul.f32 %v3583, %v3473
  %v3588 = vmul.f32 %v3581, %v3586
  %v3589 = vadd.f32 %v3587, %v3588
  %v3590 = vtanh.pop %v3589
  %v3591 = vmul.f32 %v3585, %v3590
  %3592 = vst [vmem:[#allocation3 + $0x10] sm:$0xff] %v3591
  %v3593 = vld [vmem:[#allocation2 + $0x60] sm:$0xff]
  %v3594 = vld [vmem:[#allocation2 + $0x68] sm:$0xff]
  %v3595 = vld [vmem:[#allocation2 + $0x70] sm:$0xff]
  %v3596 = vld [vmem:[#allocation2 + $0x78] sm:$0xff]
  %v3597 = vpack.c.bf16 %v3591, %v3591
  %3598 = vmatprep.subr.bf16.mxu0 %v3303
  %3599 = vmatpush1.bf16.msra.mxu0 %v3302
  %3600 = vmatprep.subr.bf16.mxu0 %v3307
  %3601 = vmatpush1.bf16.msra.mxu0 %v3306
  %3602 = vmatprep.subr.bf16.mxu0 %v3311
  %3603 = vmatpush1.bf16.msra.mxu0 %v3310
  %3604 = vmatprep.subr.bf16.mxu0 %v3315
  %3605 = vmatpush1.bf16.msra.mxu0 %v3314
  %3606 = vmatprep.subr.bf16.mxu0 %v3319
  %3607 = vmatpush1.bf16.msra.mxu0 %v3318
  %3608 = vmatprep.subr.bf16.mxu0 %v3323
  %3609 = vmatpush1.bf16.msra.mxu0 %v3322
  %3610 = vmatprep.subr.bf16.mxu0 %v3327
  %3611 = vmatpush1.bf16.msra.mxu0 %v3326
  %3612 = vmatprep.subr.bf16.mxu0 %v3331
  %3613 = vmatpush1.bf16.msra.mxu0 %v3330
  %3614 = vmatprep.subr.bf16.mxu0 0
  %3615 = vmatpush1.bf16.msra.mxu0 0
  %3616 = vmatprep.subr.bf16.mxu0 0
  %3617 = vmatpush1.bf16.msra.mxu0 0
  %3618 = vmatprep.subr.bf16.mxu0 0
  %3619 = vmatpush1.bf16.msra.mxu0 0
  %3620 = vmatprep.subr.bf16.mxu0 0
  %3621 = vmatpush1.bf16.msra.mxu0 0
  %3622 = vmatprep.subr.bf16.mxu0 0
  %3623 = vmatpush1.bf16.msra.mxu0 0
  %3624 = vmatprep.subr.bf16.mxu0 0
  %3625 = vmatpush1.bf16.msra.mxu0 0
  %3626 = vmatprep.subr.bf16.mxu0 0
  %3627 = vmatpush1.bf16.msra.mxu0 0
  %3628 = vmatprep.subr.bf16.mxu0 0
  %3629 = vmatpush1.bf16.msra.mxu0 0
  %3630 = vmatprep.mubr.bf16.mxu0 0
  %3631 = vmatmul.mubr.bf16.gmra.mrb[0].mxu0 %v3597
  %v3632 = vpop.f32.mrb[0].mxu0
  %v3633 = vadd.f32 0.0, %v3632
  %v3634 = vpop.f32.mrb[0].mxu0
  %v3635 = vadd.f32 0.0, %v3634
  %v3636 = vpop.f32.mrb[0].mxu0
  %v3637 = vpop.f32.mrb[0].mxu0
  %3638 = vdwg.mxu0
  %3639 = vmatprep.subr.bf16.mxu0 %v3305
  %3640 = vmatpush1.bf16.msra.mxu0 %v3304
  %3641 = vmatprep.subr.bf16.mxu0 %v3309
  %3642 = vmatpush1.bf16.msra.mxu0 %v3308
  %3643 = vmatprep.subr.bf16.mxu0 %v3313
  %3644 = vmatpush1.bf16.msra.mxu0 %v3312
  %3645 = vmatprep.subr.bf16.mxu0 %v3317
  %3646 = vmatpush1.bf16.msra.mxu0 %v3316
  %3647 = vmatprep.subr.bf16.mxu0 %v3321
  %3648 = vmatpush1.bf16.msra.mxu0 %v3320
  %3649 = vmatprep.subr.bf16.mxu0 %v3325
  %3650 = vmatpush1.bf16.msra.mxu0 %v3324
  %3651 = vmatprep.subr.bf16.mxu0 %v3329
  %3652 = vmatpush1.bf16.msra.mxu0 %v3328
  %3653 = vmatprep.subr.bf16.mxu0 %v3333
  %3654 = vmatpush1.bf16.msra.mxu0 %v3332
  %3655 = vmatprep.subr.bf16.mxu0 0
  %3656 = vmatpush1.bf16.msra.mxu0 0
  %3657 = vmatprep.subr.bf16.mxu0 0
  %3658 = vmatpush1.bf16.msra.mxu0 0
  %3659 = vmatprep.subr.bf16.mxu0 0
  %3660 = vmatpush1.bf16.msra.mxu0 0
  %3661 = vmatprep.subr.bf16.mxu0 0
  %3662 = vmatpush1.bf16.msra.mxu0 0
  %3663 = vmatprep.subr.bf16.mxu0 0
  %3664 = vmatpush1.bf16.msra.mxu0 0
  %3665 = vmatprep.subr.bf16.mxu0 0
  %3666 = vmatpush1.bf16.msra.mxu0 0
  %3667 = vmatprep.subr.bf16.mxu0 0
  %3668 = vmatpush1.bf16.msra.mxu0 0
  %3669 = vmatprep.subr.bf16.mxu0 0
  %3670 = vmatpush1.bf16.msra.mxu0 0
  %3671 = vmatprep.mubr.bf16.mxu0 0
  %3672 = vmatmul.mubr.bf16.gmra.mrb[0].mxu0 %v3597
  %v3673 = vpop.f32.mrb[0].mxu0
  %v3674 = vadd.f32 0.0, %v3673
  %v3675 = vpop.f32.mrb[0].mxu0
  %v3676 = vadd.f32 0.0, %v3675
  %v3677 = vpop.f32.mrb[0].mxu0
  %v3678 = vpop.f32.mrb[0].mxu0
  %3679 = vdwg.mxu0
  %v3680 = vadd.f32 %v3593, %v3633
  %v3681 = vadd.f32 %v3594, %v3635
  %v3682 = vadd.f32 %v3595, %v3674
  %v3683 = vadd.f32 %v3596, %v3676
  %v3684 = vxor.u32 %v3680, 2147483648
  %v3685 = vxor.u32 %v3681, 2147483648
  %v3686 = vxor.u32 %v3682, 2147483648
  %v3687 = vmul.f32 %v3684, 1.442695
  %v3688 = vpow.pop %v3687
  %v3689 = vmul.f32 %v3685, 1.442695
  %v3690 = vpow.pop %v3689
  %v3691 = vmul.f32 %v3686, 1.442695
  %v3692 = vpow.pop %v3691
  %v3693 = vadd.f32 %v3688, 1.0
  %v3694 = vadd.f32 %v3690, 1.0
  %v3695 = vadd.f32 %v3692, 1.0
  %v3696 = vrcp.pop %v3693
  %v3697 = vmul.f32 1.0, %v3696
  %v3698 = vrcp.pop %v3694
  %v3699 = vmul.f32 1.0, %v3698
  %v3700 = vrcp.pop %v3695
  %v3701 = vmul.f32 1.0, %v3700
  %v3702 = vtanh.pop %v3683
  %v3703 = vmul.f32 %v3699, %v3589
  %v3704 = vmul.f32 %v3697, %v3702
  %v3705 = vadd.f32 %v3703, %v3704
  %v3706 = vtanh.pop %v3705
  %v3707 = vmul.f32 %v3701, %v3706
  %3708 = vst [vmem:[#allocation3 + $0x18] sm:$0xff] %v3707
  %v3709 = vld [vmem:[#allocation2 + $0x80] sm:$0xff]
  %v3710 = vld [vmem:[#allocation2 + $0x88] sm:$0xff]
  %v3711 = vld [vmem:[#allocation2 + $0x90] sm:$0xff]
  %v3712 = vld [vmem:[#allocation2 + $0x98] sm:$0xff]
  %v3713 = vpack.c.bf16 %v3707, %v3707
  %3714 = vmatprep.subr.bf16.mxu0 %v3303
  %3715 = vmatpush1.bf16.msra.mxu0 %v3302
  %3716 = vmatprep.subr.bf16.mxu0 %v3307
  %3717 = vmatpush1.bf16.msra.mxu0 %v3306
  %3718 = vmatprep.subr.bf16.mxu0 %v3311
  %3719 = vmatpush1.bf16.msra.mxu0 %v3310
  %3720 = vmatprep.subr.bf16.mxu0 %v3315
  %3721 = vmatpush1.bf16.msra.mxu0 %v3314
  %3722 = vmatprep.subr.bf16.mxu0 %v3319
  %3723 = vmatpush1.bf16.msra.mxu0 %v3318
  %3724 = vmatprep.subr.bf16.mxu0 %v3323
  %3725 = vmatpush1.bf16.msra.mxu0 %v3322
  %3726 = vmatprep.subr.bf16.mxu0 %v3327
  %3727 = vmatpush1.bf16.msra.mxu0 %v3326
  %3728 = vmatprep.subr.bf16.mxu0 %v3331
  %3729 = vmatpush1.bf16.msra.mxu0 %v3330
  %3730 = vmatprep.subr.bf16.mxu0 0
  %3731 = vmatpush1.bf16.msra.mxu0 0
  %3732 = vmatprep.subr.bf16.mxu0 0
  %3733 = vmatpush1.bf16.msra.mxu0 0
  %3734 = vmatprep.subr.bf16.mxu0 0
  %3735 = vmatpush1.bf16.msra.mxu0 0
  %3736 = vmatprep.subr.bf16.mxu0 0
  %3737 = vmatpush1.bf16.msra.mxu0 0
  %3738 = vmatprep.subr.bf16.mxu0 0
  %3739 = vmatpush1.bf16.msra.mxu0 0
  %3740 = vmatprep.subr.bf16.mxu0 0
  %3741 = vmatpush1.bf16.msra.mxu0 0
  %3742 = vmatprep.subr.bf16.mxu0 0
  %3743 = vmatpush1.bf16.msra.mxu0 0
  %3744 = vmatprep.subr.bf16.mxu0 0
  %3745 = vmatpush1.bf16.msra.mxu0 0
  %3746 = vmatprep.mubr.bf16.mxu0 0
  %3747 = vmatmul.mubr.bf16.gmra.mrb[0].mxu0 %v3713
  %v3748 = vpop.f32.mrb[0].mxu0
  %v3749 = vadd.f32 0.0, %v3748
  %v3750 = vpop.f32.mrb[0].mxu0
  %v3751 = vadd.f32 0.0, %v3750
  %v3752 = vpop.f32.mrb[0].mxu0
  %v3753 = vpop.f32.mrb[0].mxu0
  %3754 = vdwg.mxu0
  %3755 = vmatprep.subr.bf16.mxu0 %v3305
  %3756 = vmatpush1.bf16.msra.mxu0 %v3304
  %3757 = vmatprep.subr.bf16.mxu0 %v3309
  %3758 = vmatpush1.bf16.msra.mxu0 %v3308
  %3759 = vmatprep.subr.bf16.mxu0 %v3313
  %3760 = vmatpush1.bf16.msra.mxu0 %v3312
  %3761 = vmatprep.subr.bf16.mxu0 %v3317
  %3762 = vmatpush1.bf16.msra.mxu0 %v3316
  %3763 = vmatprep.subr.bf16.mxu0 %v3321
  %3764 = vmatpush1.bf16.msra.mxu0 %v3320
  %3765 = vmatprep.subr.bf16.mxu0 %v3325
  %3766 = vmatpush1.bf16.msra.mxu0 %v3324
  %3767 = vmatprep.subr.bf16.mxu0 %v3329
  %3768 = vmatpush1.bf16.msra.mxu0 %v3328
  %3769 = vmatprep.subr.bf16.mxu0 %v3333
  %3770 = vmatpush1.bf16.msra.mxu0 %v3332
  %3771 = vmatprep.subr.bf16.mxu0 0
  %3772 = vmatpush1.bf16.msra.mxu0 0
  %3773 = vmatprep.subr.bf16.mxu0 0
  %3774 = vmatpush1.bf16.msra.mxu0 0
  %3775 = vmatprep.subr.bf16.mxu0 0
  %3776 = vmatpush1.bf16.msra.mxu0 0
  %3777 = vmatprep.subr.bf16.mxu0 0
  %3778 = vmatpush1.bf16.msra.mxu0 0
  %3779 = vmatprep.subr.bf16.mxu0 0
  %3780 = vmatpush1.bf16.msra.mxu0 0
  %3781 = vmatprep.subr.bf16.mxu0 0
  %3782 = vmatpush1.bf16.msra.mxu0 0
  %3783 = vmatprep.subr.bf16.mxu0 0
  %3784 = vmatpush1.bf16.msra.mxu0 0
  %3785 = vmatprep.subr.bf16.mxu0 0
  %3786 = vmatpush1.bf16.msra.mxu0 0
  %3787 = vmatprep.mubr.bf16.mxu0 0
  %3788 = vmatmul.mubr.bf16.gmra.mrb[0].mxu0 %v3713
  %v3789 = vpop.f32.mrb[0].mxu0
  %v3790 = vadd.f32 0.0, %v3789
  %v3791 = vpop.f32.mrb[0].mxu0
  %v3792 = vadd.f32 0.0, %v3791
  %v3793 = vpop.f32.mrb[0].mxu0
  %v3794 = vpop.f32.mrb[0].mxu0
  %3795 = vdwg.mxu0
  %v3796 = vadd.f32 %v3709, %v3749
  %v3797 = vadd.f32 %v3710, %v3751
  %v3798 = vadd.f32 %v3711, %v3790
  %v3799 = vadd.f32 %v3712, %v3792
  %v3800 = vxor.u32 %v3796, 2147483648
  %v3801 = vxor.u32 %v3797, 2147483648
  %v3802 = vxor.u32 %v3798, 2147483648
  %v3803 = vmul.f32 %v3800, 1.442695
  %v3804 = vpow.pop %v3803
  %v3805 = vmul.f32 %v3801, 1.442695
  %v3806 = vpow.pop %v3805
  %v3807 = vmul.f32 %v3802, 1.442695
  %v3808 = vpow.pop %v3807
  %v3809 = vadd.f32 %v3804, 1.0
  %v3810 = vadd.f32 %v3806, 1.0
  %v3811 = vadd.f32 %v3808, 1.0
  %v3812 = vrcp.pop %v3809
  %v3813 = vmul.f32 1.0, %v3812
  %v3814 = vrcp.pop %v3810
  %v3815 = vmul.f32 1.0, %v3814
  %v3816 = vrcp.pop %v3811
  %v3817 = vmul.f32 1.0, %v3816
  %v3818 = vtanh.pop %v3799
  %v3819 = vmul.f32 %v3815, %v3705
  %v3820 = vmul.f32 %v3813, %v3818
  %v3821 = vadd.f32 %v3819, %v3820
  %v3822 = vtanh.pop %v3821
  %v3823 = vmul.f32 %v3817, %v3822
  %3824 = vst [vmem:[#allocation3 + $0x20] sm:$0xff] %v3823
  %v3825 = vld [vmem:[#allocation2 + $0xa0] sm:$0xff]
  %v3826 = vld [vmem:[#allocation2 + $0xa8] sm:$0xff]
  %v3827 = vld [vmem:[#allocation2 + $0xb0] sm:$0xff]
  %v3828 = vld [vmem:[#allocation2 + $0xb8] sm:$0xff]
  %v3829 = vpack.c.bf16 %v3823, %v3823
  %3830 = vmatprep.subr.bf16.mxu0 %v3303
  %3831 = vmatpush1.bf16.msra.mxu0 %v3302
  %3832 = vmatprep.subr.bf16.mxu0 %v3307
  %3833 = vmatpush1.bf16.msra.mxu0 %v3306
  %3834 = vmatprep.subr.bf16.mxu0 %v3311
  %3835 = vmatpush1.bf16.msra.mxu0 %v3310
  %3836 = vmatprep.subr.bf16.mxu0 %v3315
  %3837 = vmatpush1.bf16.msra.mxu0 %v3314
  %3838 = vmatprep.subr.bf16.mxu0 %v3319
  %3839 = vmatpush1.bf16.msra.mxu0 %v3318
  %3840 = vmatprep.subr.bf16.mxu0 %v3323
  %3841 = vmatpush1.bf16.msra.mxu0 %v3322
  %3842 = vmatprep.subr.bf16.mxu0 %v3327
  %3843 = vmatpush1.bf16.msra.mxu0 %v3326
  %3844 = vmatprep.subr.bf16.mxu0 %v3331
  %3845 = vmatpush1.bf16.msra.mxu0 %v3330
  %3846 = vmatprep.subr.bf16.mxu0 0
  %3847 = vmatpush1.bf16.msra.mxu0 0
  %3848 = vmatprep.subr.bf16.mxu0 0
  %3849 = vmatpush1.bf16.msra.mxu0 0
  %3850 = vmatprep.subr.bf16.mxu0 0
  %3851 = vmatpush1.bf16.msra.mxu0 0
  %3852 = vmatprep.subr.bf16.mxu0 0
  %3853 = vmatpush1.bf16.msra.mxu0 0
  %3854 = vmatprep.subr.bf16.mxu0 0
  %3855 = vmatpush1.bf16.msra.mxu0 0
  %3856 = vmatprep.subr.bf16.mxu0 0
  %3857 = vmatpush1.bf16.msra.mxu0 0
  %3858 = vmatprep.subr.bf16.mxu0 0
  %3859 = vmatpush1.bf16.msra.mxu0 0
  %3860 = vmatprep.subr.bf16.mxu0 0
  %3861 = vmatpush1.bf16.msra.mxu0 0
  %3862 = vmatprep.mubr.bf16.mxu0 0
  %3863 = vmatmul.mubr.bf16.gmra.mrb[0].mxu0 %v3829
  %v3864 = vpop.f32.mrb[0].mxu0
  %v3865 = vadd.f32 0.0, %v3864
  %v3866 = vpop.f32.mrb[0].mxu0
  %v3867 = vadd.f32 0.0, %v3866
  %v3868 = vpop.f32.mrb[0].mxu0
  %v3869 = vpop.f32.mrb[0].mxu0
  %3870 = vdwg.mxu0
  %3871 = vmatprep.subr.bf16.mxu0 %v3305
  %3872 = vmatpush1.bf16.msra.mxu0 %v3304
  %3873 = vmatprep.subr.bf16.mxu0 %v3309
  %3874 = vmatpush1.bf16.msra.mxu0 %v3308
  %3875 = vmatprep.subr.bf16.mxu0 %v3313
  %3876 = vmatpush1.bf16.msra.mxu0 %v3312
  %3877 = vmatprep.subr.bf16.mxu0 %v3317
  %3878 = vmatpush1.bf16.msra.mxu0 %v3316
  %3879 = vmatprep.subr.bf16.mxu0 %v3321
  %3880 = vmatpush1.bf16.msra.mxu0 %v3320
  %3881 = vmatprep.subr.bf16.mxu0 %v3325
  %3882 = vmatpush1.bf16.msra.mxu0 %v3324
  %3883 = vmatprep.subr.bf16.mxu0 %v3329
  %3884 = vmatpush1.bf16.msra.mxu0 %v3328
  %3885 = vmatprep.subr.bf16.mxu0 %v3333
  %3886 = vmatpush1.bf16.msra.mxu0 %v3332
  %3887 = vmatprep.subr.bf16.mxu0 0
  %3888 = vmatpush1.bf16.msra.mxu0 0
  %3889 = vmatprep.subr.bf16.mxu0 0
  %3890 = vmatpush1.bf16.msra.mxu0 0
  %3891 = vmatprep.subr.bf16.mxu0 0
  %3892 = vmatpush1.bf16.msra.mxu0 0
  %3893 = vmatprep.subr.bf16.mxu0 0
  %3894 = vmatpush1.bf16.msra.mxu0 0
  %3895 = vmatprep.subr.bf16.mxu0 0
  %3896 = vmatpush1.bf16.msra.mxu0 0
  %3897 = vmatprep.subr.bf16.mxu0 0
  %3898 = vmatpush1.bf16.msra.mxu0 0
  %3899 = vmatprep.subr.bf16.mxu0 0
  %3900 = vmatpush1.bf16.msra.mxu0 0
  %3901 = vmatprep.subr.bf16.mxu0 0
  %3902 = vmatpush1.bf16.msra.mxu0 0
  %3903 = vmatprep.mubr.bf16.mxu0 0
  %3904 = vmatmul.mubr.bf16.gmra.mrb[0].mxu0 %v3829
  %v3905 = vpop.f32.mrb[0].mxu0
  %v3906 = vadd.f32 0.0, %v3905
  %v3907 = vpop.f32.mrb[0].mxu0
  %v3908 = vadd.f32 0.0, %v3907
  %v3909 = vpop.f32.mrb[0].mxu0
  %v3910 = vpop.f32.mrb[0].mxu0
  %3911 = vdwg.mxu0
  %v3912 = vadd.f32 %v3825, %v3865
  %v3913 = vadd.f32 %v3826, %v3867
  %v3914 = vadd.f32 %v3827, %v3906
  %v3915 = vadd.f32 %v3828, %v3908
  %v3916 = vxor.u32 %v3912, 2147483648
  %v3917 = vxor.u32 %v3913, 2147483648
  %v3918 = vxor.u32 %v3914, 2147483648
  %v3919 = vmul.f32 %v3916, 1.442695
  %v3920 = vpow.pop %v3919
  %v3921 = vmul.f32 %v3917, 1.442695
  %v3922 = vpow.pop %v3921
  %v3923 = vmul.f32 %v3918, 1.442695
  %v3924 = vpow.pop %v3923
  %v3925 = vadd.f32 %v3920, 1.0
  %v3926 = vadd.f32 %v3922, 1.0
  %v3927 = vadd.f32 %v3924, 1.0
  %v3928 = vrcp.pop %v3925
  %v3929 = vmul.f32 1.0, %v3928
  %v3930 = vrcp.pop %v3926
  %v3931 = vmul.f32 1.0, %v3930
  %v3932 = vrcp.pop %v3927
  %v3933 = vmul.f32 1.0, %v3932
  %v3934 = vtanh.pop %v3915
  %v3935 = vmul.f32 %v3931, %v3821
  %v3936 = vmul.f32 %v3929, %v3934
  %v3937 = vadd.f32 %v3935, %v3936
  %v3938 = vtanh.pop %v3937
  %v3939 = vmul.f32 %v3933, %v3938
  %3940 = vst [vmem:[#allocation3 + $0x28] sm:$0xff] %v3939
  %v3941 = vld [vmem:[#allocation2 + $0xc0] sm:$0xff]
  %v3942 = vld [vmem:[#allocation2 + $0xc8] sm:$0xff]
  %v3943 = vld [vmem:[#allocation2 + $0xd0] sm:$0xff]
  %v3944 = vld [vmem:[#allocation2 + $0xd8] sm:$0xff]
  %v3945 = vpack.c.bf16 %v3939, %v3939
  %3946 = vmatprep.subr.bf16.mxu0 %v3303
  %3947 = vmatpush1.bf16.msra.mxu0 %v3302
  %3948 = vmatprep.subr.bf16.mxu0 %v3307
  %3949 = vmatpush1.bf16.msra.mxu0 %v3306
  %3950 = vmatprep.subr.bf16.mxu0 %v3311
  %3951 = vmatpush1.bf16.msra.mxu0 %v3310
  %3952 = vmatprep.subr.bf16.mxu0 %v3315
  %3953 = vmatpush1.bf16.msra.mxu0 %v3314
  %3954 = vmatprep.subr.bf16.mxu0 %v3319
  %3955 = vmatpush1.bf16.msra.mxu0 %v3318
  %3956 = vmatprep.subr.bf16.mxu0 %v3323
  %3957 = vmatpush1.bf16.msra.mxu0 %v3322
  %3958 = vmatprep.subr.bf16.mxu0 %v3327
  %3959 = vmatpush1.bf16.msra.mxu0 %v3326
  %3960 = vmatprep.subr.bf16.mxu0 %v3331
  %3961 = vmatpush1.bf16.msra.mxu0 %v3330
  %3962 = vmatprep.subr.bf16.mxu0 0
  %3963 = vmatpush1.bf16.msra.mxu0 0
  %3964 = vmatprep.subr.bf16.mxu0 0
  %3965 = vmatpush1.bf16.msra.mxu0 0
  %3966 = vmatprep.subr.bf16.mxu0 0
  %3967 = vmatpush1.bf16.msra.mxu0 0
  %3968 = vmatprep.subr.bf16.mxu0 0
  %3969 = vmatpush1.bf16.msra.mxu0 0
  %3970 = vmatprep.subr.bf16.mxu0 0
  %3971 = vmatpush1.bf16.msra.mxu0 0
  %3972 = vmatprep.subr.bf16.mxu0 0
  %3973 = vmatpush1.bf16.msra.mxu0 0
  %3974 = vmatprep.subr.bf16.mxu0 0
  %3975 = vmatpush1.bf16.msra.mxu0 0
  %3976 = vmatprep.subr.bf16.mxu0 0
  %3977 = vmatpush1.bf16.msra.mxu0 0
  %3978 = vmatprep.mubr.bf16.mxu0 0
  %3979 = vmatmul.mubr.bf16.gmra.mrb[0].mxu0 %v3945
  %v3980 = vpop.f32.mrb[0].mxu0
  %v3981 = vadd.f32 0.0, %v3980
  %v3982 = vpop.f32.mrb[0].mxu0
  %v3983 = vadd.f32 0.0, %v3982
  %v3984 = vpop.f32.mrb[0].mxu0
  %v3985 = vpop.f32.mrb[0].mxu0
  %3986 = vdwg.mxu0
  %3987 = vmatprep.subr.bf16.mxu0 %v3305
  %3988 = vmatpush1.bf16.msra.mxu0 %v3304
  %3989 = vmatprep.subr.bf16.mxu0 %v3309
  %3990 = vmatpush1.bf16.msra.mxu0 %v3308
  %3991 = vmatprep.subr.bf16.mxu0 %v3313
  %3992 = vmatpush1.bf16.msra.mxu0 %v3312
  %3993 = vmatprep.subr.bf16.mxu0 %v3317
  %3994 = vmatpush1.bf16.msra.mxu0 %v3316
  %3995 = vmatprep.subr.bf16.mxu0 %v3321
  %3996 = vmatpush1.bf16.msra.mxu0 %v3320
  %3997 = vmatprep.subr.bf16.mxu0 %v3325
  %3998 = vmatpush1.bf16.msra.mxu0 %v3324
  %3999 = vmatprep.subr.bf16.mxu0 %v3329
  %4000 = vmatpush1.bf16.msra.mxu0 %v3328
  %4001 = vmatprep.subr.bf16.mxu0 %v3333
  %4002 = vmatpush1.bf16.msra.mxu0 %v3332
  %4003 = vmatprep.subr.bf16.mxu0 0
  %4004 = vmatpush1.bf16.msra.mxu0 0
  %4005 = vmatprep.subr.bf16.mxu0 0
  %4006 = vmatpush1.bf16.msra.mxu0 0
  %4007 = vmatprep.subr.bf16.mxu0 0
  %4008 = vmatpush1.bf16.msra.mxu0 0
  %4009 = vmatprep.subr.bf16.mxu0 0
  %4010 = vmatpush1.bf16.msra.mxu0 0
  %4011 = vmatprep.subr.bf16.mxu0 0
  %4012 = vmatpush1.bf16.msra.mxu0 0
  %4013 = vmatprep.subr.bf16.mxu0 0
  %4014 = vmatpush1.bf16.msra.mxu0 0
  %4015 = vmatprep.subr.bf16.mxu0 0
  %4016 = vmatpush1.bf16.msra.mxu0 0
  %4017 = vmatprep.subr.bf16.mxu0 0
  %4018 = vmatpush1.bf16.msra.mxu0 0
  %4019 = vmatprep.mubr.bf16.mxu0 0
  %4020 = vmatmul.mubr.bf16.gmra.mrb[0].mxu0 %v3945
  %v4021 = vpop.f32.mrb[0].mxu0
  %v4022 = vadd.f32 0.0, %v4021
  %v4023 = vpop.f32.mrb[0].mxu0
  %v4024 = vadd.f32 0.0, %v4023
  %v4025 = vpop.f32.mrb[0].mxu0
  %v4026 = vpop.f32.mrb[0].mxu0
  %4027 = vdwg.mxu0
  %v4028 = vadd.f32 %v3941, %v3981
  %v4029 = vadd.f32 %v3942, %v3983
  %v4030 = vadd.f32 %v3943, %v4022
  %v4031 = vadd.f32 %v3944, %v4024
  %v4032 = vxor.u32 %v4028, 2147483648
  %v4033 = vxor.u32 %v4029, 2147483648
  %v4034 = vxor.u32 %v4030, 2147483648
  %v4035 = vmul.f32 %v4032, 1.442695
  %v4036 = vpow.pop %v4035
  %v4037 = vmul.f32 %v4033, 1.442695
  %v4038 = vpow.pop %v4037
  %v4039 = vmul.f32 %v4034, 1.442695
  %v4040 = vpow.pop %v4039
  %v4041 = vadd.f32 %v4036, 1.0
  %v4042 = vadd.f32 %v4038, 1.0
  %v4043 = vadd.f32 %v4040, 1.0
  %v4044 = vrcp.pop %v4041
  %v4045 = vmul.f32 1.0, %v4044
  %v4046 = vrcp.pop %v4042
  %v4047 = vmul.f32 1.0, %v4046
  %v4048 = vrcp.pop %v4043
  %v4049 = vmul.f32 1.0, %v4048
  %v4050 = vtanh.pop %v4031
  %v4051 = vmul.f32 %v4047, %v3937
  %v4052 = vmul.f32 %v4045, %v4050
  %v4053 = vadd.f32 %v4051, %v4052
  %v4054 = vtanh.pop %v4053
  %v4055 = vmul.f32 %v4049, %v4054
  %4056 = vst [vmem:[#allocation3 + $0x30] sm:$0xff] %v4055
  %v4057 = vld [vmem:[#allocation2 + $0xe0] sm:$0xff]
  %v4058 = vld [vmem:[#allocation2 + $0xe8] sm:$0xff]
  %v4059 = vld [vmem:[#allocation2 + $0xf0] sm:$0xff]
  %v4060 = vld [vmem:[#allocation2 + $0xf8] sm:$0xff]
  %v4061 = vpack.c.bf16 %v4055, %v4055
  %4062 = vmatprep.subr.bf16.mxu0 %v3303
  %4063 = vmatpush1.bf16.msra.mxu0 %v3302
  %4064 = vmatprep.subr.bf16.mxu0 %v3307
  %4065 = vmatpush1.bf16.msra.mxu0 %v3306
  %4066 = vmatprep.subr.bf16.mxu0 %v3311
  %4067 = vmatpush1.bf16.msra.mxu0 %v3310
  %4068 = vmatprep.subr.bf16.mxu0 %v3315
  %4069 = vmatpush1.bf16.msra.mxu0 %v3314
  %4070 = vmatprep.subr.bf16.mxu0 %v3319
  %4071 = vmatpush1.bf16.msra.mxu0 %v3318
  %4072 = vmatprep.subr.bf16.mxu0 %v3323
  %4073 = vmatpush1.bf16.msra.mxu0 %v3322
  %4074 = vmatprep.subr.bf16.mxu0 %v3327
  %4075 = vmatpush1.bf16.msra.mxu0 %v3326
  %4076 = vmatprep.subr.bf16.mxu0 %v3331
  %4077 = vmatpush1.bf16.msra.mxu0 %v3330
  %4078 = vmatprep.subr.bf16.mxu0 0
  %4079 = vmatpush1.bf16.msra.mxu0 0
  %4080 = vmatprep.subr.bf16.mxu0 0
  %4081 = vmatpush1.bf16.msra.mxu0 0
  %4082 = vmatprep.subr.bf16.mxu0 0
  %4083 = vmatpush1.bf16.msra.mxu0 0
  %4084 = vmatprep.subr.bf16.mxu0 0
  %4085 = vmatpush1.bf16.msra.mxu0 0
  %4086 = vmatprep.subr.bf16.mxu0 0
  %4087 = vmatpush1.bf16.msra.mxu0 0
  %4088 = vmatprep.subr.bf16.mxu0 0
  %4089 = vmatpush1.bf16.msra.mxu0 0
  %4090 = vmatprep.subr.bf16.mxu0 0
  %4091 = vmatpush1.bf16.msra.mxu0 0
  %4092 = vmatprep.subr.bf16.mxu0 0
  %4093 = vmatpush1.bf16.msra.mxu0 0
  %4094 = vmatprep.mubr.bf16.mxu0 0
  %4095 = vmatmul.mubr.bf16.gmra.mrb[0].mxu0 %v4061
  %v4096 = vpop.f32.mrb[0].mxu0
  %v4097 = vadd.f32 0.0, %v4096
  %v4098 = vpop.f32.mrb[0].mxu0
  %v4099 = vadd.f32 0.0, %v4098
  %v4100 = vpop.f32.mrb[0].mxu0
  %v4101 = vpop.f32.mrb[0].mxu0
  %4102 = vdwg.mxu0
  %4103 = vmatprep.subr.bf16.mxu0 %v3305
  %4104 = vmatpush1.bf16.msra.mxu0 %v3304
  %4105 = vmatprep.subr.bf16.mxu0 %v3309
  %4106 = vmatpush1.bf16.msra.mxu0 %v3308
  %4107 = vmatprep.subr.bf16.mxu0 %v3313
  %4108 = vmatpush1.bf16.msra.mxu0 %v3312
  %4109 = vmatprep.subr.bf16.mxu0 %v3317
  %4110 = vmatpush1.bf16.msra.mxu0 %v3316
  %4111 = vmatprep.subr.bf16.mxu0 %v3321
  %4112 = vmatpush1.bf16.msra.mxu0 %v3320
  %4113 = vmatprep.subr.bf16.mxu0 %v3325
  %4114 = vmatpush1.bf16.msra.mxu0 %v3324
  %4115 = vmatprep.subr.bf16.mxu0 %v3329
  %4116 = vmatpush1.bf16.msra.mxu0 %v3328
  %4117 = vmatprep.subr.bf16.mxu0 %v3333
  %4118 = vmatpush1.bf16.msra.mxu0 %v3332
  %4119 = vmatprep.subr.bf16.mxu0 0
  %4120 = vmatpush1.bf16.msra.mxu0 0
  %4121 = vmatprep.subr.bf16.mxu0 0
  %4122 = vmatpush1.bf16.msra.mxu0 0
  %4123 = vmatprep.subr.bf16.mxu0 0
  %4124 = vmatpush1.bf16.msra.mxu0 0
  %4125 = vmatprep.subr.bf16.mxu0 0
  %4126 = vmatpush1.bf16.msra.mxu0 0
  %4127 = vmatprep.subr.bf16.mxu0 0
  %4128 = vmatpush1.bf16.msra.mxu0 0
  %4129 = vmatprep.subr.bf16.mxu0 0
  %4130 = vmatpush1.bf16.msra.mxu0 0
  %4131 = vmatprep.subr.bf16.mxu0 0
  %4132 = vmatpush1.bf16.msra.mxu0 0
  %4133 = vmatprep.subr.bf16.mxu0 0
  %4134 = vmatpush1.bf16.msra.mxu0 0
  %4135 = vmatprep.mubr.bf16.mxu0 0
  %4136 = vmatmul.mubr.bf16.gmra.mrb[0].mxu0 %v4061
  %v4137 = vpop.f32.mrb[0].mxu0
  %v4138 = vadd.f32 0.0, %v4137
  %v4139 = vpop.f32.mrb[0].mxu0
  %v4140 = vadd.f32 0.0, %v4139
  %v4141 = vpop.f32.mrb[0].mxu0
  %v4142 = vpop.f32.mrb[0].mxu0
  %4143 = vdwg.mxu0
  %v4144 = vadd.f32 %v4057, %v4097
  %v4145 = vadd.f32 %v4058, %v4099
  %v4146 = vadd.f32 %v4059, %v4138
  %v4147 = vadd.f32 %v4060, %v4140
  %v4148 = vxor.u32 %v4144, 2147483648
  %v4149 = vxor.u32 %v4145, 2147483648
  %v4150 = vxor.u32 %v4146, 2147483648
  %v4151 = vmul.f32 %v4148, 1.442695
  %v4152 = vpow.pop %v4151
  %v4153 = vmul.f32 %v4149, 1.442695
  %v4154 = vpow.pop %v4153
  %v4155 = vmul.f32 %v4150, 1.442695
  %v4156 = vpow.pop %v4155
  %v4157 = vadd.f32 %v4152, 1.0
  %v4158 = vadd.f32 %v4154, 1.0
  %v4159 = vadd.f32 %v4156, 1.0
  %v4160 = vrcp.pop %v4157
  %v4161 = vmul.f32 1.0, %v4160
  %v4162 = vrcp.pop %v4158
  %v4163 = vmul.f32 1.0, %v4162
  %v4164 = vrcp.pop %v4159
  %v4165 = vmul.f32 1.0, %v4164
  %v4166 = vtanh.pop %v4147
  %v4167 = vmul.f32 %v4163, %v4053
  %v4168 = vmul.f32 %v4161, %v4166
  %v4169 = vadd.f32 %v4167, %v4168
  %v4170 = vtanh.pop %v4169
  %v4171 = vmul.f32 %v4165, %v4170
  %4172 = vst [vmem:[#allocation3 + $0x38] sm:$0xff] %v4171
  %v4173 = vld [vmem:[#allocation3] sm:$0xff]
  %v4174 = vld [vmem:[#allocation3 + $0x8] sm:$0xff]
  %v4175 = vld [vmem:[#allocation3 + $0x10] sm:$0xff]
  %v4176 = vld [vmem:[#allocation3 + $0x18] sm:$0xff]
  %v4177 = vld [vmem:[#allocation3 + $0x20] sm:$0xff]
  %v4178 = vld [vmem:[#allocation3 + $0x28] sm:$0xff]
  %v4179 = vld [vmem:[#allocation3 + $0x30] sm:$0xff]
  %v4180 = vld [vmem:[#allocation3 + $0x38] sm:$0xff]
  %v4181 = vpack.c.bf16 %v4174, %v4173
  %v4182 = vpack.c.bf16 %v4176, %v4175
  %v4183 = vpack.c.bf16 %v4178, %v4177
  %v4184 = vpack.c.bf16 %v4180, %v4179
  %v4185 = vld [vmem:[%s10] sm:$0xff]
  %v4186 = vld [vmem:[%s10 + $0x8] sm:$0xff]
  %v4187 = vld [vmem:[%s10 + $0x10] sm:$0xff]
  %v4188 = vld [vmem:[%s10 + $0x18] sm:$0xff]
  %v4189 = vld [vmem:[%s10 + $0x20] sm:$0xff]
  %v4190 = vld [vmem:[%s10 + $0x28] sm:$0xff]
  %v4191 = vld [vmem:[%s10 + $0x30] sm:$0xff]
  %v4192 = vld [vmem:[%s10 + $0x38] sm:$0xff]
  %v4193 = vld [vmem:[%s10 + $0x40] sm:$0xff]
  %v4194 = vld [vmem:[%s10 + $0x48] sm:$0xff]
  %v4195 = vld [vmem:[%s10 + $0x50] sm:$0xff]
  %v4196 = vld [vmem:[%s10 + $0x58] sm:$0xff]
  %v4197 = vld [vmem:[%s10 + $0x60] sm:$0xff]
  %v4198 = vld [vmem:[%s10 + $0x68] sm:$0xff]
  %v4199 = vld [vmem:[%s10 + $0x70] sm:$0xff]
  %v4200 = vld [vmem:[%s10 + $0x78] sm:$0xff]
  %v4201 = vld [vmem:[%s10 + $0x80] sm:$0xff]
  %v4202 = vld [vmem:[%s10 + $0x88] sm:$0xff]
  %v4203 = vld [vmem:[%s10 + $0x90] sm:$0xff]
  %v4204 = vld [vmem:[%s10 + $0x98] sm:$0xff]
  %v4205 = vld [vmem:[%s10 + $0xa0] sm:$0xff]
  %v4206 = vld [vmem:[%s10 + $0xa8] sm:$0xff]
  %v4207 = vld [vmem:[%s10 + $0xb0] sm:$0xff]
  %v4208 = vld [vmem:[%s10 + $0xb8] sm:$0xff]
  %v4209 = vld [vmem:[%s10 + $0xc0] sm:$0xff]
  %v4210 = vld [vmem:[%s10 + $0xc8] sm:$0xff]
  %v4211 = vld [vmem:[%s10 + $0xd0] sm:$0xff]
  %v4212 = vld [vmem:[%s10 + $0xd8] sm:$0xff]
  %v4213 = vld [vmem:[%s10 + $0xe0] sm:$0xff]
  %v4214 = vld [vmem:[%s10 + $0xe8] sm:$0xff]
  %v4215 = vld [vmem:[%s10 + $0xf0] sm:$0xff]
  %v4216 = vld [vmem:[%s10 + $0xf8] sm:$0xff]
  %v4217 = vld [vmem:[%s12] sm:$0xf]
  %v4219 = vlaneseq
  %v4220 = vshrl.u32 %v4219, 7
  %v4221 = vsub.s32 0, %v4220
  %v4222 = vrot.slane %v4217, %v4221
  %v4223 = vlaneseq
  %v4224 = vshrl.u32 %v4223, 7
  %v4225 = vsub.s32 1, %v4224
  %v4226 = vrot.slane %v4217, %v4225
  %v4227 = vlaneseq
  %v4228 = vshrl.u32 %v4227, 7
  %v4229 = vsub.s32 2, %v4228
  %v4230 = vrot.slane %v4217, %v4229
  %v4231 = vlaneseq
  %v4232 = vshrl.u32 %v4231, 7
  %v4233 = vsub.s32 3, %v4232
  %v4234 = vrot.slane %v4217, %v4233
  %v4271 = vunpack.c.l.b16 %v4185
  %v4272 = vunpack.c.h.b16 %v4185
  %v4273 = vunpack.c.l.b16 %v4186
  %v4274 = vunpack.c.h.b16 %v4186
  %v4275 = vunpack.c.l.b16 %v4187
  %v4276 = vunpack.c.h.b16 %v4187
  %v4277 = vunpack.c.l.b16 %v4188
  %v4278 = vunpack.c.h.b16 %v4188
  %v4279 = vunpack.c.l.b16 %v4189
  %v4280 = vunpack.c.h.b16 %v4189
  %v4281 = vunpack.c.l.b16 %v4190
  %v4282 = vunpack.c.h.b16 %v4190
  %v4283 = vunpack.c.l.b16 %v4191
  %v4284 = vunpack.c.h.b16 %v4191
  %v4285 = vunpack.c.l.b16 %v4192
  %v4286 = vunpack.c.h.b16 %v4192
  %v4287 = vunpack.c.l.b16 %v4193
  %v4288 = vunpack.c.h.b16 %v4193
  %v4289 = vunpack.c.l.b16 %v4194
  %v4290 = vunpack.c.h.b16 %v4194
  %v4291 = vunpack.c.l.b16 %v4195
  %v4292 = vunpack.c.h.b16 %v4195
  %v4293 = vunpack.c.l.b16 %v4196
  %v4294 = vunpack.c.h.b16 %v4196
  %v4295 = vunpack.c.l.b16 %v4197
  %v4296 = vunpack.c.h.b16 %v4197
  %v4297 = vunpack.c.l.b16 %v4198
  %v4298 = vunpack.c.h.b16 %v4198
  %v4299 = vunpack.c.l.b16 %v4199
  %v4300 = vunpack.c.h.b16 %v4199
  %v4301 = vunpack.c.l.b16 %v4200
  %v4302 = vunpack.c.h.b16 %v4200
  %v4303 = vunpack.c.l.b16 %v4201
  %v4304 = vunpack.c.h.b16 %v4201
  %v4305 = vunpack.c.l.b16 %v4202
  %v4306 = vunpack.c.h.b16 %v4202
  %v4307 = vunpack.c.l.b16 %v4203
  %v4308 = vunpack.c.h.b16 %v4203
  %v4309 = vunpack.c.l.b16 %v4204
  %v4310 = vunpack.c.h.b16 %v4204
  %v4311 = vunpack.c.l.b16 %v4205
  %v4312 = vunpack.c.h.b16 %v4205
  %v4313 = vunpack.c.l.b16 %v4206
  %v4314 = vunpack.c.h.b16 %v4206
  %v4315 = vunpack.c.l.b16 %v4207
  %v4316 = vunpack.c.h.b16 %v4207
  %v4317 = vunpack.c.l.b16 %v4208
  %v4318 = vunpack.c.h.b16 %v4208
  %v4319 = vunpack.c.l.b16 %v4209
  %v4320 = vunpack.c.h.b16 %v4209
  %v4321 = vunpack.c.l.b16 %v4210
  %v4322 = vunpack.c.h.b16 %v4210
  %v4323 = vunpack.c.l.b16 %v4211
  %v4324 = vunpack.c.h.b16 %v4211
  %v4325 = vunpack.c.l.b16 %v4212
  %v4326 = vunpack.c.h.b16 %v4212
  %v4327 = vunpack.c.l.b16 %v4213
  %v4328 = vunpack.c.h.b16 %v4213
  %v4329 = vunpack.c.l.b16 %v4214
  %v4330 = vunpack.c.h.b16 %v4214
  %v4331 = vunpack.c.l.b16 %v4215
  %v4332 = vunpack.c.h.b16 %v4215
  %v4333 = vunpack.c.l.b16 %v4216
  %v4334 = vunpack.c.h.b16 %v4216
  %v4335 = vpack.c.b16 %v4275, %v4271
  %v4336 = vpack.c.b16 %v4276, %v4272
  %v4337 = vpack.c.b16 %v4277, %v4273
  %v4338 = vpack.c.b16 %v4278, %v4274
  %v4339 = vpack.c.b16 %v4283, %v4279
  %v4340 = vpack.c.b16 %v4284, %v4280
  %v4341 = vpack.c.b16 %v4285, %v4281
  %v4342 = vpack.c.b16 %v4286, %v4282
  %v4343 = vpack.c.b16 %v4291, %v4287
  %v4344 = vpack.c.b16 %v4292, %v4288
  %v4345 = vpack.c.b16 %v4293, %v4289
  %v4346 = vpack.c.b16 %v4294, %v4290
  %v4347 = vpack.c.b16 %v4299, %v4295
  %v4348 = vpack.c.b16 %v4300, %v4296
  %v4349 = vpack.c.b16 %v4301, %v4297
  %v4350 = vpack.c.b16 %v4302, %v4298
  %v4351 = vpack.c.b16 %v4307, %v4303
  %v4352 = vpack.c.b16 %v4308, %v4304
  %v4353 = vpack.c.b16 %v4309, %v4305
  %v4354 = vpack.c.b16 %v4310, %v4306
  %v4355 = vpack.c.b16 %v4315, %v4311
  %v4356 = vpack.c.b16 %v4316, %v4312
  %v4357 = vpack.c.b16 %v4317, %v4313
  %v4358 = vpack.c.b16 %v4318, %v4314
  %v4359 = vpack.c.b16 %v4323, %v4319
  %v4360 = vpack.c.b16 %v4324, %v4320
  %v4361 = vpack.c.b16 %v4325, %v4321
  %v4362 = vpack.c.b16 %v4326, %v4322
  %v4363 = vpack.c.b16 %v4331, %v4327
  %v4364 = vpack.c.b16 %v4332, %v4328
  %v4365 = vpack.c.b16 %v4333, %v4329
  %v4366 = vpack.c.b16 %v4334, %v4330
  %4399 = vmatprep.subr.bf16.mxu0 %v4336
  %4400 = vmatpush1.bf16.msra.mxu0 %v4335
  %4401 = vmatprep.subr.bf16.mxu0 %v4340
  %4402 = vmatpush1.bf16.msra.mxu0 %v4339
  %4403 = vmatprep.subr.bf16.mxu0 %v4344
  %4404 = vmatpush1.bf16.msra.mxu0 %v4343
  %4405 = vmatprep.subr.bf16.mxu0 %v4348
  %4406 = vmatpush1.bf16.msra.mxu0 %v4347
  %4407 = vmatprep.subr.bf16.mxu0 %v4352
  %4408 = vmatpush1.bf16.msra.mxu0 %v4351
  %4409 = vmatprep.subr.bf16.mxu0 %v4356
  %4410 = vmatpush1.bf16.msra.mxu0 %v4355
  %4411 = vmatprep.subr.bf16.mxu0 %v4360
  %4412 = vmatpush1.bf16.msra.mxu0 %v4359
  %4413 = vmatprep.subr.bf16.mxu0 %v4364
  %4414 = vmatpush1.bf16.msra.mxu0 %v4363
  %4415 = vmatprep.subr.bf16.mxu0 0
  %4416 = vmatpush1.bf16.msra.mxu0 0
  %4417 = vmatprep.subr.bf16.mxu0 0
  %4418 = vmatpush1.bf16.msra.mxu0 0
  %4419 = vmatprep.subr.bf16.mxu0 0
  %4420 = vmatpush1.bf16.msra.mxu0 0
  %4421 = vmatprep.subr.bf16.mxu0 0
  %4422 = vmatpush1.bf16.msra.mxu0 0
  %4423 = vmatprep.subr.bf16.mxu0 0
  %4424 = vmatpush1.bf16.msra.mxu0 0
  %4425 = vmatprep.subr.bf16.mxu0 0
  %4426 = vmatpush1.bf16.msra.mxu0 0
  %4427 = vmatprep.subr.bf16.mxu0 0
  %4428 = vmatpush1.bf16.msra.mxu0 0
  %4429 = vmatprep.subr.bf16.mxu0 0
  %4430 = vmatpush1.bf16.msra.mxu0 0
  %4431 = vmatprep.mubr.bf16.mxu0 0
  %4432 = vmatmul.mubr.bf16.gmra.mrb[0].mxu0 %v4181
  %v4433 = vpop.f32.mrb[0].mxu0
  %v4434 = vadd.f32 %v4222, %v4433
  %v4435 = vpop.f32.mrb[0].mxu0
  %v4436 = vadd.f32 %v4226, %v4435
  %v4437 = vpop.f32.mrb[0].mxu0
  %v4438 = vadd.f32 %v4222, %v4437
  %v4439 = vpop.f32.mrb[0].mxu0
  %v4440 = vadd.f32 %v4226, %v4439
  %4441 = vmatprep.mubr.bf16.mxu0 0
  %4442 = vmatmul.mubr.bf16.gmra.mrb[0].mxu0 %v4182
  %v4443 = vpop.f32.mrb[0].mxu0
  %v4444 = vadd.f32 %v4222, %v4443
  %v4445 = vpop.f32.mrb[0].mxu0
  %v4446 = vadd.f32 %v4226, %v4445
  %v4447 = vpop.f32.mrb[0].mxu0
  %v4448 = vadd.f32 %v4222, %v4447
  %v4449 = vpop.f32.mrb[0].mxu0
  %v4450 = vadd.f32 %v4226, %v4449
  %4451 = vmatprep.mubr.bf16.mxu0 0
  %4452 = vmatmul.mubr.bf16.gmra.mrb[0].mxu0 %v4183
  %v4453 = vpop.f32.mrb[0].mxu0
  %v4454 = vadd.f32 %v4222, %v4453
  %v4455 = vpop.f32.mrb[0].mxu0
  %v4456 = vadd.f32 %v4226, %v4455
  %v4457 = vpop.f32.mrb[0].mxu0
  %v4458 = vadd.f32 %v4222, %v4457
  %v4459 = vpop.f32.mrb[0].mxu0
  %v4460 = vadd.f32 %v4226, %v4459
  %4461 = vmatprep.mubr.bf16.mxu0 0
  %4462 = vmatmul.mubr.bf16.gmra.mrb[0].mxu0 %v4184
  %v4463 = vpop.f32.mrb[0].mxu0
  %v4464 = vadd.f32 %v4222, %v4463
  %v4465 = vpop.f32.mrb[0].mxu0
  %v4466 = vadd.f32 %v4226, %v4465
  %v4467 = vpop.f32.mrb[0].mxu0
  %v4468 = vadd.f32 %v4222, %v4467
  %v4469 = vpop.f32.mrb[0].mxu0
  %v4470 = vadd.f32 %v4226, %v4469
  %4471 = vdwg.mxu0
  %4472 = vmatprep.subr.bf16.mxu0 %v4338
  %4473 = vmatpush1.bf16.msra.mxu0 %v4337
  %4474 = vmatprep.subr.bf16.mxu0 %v4342
  %4475 = vmatpush1.bf16.msra.mxu0 %v4341
  %4476 = vmatprep.subr.bf16.mxu0 %v4346
  %4477 = vmatpush1.bf16.msra.mxu0 %v4345
  %4478 = vmatprep.subr.bf16.mxu0 %v4350
  %4479 = vmatpush1.bf16.msra.mxu0 %v4349
  %4480 = vmatprep.subr.bf16.mxu0 %v4354
  %4481 = vmatpush1.bf16.msra.mxu0 %v4353
  %4482 = vmatprep.subr.bf16.mxu0 %v4358
  %4483 = vmatpush1.bf16.msra.mxu0 %v4357
  %4484 = vmatprep.subr.bf16.mxu0 %v4362
  %4485 = vmatpush1.bf16.msra.mxu0 %v4361
  %4486 = vmatprep.subr.bf16.mxu0 %v4366
  %4487 = vmatpush1.bf16.msra.mxu0 %v4365
  %4488 = vmatprep.subr.bf16.mxu0 0
  %4489 = vmatpush1.bf16.msra.mxu0 0
  %4490 = vmatprep.subr.bf16.mxu0 0
  %4491 = vmatpush1.bf16.msra.mxu0 0
  %4492 = vmatprep.subr.bf16.mxu0 0
  %4493 = vmatpush1.bf16.msra.mxu0 0
  %4494 = vmatprep.subr.bf16.mxu0 0
  %4495 = vmatpush1.bf16.msra.mxu0 0
  %4496 = vmatprep.subr.bf16.mxu0 0
  %4497 = vmatpush1.bf16.msra.mxu0 0
  %4498 = vmatprep.subr.bf16.mxu0 0
  %4499 = vmatpush1.bf16.msra.mxu0 0
  %4500 = vmatprep.subr.bf16.mxu0 0
  %4501 = vmatpush1.bf16.msra.mxu0 0
  %4502 = vmatprep.subr.bf16.mxu0 0
  %4503 = vmatpush1.bf16.msra.mxu0 0
  %4504 = vmatprep.mubr.bf16.mxu0 0
  %4505 = vmatmul.mubr.bf16.gmra.mrb[0].mxu0 %v4181
  %v4506 = vpop.f32.mrb[0].mxu0
  %v4507 = vadd.f32 %v4230, %v4506
  %v4508 = vpop.f32.mrb[0].mxu0
  %v4509 = vadd.f32 %v4234, %v4508
  %v4510 = vpop.f32.mrb[0].mxu0
  %v4511 = vadd.f32 %v4230, %v4510
  %v4512 = vpop.f32.mrb[0].mxu0
  %v4513 = vadd.f32 %v4234, %v4512
  %4514 = vmatprep.mubr.bf16.mxu0 0
  %4515 = vmatmul.mubr.bf16.gmra.mrb[0].mxu0 %v4182
  %v4516 = vpop.f32.mrb[0].mxu0
  %v4517 = vadd.f32 %v4230, %v4516
  %v4518 = vpop.f32.mrb[0].mxu0
  %v4519 = vadd.f32 %v4234, %v4518
  %v4520 = vpop.f32.mrb[0].mxu0
  %v4521 = vadd.f32 %v4230, %v4520
  %v4522 = vpop.f32.mrb[0].mxu0
  %v4523 = vadd.f32 %v4234, %v4522
  %4524 = vmatprep.mubr.bf16.mxu0 0
  %4525 = vmatmul.mubr.bf16.gmra.mrb[0].mxu0 %v4183
  %v4526 = vpop.f32.mrb[0].mxu0
  %v4527 = vadd.f32 %v4230, %v4526
  %v4528 = vpop.f32.mrb[0].mxu0
  %v4529 = vadd.f32 %v4234, %v4528
  %v4530 = vpop.f32.mrb[0].mxu0
  %v4531 = vadd.f32 %v4230, %v4530
  %v4532 = vpop.f32.mrb[0].mxu0
  %v4533 = vadd.f32 %v4234, %v4532
  %4534 = vmatprep.mubr.bf16.mxu0 0
  %4535 = vmatmul.mubr.bf16.gmra.mrb[0].mxu0 %v4184
  %v4536 = vpop.f32.mrb[0].mxu0
  %v4537 = vadd.f32 %v4230, %v4536
  %v4538 = vpop.f32.mrb[0].mxu0
  %v4539 = vadd.f32 %v4234, %v4538
  %v4540 = vpop.f32.mrb[0].mxu0
  %v4541 = vadd.f32 %v4230, %v4540
  %v4542 = vpop.f32.mrb[0].mxu0
  %v4543 = vadd.f32 %v4234, %v4542
  %4544 = vdwg.mxu0
  %4545 = vst [vmem:[#allocation2] sm:$0xff] %v4434
  %4546 = vst [vmem:[#allocation2 + $0x8] sm:$0xff] %v4436
  %4547 = vst [vmem:[#allocation2 + $0x10] sm:$0xff] %v4507
  %4548 = vst [vmem:[#allocation2 + $0x18] sm:$0xff] %v4509
  %4549 = vst [vmem:[#allocation2 + $0x20] sm:$0xff] %v4438
  %4550 = vst [vmem:[#allocation2 + $0x28] sm:$0xff] %v4440
  %4551 = vst [vmem:[#allocation2 + $0x30] sm:$0xff] %v4511
  %4552 = vst [vmem:[#allocation2 + $0x38] sm:$0xff] %v4513
  %4553 = vst [vmem:[#allocation2 + $0x40] sm:$0xff] %v4444
  %4554 = vst [vmem:[#allocation2 + $0x48] sm:$0xff] %v4446
  %4555 = vst [vmem:[#allocation2 + $0x50] sm:$0xff] %v4517
  %4556 = vst [vmem:[#allocation2 + $0x58] sm:$0xff] %v4519
  %4557 = vst [vmem:[#allocation2 + $0x60] sm:$0xff] %v4448
  %4558 = vst [vmem:[#allocation2 + $0x68] sm:$0xff] %v4450
  %4559 = vst [vmem:[#allocation2 + $0x70] sm:$0xff] %v4521
  %4560 = vst [vmem:[#allocation2 + $0x78] sm:$0xff] %v4523
  %4561 = vst [vmem:[#allocation2 + $0x80] sm:$0xff] %v4454
  %4562 = vst [vmem:[#allocation2 + $0x88] sm:$0xff] %v4456
  %4563 = vst [vmem:[#allocation2 + $0x90] sm:$0xff] %v4527
  %4564 = vst [vmem:[#allocation2 + $0x98] sm:$0xff] %v4529
  %4565 = vst [vmem:[#allocation2 + $0xa0] sm:$0xff] %v4458
  %4566 = vst [vmem:[#allocation2 + $0xa8] sm:$0xff] %v4460
  %4567 = vst [vmem:[#allocation2 + $0xb0] sm:$0xff] %v4531
  %4568 = vst [vmem:[#allocation2 + $0xb8] sm:$0xff] %v4533
  %4569 = vst [vmem:[#allocation2 + $0xc0] sm:$0xff] %v4464
  %4570 = vst [vmem:[#allocation2 + $0xc8] sm:$0xff] %v4466
  %4571 = vst [vmem:[#allocation2 + $0xd0] sm:$0xff] %v4537
  %4572 = vst [vmem:[#allocation2 + $0xd8] sm:$0xff] %v4539
  %4573 = vst [vmem:[#allocation2 + $0xe0] sm:$0xff] %v4468
  %4574 = vst [vmem:[#allocation2 + $0xe8] sm:$0xff] %v4470
  %4575 = vst [vmem:[#allocation2 + $0xf0] sm:$0xff] %v4541
  %4576 = vst [vmem:[#allocation2 + $0xf8] sm:$0xff] %v4543
  %v4577 = vld [vmem:[%s11] sm:$0xff]
  %v4578 = vld [vmem:[%s11 + $0x8] sm:$0xff]
  %v4579 = vld [vmem:[%s11 + $0x10] sm:$0xff]
  %v4580 = vld [vmem:[%s11 + $0x18] sm:$0xff]
  %v4581 = vld [vmem:[%s11 + $0x20] sm:$0xff]
  %v4582 = vld [vmem:[%s11 + $0x28] sm:$0xff]
  %v4583 = vld [vmem:[%s11 + $0x30] sm:$0xff]
  %v4584 = vld [vmem:[%s11 + $0x38] sm:$0xff]
  %v4585 = vld [vmem:[%s11 + $0x40] sm:$0xff]
  %v4586 = vld [vmem:[%s11 + $0x48] sm:$0xff]
  %v4587 = vld [vmem:[%s11 + $0x50] sm:$0xff]
  %v4588 = vld [vmem:[%s11 + $0x58] sm:$0xff]
  %v4589 = vld [vmem:[%s11 + $0x60] sm:$0xff]
  %v4590 = vld [vmem:[%s11 + $0x68] sm:$0xff]
  %v4591 = vld [vmem:[%s11 + $0x70] sm:$0xff]
  %v4592 = vld [vmem:[%s11 + $0x78] sm:$0xff]
  %v4593 = vld [vmem:[%s11 + $0x80] sm:$0xff]
  %v4594 = vld [vmem:[%s11 + $0x88] sm:$0xff]
  %v4595 = vld [vmem:[%s11 + $0x90] sm:$0xff]
  %v4596 = vld [vmem:[%s11 + $0x98] sm:$0xff]
  %v4597 = vld [vmem:[%s11 + $0xa0] sm:$0xff]
  %v4598 = vld [vmem:[%s11 + $0xa8] sm:$0xff]
  %v4599 = vld [vmem:[%s11 + $0xb0] sm:$0xff]
  %v4600 = vld [vmem:[%s11 + $0xb8] sm:$0xff]
  %v4601 = vld [vmem:[%s11 + $0xc0] sm:$0xff]
  %v4602 = vld [vmem:[%s11 + $0xc8] sm:$0xff]
  %v4603 = vld [vmem:[%s11 + $0xd0] sm:$0xff]
  %v4604 = vld [vmem:[%s11 + $0xd8] sm:$0xff]
  %v4605 = vld [vmem:[%s11 + $0xe0] sm:$0xff]
  %v4606 = vld [vmem:[%s11 + $0xe8] sm:$0xff]
  %v4607 = vld [vmem:[%s11 + $0xf0] sm:$0xff]
  %v4608 = vld [vmem:[%s11 + $0xf8] sm:$0xff]
  %v4609 = vld [vmem:[#allocation2] sm:$0xff]
  %v4610 = vld [vmem:[#allocation2 + $0x8] sm:$0xff]
  %v4611 = vld [vmem:[#allocation2 + $0x10] sm:$0xff]
  %v4612 = vld [vmem:[#allocation2 + $0x18] sm:$0xff]
  %v4613 = vxor.u32 %v4609, 2147483648
  %v4614 = vxor.u32 %v4610, 2147483648
  %v4615 = vxor.u32 %v4611, 2147483648
  %v4616 = vmul.f32 %v4613, 1.442695
  %v4617 = vpow.pop %v4616
  %v4618 = vmul.f32 %v4614, 1.442695
  %v4619 = vpow.pop %v4618
  %v4620 = vmul.f32 %v4615, 1.442695
  %v4621 = vpow.pop %v4620
  %v4622 = vadd.f32 %v4617, 1.0
  %v4623 = vadd.f32 %v4619, 1.0
  %v4624 = vadd.f32 %v4621, 1.0
  %v4625 = vrcp.pop %v4622
  %v4626 = vmul.f32 1.0, %v4625
  %v4627 = vrcp.pop %v4623
  %v4628 = vmul.f32 1.0, %v4627
  %v4629 = vrcp.pop %v4624
  %v4630 = vmul.f32 1.0, %v4629
  %v4631 = vtanh.pop %v4612
  %v4632 = vmul.f32 %v4628, 0.0
  %v4633 = vmul.f32 %v4626, %v4631
  %v4634 = vadd.f32 %v4632, %v4633
  %v4635 = vtanh.pop %v4634
  %v4636 = vmul.f32 %v4630, %v4635
  %4637 = vst [vmem:[#allocation4] sm:$0xff] %v4636
  %v4638 = vld [vmem:[#allocation2 + $0x20] sm:$0xff]
  %v4639 = vld [vmem:[#allocation2 + $0x28] sm:$0xff]
  %v4640 = vld [vmem:[#allocation2 + $0x30] sm:$0xff]
  %v4641 = vld [vmem:[#allocation2 + $0x38] sm:$0xff]
  %v4642 = vpack.c.bf16 %v4636, %v4636
  %v4675 = vunpack.c.l.b16 %v4577
  %v4676 = vunpack.c.h.b16 %v4577
  %v4677 = vunpack.c.l.b16 %v4578
  %v4678 = vunpack.c.h.b16 %v4578
  %v4679 = vunpack.c.l.b16 %v4579
  %v4680 = vunpack.c.h.b16 %v4579
  %v4681 = vunpack.c.l.b16 %v4580
  %v4682 = vunpack.c.h.b16 %v4580
  %v4683 = vunpack.c.l.b16 %v4581
  %v4684 = vunpack.c.h.b16 %v4581
  %v4685 = vunpack.c.l.b16 %v4582
  %v4686 = vunpack.c.h.b16 %v4582
  %v4687 = vunpack.c.l.b16 %v4583
  %v4688 = vunpack.c.h.b16 %v4583
  %v4689 = vunpack.c.l.b16 %v4584
  %v4690 = vunpack.c.h.b16 %v4584
  %v4691 = vunpack.c.l.b16 %v4585
  %v4692 = vunpack.c.h.b16 %v4585
  %v4693 = vunpack.c.l.b16 %v4586
  %v4694 = vunpack.c.h.b16 %v4586
  %v4695 = vunpack.c.l.b16 %v4587
  %v4696 = vunpack.c.h.b16 %v4587
  %v4697 = vunpack.c.l.b16 %v4588
  %v4698 = vunpack.c.h.b16 %v4588
  %v4699 = vunpack.c.l.b16 %v4589
  %v4700 = vunpack.c.h.b16 %v4589
  %v4701 = vunpack.c.l.b16 %v4590
  %v4702 = vunpack.c.h.b16 %v4590
  %v4703 = vunpack.c.l.b16 %v4591
  %v4704 = vunpack.c.h.b16 %v4591
  %v4705 = vunpack.c.l.b16 %v4592
  %v4706 = vunpack.c.h.b16 %v4592
  %v4707 = vunpack.c.l.b16 %v4593
  %v4708 = vunpack.c.h.b16 %v4593
  %v4709 = vunpack.c.l.b16 %v4594
  %v4710 = vunpack.c.h.b16 %v4594
  %v4711 = vunpack.c.l.b16 %v4595
  %v4712 = vunpack.c.h.b16 %v4595
  %v4713 = vunpack.c.l.b16 %v4596
  %v4714 = vunpack.c.h.b16 %v4596
  %v4715 = vunpack.c.l.b16 %v4597
  %v4716 = vunpack.c.h.b16 %v4597
  %v4717 = vunpack.c.l.b16 %v4598
  %v4718 = vunpack.c.h.b16 %v4598
  %v4719 = vunpack.c.l.b16 %v4599
  %v4720 = vunpack.c.h.b16 %v4599
  %v4721 = vunpack.c.l.b16 %v4600
  %v4722 = vunpack.c.h.b16 %v4600
  %v4723 = vunpack.c.l.b16 %v4601
  %v4724 = vunpack.c.h.b16 %v4601
  %v4725 = vunpack.c.l.b16 %v4602
  %v4726 = vunpack.c.h.b16 %v4602
  %v4727 = vunpack.c.l.b16 %v4603
  %v4728 = vunpack.c.h.b16 %v4603
  %v4729 = vunpack.c.l.b16 %v4604
  %v4730 = vunpack.c.h.b16 %v4604
  %v4731 = vunpack.c.l.b16 %v4605
  %v4732 = vunpack.c.h.b16 %v4605
  %v4733 = vunpack.c.l.b16 %v4606
  %v4734 = vunpack.c.h.b16 %v4606
  %v4735 = vunpack.c.l.b16 %v4607
  %v4736 = vunpack.c.h.b16 %v4607
  %v4737 = vunpack.c.l.b16 %v4608
  %v4738 = vunpack.c.h.b16 %v4608
  %v4739 = vpack.c.b16 %v4679, %v4675
  %v4740 = vpack.c.b16 %v4680, %v4676
  %v4741 = vpack.c.b16 %v4681, %v4677
  %v4742 = vpack.c.b16 %v4682, %v4678
  %v4743 = vpack.c.b16 %v4687, %v4683
  %v4744 = vpack.c.b16 %v4688, %v4684
  %v4745 = vpack.c.b16 %v4689, %v4685
  %v4746 = vpack.c.b16 %v4690, %v4686
  %v4747 = vpack.c.b16 %v4695, %v4691
  %v4748 = vpack.c.b16 %v4696, %v4692
  %v4749 = vpack.c.b16 %v4697, %v4693
  %v4750 = vpack.c.b16 %v4698, %v4694
  %v4751 = vpack.c.b16 %v4703, %v4699
  %v4752 = vpack.c.b16 %v4704, %v4700
  %v4753 = vpack.c.b16 %v4705, %v4701
  %v4754 = vpack.c.b16 %v4706, %v4702
  %v4755 = vpack.c.b16 %v4711, %v4707
  %v4756 = vpack.c.b16 %v4712, %v4708
  %v4757 = vpack.c.b16 %v4713, %v4709
  %v4758 = vpack.c.b16 %v4714, %v4710
  %v4759 = vpack.c.b16 %v4719, %v4715
  %v4760 = vpack.c.b16 %v4720, %v4716
  %v4761 = vpack.c.b16 %v4721, %v4717
  %v4762 = vpack.c.b16 %v4722, %v4718
  %v4763 = vpack.c.b16 %v4727, %v4723
  %v4764 = vpack.c.b16 %v4728, %v4724
  %v4765 = vpack.c.b16 %v4729, %v4725
  %v4766 = vpack.c.b16 %v4730, %v4726
  %v4767 = vpack.c.b16 %v4735, %v4731
  %v4768 = vpack.c.b16 %v4736, %v4732
  %v4769 = vpack.c.b16 %v4737, %v4733
  %v4770 = vpack.c.b16 %v4738, %v4734
  %4803 = vmatprep.subr.bf16.mxu0 %v4740
  %4804 = vmatpush1.bf16.msra.mxu0 %v4739
  %4805 = vmatprep.subr.bf16.mxu0 %v4744
  %4806 = vmatpush1.bf16.msra.mxu0 %v4743
  %4807 = vmatprep.subr.bf16.mxu0 %v4748
  %4808 = vmatpush1.bf16.msra.mxu0 %v4747
  %4809 = vmatprep.subr.bf16.mxu0 %v4752
  %4810 = vmatpush1.bf16.msra.mxu0 %v4751
  %4811 = vmatprep.subr.bf16.mxu0 %v4756
  %4812 = vmatpush1.bf16.msra.mxu0 %v4755
  %4813 = vmatprep.subr.bf16.mxu0 %v4760
  %4814 = vmatpush1.bf16.msra.mxu0 %v4759
  %4815 = vmatprep.subr.bf16.mxu0 %v4764
  %4816 = vmatpush1.bf16.msra.mxu0 %v4763
  %4817 = vmatprep.subr.bf16.mxu0 %v4768
  %4818 = vmatpush1.bf16.msra.mxu0 %v4767
  %4819 = vmatprep.subr.bf16.mxu0 0
  %4820 = vmatpush1.bf16.msra.mxu0 0
  %4821 = vmatprep.subr.bf16.mxu0 0
  %4822 = vmatpush1.bf16.msra.mxu0 0
  %4823 = vmatprep.subr.bf16.mxu0 0
  %4824 = vmatpush1.bf16.msra.mxu0 0
  %4825 = vmatprep.subr.bf16.mxu0 0
  %4826 = vmatpush1.bf16.msra.mxu0 0
  %4827 = vmatprep.subr.bf16.mxu0 0
  %4828 = vmatpush1.bf16.msra.mxu0 0
  %4829 = vmatprep.subr.bf16.mxu0 0
  %4830 = vmatpush1.bf16.msra.mxu0 0
  %4831 = vmatprep.subr.bf16.mxu0 0
  %4832 = vmatpush1.bf16.msra.mxu0 0
  %4833 = vmatprep.subr.bf16.mxu0 0
  %4834 = vmatpush1.bf16.msra.mxu0 0
  %4835 = vmatprep.mubr.bf16.mxu0 0
  %4836 = vmatmul.mubr.bf16.gmra.mrb[0].mxu0 %v4642
  %v4837 = vpop.f32.mrb[0].mxu0
  %v4838 = vadd.f32 0.0, %v4837
  %v4839 = vpop.f32.mrb[0].mxu0
  %v4840 = vadd.f32 0.0, %v4839
  %v4841 = vpop.f32.mrb[0].mxu0
  %v4842 = vpop.f32.mrb[0].mxu0
  %4843 = vdwg.mxu0
  %4844 = vmatprep.subr.bf16.mxu0 %v4742
  %4845 = vmatpush1.bf16.msra.mxu0 %v4741
  %4846 = vmatprep.subr.bf16.mxu0 %v4746
  %4847 = vmatpush1.bf16.msra.mxu0 %v4745
  %4848 = vmatprep.subr.bf16.mxu0 %v4750
  %4849 = vmatpush1.bf16.msra.mxu0 %v4749
  %4850 = vmatprep.subr.bf16.mxu0 %v4754
  %4851 = vmatpush1.bf16.msra.mxu0 %v4753
  %4852 = vmatprep.subr.bf16.mxu0 %v4758
  %4853 = vmatpush1.bf16.msra.mxu0 %v4757
  %4854 = vmatprep.subr.bf16.mxu0 %v4762
  %4855 = vmatpush1.bf16.msra.mxu0 %v4761
  %4856 = vmatprep.subr.bf16.mxu0 %v4766
  %4857 = vmatpush1.bf16.msra.mxu0 %v4765
  %4858 = vmatprep.subr.bf16.mxu0 %v4770
  %4859 = vmatpush1.bf16.msra.mxu0 %v4769
  %4860 = vmatprep.subr.bf16.mxu0 0
  %4861 = vmatpush1.bf16.msra.mxu0 0
  %4862 = vmatprep.subr.bf16.mxu0 0
  %4863 = vmatpush1.bf16.msra.mxu0 0
  %4864 = vmatprep.subr.bf16.mxu0 0
  %4865 = vmatpush1.bf16.msra.mxu0 0
  %4866 = vmatprep.subr.bf16.mxu0 0
  %4867 = vmatpush1.bf16.msra.mxu0 0
  %4868 = vmatprep.subr.bf16.mxu0 0
  %4869 = vmatpush1.bf16.msra.mxu0 0
  %4870 = vmatprep.subr.bf16.mxu0 0
  %4871 = vmatpush1.bf16.msra.mxu0 0
  %4872 = vmatprep.subr.bf16.mxu0 0
  %4873 = vmatpush1.bf16.msra.mxu0 0
  %4874 = vmatprep.subr.bf16.mxu0 0
  %4875 = vmatpush1.bf16.msra.mxu0 0
  %4876 = vmatprep.mubr.bf16.mxu0 0
  %4877 = vmatmul.mubr.bf16.gmra.mrb[0].mxu0 %v4642
  %v4878 = vpop.f32.mrb[0].mxu0
  %v4879 = vadd.f32 0.0, %v4878
  %v4880 = vpop.f32.mrb[0].mxu0
  %v4881 = vadd.f32 0.0, %v4880
  %v4882 = vpop.f32.mrb[0].mxu0
  %v4883 = vpop.f32.mrb[0].mxu0
  %4884 = vdwg.mxu0
  %v4885 = vadd.f32 %v4638, %v4838
  %v4886 = vadd.f32 %v4639, %v4840
  %v4887 = vadd.f32 %v4640, %v4879
  %v4888 = vadd.f32 %v4641, %v4881
  %v4889 = vxor.u32 %v4885, 2147483648
  %v4890 = vxor.u32 %v4886, 2147483648
  %v4891 = vxor.u32 %v4887, 2147483648
  %v4892 = vmul.f32 %v4889, 1.442695
  %v4893 = vpow.pop %v4892
  %v4894 = vmul.f32 %v4890, 1.442695
  %v4895 = vpow.pop %v4894
  %v4896 = vmul.f32 %v4891, 1.442695
  %v4897 = vpow.pop %v4896
  %v4898 = vadd.f32 %v4893, 1.0
  %v4899 = vadd.f32 %v4895, 1.0
  %v4900 = vadd.f32 %v4897, 1.0
  %v4901 = vrcp.pop %v4898
  %v4902 = vmul.f32 1.0, %v4901
  %v4903 = vrcp.pop %v4899
  %v4904 = vmul.f32 1.0, %v4903
  %v4905 = vrcp.pop %v4900
  %v4906 = vmul.f32 1.0, %v4905
  %v4907 = vtanh.pop %v4888
  %v4908 = vmul.f32 %v4904, %v4634
  %v4909 = vmul.f32 %v4902, %v4907
  %v4910 = vadd.f32 %v4908, %v4909
  %v4911 = vtanh.pop %v4910
  %v4912 = vmul.f32 %v4906, %v4911
  %4913 = vst [vmem:[#allocation4 + $0x8] sm:$0xff] %v4912
  %v4914 = vld [vmem:[#allocation2 + $0x40] sm:$0xff]
  %v4915 = vld [vmem:[#allocation2 + $0x48] sm:$0xff]
  %v4916 = vld [vmem:[#allocation2 + $0x50] sm:$0xff]
  %v4917 = vld [vmem:[#allocation2 + $0x58] sm:$0xff]
  %v4918 = vpack.c.bf16 %v4912, %v4912
  %4919 = vmatprep.subr.bf16.mxu0 %v4740
  %4920 = vmatpush1.bf16.msra.mxu0 %v4739
  %4921 = vmatprep.subr.bf16.mxu0 %v4744
  %4922 = vmatpush1.bf16.msra.mxu0 %v4743
  %4923 = vmatprep.subr.bf16.mxu0 %v4748
  %4924 = vmatpush1.bf16.msra.mxu0 %v4747
  %4925 = vmatprep.subr.bf16.mxu0 %v4752
  %4926 = vmatpush1.bf16.msra.mxu0 %v4751
  %4927 = vmatprep.subr.bf16.mxu0 %v4756
  %4928 = vmatpush1.bf16.msra.mxu0 %v4755
  %4929 = vmatprep.subr.bf16.mxu0 %v4760
  %4930 = vmatpush1.bf16.msra.mxu0 %v4759
  %4931 = vmatprep.subr.bf16.mxu0 %v4764
  %4932 = vmatpush1.bf16.msra.mxu0 %v4763
  %4933 = vmatprep.subr.bf16.mxu0 %v4768
  %4934 = vmatpush1.bf16.msra.mxu0 %v4767
  %4935 = vmatprep.subr.bf16.mxu0 0
  %4936 = vmatpush1.bf16.msra.mxu0 0
  %4937 = vmatprep.subr.bf16.mxu0 0
  %4938 = vmatpush1.bf16.msra.mxu0 0
  %4939 = vmatprep.subr.bf16.mxu0 0
  %4940 = vmatpush1.bf16.msra.mxu0 0
  %4941 = vmatprep.subr.bf16.mxu0 0
  %4942 = vmatpush1.bf16.msra.mxu0 0
  %4943 = vmatprep.subr.bf16.mxu0 0
  %4944 = vmatpush1.bf16.msra.mxu0 0
  %4945 = vmatprep.subr.bf16.mxu0 0
  %4946 = vmatpush1.bf16.msra.mxu0 0
  %4947 = vmatprep.subr.bf16.mxu0 0
  %4948 = vmatpush1.bf16.msra.mxu0 0
  %4949 = vmatprep.subr.bf16.mxu0 0
  %4950 = vmatpush1.bf16.msra.mxu0 0
  %4951 = vmatprep.mubr.bf16.mxu0 0
  %4952 = vmatmul.mubr.bf16.gmra.mrb[0].mxu0 %v4918
  %v4953 = vpop.f32.mrb[0].mxu0
  %v4954 = vadd.f32 0.0, %v4953
  %v4955 = vpop.f32.mrb[0].mxu0
  %v4956 = vadd.f32 0.0, %v4955
  %v4957 = vpop.f32.mrb[0].mxu0
  %v4958 = vpop.f32.mrb[0].mxu0
  %4959 = vdwg.mxu0
  %4960 = vmatprep.subr.bf16.mxu0 %v4742
  %4961 = vmatpush1.bf16.msra.mxu0 %v4741
  %4962 = vmatprep.subr.bf16.mxu0 %v4746
  %4963 = vmatpush1.bf16.msra.mxu0 %v4745
  %4964 = vmatprep.subr.bf16.mxu0 %v4750
  %4965 = vmatpush1.bf16.msra.mxu0 %v4749
  %4966 = vmatprep.subr.bf16.mxu0 %v4754
  %4967 = vmatpush1.bf16.msra.mxu0 %v4753
  %4968 = vmatprep.subr.bf16.mxu0 %v4758
  %4969 = vmatpush1.bf16.msra.mxu0 %v4757
  %4970 = vmatprep.subr.bf16.mxu0 %v4762
  %4971 = vmatpush1.bf16.msra.mxu0 %v4761
  %4972 = vmatprep.subr.bf16.mxu0 %v4766
  %4973 = vmatpush1.bf16.msra.mxu0 %v4765
  %4974 = vmatprep.subr.bf16.mxu0 %v4770
  %4975 = vmatpush1.bf16.msra.mxu0 %v4769
  %4976 = vmatprep.subr.bf16.mxu0 0
  %4977 = vmatpush1.bf16.msra.mxu0 0
  %4978 = vmatprep.subr.bf16.mxu0 0
  %4979 = vmatpush1.bf16.msra.mxu0 0
  %4980 = vmatprep.subr.bf16.mxu0 0
  %4981 = vmatpush1.bf16.msra.mxu0 0
  %4982 = vmatprep.subr.bf16.mxu0 0
  %4983 = vmatpush1.bf16.msra.mxu0 0
  %4984 = vmatprep.subr.bf16.mxu0 0
  %4985 = vmatpush1.bf16.msra.mxu0 0
  %4986 = vmatprep.subr.bf16.mxu0 0
  %4987 = vmatpush1.bf16.msra.mxu0 0
  %4988 = vmatprep.subr.bf16.mxu0 0
  %4989 = vmatpush1.bf16.msra.mxu0 0
  %4990 = vmatprep.subr.bf16.mxu0 0
  %4991 = vmatpush1.bf16.msra.mxu0 0
  %4992 = vmatprep.mubr.bf16.mxu0 0
  %4993 = vmatmul.mubr.bf16.gmra.mrb[0].mxu0 %v4918
  %v4994 = vpop.f32.mrb[0].mxu0
  %v4995 = vadd.f32 0.0, %v4994
  %v4996 = vpop.f32.mrb[0].mxu0
  %v4997 = vadd.f32 0.0, %v4996
  %v4998 = vpop.f32.mrb[0].mxu0
  %v4999 = vpop.f32.mrb[0].mxu0
  %5000 = vdwg.mxu0
  %v5001 = vadd.f32 %v4914, %v4954
  %v5002 = vadd.f32 %v4915, %v4956
  %v5003 = vadd.f32 %v4916, %v4995
  %v5004 = vadd.f32 %v4917, %v4997
  %v5005 = vxor.u32 %v5001, 2147483648
  %v5006 = vxor.u32 %v5002, 2147483648
  %v5007 = vxor.u32 %v5003, 2147483648
  %v5008 = vmul.f32 %v5005, 1.442695
  %v5009 = vpow.pop %v5008
  %v5010 = vmul.f32 %v5006, 1.442695
  %v5011 = vpow.pop %v5010
  %v5012 = vmul.f32 %v5007, 1.442695
  %v5013 = vpow.pop %v5012
  %v5014 = vadd.f32 %v5009, 1.0
  %v5015 = vadd.f32 %v5011, 1.0
  %v5016 = vadd.f32 %v5013, 1.0
  %v5017 = vrcp.pop %v5014
  %v5018 = vmul.f32 1.0, %v5017
  %v5019 = vrcp.pop %v5015
  %v5020 = vmul.f32 1.0, %v5019
  %v5021 = vrcp.pop %v5016
  %v5022 = vmul.f32 1.0, %v5021
  %v5023 = vtanh.pop %v5004
  %v5024 = vmul.f32 %v5020, %v4910
  %v5025 = vmul.f32 %v5018, %v5023
  %v5026 = vadd.f32 %v5024, %v5025
  %v5027 = vtanh.pop %v5026
  %v5028 = vmul.f32 %v5022, %v5027
  %5029 = vst [vmem:[#allocation4 + $0x10] sm:$0xff] %v5028
  %v5030 = vld [vmem:[#allocation2 + $0x60] sm:$0xff]
  %v5031 = vld [vmem:[#allocation2 + $0x68] sm:$0xff]
  %v5032 = vld [vmem:[#allocation2 + $0x70] sm:$0xff]
  %v5033 = vld [vmem:[#allocation2 + $0x78] sm:$0xff]
  %v5034 = vpack.c.bf16 %v5028, %v5028
  %5035 = vmatprep.subr.bf16.mxu0 %v4740
  %5036 = vmatpush1.bf16.msra.mxu0 %v4739
  %5037 = vmatprep.subr.bf16.mxu0 %v4744
  %5038 = vmatpush1.bf16.msra.mxu0 %v4743
  %5039 = vmatprep.subr.bf16.mxu0 %v4748
  %5040 = vmatpush1.bf16.msra.mxu0 %v4747
  %5041 = vmatprep.subr.bf16.mxu0 %v4752
  %5042 = vmatpush1.bf16.msra.mxu0 %v4751
  %5043 = vmatprep.subr.bf16.mxu0 %v4756
  %5044 = vmatpush1.bf16.msra.mxu0 %v4755
  %5045 = vmatprep.subr.bf16.mxu0 %v4760
  %5046 = vmatpush1.bf16.msra.mxu0 %v4759
  %5047 = vmatprep.subr.bf16.mxu0 %v4764
  %5048 = vmatpush1.bf16.msra.mxu0 %v4763
  %5049 = vmatprep.subr.bf16.mxu0 %v4768
  %5050 = vmatpush1.bf16.msra.mxu0 %v4767
  %5051 = vmatprep.subr.bf16.mxu0 0
  %5052 = vmatpush1.bf16.msra.mxu0 0
  %5053 = vmatprep.subr.bf16.mxu0 0
  %5054 = vmatpush1.bf16.msra.mxu0 0
  %5055 = vmatprep.subr.bf16.mxu0 0
  %5056 = vmatpush1.bf16.msra.mxu0 0
  %5057 = vmatprep.subr.bf16.mxu0 0
  %5058 = vmatpush1.bf16.msra.mxu0 0
  %5059 = vmatprep.subr.bf16.mxu0 0
  %5060 = vmatpush1.bf16.msra.mxu0 0
  %5061 = vmatprep.subr.bf16.mxu0 0
  %5062 = vmatpush1.bf16.msra.mxu0 0
  %5063 = vmatprep.subr.bf16.mxu0 0
  %5064 = vmatpush1.bf16.msra.mxu0 0
  %5065 = vmatprep.subr.bf16.mxu0 0
  %5066 = vmatpush1.bf16.msra.mxu0 0
  %5067 = vmatprep.mubr.bf16.mxu0 0
  %5068 = vmatmul.mubr.bf16.gmra.mrb[0].mxu0 %v5034
  %v5069 = vpop.f32.mrb[0].mxu0
  %v5070 = vadd.f32 0.0, %v5069
  %v5071 = vpop.f32.mrb[0].mxu0
  %v5072 = vadd.f32 0.0, %v5071
  %v5073 = vpop.f32.mrb[0].mxu0
  %v5074 = vpop.f32.mrb[0].mxu0
  %5075 = vdwg.mxu0
  %5076 = vmatprep.subr.bf16.mxu0 %v4742
  %5077 = vmatpush1.bf16.msra.mxu0 %v4741
  %5078 = vmatprep.subr.bf16.mxu0 %v4746
  %5079 = vmatpush1.bf16.msra.mxu0 %v4745
  %5080 = vmatprep.subr.bf16.mxu0 %v4750
  %5081 = vmatpush1.bf16.msra.mxu0 %v4749
  %5082 = vmatprep.subr.bf16.mxu0 %v4754
  %5083 = vmatpush1.bf16.msra.mxu0 %v4753
  %5084 = vmatprep.subr.bf16.mxu0 %v4758
  %5085 = vmatpush1.bf16.msra.mxu0 %v4757
  %5086 = vmatprep.subr.bf16.mxu0 %v4762
  %5087 = vmatpush1.bf16.msra.mxu0 %v4761
  %5088 = vmatprep.subr.bf16.mxu0 %v4766
  %5089 = vmatpush1.bf16.msra.mxu0 %v4765
  %5090 = vmatprep.subr.bf16.mxu0 %v4770
  %5091 = vmatpush1.bf16.msra.mxu0 %v4769
  %5092 = vmatprep.subr.bf16.mxu0 0
  %5093 = vmatpush1.bf16.msra.mxu0 0
  %5094 = vmatprep.subr.bf16.mxu0 0
  %5095 = vmatpush1.bf16.msra.mxu0 0
  %5096 = vmatprep.subr.bf16.mxu0 0
  %5097 = vmatpush1.bf16.msra.mxu0 0
  %5098 = vmatprep.subr.bf16.mxu0 0
  %5099 = vmatpush1.bf16.msra.mxu0 0
  %5100 = vmatprep.subr.bf16.mxu0 0
  %5101 = vmatpush1.bf16.msra.mxu0 0
  %5102 = vmatprep.subr.bf16.mxu0 0
  %5103 = vmatpush1.bf16.msra.mxu0 0
  %5104 = vmatprep.subr.bf16.mxu0 0
  %5105 = vmatpush1.bf16.msra.mxu0 0
  %5106 = vmatprep.subr.bf16.mxu0 0
  %5107 = vmatpush1.bf16.msra.mxu0 0
  %5108 = vmatprep.mubr.bf16.mxu0 0
  %5109 = vmatmul.mubr.bf16.gmra.mrb[0].mxu0 %v5034
  %v5110 = vpop.f32.mrb[0].mxu0
  %v5111 = vadd.f32 0.0, %v5110
  %v5112 = vpop.f32.mrb[0].mxu0
  %v5113 = vadd.f32 0.0, %v5112
  %v5114 = vpop.f32.mrb[0].mxu0
  %v5115 = vpop.f32.mrb[0].mxu0
  %5116 = vdwg.mxu0
  %v5117 = vadd.f32 %v5030, %v5070
  %v5118 = vadd.f32 %v5031, %v5072
  %v5119 = vadd.f32 %v5032, %v5111
  %v5120 = vadd.f32 %v5033, %v5113
  %v5121 = vxor.u32 %v5117, 2147483648
  %v5122 = vxor.u32 %v5118, 2147483648
  %v5123 = vxor.u32 %v5119, 2147483648
  %v5124 = vmul.f32 %v5121, 1.442695
  %v5125 = vpow.pop %v5124
  %v5126 = vmul.f32 %v5122, 1.442695
  %v5127 = vpow.pop %v5126
  %v5128 = vmul.f32 %v5123, 1.442695
  %v5129 = vpow.pop %v5128
  %v5130 = vadd.f32 %v5125, 1.0
  %v5131 = vadd.f32 %v5127, 1.0
  %v5132 = vadd.f32 %v5129, 1.0
  %v5133 = vrcp.pop %v5130
  %v5134 = vmul.f32 1.0, %v5133
  %v5135 = vrcp.pop %v5131
  %v5136 = vmul.f32 1.0, %v5135
  %v5137 = vrcp.pop %v5132
  %v5138 = vmul.f32 1.0, %v5137
  %v5139 = vtanh.pop %v5120
  %v5140 = vmul.f32 %v5136, %v5026
  %v5141 = vmul.f32 %v5134, %v5139
  %v5142 = vadd.f32 %v5140, %v5141
  %v5143 = vtanh.pop %v5142
  %v5144 = vmul.f32 %v5138, %v5143
  %5145 = vst [vmem:[#allocation4 + $0x18] sm:$0xff] %v5144
  %v5146 = vld [vmem:[#allocation2 + $0x80] sm:$0xff]
  %v5147 = vld [vmem:[#allocation2 + $0x88] sm:$0xff]
  %v5148 = vld [vmem:[#allocation2 + $0x90] sm:$0xff]
  %v5149 = vld [vmem:[#allocation2 + $0x98] sm:$0xff]
  %v5150 = vpack.c.bf16 %v5144, %v5144
  %5151 = vmatprep.subr.bf16.mxu0 %v4740
  %5152 = vmatpush1.bf16.msra.mxu0 %v4739
  %5153 = vmatprep.subr.bf16.mxu0 %v4744
  %5154 = vmatpush1.bf16.msra.mxu0 %v4743
  %5155 = vmatprep.subr.bf16.mxu0 %v4748
  %5156 = vmatpush1.bf16.msra.mxu0 %v4747
  %5157 = vmatprep.subr.bf16.mxu0 %v4752
  %5158 = vmatpush1.bf16.msra.mxu0 %v4751
  %5159 = vmatprep.subr.bf16.mxu0 %v4756
  %5160 = vmatpush1.bf16.msra.mxu0 %v4755
  %5161 = vmatprep.subr.bf16.mxu0 %v4760
  %5162 = vmatpush1.bf16.msra.mxu0 %v4759
  %5163 = vmatprep.subr.bf16.mxu0 %v4764
  %5164 = vmatpush1.bf16.msra.mxu0 %v4763
  %5165 = vmatprep.subr.bf16.mxu0 %v4768
  %5166 = vmatpush1.bf16.msra.mxu0 %v4767
  %5167 = vmatprep.subr.bf16.mxu0 0
  %5168 = vmatpush1.bf16.msra.mxu0 0
  %5169 = vmatprep.subr.bf16.mxu0 0
  %5170 = vmatpush1.bf16.msra.mxu0 0
  %5171 = vmatprep.subr.bf16.mxu0 0
  %5172 = vmatpush1.bf16.msra.mxu0 0
  %5173 = vmatprep.subr.bf16.mxu0 0
  %5174 = vmatpush1.bf16.msra.mxu0 0
  %5175 = vmatprep.subr.bf16.mxu0 0
  %5176 = vmatpush1.bf16.msra.mxu0 0
  %5177 = vmatprep.subr.bf16.mxu0 0
  %5178 = vmatpush1.bf16.msra.mxu0 0
  %5179 = vmatprep.subr.bf16.mxu0 0
  %5180 = vmatpush1.bf16.msra.mxu0 0
  %5181 = vmatprep.subr.bf16.mxu0 0
  %5182 = vmatpush1.bf16.msra.mxu0 0
  %5183 = vmatprep.mubr.bf16.mxu0 0
  %5184 = vmatmul.mubr.bf16.gmra.mrb[0].mxu0 %v5150
  %v5185 = vpop.f32.mrb[0].mxu0
  %v5186 = vadd.f32 0.0, %v5185
  %v5187 = vpop.f32.mrb[0].mxu0
  %v5188 = vadd.f32 0.0, %v5187
  %v5189 = vpop.f32.mrb[0].mxu0
  %v5190 = vpop.f32.mrb[0].mxu0
  %5191 = vdwg.mxu0
  %5192 = vmatprep.subr.bf16.mxu0 %v4742
  %5193 = vmatpush1.bf16.msra.mxu0 %v4741
  %5194 = vmatprep.subr.bf16.mxu0 %v4746
  %5195 = vmatpush1.bf16.msra.mxu0 %v4745
  %5196 = vmatprep.subr.bf16.mxu0 %v4750
  %5197 = vmatpush1.bf16.msra.mxu0 %v4749
  %5198 = vmatprep.subr.bf16.mxu0 %v4754
  %5199 = vmatpush1.bf16.msra.mxu0 %v4753
  %5200 = vmatprep.subr.bf16.mxu0 %v4758
  %5201 = vmatpush1.bf16.msra.mxu0 %v4757
  %5202 = vmatprep.subr.bf16.mxu0 %v4762
  %5203 = vmatpush1.bf16.msra.mxu0 %v4761
  %5204 = vmatprep.subr.bf16.mxu0 %v4766
  %5205 = vmatpush1.bf16.msra.mxu0 %v4765
  %5206 = vmatprep.subr.bf16.mxu0 %v4770
  %5207 = vmatpush1.bf16.msra.mxu0 %v4769
  %5208 = vmatprep.subr.bf16.mxu0 0
  %5209 = vmatpush1.bf16.msra.mxu0 0
  %5210 = vmatprep.subr.bf16.mxu0 0
  %5211 = vmatpush1.bf16.msra.mxu0 0
  %5212 = vmatprep.subr.bf16.mxu0 0
  %5213 = vmatpush1.bf16.msra.mxu0 0
  %5214 = vmatprep.subr.bf16.mxu0 0
  %5215 = vmatpush1.bf16.msra.mxu0 0
  %5216 = vmatprep.subr.bf16.mxu0 0
  %5217 = vmatpush1.bf16.msra.mxu0 0
  %5218 = vmatprep.subr.bf16.mxu0 0
  %5219 = vmatpush1.bf16.msra.mxu0 0
  %5220 = vmatprep.subr.bf16.mxu0 0
  %5221 = vmatpush1.bf16.msra.mxu0 0
  %5222 = vmatprep.subr.bf16.mxu0 0
  %5223 = vmatpush1.bf16.msra.mxu0 0
  %5224 = vmatprep.mubr.bf16.mxu0 0
  %5225 = vmatmul.mubr.bf16.gmra.mrb[0].mxu0 %v5150
  %v5226 = vpop.f32.mrb[0].mxu0
  %v5227 = vadd.f32 0.0, %v5226
  %v5228 = vpop.f32.mrb[0].mxu0
  %v5229 = vadd.f32 0.0, %v5228
  %v5230 = vpop.f32.mrb[0].mxu0
  %v5231 = vpop.f32.mrb[0].mxu0
  %5232 = vdwg.mxu0
  %v5233 = vadd.f32 %v5146, %v5186
  %v5234 = vadd.f32 %v5147, %v5188
  %v5235 = vadd.f32 %v5148, %v5227
  %v5236 = vadd.f32 %v5149, %v5229
  %v5237 = vxor.u32 %v5233, 2147483648
  %v5238 = vxor.u32 %v5234, 2147483648
  %v5239 = vxor.u32 %v5235, 2147483648
  %v5240 = vmul.f32 %v5237, 1.442695
  %v5241 = vpow.pop %v5240
  %v5242 = vmul.f32 %v5238, 1.442695
  %v5243 = vpow.pop %v5242
  %v5244 = vmul.f32 %v5239, 1.442695
  %v5245 = vpow.pop %v5244
  %v5246 = vadd.f32 %v5241, 1.0
  %v5247 = vadd.f32 %v5243, 1.0
  %v5248 = vadd.f32 %v5245, 1.0
  %v5249 = vrcp.pop %v5246
  %v5250 = vmul.f32 1.0, %v5249
  %v5251 = vrcp.pop %v5247
  %v5252 = vmul.f32 1.0, %v5251
  %v5253 = vrcp.pop %v5248
  %v5254 = vmul.f32 1.0, %v5253
  %v5255 = vtanh.pop %v5236
  %v5256 = vmul.f32 %v5252, %v5142
  %v5257 = vmul.f32 %v5250, %v5255
  %v5258 = vadd.f32 %v5256, %v5257
  %v5259 = vtanh.pop %v5258
  %v5260 = vmul.f32 %v5254, %v5259
  %5261 = vst [vmem:[#allocation4 + $0x20] sm:$0xff] %v5260
  %v5262 = vld [vmem:[#allocation2 + $0xa0] sm:$0xff]
  %v5263 = vld [vmem:[#allocation2 + $0xa8] sm:$0xff]
  %v5264 = vld [vmem:[#allocation2 + $0xb0] sm:$0xff]
  %v5265 = vld [vmem:[#allocation2 + $0xb8] sm:$0xff]
  %v5266 = vpack.c.bf16 %v5260, %v5260
  %5267 = vmatprep.subr.bf16.mxu0 %v4740
  %5268 = vmatpush1.bf16.msra.mxu0 %v4739
  %5269 = vmatprep.subr.bf16.mxu0 %v4744
  %5270 = vmatpush1.bf16.msra.mxu0 %v4743
  %5271 = vmatprep.subr.bf16.mxu0 %v4748
  %5272 = vmatpush1.bf16.msra.mxu0 %v4747
  %5273 = vmatprep.subr.bf16.mxu0 %v4752
  %5274 = vmatpush1.bf16.msra.mxu0 %v4751
  %5275 = vmatprep.subr.bf16.mxu0 %v4756
  %5276 = vmatpush1.bf16.msra.mxu0 %v4755
  %5277 = vmatprep.subr.bf16.mxu0 %v4760
  %5278 = vmatpush1.bf16.msra.mxu0 %v4759
  %5279 = vmatprep.subr.bf16.mxu0 %v4764
  %5280 = vmatpush1.bf16.msra.mxu0 %v4763
  %5281 = vmatprep.subr.bf16.mxu0 %v4768
  %5282 = vmatpush1.bf16.msra.mxu0 %v4767
  %5283 = vmatprep.subr.bf16.mxu0 0
  %5284 = vmatpush1.bf16.msra.mxu0 0
  %5285 = vmatprep.subr.bf16.mxu0 0
  %5286 = vmatpush1.bf16.msra.mxu0 0
  %5287 = vmatprep.subr.bf16.mxu0 0
  %5288 = vmatpush1.bf16.msra.mxu0 0
  %5289 = vmatprep.subr.bf16.mxu0 0
  %5290 = vmatpush1.bf16.msra.mxu0 0
  %5291 = vmatprep.subr.bf16.mxu0 0
  %5292 = vmatpush1.bf16.msra.mxu0 0
  %5293 = vmatprep.subr.bf16.mxu0 0
  %5294 = vmatpush1.bf16.msra.mxu0 0
  %5295 = vmatprep.subr.bf16.mxu0 0
  %5296 = vmatpush1.bf16.msra.mxu0 0
  %5297 = vmatprep.subr.bf16.mxu0 0
  %5298 = vmatpush1.bf16.msra.mxu0 0
  %5299 = vmatprep.mubr.bf16.mxu0 0
  %5300 = vmatmul.mubr.bf16.gmra.mrb[0].mxu0 %v5266
  %v5301 = vpop.f32.mrb[0].mxu0
  %v5302 = vadd.f32 0.0, %v5301
  %v5303 = vpop.f32.mrb[0].mxu0
  %v5304 = vadd.f32 0.0, %v5303
  %v5305 = vpop.f32.mrb[0].mxu0
  %v5306 = vpop.f32.mrb[0].mxu0
  %5307 = vdwg.mxu0
  %5308 = vmatprep.subr.bf16.mxu0 %v4742
  %5309 = vmatpush1.bf16.msra.mxu0 %v4741
  %5310 = vmatprep.subr.bf16.mxu0 %v4746
  %5311 = vmatpush1.bf16.msra.mxu0 %v4745
  %5312 = vmatprep.subr.bf16.mxu0 %v4750
  %5313 = vmatpush1.bf16.msra.mxu0 %v4749
  %5314 = vmatprep.subr.bf16.mxu0 %v4754
  %5315 = vmatpush1.bf16.msra.mxu0 %v4753
  %5316 = vmatprep.subr.bf16.mxu0 %v4758
  %5317 = vmatpush1.bf16.msra.mxu0 %v4757
  %5318 = vmatprep.subr.bf16.mxu0 %v4762
  %5319 = vmatpush1.bf16.msra.mxu0 %v4761
  %5320 = vmatprep.subr.bf16.mxu0 %v4766
  %5321 = vmatpush1.bf16.msra.mxu0 %v4765
  %5322 = vmatprep.subr.bf16.mxu0 %v4770
  %5323 = vmatpush1.bf16.msra.mxu0 %v4769
  %5324 = vmatprep.subr.bf16.mxu0 0
  %5325 = vmatpush1.bf16.msra.mxu0 0
  %5326 = vmatprep.subr.bf16.mxu0 0
  %5327 = vmatpush1.bf16.msra.mxu0 0
  %5328 = vmatprep.subr.bf16.mxu0 0
  %5329 = vmatpush1.bf16.msra.mxu0 0
  %5330 = vmatprep.subr.bf16.mxu0 0
  %5331 = vmatpush1.bf16.msra.mxu0 0
  %5332 = vmatprep.subr.bf16.mxu0 0
  %5333 = vmatpush1.bf16.msra.mxu0 0
  %5334 = vmatprep.subr.bf16.mxu0 0
  %5335 = vmatpush1.bf16.msra.mxu0 0
  %5336 = vmatprep.subr.bf16.mxu0 0
  %5337 = vmatpush1.bf16.msra.mxu0 0
  %5338 = vmatprep.subr.bf16.mxu0 0
  %5339 = vmatpush1.bf16.msra.mxu0 0
  %5340 = vmatprep.mubr.bf16.mxu0 0
  %5341 = vmatmul.mubr.bf16.gmra.mrb[0].mxu0 %v5266
  %v5342 = vpop.f32.mrb[0].mxu0
  %v5343 = vadd.f32 0.0, %v5342
  %v5344 = vpop.f32.mrb[0].mxu0
  %v5345 = vadd.f32 0.0, %v5344
  %v5346 = vpop.f32.mrb[0].mxu0
  %v5347 = vpop.f32.mrb[0].mxu0
  %5348 = vdwg.mxu0
  %v5349 = vadd.f32 %v5262, %v5302
  %v5350 = vadd.f32 %v5263, %v5304
  %v5351 = vadd.f32 %v5264, %v5343
  %v5352 = vadd.f32 %v5265, %v5345
  %v5353 = vxor.u32 %v5349, 2147483648
  %v5354 = vxor.u32 %v5350, 2147483648
  %v5355 = vxor.u32 %v5351, 2147483648
  %v5356 = vmul.f32 %v5353, 1.442695
  %v5357 = vpow.pop %v5356
  %v5358 = vmul.f32 %v5354, 1.442695
  %v5359 = vpow.pop %v5358
  %v5360 = vmul.f32 %v5355, 1.442695
  %v5361 = vpow.pop %v5360
  %v5362 = vadd.f32 %v5357, 1.0
  %v5363 = vadd.f32 %v5359, 1.0
  %v5364 = vadd.f32 %v5361, 1.0
  %v5365 = vrcp.pop %v5362
  %v5366 = vmul.f32 1.0, %v5365
  %v5367 = vrcp.pop %v5363
  %v5368 = vmul.f32 1.0, %v5367
  %v5369 = vrcp.pop %v5364
  %v5370 = vmul.f32 1.0, %v5369
  %v5371 = vtanh.pop %v5352
  %v5372 = vmul.f32 %v5368, %v5258
  %v5373 = vmul.f32 %v5366, %v5371
  %v5374 = vadd.f32 %v5372, %v5373
  %v5375 = vtanh.pop %v5374
  %v5376 = vmul.f32 %v5370, %v5375
  %5377 = vst [vmem:[#allocation4 + $0x28] sm:$0xff] %v5376
  %v5378 = vld [vmem:[#allocation2 + $0xc0] sm:$0xff]
  %v5379 = vld [vmem:[#allocation2 + $0xc8] sm:$0xff]
  %v5380 = vld [vmem:[#allocation2 + $0xd0] sm:$0xff]
  %v5381 = vld [vmem:[#allocation2 + $0xd8] sm:$0xff]
  %v5382 = vpack.c.bf16 %v5376, %v5376
  %5383 = vmatprep.subr.bf16.mxu0 %v4740
  %5384 = vmatpush1.bf16.msra.mxu0 %v4739
  %5385 = vmatprep.subr.bf16.mxu0 %v4744
  %5386 = vmatpush1.bf16.msra.mxu0 %v4743
  %5387 = vmatprep.subr.bf16.mxu0 %v4748
  %5388 = vmatpush1.bf16.msra.mxu0 %v4747
  %5389 = vmatprep.subr.bf16.mxu0 %v4752
  %5390 = vmatpush1.bf16.msra.mxu0 %v4751
  %5391 = vmatprep.subr.bf16.mxu0 %v4756
  %5392 = vmatpush1.bf16.msra.mxu0 %v4755
  %5393 = vmatprep.subr.bf16.mxu0 %v4760
  %5394 = vmatpush1.bf16.msra.mxu0 %v4759
  %5395 = vmatprep.subr.bf16.mxu0 %v4764
  %5396 = vmatpush1.bf16.msra.mxu0 %v4763
  %5397 = vmatprep.subr.bf16.mxu0 %v4768
  %5398 = vmatpush1.bf16.msra.mxu0 %v4767
  %5399 = vmatprep.subr.bf16.mxu0 0
  %5400 = vmatpush1.bf16.msra.mxu0 0
  %5401 = vmatprep.subr.bf16.mxu0 0
  %5402 = vmatpush1.bf16.msra.mxu0 0
  %5403 = vmatprep.subr.bf16.mxu0 0
  %5404 = vmatpush1.bf16.msra.mxu0 0
  %5405 = vmatprep.subr.bf16.mxu0 0
  %5406 = vmatpush1.bf16.msra.mxu0 0
  %5407 = vmatprep.subr.bf16.mxu0 0
  %5408 = vmatpush1.bf16.msra.mxu0 0
  %5409 = vmatprep.subr.bf16.mxu0 0
  %5410 = vmatpush1.bf16.msra.mxu0 0
  %5411 = vmatprep.subr.bf16.mxu0 0
  %5412 = vmatpush1.bf16.msra.mxu0 0
  %5413 = vmatprep.subr.bf16.mxu0 0
  %5414 = vmatpush1.bf16.msra.mxu0 0
  %5415 = vmatprep.mubr.bf16.mxu0 0
  %5416 = vmatmul.mubr.bf16.gmra.mrb[0].mxu0 %v5382
  %v5417 = vpop.f32.mrb[0].mxu0
  %v5418 = vadd.f32 0.0, %v5417
  %v5419 = vpop.f32.mrb[0].mxu0
  %v5420 = vadd.f32 0.0, %v5419
  %v5421 = vpop.f32.mrb[0].mxu0
  %v5422 = vpop.f32.mrb[0].mxu0
  %5423 = vdwg.mxu0
  %5424 = vmatprep.subr.bf16.mxu0 %v4742
  %5425 = vmatpush1.bf16.msra.mxu0 %v4741
  %5426 = vmatprep.subr.bf16.mxu0 %v4746
  %5427 = vmatpush1.bf16.msra.mxu0 %v4745
  %5428 = vmatprep.subr.bf16.mxu0 %v4750
  %5429 = vmatpush1.bf16.msra.mxu0 %v4749
  %5430 = vmatprep.subr.bf16.mxu0 %v4754
  %5431 = vmatpush1.bf16.msra.mxu0 %v4753
  %5432 = vmatprep.subr.bf16.mxu0 %v4758
  %5433 = vmatpush1.bf16.msra.mxu0 %v4757
  %5434 = vmatprep.subr.bf16.mxu0 %v4762
  %5435 = vmatpush1.bf16.msra.mxu0 %v4761
  %5436 = vmatprep.subr.bf16.mxu0 %v4766
  %5437 = vmatpush1.bf16.msra.mxu0 %v4765
  %5438 = vmatprep.subr.bf16.mxu0 %v4770
  %5439 = vmatpush1.bf16.msra.mxu0 %v4769
  %5440 = vmatprep.subr.bf16.mxu0 0
  %5441 = vmatpush1.bf16.msra.mxu0 0
  %5442 = vmatprep.subr.bf16.mxu0 0
  %5443 = vmatpush1.bf16.msra.mxu0 0
  %5444 = vmatprep.subr.bf16.mxu0 0
  %5445 = vmatpush1.bf16.msra.mxu0 0
  %5446 = vmatprep.subr.bf16.mxu0 0
  %5447 = vmatpush1.bf16.msra.mxu0 0
  %5448 = vmatprep.subr.bf16.mxu0 0
  %5449 = vmatpush1.bf16.msra.mxu0 0
  %5450 = vmatprep.subr.bf16.mxu0 0
  %5451 = vmatpush1.bf16.msra.mxu0 0
  %5452 = vmatprep.subr.bf16.mxu0 0
  %5453 = vmatpush1.bf16.msra.mxu0 0
  %5454 = vmatprep.subr.bf16.mxu0 0
  %5455 = vmatpush1.bf16.msra.mxu0 0
  %5456 = vmatprep.mubr.bf16.mxu0 0
  %5457 = vmatmul.mubr.bf16.gmra.mrb[0].mxu0 %v5382
  %v5458 = vpop.f32.mrb[0].mxu0
  %v5459 = vadd.f32 0.0, %v5458
  %v5460 = vpop.f32.mrb[0].mxu0
  %v5461 = vadd.f32 0.0, %v5460
  %v5462 = vpop.f32.mrb[0].mxu0
  %v5463 = vpop.f32.mrb[0].mxu0
  %5464 = vdwg.mxu0
  %v5465 = vadd.f32 %v5378, %v5418
  %v5466 = vadd.f32 %v5379, %v5420
  %v5467 = vadd.f32 %v5380, %v5459
  %v5468 = vadd.f32 %v5381, %v5461
  %v5469 = vxor.u32 %v5465, 2147483648
  %v5470 = vxor.u32 %v5466, 2147483648
  %v5471 = vxor.u32 %v5467, 2147483648
  %v5472 = vmul.f32 %v5469, 1.442695
  %v5473 = vpow.pop %v5472
  %v5474 = vmul.f32 %v5470, 1.442695
  %v5475 = vpow.pop %v5474
  %v5476 = vmul.f32 %v5471, 1.442695
  %v5477 = vpow.pop %v5476
  %v5478 = vadd.f32 %v5473, 1.0
  %v5479 = vadd.f32 %v5475, 1.0
  %v5480 = vadd.f32 %v5477, 1.0
  %v5481 = vrcp.pop %v5478
  %v5482 = vmul.f32 1.0, %v5481
  %v5483 = vrcp.pop %v5479
  %v5484 = vmul.f32 1.0, %v5483
  %v5485 = vrcp.pop %v5480
  %v5486 = vmul.f32 1.0, %v5485
  %v5487 = vtanh.pop %v5468
  %v5488 = vmul.f32 %v5484, %v5374
  %v5489 = vmul.f32 %v5482, %v5487
  %v5490 = vadd.f32 %v5488, %v5489
  %v5491 = vtanh.pop %v5490
  %v5492 = vmul.f32 %v5486, %v5491
  %5493 = vst [vmem:[#allocation4 + $0x30] sm:$0xff] %v5492
  %v5494 = vld [vmem:[#allocation2 + $0xe0] sm:$0xff]
  %v5495 = vld [vmem:[#allocation2 + $0xe8] sm:$0xff]
  %v5496 = vld [vmem:[#allocation2 + $0xf0] sm:$0xff]
  %v5497 = vld [vmem:[#allocation2 + $0xf8] sm:$0xff]
  %v5498 = vpack.c.bf16 %v5492, %v5492
  %5499 = vmatprep.subr.bf16.mxu0 %v4740
  %5500 = vmatpush1.bf16.msra.mxu0 %v4739
  %5501 = vmatprep.subr.bf16.mxu0 %v4744
  %5502 = vmatpush1.bf16.msra.mxu0 %v4743
  %5503 = vmatprep.subr.bf16.mxu0 %v4748
  %5504 = vmatpush1.bf16.msra.mxu0 %v4747
  %5505 = vmatprep.subr.bf16.mxu0 %v4752
  %5506 = vmatpush1.bf16.msra.mxu0 %v4751
  %5507 = vmatprep.subr.bf16.mxu0 %v4756
  %5508 = vmatpush1.bf16.msra.mxu0 %v4755
  %5509 = vmatprep.subr.bf16.mxu0 %v4760
  %5510 = vmatpush1.bf16.msra.mxu0 %v4759
  %5511 = vmatprep.subr.bf16.mxu0 %v4764
  %5512 = vmatpush1.bf16.msra.mxu0 %v4763
  %5513 = vmatprep.subr.bf16.mxu0 %v4768
  %5514 = vmatpush1.bf16.msra.mxu0 %v4767
  %5515 = vmatprep.subr.bf16.mxu0 0
  %5516 = vmatpush1.bf16.msra.mxu0 0
  %5517 = vmatprep.subr.bf16.mxu0 0
  %5518 = vmatpush1.bf16.msra.mxu0 0
  %5519 = vmatprep.subr.bf16.mxu0 0
  %5520 = vmatpush1.bf16.msra.mxu0 0
  %5521 = vmatprep.subr.bf16.mxu0 0
  %5522 = vmatpush1.bf16.msra.mxu0 0
  %5523 = vmatprep.subr.bf16.mxu0 0
  %5524 = vmatpush1.bf16.msra.mxu0 0
  %5525 = vmatprep.subr.bf16.mxu0 0
  %5526 = vmatpush1.bf16.msra.mxu0 0
  %5527 = vmatprep.subr.bf16.mxu0 0
  %5528 = vmatpush1.bf16.msra.mxu0 0
  %5529 = vmatprep.subr.bf16.mxu0 0
  %5530 = vmatpush1.bf16.msra.mxu0 0
  %5531 = vmatprep.mubr.bf16.mxu0 0
  %5532 = vmatmul.mubr.bf16.gmra.mrb[0].mxu0 %v5498
  %v5533 = vpop.f32.mrb[0].mxu0
  %v5534 = vadd.f32 0.0, %v5533
  %v5535 = vpop.f32.mrb[0].mxu0
  %v5536 = vadd.f32 0.0, %v5535
  %v5537 = vpop.f32.mrb[0].mxu0
  %v5538 = vpop.f32.mrb[0].mxu0
  %5539 = vdwg.mxu0
  %5540 = vmatprep.subr.bf16.mxu0 %v4742
  %5541 = vmatpush1.bf16.msra.mxu0 %v4741
  %5542 = vmatprep.subr.bf16.mxu0 %v4746
  %5543 = vmatpush1.bf16.msra.mxu0 %v4745
  %5544 = vmatprep.subr.bf16.mxu0 %v4750
  %5545 = vmatpush1.bf16.msra.mxu0 %v4749
  %5546 = vmatprep.subr.bf16.mxu0 %v4754
  %5547 = vmatpush1.bf16.msra.mxu0 %v4753
  %5548 = vmatprep.subr.bf16.mxu0 %v4758
  %5549 = vmatpush1.bf16.msra.mxu0 %v4757
  %5550 = vmatprep.subr.bf16.mxu0 %v4762
  %5551 = vmatpush1.bf16.msra.mxu0 %v4761
  %5552 = vmatprep.subr.bf16.mxu0 %v4766
  %5553 = vmatpush1.bf16.msra.mxu0 %v4765
  %5554 = vmatprep.subr.bf16.mxu0 %v4770
  %5555 = vmatpush1.bf16.msra.mxu0 %v4769
  %5556 = vmatprep.subr.bf16.mxu0 0
  %5557 = vmatpush1.bf16.msra.mxu0 0
  %5558 = vmatprep.subr.bf16.mxu0 0
  %5559 = vmatpush1.bf16.msra.mxu0 0
  %5560 = vmatprep.subr.bf16.mxu0 0
  %5561 = vmatpush1.bf16.msra.mxu0 0
  %5562 = vmatprep.subr.bf16.mxu0 0
  %5563 = vmatpush1.bf16.msra.mxu0 0
  %5564 = vmatprep.subr.bf16.mxu0 0
  %5565 = vmatpush1.bf16.msra.mxu0 0
  %5566 = vmatprep.subr.bf16.mxu0 0
  %5567 = vmatpush1.bf16.msra.mxu0 0
  %5568 = vmatprep.subr.bf16.mxu0 0
  %5569 = vmatpush1.bf16.msra.mxu0 0
  %5570 = vmatprep.subr.bf16.mxu0 0
  %5571 = vmatpush1.bf16.msra.mxu0 0
  %5572 = vmatprep.mubr.bf16.mxu0 0
  %5573 = vmatmul.mubr.bf16.gmra.mrb[0].mxu0 %v5498
  %v5574 = vpop.f32.mrb[0].mxu0
  %v5575 = vadd.f32 0.0, %v5574
  %v5576 = vpop.f32.mrb[0].mxu0
  %v5577 = vadd.f32 0.0, %v5576
  %v5578 = vpop.f32.mrb[0].mxu0
  %v5579 = vpop.f32.mrb[0].mxu0
  %5580 = vdwg.mxu0
  %v5581 = vadd.f32 %v5494, %v5534
  %v5582 = vadd.f32 %v5495, %v5536
  %v5583 = vadd.f32 %v5496, %v5575
  %v5584 = vadd.f32 %v5497, %v5577
  %v5585 = vxor.u32 %v5581, 2147483648
  %v5586 = vxor.u32 %v5582, 2147483648
  %v5587 = vxor.u32 %v5583, 2147483648
  %v5588 = vmul.f32 %v5585, 1.442695
  %v5589 = vpow.pop %v5588
  %v5590 = vmul.f32 %v5586, 1.442695
  %v5591 = vpow.pop %v5590
  %v5592 = vmul.f32 %v5587, 1.442695
  %v5593 = vpow.pop %v5592
  %v5594 = vadd.f32 %v5589, 1.0
  %v5595 = vadd.f32 %v5591, 1.0
  %v5596 = vadd.f32 %v5593, 1.0
  %v5597 = vrcp.pop %v5594
  %v5598 = vmul.f32 1.0, %v5597
  %v5599 = vrcp.pop %v5595
  %v5600 = vmul.f32 1.0, %v5599
  %v5601 = vrcp.pop %v5596
  %v5602 = vmul.f32 1.0, %v5601
  %v5603 = vtanh.pop %v5584
  %v5604 = vmul.f32 %v5600, %v5490
  %v5605 = vmul.f32 %v5598, %v5603
  %v5606 = vadd.f32 %v5604, %v5605
  %v5607 = vtanh.pop %v5606
  %v5608 = vmul.f32 %v5602, %v5607
  %5609 = vst [vmem:[#allocation4 + $0x38] sm:$0xff] %v5608
  %v5610 = vld [vmem:[#allocation4] sm:$0xff]
  %v5611 = vld [vmem:[#allocation4 + $0x8] sm:$0xff]
  %v5612 = vld [vmem:[#allocation4 + $0x10] sm:$0xff]
  %v5613 = vld [vmem:[#allocation4 + $0x18] sm:$0xff]
  %v5614 = vld [vmem:[#allocation4 + $0x20] sm:$0xff]
  %v5615 = vld [vmem:[#allocation4 + $0x28] sm:$0xff]
  %v5616 = vld [vmem:[#allocation4 + $0x30] sm:$0xff]
  %v5617 = vld [vmem:[#allocation4 + $0x38] sm:$0xff]
  %v5618 = vpack.c.bf16 %v5611, %v5610
  %v5619 = vpack.c.bf16 %v5613, %v5612
  %v5620 = vpack.c.bf16 %v5615, %v5614
  %v5621 = vpack.c.bf16 %v5617, %v5616
  %v5622 = vld [vmem:[%s13] sm:$0xff]
  %v5623 = vld [vmem:[%s13 + $0x8] sm:$0xff]
  %v5624 = vld [vmem:[%s13 + $0x10] sm:$0xff]
  %v5625 = vld [vmem:[%s13 + $0x18] sm:$0xff]
  %v5626 = vld [vmem:[%s13 + $0x20] sm:$0xff]
  %v5627 = vld [vmem:[%s13 + $0x28] sm:$0xff]
  %v5628 = vld [vmem:[%s13 + $0x30] sm:$0xff]
  %v5629 = vld [vmem:[%s13 + $0x38] sm:$0xff]
  %v5630 = vld [vmem:[%s13 + $0x40] sm:$0xff]
  %v5631 = vld [vmem:[%s13 + $0x48] sm:$0xff]
  %v5632 = vld [vmem:[%s13 + $0x50] sm:$0xff]
  %v5633 = vld [vmem:[%s13 + $0x58] sm:$0xff]
  %v5634 = vld [vmem:[%s13 + $0x60] sm:$0xff]
  %v5635 = vld [vmem:[%s13 + $0x68] sm:$0xff]
  %v5636 = vld [vmem:[%s13 + $0x70] sm:$0xff]
  %v5637 = vld [vmem:[%s13 + $0x78] sm:$0xff]
  %v5638 = vld [vmem:[%s13 + $0x80] sm:$0xff]
  %v5639 = vld [vmem:[%s13 + $0x88] sm:$0xff]
  %v5640 = vld [vmem:[%s13 + $0x90] sm:$0xff]
  %v5641 = vld [vmem:[%s13 + $0x98] sm:$0xff]
  %v5642 = vld [vmem:[%s13 + $0xa0] sm:$0xff]
  %v5643 = vld [vmem:[%s13 + $0xa8] sm:$0xff]
  %v5644 = vld [vmem:[%s13 + $0xb0] sm:$0xff]
  %v5645 = vld [vmem:[%s13 + $0xb8] sm:$0xff]
  %v5646 = vld [vmem:[%s13 + $0xc0] sm:$0xff]
  %v5647 = vld [vmem:[%s13 + $0xc8] sm:$0xff]
  %v5648 = vld [vmem:[%s13 + $0xd0] sm:$0xff]
  %v5649 = vld [vmem:[%s13 + $0xd8] sm:$0xff]
  %v5650 = vld [vmem:[%s13 + $0xe0] sm:$0xff]
  %v5651 = vld [vmem:[%s13 + $0xe8] sm:$0xff]
  %v5652 = vld [vmem:[%s13 + $0xf0] sm:$0xff]
  %v5653 = vld [vmem:[%s13 + $0xf8] sm:$0xff]
  %v5654 = vld [vmem:[%s15] sm:$0xf]
  %v5656 = vlaneseq
  %v5657 = vshrl.u32 %v5656, 7
  %v5658 = vsub.s32 0, %v5657
  %v5659 = vrot.slane %v5654, %v5658
  %v5660 = vlaneseq
  %v5661 = vshrl.u32 %v5660, 7
  %v5662 = vsub.s32 1, %v5661
  %v5663 = vrot.slane %v5654, %v5662
  %v5664 = vlaneseq
  %v5665 = vshrl.u32 %v5664, 7
  %v5666 = vsub.s32 2, %v5665
  %v5667 = vrot.slane %v5654, %v5666
  %v5668 = vlaneseq
  %v5669 = vshrl.u32 %v5668, 7
  %v5670 = vsub.s32 3, %v5669
  %v5671 = vrot.slane %v5654, %v5670
  %v5708 = vunpack.c.l.b16 %v5622
  %v5709 = vunpack.c.h.b16 %v5622
  %v5710 = vunpack.c.l.b16 %v5623
  %v5711 = vunpack.c.h.b16 %v5623
  %v5712 = vunpack.c.l.b16 %v5624
  %v5713 = vunpack.c.h.b16 %v5624
  %v5714 = vunpack.c.l.b16 %v5625
  %v5715 = vunpack.c.h.b16 %v5625
  %v5716 = vunpack.c.l.b16 %v5626
  %v5717 = vunpack.c.h.b16 %v5626
  %v5718 = vunpack.c.l.b16 %v5627
  %v5719 = vunpack.c.h.b16 %v5627
  %v5720 = vunpack.c.l.b16 %v5628
  %v5721 = vunpack.c.h.b16 %v5628
  %v5722 = vunpack.c.l.b16 %v5629
  %v5723 = vunpack.c.h.b16 %v5629
  %v5724 = vunpack.c.l.b16 %v5630
  %v5725 = vunpack.c.h.b16 %v5630
  %v5726 = vunpack.c.l.b16 %v5631
  %v5727 = vunpack.c.h.b16 %v5631
  %v5728 = vunpack.c.l.b16 %v5632
  %v5729 = vunpack.c.h.b16 %v5632
  %v5730 = vunpack.c.l.b16 %v5633
  %v5731 = vunpack.c.h.b16 %v5633
  %v5732 = vunpack.c.l.b16 %v5634
  %v5733 = vunpack.c.h.b16 %v5634
  %v5734 = vunpack.c.l.b16 %v5635
  %v5735 = vunpack.c.h.b16 %v5635
  %v5736 = vunpack.c.l.b16 %v5636
  %v5737 = vunpack.c.h.b16 %v5636
  %v5738 = vunpack.c.l.b16 %v5637
  %v5739 = vunpack.c.h.b16 %v5637
  %v5740 = vunpack.c.l.b16 %v5638
  %v5741 = vunpack.c.h.b16 %v5638
  %v5742 = vunpack.c.l.b16 %v5639
  %v5743 = vunpack.c.h.b16 %v5639
  %v5744 = vunpack.c.l.b16 %v5640
  %v5745 = vunpack.c.h.b16 %v5640
  %v5746 = vunpack.c.l.b16 %v5641
  %v5747 = vunpack.c.h.b16 %v5641
  %v5748 = vunpack.c.l.b16 %v5642
  %v5749 = vunpack.c.h.b16 %v5642
  %v5750 = vunpack.c.l.b16 %v5643
  %v5751 = vunpack.c.h.b16 %v5643
  %v5752 = vunpack.c.l.b16 %v5644
  %v5753 = vunpack.c.h.b16 %v5644
  %v5754 = vunpack.c.l.b16 %v5645
  %v5755 = vunpack.c.h.b16 %v5645
  %v5756 = vunpack.c.l.b16 %v5646
  %v5757 = vunpack.c.h.b16 %v5646
  %v5758 = vunpack.c.l.b16 %v5647
  %v5759 = vunpack.c.h.b16 %v5647
  %v5760 = vunpack.c.l.b16 %v5648
  %v5761 = vunpack.c.h.b16 %v5648
  %v5762 = vunpack.c.l.b16 %v5649
  %v5763 = vunpack.c.h.b16 %v5649
  %v5764 = vunpack.c.l.b16 %v5650
  %v5765 = vunpack.c.h.b16 %v5650
  %v5766 = vunpack.c.l.b16 %v5651
  %v5767 = vunpack.c.h.b16 %v5651
  %v5768 = vunpack.c.l.b16 %v5652
  %v5769 = vunpack.c.h.b16 %v5652
  %v5770 = vunpack.c.l.b16 %v5653
  %v5771 = vunpack.c.h.b16 %v5653
  %v5772 = vpack.c.b16 %v5712, %v5708
  %v5773 = vpack.c.b16 %v5713, %v5709
  %v5774 = vpack.c.b16 %v5714, %v5710
  %v5775 = vpack.c.b16 %v5715, %v5711
  %v5776 = vpack.c.b16 %v5720, %v5716
  %v5777 = vpack.c.b16 %v5721, %v5717
  %v5778 = vpack.c.b16 %v5722, %v5718
  %v5779 = vpack.c.b16 %v5723, %v5719
  %v5780 = vpack.c.b16 %v5728, %v5724
  %v5781 = vpack.c.b16 %v5729, %v5725
  %v5782 = vpack.c.b16 %v5730, %v5726
  %v5783 = vpack.c.b16 %v5731, %v5727
  %v5784 = vpack.c.b16 %v5736, %v5732
  %v5785 = vpack.c.b16 %v5737, %v5733
  %v5786 = vpack.c.b16 %v5738, %v5734
  %v5787 = vpack.c.b16 %v5739, %v5735
  %v5788 = vpack.c.b16 %v5744, %v5740
  %v5789 = vpack.c.b16 %v5745, %v5741
  %v5790 = vpack.c.b16 %v5746, %v5742
  %v5791 = vpack.c.b16 %v5747, %v5743
  %v5792 = vpack.c.b16 %v5752, %v5748
  %v5793 = vpack.c.b16 %v5753, %v5749
  %v5794 = vpack.c.b16 %v5754, %v5750
  %v5795 = vpack.c.b16 %v5755, %v5751
  %v5796 = vpack.c.b16 %v5760, %v5756
  %v5797 = vpack.c.b16 %v5761, %v5757
  %v5798 = vpack.c.b16 %v5762, %v5758
  %v5799 = vpack.c.b16 %v5763, %v5759
  %v5800 = vpack.c.b16 %v5768, %v5764
  %v5801 = vpack.c.b16 %v5769, %v5765
  %v5802 = vpack.c.b16 %v5770, %v5766
  %v5803 = vpack.c.b16 %v5771, %v5767
  %5836 = vmatprep.subr.bf16.mxu0 %v5773
  %5837 = vmatpush1.bf16.msra.mxu0 %v5772
  %5838 = vmatprep.subr.bf16.mxu0 %v5777
  %5839 = vmatpush1.bf16.msra.mxu0 %v5776
  %5840 = vmatprep.subr.bf16.mxu0 %v5781
  %5841 = vmatpush1.bf16.msra.mxu0 %v5780
  %5842 = vmatprep.subr.bf16.mxu0 %v5785
  %5843 = vmatpush1.bf16.msra.mxu0 %v5784
  %5844 = vmatprep.subr.bf16.mxu0 %v5789
  %5845 = vmatpush1.bf16.msra.mxu0 %v5788
  %5846 = vmatprep.subr.bf16.mxu0 %v5793
  %5847 = vmatpush1.bf16.msra.mxu0 %v5792
  %5848 = vmatprep.subr.bf16.mxu0 %v5797
  %5849 = vmatpush1.bf16.msra.mxu0 %v5796
  %5850 = vmatprep.subr.bf16.mxu0 %v5801
  %5851 = vmatpush1.bf16.msra.mxu0 %v5800
  %5852 = vmatprep.subr.bf16.mxu0 0
  %5853 = vmatpush1.bf16.msra.mxu0 0
  %5854 = vmatprep.subr.bf16.mxu0 0
  %5855 = vmatpush1.bf16.msra.mxu0 0
  %5856 = vmatprep.subr.bf16.mxu0 0
  %5857 = vmatpush1.bf16.msra.mxu0 0
  %5858 = vmatprep.subr.bf16.mxu0 0
  %5859 = vmatpush1.bf16.msra.mxu0 0
  %5860 = vmatprep.subr.bf16.mxu0 0
  %5861 = vmatpush1.bf16.msra.mxu0 0
  %5862 = vmatprep.subr.bf16.mxu0 0
  %5863 = vmatpush1.bf16.msra.mxu0 0
  %5864 = vmatprep.subr.bf16.mxu0 0
  %5865 = vmatpush1.bf16.msra.mxu0 0
  %5866 = vmatprep.subr.bf16.mxu0 0
  %5867 = vmatpush1.bf16.msra.mxu0 0
  %5868 = vmatprep.mubr.bf16.mxu0 0
  %5869 = vmatmul.mubr.bf16.gmra.mrb[0].mxu0 %v5618
  %v5870 = vpop.f32.mrb[0].mxu0
  %v5871 = vadd.f32 %v5659, %v5870
  %v5872 = vpop.f32.mrb[0].mxu0
  %v5873 = vadd.f32 %v5663, %v5872
  %v5874 = vpop.f32.mrb[0].mxu0
  %v5875 = vadd.f32 %v5659, %v5874
  %v5876 = vpop.f32.mrb[0].mxu0
  %v5877 = vadd.f32 %v5663, %v5876
  %5878 = vmatprep.mubr.bf16.mxu0 0
  %5879 = vmatmul.mubr.bf16.gmra.mrb[0].mxu0 %v5619
  %v5880 = vpop.f32.mrb[0].mxu0
  %v5881 = vadd.f32 %v5659, %v5880
  %v5882 = vpop.f32.mrb[0].mxu0
  %v5883 = vadd.f32 %v5663, %v5882
  %v5884 = vpop.f32.mrb[0].mxu0
  %v5885 = vadd.f32 %v5659, %v5884
  %v5886 = vpop.f32.mrb[0].mxu0
  %v5887 = vadd.f32 %v5663, %v5886
  %5888 = vmatprep.mubr.bf16.mxu0 0
  %5889 = vmatmul.mubr.bf16.gmra.mrb[0].mxu0 %v5620
  %v5890 = vpop.f32.mrb[0].mxu0
  %v5891 = vadd.f32 %v5659, %v5890
  %v5892 = vpop.f32.mrb[0].mxu0
  %v5893 = vadd.f32 %v5663, %v5892
  %v5894 = vpop.f32.mrb[0].mxu0
  %v5895 = vadd.f32 %v5659, %v5894
  %v5896 = vpop.f32.mrb[0].mxu0
  %v5897 = vadd.f32 %v5663, %v5896
  %5898 = vmatprep.mubr.bf16.mxu0 0
  %5899 = vmatmul.mubr.bf16.gmra.mrb[0].mxu0 %v5621
  %v5900 = vpop.f32.mrb[0].mxu0
  %v5901 = vadd.f32 %v5659, %v5900
  %v5902 = vpop.f32.mrb[0].mxu0
  %v5903 = vadd.f32 %v5663, %v5902
  %v5904 = vpop.f32.mrb[0].mxu0
  %v5905 = vadd.f32 %v5659, %v5904
  %v5906 = vpop.f32.mrb[0].mxu0
  %v5907 = vadd.f32 %v5663, %v5906
  %5908 = vdwg.mxu0
  %5909 = vmatprep.subr.bf16.mxu0 %v5775
  %5910 = vmatpush1.bf16.msra.mxu0 %v5774
  %5911 = vmatprep.subr.bf16.mxu0 %v5779
  %5912 = vmatpush1.bf16.msra.mxu0 %v5778
  %5913 = vmatprep.subr.bf16.mxu0 %v5783
  %5914 = vmatpush1.bf16.msra.mxu0 %v5782
  %5915 = vmatprep.subr.bf16.mxu0 %v5787
  %5916 = vmatpush1.bf16.msra.mxu0 %v5786
  %5917 = vmatprep.subr.bf16.mxu0 %v5791
  %5918 = vmatpush1.bf16.msra.mxu0 %v5790
  %5919 = vmatprep.subr.bf16.mxu0 %v5795
  %5920 = vmatpush1.bf16.msra.mxu0 %v5794
  %5921 = vmatprep.subr.bf16.mxu0 %v5799
  %5922 = vmatpush1.bf16.msra.mxu0 %v5798
  %5923 = vmatprep.subr.bf16.mxu0 %v5803
  %5924 = vmatpush1.bf16.msra.mxu0 %v5802
  %5925 = vmatprep.subr.bf16.mxu0 0
  %5926 = vmatpush1.bf16.msra.mxu0 0
  %5927 = vmatprep.subr.bf16.mxu0 0
  %5928 = vmatpush1.bf16.msra.mxu0 0
  %5929 = vmatprep.subr.bf16.mxu0 0
  %5930 = vmatpush1.bf16.msra.mxu0 0
  %5931 = vmatprep.subr.bf16.mxu0 0
  %5932 = vmatpush1.bf16.msra.mxu0 0
  %5933 = vmatprep.subr.bf16.mxu0 0
  %5934 = vmatpush1.bf16.msra.mxu0 0
  %5935 = vmatprep.subr.bf16.mxu0 0
  %5936 = vmatpush1.bf16.msra.mxu0 0
  %5937 = vmatprep.subr.bf16.mxu0 0
  %5938 = vmatpush1.bf16.msra.mxu0 0
  %5939 = vmatprep.subr.bf16.mxu0 0
  %5940 = vmatpush1.bf16.msra.mxu0 0
  %5941 = vmatprep.mubr.bf16.mxu0 0
  %5942 = vmatmul.mubr.bf16.gmra.mrb[0].mxu0 %v5618
  %v5943 = vpop.f32.mrb[0].mxu0
  %v5944 = vadd.f32 %v5667, %v5943
  %v5945 = vpop.f32.mrb[0].mxu0
  %v5946 = vadd.f32 %v5671, %v5945
  %v5947 = vpop.f32.mrb[0].mxu0
  %v5948 = vadd.f32 %v5667, %v5947
  %v5949 = vpop.f32.mrb[0].mxu0
  %v5950 = vadd.f32 %v5671, %v5949
  %5951 = vmatprep.mubr.bf16.mxu0 0
  %5952 = vmatmul.mubr.bf16.gmra.mrb[0].mxu0 %v5619
  %v5953 = vpop.f32.mrb[0].mxu0
  %v5954 = vadd.f32 %v5667, %v5953
  %v5955 = vpop.f32.mrb[0].mxu0
  %v5956 = vadd.f32 %v5671, %v5955
  %v5957 = vpop.f32.mrb[0].mxu0
  %v5958 = vadd.f32 %v5667, %v5957
  %v5959 = vpop.f32.mrb[0].mxu0
  %v5960 = vadd.f32 %v5671, %v5959
  %5961 = vmatprep.mubr.bf16.mxu0 0
  %5962 = vmatmul.mubr.bf16.gmra.mrb[0].mxu0 %v5620
  %v5963 = vpop.f32.mrb[0].mxu0
  %v5964 = vadd.f32 %v5667, %v5963
  %v5965 = vpop.f32.mrb[0].mxu0
  %v5966 = vadd.f32 %v5671, %v5965
  %v5967 = vpop.f32.mrb[0].mxu0
  %v5968 = vadd.f32 %v5667, %v5967
  %v5969 = vpop.f32.mrb[0].mxu0
  %v5970 = vadd.f32 %v5671, %v5969
  %5971 = vmatprep.mubr.bf16.mxu0 0
  %5972 = vmatmul.mubr.bf16.gmra.mrb[0].mxu0 %v5621
  %v5973 = vpop.f32.mrb[0].mxu0
  %v5974 = vadd.f32 %v5667, %v5973
  %v5975 = vpop.f32.mrb[0].mxu0
  %v5976 = vadd.f32 %v5671, %v5975
  %v5977 = vpop.f32.mrb[0].mxu0
  %v5978 = vadd.f32 %v5667, %v5977
  %v5979 = vpop.f32.mrb[0].mxu0
  %v5980 = vadd.f32 %v5671, %v5979
  %5981 = vdwg.mxu0
  %5982 = vst [vmem:[#allocation2] sm:$0xff] %v5871
  %5983 = vst [vmem:[#allocation2 + $0x8] sm:$0xff] %v5873
  %5984 = vst [vmem:[#allocation2 + $0x10] sm:$0xff] %v5944
  %5985 = vst [vmem:[#allocation2 + $0x18] sm:$0xff] %v5946
  %5986 = vst [vmem:[#allocation2 + $0x20] sm:$0xff] %v5875
  %5987 = vst [vmem:[#allocation2 + $0x28] sm:$0xff] %v5877
  %5988 = vst [vmem:[#allocation2 + $0x30] sm:$0xff] %v5948
  %5989 = vst [vmem:[#allocation2 + $0x38] sm:$0xff] %v5950
  %5990 = vst [vmem:[#allocation2 + $0x40] sm:$0xff] %v5881
  %5991 = vst [vmem:[#allocation2 + $0x48] sm:$0xff] %v5883
  %5992 = vst [vmem:[#allocation2 + $0x50] sm:$0xff] %v5954
  %5993 = vst [vmem:[#allocation2 + $0x58] sm:$0xff] %v5956
  %5994 = vst [vmem:[#allocation2 + $0x60] sm:$0xff] %v5885
  %5995 = vst [vmem:[#allocation2 + $0x68] sm:$0xff] %v5887
  %5996 = vst [vmem:[#allocation2 + $0x70] sm:$0xff] %v5958
  %5997 = vst [vmem:[#allocation2 + $0x78] sm:$0xff] %v5960
  %5998 = vst [vmem:[#allocation2 + $0x80] sm:$0xff] %v5891
  %5999 = vst [vmem:[#allocation2 + $0x88] sm:$0xff] %v5893
  %6000 = vst [vmem:[#allocation2 + $0x90] sm:$0xff] %v5964
  %6001 = vst [vmem:[#allocation2 + $0x98] sm:$0xff] %v5966
  %6002 = vst [vmem:[#allocation2 + $0xa0] sm:$0xff] %v5895
  %6003 = vst [vmem:[#allocation2 + $0xa8] sm:$0xff] %v5897
  %6004 = vst [vmem:[#allocation2 + $0xb0] sm:$0xff] %v5968
  %6005 = vst [vmem:[#allocation2 + $0xb8] sm:$0xff] %v5970
  %6006 = vst [vmem:[#allocation2 + $0xc0] sm:$0xff] %v5901
  %6007 = vst [vmem:[#allocation2 + $0xc8] sm:$0xff] %v5903
  %6008 = vst [vmem:[#allocation2 + $0xd0] sm:$0xff] %v5974
  %6009 = vst [vmem:[#allocation2 + $0xd8] sm:$0xff] %v5976
  %6010 = vst [vmem:[#allocation2 + $0xe0] sm:$0xff] %v5905
  %6011 = vst [vmem:[#allocation2 + $0xe8] sm:$0xff] %v5907
  %6012 = vst [vmem:[#allocation2 + $0xf0] sm:$0xff] %v5978
  %6013 = vst [vmem:[#allocation2 + $0xf8] sm:$0xff] %v5980
  %v6014 = vld [vmem:[%s14] sm:$0xff]
  %v6015 = vld [vmem:[%s14 + $0x8] sm:$0xff]
  %v6016 = vld [vmem:[%s14 + $0x10] sm:$0xff]
  %v6017 = vld [vmem:[%s14 + $0x18] sm:$0xff]
  %v6018 = vld [vmem:[%s14 + $0x20] sm:$0xff]
  %v6019 = vld [vmem:[%s14 + $0x28] sm:$0xff]
  %v6020 = vld [vmem:[%s14 + $0x30] sm:$0xff]
  %v6021 = vld [vmem:[%s14 + $0x38] sm:$0xff]
  %v6022 = vld [vmem:[%s14 + $0x40] sm:$0xff]
  %v6023 = vld [vmem:[%s14 + $0x48] sm:$0xff]
  %v6024 = vld [vmem:[%s14 + $0x50] sm:$0xff]
  %v6025 = vld [vmem:[%s14 + $0x58] sm:$0xff]
  %v6026 = vld [vmem:[%s14 + $0x60] sm:$0xff]
  %v6027 = vld [vmem:[%s14 + $0x68] sm:$0xff]
  %v6028 = vld [vmem:[%s14 + $0x70] sm:$0xff]
  %v6029 = vld [vmem:[%s14 + $0x78] sm:$0xff]
  %v6030 = vld [vmem:[%s14 + $0x80] sm:$0xff]
  %v6031 = vld [vmem:[%s14 + $0x88] sm:$0xff]
  %v6032 = vld [vmem:[%s14 + $0x90] sm:$0xff]
  %v6033 = vld [vmem:[%s14 + $0x98] sm:$0xff]
  %v6034 = vld [vmem:[%s14 + $0xa0] sm:$0xff]
  %v6035 = vld [vmem:[%s14 + $0xa8] sm:$0xff]
  %v6036 = vld [vmem:[%s14 + $0xb0] sm:$0xff]
  %v6037 = vld [vmem:[%s14 + $0xb8] sm:$0xff]
  %v6038 = vld [vmem:[%s14 + $0xc0] sm:$0xff]
  %v6039 = vld [vmem:[%s14 + $0xc8] sm:$0xff]
  %v6040 = vld [vmem:[%s14 + $0xd0] sm:$0xff]
  %v6041 = vld [vmem:[%s14 + $0xd8] sm:$0xff]
  %v6042 = vld [vmem:[%s14 + $0xe0] sm:$0xff]
  %v6043 = vld [vmem:[%s14 + $0xe8] sm:$0xff]
  %v6044 = vld [vmem:[%s14 + $0xf0] sm:$0xff]
  %v6045 = vld [vmem:[%s14 + $0xf8] sm:$0xff]
  %v6046 = vld [vmem:[#allocation2] sm:$0xff]
  %v6047 = vld [vmem:[#allocation2 + $0x8] sm:$0xff]
  %v6048 = vld [vmem:[#allocation2 + $0x10] sm:$0xff]
  %v6049 = vld [vmem:[#allocation2 + $0x18] sm:$0xff]
  %v6050 = vxor.u32 %v6046, 2147483648
  %v6051 = vxor.u32 %v6047, 2147483648
  %v6052 = vxor.u32 %v6048, 2147483648
  %v6053 = vmul.f32 %v6050, 1.442695
  %v6054 = vpow.pop %v6053
  %v6055 = vmul.f32 %v6051, 1.442695
  %v6056 = vpow.pop %v6055
  %v6057 = vmul.f32 %v6052, 1.442695
  %v6058 = vpow.pop %v6057
  %v6059 = vadd.f32 %v6054, 1.0
  %v6060 = vadd.f32 %v6056, 1.0
  %v6061 = vadd.f32 %v6058, 1.0
  %v6062 = vrcp.pop %v6059
  %v6063 = vmul.f32 1.0, %v6062
  %v6064 = vrcp.pop %v6060
  %v6065 = vmul.f32 1.0, %v6064
  %v6066 = vrcp.pop %v6061
  %v6067 = vmul.f32 1.0, %v6066
  %v6068 = vtanh.pop %v6049
  %v6069 = vmul.f32 %v6065, 0.0
  %v6070 = vmul.f32 %v6063, %v6068
  %v6071 = vadd.f32 %v6069, %v6070
  %v6072 = vtanh.pop %v6071
  %v6073 = vmul.f32 %v6067, %v6072
  %6074 = vst [vmem:[#allocation3] sm:$0xff] %v6073
  %v6075 = vld [vmem:[#allocation2 + $0x20] sm:$0xff]
  %v6076 = vld [vmem:[#allocation2 + $0x28] sm:$0xff]
  %v6077 = vld [vmem:[#allocation2 + $0x30] sm:$0xff]
  %v6078 = vld [vmem:[#allocation2 + $0x38] sm:$0xff]
  %v6079 = vpack.c.bf16 %v6073, %v6073
  %v6112 = vunpack.c.l.b16 %v6014
  %v6113 = vunpack.c.h.b16 %v6014
  %v6114 = vunpack.c.l.b16 %v6015
  %v6115 = vunpack.c.h.b16 %v6015
  %v6116 = vunpack.c.l.b16 %v6016
  %v6117 = vunpack.c.h.b16 %v6016
  %v6118 = vunpack.c.l.b16 %v6017
  %v6119 = vunpack.c.h.b16 %v6017
  %v6120 = vunpack.c.l.b16 %v6018
  %v6121 = vunpack.c.h.b16 %v6018
  %v6122 = vunpack.c.l.b16 %v6019
  %v6123 = vunpack.c.h.b16 %v6019
  %v6124 = vunpack.c.l.b16 %v6020
  %v6125 = vunpack.c.h.b16 %v6020
  %v6126 = vunpack.c.l.b16 %v6021
  %v6127 = vunpack.c.h.b16 %v6021
  %v6128 = vunpack.c.l.b16 %v6022
  %v6129 = vunpack.c.h.b16 %v6022
  %v6130 = vunpack.c.l.b16 %v6023
  %v6131 = vunpack.c.h.b16 %v6023
  %v6132 = vunpack.c.l.b16 %v6024
  %v6133 = vunpack.c.h.b16 %v6024
  %v6134 = vunpack.c.l.b16 %v6025
  %v6135 = vunpack.c.h.b16 %v6025
  %v6136 = vunpack.c.l.b16 %v6026
  %v6137 = vunpack.c.h.b16 %v6026
  %v6138 = vunpack.c.l.b16 %v6027
  %v6139 = vunpack.c.h.b16 %v6027
  %v6140 = vunpack.c.l.b16 %v6028
  %v6141 = vunpack.c.h.b16 %v6028
  %v6142 = vunpack.c.l.b16 %v6029
  %v6143 = vunpack.c.h.b16 %v6029
  %v6144 = vunpack.c.l.b16 %v6030
  %v6145 = vunpack.c.h.b16 %v6030
  %v6146 = vunpack.c.l.b16 %v6031
  %v6147 = vunpack.c.h.b16 %v6031
  %v6148 = vunpack.c.l.b16 %v6032
  %v6149 = vunpack.c.h.b16 %v6032
  %v6150 = vunpack.c.l.b16 %v6033
  %v6151 = vunpack.c.h.b16 %v6033
  %v6152 = vunpack.c.l.b16 %v6034
  %v6153 = vunpack.c.h.b16 %v6034
  %v6154 = vunpack.c.l.b16 %v6035
  %v6155 = vunpack.c.h.b16 %v6035
  %v6156 = vunpack.c.l.b16 %v6036
  %v6157 = vunpack.c.h.b16 %v6036
  %v6158 = vunpack.c.l.b16 %v6037
  %v6159 = vunpack.c.h.b16 %v6037
  %v6160 = vunpack.c.l.b16 %v6038
  %v6161 = vunpack.c.h.b16 %v6038
  %v6162 = vunpack.c.l.b16 %v6039
  %v6163 = vunpack.c.h.b16 %v6039
  %v6164 = vunpack.c.l.b16 %v6040
  %v6165 = vunpack.c.h.b16 %v6040
  %v6166 = vunpack.c.l.b16 %v6041
  %v6167 = vunpack.c.h.b16 %v6041
  %v6168 = vunpack.c.l.b16 %v6042
  %v6169 = vunpack.c.h.b16 %v6042
  %v6170 = vunpack.c.l.b16 %v6043
  %v6171 = vunpack.c.h.b16 %v6043
  %v6172 = vunpack.c.l.b16 %v6044
  %v6173 = vunpack.c.h.b16 %v6044
  %v6174 = vunpack.c.l.b16 %v6045
  %v6175 = vunpack.c.h.b16 %v6045
  %v6176 = vpack.c.b16 %v6116, %v6112
  %v6177 = vpack.c.b16 %v6117, %v6113
  %v6178 = vpack.c.b16 %v6118, %v6114
  %v6179 = vpack.c.b16 %v6119, %v6115
  %v6180 = vpack.c.b16 %v6124, %v6120
  %v6181 = vpack.c.b16 %v6125, %v6121
  %v6182 = vpack.c.b16 %v6126, %v6122
  %v6183 = vpack.c.b16 %v6127, %v6123
  %v6184 = vpack.c.b16 %v6132, %v6128
  %v6185 = vpack.c.b16 %v6133, %v6129
  %v6186 = vpack.c.b16 %v6134, %v6130
  %v6187 = vpack.c.b16 %v6135, %v6131
  %v6188 = vpack.c.b16 %v6140, %v6136
  %v6189 = vpack.c.b16 %v6141, %v6137
  %v6190 = vpack.c.b16 %v6142, %v6138
  %v6191 = vpack.c.b16 %v6143, %v6139
  %v6192 = vpack.c.b16 %v6148, %v6144
  %v6193 = vpack.c.b16 %v6149, %v6145
  %v6194 = vpack.c.b16 %v6150, %v6146
  %v6195 = vpack.c.b16 %v6151, %v6147
  %v6196 = vpack.c.b16 %v6156, %v6152
  %v6197 = vpack.c.b16 %v6157, %v6153
  %v6198 = vpack.c.b16 %v6158, %v6154
  %v6199 = vpack.c.b16 %v6159, %v6155
  %v6200 = vpack.c.b16 %v6164, %v6160
  %v6201 = vpack.c.b16 %v6165, %v6161
  %v6202 = vpack.c.b16 %v6166, %v6162
  %v6203 = vpack.c.b16 %v6167, %v6163
  %v6204 = vpack.c.b16 %v6172, %v6168
  %v6205 = vpack.c.b16 %v6173, %v6169
  %v6206 = vpack.c.b16 %v6174, %v6170
  %v6207 = vpack.c.b16 %v6175, %v6171
  %6240 = vmatprep.subr.bf16.mxu0 %v6177
  %6241 = vmatpush1.bf16.msra.mxu0 %v6176
  %6242 = vmatprep.subr.bf16.mxu0 %v6181
  %6243 = vmatpush1.bf16.msra.mxu0 %v6180
  %6244 = vmatprep.subr.bf16.mxu0 %v6185
  %6245 = vmatpush1.bf16.msra.mxu0 %v6184
  %6246 = vmatprep.subr.bf16.mxu0 %v6189
  %6247 = vmatpush1.bf16.msra.mxu0 %v6188
  %6248 = vmatprep.subr.bf16.mxu0 %v6193
  %6249 = vmatpush1.bf16.msra.mxu0 %v6192
  %6250 = vmatprep.subr.bf16.mxu0 %v6197
  %6251 = vmatpush1.bf16.msra.mxu0 %v6196
  %6252 = vmatprep.subr.bf16.mxu0 %v6201
  %6253 = vmatpush1.bf16.msra.mxu0 %v6200
  %6254 = vmatprep.subr.bf16.mxu0 %v6205
  %6255 = vmatpush1.bf16.msra.mxu0 %v6204
  %6256 = vmatprep.subr.bf16.mxu0 0
  %6257 = vmatpush1.bf16.msra.mxu0 0
  %6258 = vmatprep.subr.bf16.mxu0 0
  %6259 = vmatpush1.bf16.msra.mxu0 0
  %6260 = vmatprep.subr.bf16.mxu0 0
  %6261 = vmatpush1.bf16.msra.mxu0 0
  %6262 = vmatprep.subr.bf16.mxu0 0
  %6263 = vmatpush1.bf16.msra.mxu0 0
  %6264 = vmatprep.subr.bf16.mxu0 0
  %6265 = vmatpush1.bf16.msra.mxu0 0
  %6266 = vmatprep.subr.bf16.mxu0 0
  %6267 = vmatpush1.bf16.msra.mxu0 0
  %6268 = vmatprep.subr.bf16.mxu0 0
  %6269 = vmatpush1.bf16.msra.mxu0 0
  %6270 = vmatprep.subr.bf16.mxu0 0
  %6271 = vmatpush1.bf16.msra.mxu0 0
  %6272 = vmatprep.mubr.bf16.mxu0 0
  %6273 = vmatmul.mubr.bf16.gmra.mrb[0].mxu0 %v6079
  %v6274 = vpop.f32.mrb[0].mxu0
  %v6275 = vadd.f32 0.0, %v6274
  %v6276 = vpop.f32.mrb[0].mxu0
  %v6277 = vadd.f32 0.0, %v6276
  %v6278 = vpop.f32.mrb[0].mxu0
  %v6279 = vpop.f32.mrb[0].mxu0
  %6280 = vdwg.mxu0
  %6281 = vmatprep.subr.bf16.mxu0 %v6179
  %6282 = vmatpush1.bf16.msra.mxu0 %v6178
  %6283 = vmatprep.subr.bf16.mxu0 %v6183
  %6284 = vmatpush1.bf16.msra.mxu0 %v6182
  %6285 = vmatprep.subr.bf16.mxu0 %v6187
  %6286 = vmatpush1.bf16.msra.mxu0 %v6186
  %6287 = vmatprep.subr.bf16.mxu0 %v6191
  %6288 = vmatpush1.bf16.msra.mxu0 %v6190
  %6289 = vmatprep.subr.bf16.mxu0 %v6195
  %6290 = vmatpush1.bf16.msra.mxu0 %v6194
  %6291 = vmatprep.subr.bf16.mxu0 %v6199
  %6292 = vmatpush1.bf16.msra.mxu0 %v6198
  %6293 = vmatprep.subr.bf16.mxu0 %v6203
  %6294 = vmatpush1.bf16.msra.mxu0 %v6202
  %6295 = vmatprep.subr.bf16.mxu0 %v6207
  %6296 = vmatpush1.bf16.msra.mxu0 %v6206
  %6297 = vmatprep.subr.bf16.mxu0 0
  %6298 = vmatpush1.bf16.msra.mxu0 0
  %6299 = vmatprep.subr.bf16.mxu0 0
  %6300 = vmatpush1.bf16.msra.mxu0 0
  %6301 = vmatprep.subr.bf16.mxu0 0
  %6302 = vmatpush1.bf16.msra.mxu0 0
  %6303 = vmatprep.subr.bf16.mxu0 0
  %6304 = vmatpush1.bf16.msra.mxu0 0
  %6305 = vmatprep.subr.bf16.mxu0 0
  %6306 = vmatpush1.bf16.msra.mxu0 0
  %6307 = vmatprep.subr.bf16.mxu0 0
  %6308 = vmatpush1.bf16.msra.mxu0 0
  %6309 = vmatprep.subr.bf16.mxu0 0
  %6310 = vmatpush1.bf16.msra.mxu0 0
  %6311 = vmatprep.subr.bf16.mxu0 0
  %6312 = vmatpush1.bf16.msra.mxu0 0
  %6313 = vmatprep.mubr.bf16.mxu0 0
  %6314 = vmatmul.mubr.bf16.gmra.mrb[0].mxu0 %v6079
  %v6315 = vpop.f32.mrb[0].mxu0
  %v6316 = vadd.f32 0.0, %v6315
  %v6317 = vpop.f32.mrb[0].mxu0
  %v6318 = vadd.f32 0.0, %v6317
  %v6319 = vpop.f32.mrb[0].mxu0
  %v6320 = vpop.f32.mrb[0].mxu0
  %6321 = vdwg.mxu0
  %v6322 = vadd.f32 %v6075, %v6275
  %v6323 = vadd.f32 %v6076, %v6277
  %v6324 = vadd.f32 %v6077, %v6316
  %v6325 = vadd.f32 %v6078, %v6318
  %v6326 = vxor.u32 %v6322, 2147483648
  %v6327 = vxor.u32 %v6323, 2147483648
  %v6328 = vxor.u32 %v6324, 2147483648
  %v6329 = vmul.f32 %v6326, 1.442695
  %v6330 = vpow.pop %v6329
  %v6331 = vmul.f32 %v6327, 1.442695
  %v6332 = vpow.pop %v6331
  %v6333 = vmul.f32 %v6328, 1.442695
  %v6334 = vpow.pop %v6333
  %v6335 = vadd.f32 %v6330, 1.0
  %v6336 = vadd.f32 %v6332, 1.0
  %v6337 = vadd.f32 %v6334, 1.0
  %v6338 = vrcp.pop %v6335
  %v6339 = vmul.f32 1.0, %v6338
  %v6340 = vrcp.pop %v6336
  %v6341 = vmul.f32 1.0, %v6340
  %v6342 = vrcp.pop %v6337
  %v6343 = vmul.f32 1.0, %v6342
  %v6344 = vtanh.pop %v6325
  %v6345 = vmul.f32 %v6341, %v6071
  %v6346 = vmul.f32 %v6339, %v6344
  %v6347 = vadd.f32 %v6345, %v6346
  %v6348 = vtanh.pop %v6347
  %v6349 = vmul.f32 %v6343, %v6348
  %6350 = vst [vmem:[#allocation3 + $0x8] sm:$0xff] %v6349
  %v6351 = vld [vmem:[#allocation2 + $0x40] sm:$0xff]
  %v6352 = vld [vmem:[#allocation2 + $0x48] sm:$0xff]
  %v6353 = vld [vmem:[#allocation2 + $0x50] sm:$0xff]
  %v6354 = vld [vmem:[#allocation2 + $0x58] sm:$0xff]
  %v6355 = vpack.c.bf16 %v6349, %v6349
  %6356 = vmatprep.subr.bf16.mxu0 %v6177
  %6357 = vmatpush1.bf16.msra.mxu0 %v6176
  %6358 = vmatprep.subr.bf16.mxu0 %v6181
  %6359 = vmatpush1.bf16.msra.mxu0 %v6180
  %6360 = vmatprep.subr.bf16.mxu0 %v6185
  %6361 = vmatpush1.bf16.msra.mxu0 %v6184
  %6362 = vmatprep.subr.bf16.mxu0 %v6189
  %6363 = vmatpush1.bf16.msra.mxu0 %v6188
  %6364 = vmatprep.subr.bf16.mxu0 %v6193
  %6365 = vmatpush1.bf16.msra.mxu0 %v6192
  %6366 = vmatprep.subr.bf16.mxu0 %v6197
  %6367 = vmatpush1.bf16.msra.mxu0 %v6196
  %6368 = vmatprep.subr.bf16.mxu0 %v6201
  %6369 = vmatpush1.bf16.msra.mxu0 %v6200
  %6370 = vmatprep.subr.bf16.mxu0 %v6205
  %6371 = vmatpush1.bf16.msra.mxu0 %v6204
  %6372 = vmatprep.subr.bf16.mxu0 0
  %6373 = vmatpush1.bf16.msra.mxu0 0
  %6374 = vmatprep.subr.bf16.mxu0 0
  %6375 = vmatpush1.bf16.msra.mxu0 0
  %6376 = vmatprep.subr.bf16.mxu0 0
  %6377 = vmatpush1.bf16.msra.mxu0 0
  %6378 = vmatprep.subr.bf16.mxu0 0
  %6379 = vmatpush1.bf16.msra.mxu0 0
  %6380 = vmatprep.subr.bf16.mxu0 0
  %6381 = vmatpush1.bf16.msra.mxu0 0
  %6382 = vmatprep.subr.bf16.mxu0 0
  %6383 = vmatpush1.bf16.msra.mxu0 0
  %6384 = vmatprep.subr.bf16.mxu0 0
  %6385 = vmatpush1.bf16.msra.mxu0 0
  %6386 = vmatprep.subr.bf16.mxu0 0
  %6387 = vmatpush1.bf16.msra.mxu0 0
  %6388 = vmatprep.mubr.bf16.mxu0 0
  %6389 = vmatmul.mubr.bf16.gmra.mrb[0].mxu0 %v6355
  %v6390 = vpop.f32.mrb[0].mxu0
  %v6391 = vadd.f32 0.0, %v6390
  %v6392 = vpop.f32.mrb[0].mxu0
  %v6393 = vadd.f32 0.0, %v6392
  %v6394 = vpop.f32.mrb[0].mxu0
  %v6395 = vpop.f32.mrb[0].mxu0
  %6396 = vdwg.mxu0
  %6397 = vmatprep.subr.bf16.mxu0 %v6179
  %6398 = vmatpush1.bf16.msra.mxu0 %v6178
  %6399 = vmatprep.subr.bf16.mxu0 %v6183
  %6400 = vmatpush1.bf16.msra.mxu0 %v6182
  %6401 = vmatprep.subr.bf16.mxu0 %v6187
  %6402 = vmatpush1.bf16.msra.mxu0 %v6186
  %6403 = vmatprep.subr.bf16.mxu0 %v6191
  %6404 = vmatpush1.bf16.msra.mxu0 %v6190
  %6405 = vmatprep.subr.bf16.mxu0 %v6195
  %6406 = vmatpush1.bf16.msra.mxu0 %v6194
  %6407 = vmatprep.subr.bf16.mxu0 %v6199
  %6408 = vmatpush1.bf16.msra.mxu0 %v6198
  %6409 = vmatprep.subr.bf16.mxu0 %v6203
  %6410 = vmatpush1.bf16.msra.mxu0 %v6202
  %6411 = vmatprep.subr.bf16.mxu0 %v6207
  %6412 = vmatpush1.bf16.msra.mxu0 %v6206
  %6413 = vmatprep.subr.bf16.mxu0 0
  %6414 = vmatpush1.bf16.msra.mxu0 0
  %6415 = vmatprep.subr.bf16.mxu0 0
  %6416 = vmatpush1.bf16.msra.mxu0 0
  %6417 = vmatprep.subr.bf16.mxu0 0
  %6418 = vmatpush1.bf16.msra.mxu0 0
  %6419 = vmatprep.subr.bf16.mxu0 0
  %6420 = vmatpush1.bf16.msra.mxu0 0
  %6421 = vmatprep.subr.bf16.mxu0 0
  %6422 = vmatpush1.bf16.msra.mxu0 0
  %6423 = vmatprep.subr.bf16.mxu0 0
  %6424 = vmatpush1.bf16.msra.mxu0 0
  %6425 = vmatprep.subr.bf16.mxu0 0
  %6426 = vmatpush1.bf16.msra.mxu0 0
  %6427 = vmatprep.subr.bf16.mxu0 0
  %6428 = vmatpush1.bf16.msra.mxu0 0
  %6429 = vmatprep.mubr.bf16.mxu0 0
  %6430 = vmatmul.mubr.bf16.gmra.mrb[0].mxu0 %v6355
  %v6431 = vpop.f32.mrb[0].mxu0
  %v6432 = vadd.f32 0.0, %v6431
  %v6433 = vpop.f32.mrb[0].mxu0
  %v6434 = vadd.f32 0.0, %v6433
  %v6435 = vpop.f32.mrb[0].mxu0
  %v6436 = vpop.f32.mrb[0].mxu0
  %6437 = vdwg.mxu0
  %v6438 = vadd.f32 %v6351, %v6391
  %v6439 = vadd.f32 %v6352, %v6393
  %v6440 = vadd.f32 %v6353, %v6432
  %v6441 = vadd.f32 %v6354, %v6434
  %v6442 = vxor.u32 %v6438, 2147483648
  %v6443 = vxor.u32 %v6439, 2147483648
  %v6444 = vxor.u32 %v6440, 2147483648
  %v6445 = vmul.f32 %v6442, 1.442695
  %v6446 = vpow.pop %v6445
  %v6447 = vmul.f32 %v6443, 1.442695
  %v6448 = vpow.pop %v6447
  %v6449 = vmul.f32 %v6444, 1.442695
  %v6450 = vpow.pop %v6449
  %v6451 = vadd.f32 %v6446, 1.0
  %v6452 = vadd.f32 %v6448, 1.0
  %v6453 = vadd.f32 %v6450, 1.0
  %v6454 = vrcp.pop %v6451
  %v6455 = vmul.f32 1.0, %v6454
  %v6456 = vrcp.pop %v6452
  %v6457 = vmul.f32 1.0, %v6456
  %v6458 = vrcp.pop %v6453
  %v6459 = vmul.f32 1.0, %v6458
  %v6460 = vtanh.pop %v6441
  %v6461 = vmul.f32 %v6457, %v6347
  %v6462 = vmul.f32 %v6455, %v6460
  %v6463 = vadd.f32 %v6461, %v6462
  %v6464 = vtanh.pop %v6463
  %v6465 = vmul.f32 %v6459, %v6464
  %6466 = vst [vmem:[#allocation3 + $0x10] sm:$0xff] %v6465
  %v6467 = vld [vmem:[#allocation2 + $0x60] sm:$0xff]
  %v6468 = vld [vmem:[#allocation2 + $0x68] sm:$0xff]
  %v6469 = vld [vmem:[#allocation2 + $0x70] sm:$0xff]
  %v6470 = vld [vmem:[#allocation2 + $0x78] sm:$0xff]
  %v6471 = vpack.c.bf16 %v6465, %v6465
  %6472 = vmatprep.subr.bf16.mxu0 %v6177
  %6473 = vmatpush1.bf16.msra.mxu0 %v6176
  %6474 = vmatprep.subr.bf16.mxu0 %v6181
  %6475 = vmatpush1.bf16.msra.mxu0 %v6180
  %6476 = vmatprep.subr.bf16.mxu0 %v6185
  %6477 = vmatpush1.bf16.msra.mxu0 %v6184
  %6478 = vmatprep.subr.bf16.mxu0 %v6189
  %6479 = vmatpush1.bf16.msra.mxu0 %v6188
  %6480 = vmatprep.subr.bf16.mxu0 %v6193
  %6481 = vmatpush1.bf16.msra.mxu0 %v6192
  %6482 = vmatprep.subr.bf16.mxu0 %v6197
  %6483 = vmatpush1.bf16.msra.mxu0 %v6196
  %6484 = vmatprep.subr.bf16.mxu0 %v6201
  %6485 = vmatpush1.bf16.msra.mxu0 %v6200
  %6486 = vmatprep.subr.bf16.mxu0 %v6205
  %6487 = vmatpush1.bf16.msra.mxu0 %v6204
  %6488 = vmatprep.subr.bf16.mxu0 0
  %6489 = vmatpush1.bf16.msra.mxu0 0
  %6490 = vmatprep.subr.bf16.mxu0 0
  %6491 = vmatpush1.bf16.msra.mxu0 0
  %6492 = vmatprep.subr.bf16.mxu0 0
  %6493 = vmatpush1.bf16.msra.mxu0 0
  %6494 = vmatprep.subr.bf16.mxu0 0
  %6495 = vmatpush1.bf16.msra.mxu0 0
  %6496 = vmatprep.subr.bf16.mxu0 0
  %6497 = vmatpush1.bf16.msra.mxu0 0
  %6498 = vmatprep.subr.bf16.mxu0 0
  %6499 = vmatpush1.bf16.msra.mxu0 0
  %6500 = vmatprep.subr.bf16.mxu0 0
  %6501 = vmatpush1.bf16.msra.mxu0 0
  %6502 = vmatprep.subr.bf16.mxu0 0
  %6503 = vmatpush1.bf16.msra.mxu0 0
  %6504 = vmatprep.mubr.bf16.mxu0 0
  %6505 = vmatmul.mubr.bf16.gmra.mrb[0].mxu0 %v6471
  %v6506 = vpop.f32.mrb[0].mxu0
  %v6507 = vadd.f32 0.0, %v6506
  %v6508 = vpop.f32.mrb[0].mxu0
  %v6509 = vadd.f32 0.0, %v6508
  %v6510 = vpop.f32.mrb[0].mxu0
  %v6511 = vpop.f32.mrb[0].mxu0
  %6512 = vdwg.mxu0
  %6513 = vmatprep.subr.bf16.mxu0 %v6179
  %6514 = vmatpush1.bf16.msra.mxu0 %v6178
  %6515 = vmatprep.subr.bf16.mxu0 %v6183
  %6516 = vmatpush1.bf16.msra.mxu0 %v6182
  %6517 = vmatprep.subr.bf16.mxu0 %v6187
  %6518 = vmatpush1.bf16.msra.mxu0 %v6186
  %6519 = vmatprep.subr.bf16.mxu0 %v6191
  %6520 = vmatpush1.bf16.msra.mxu0 %v6190
  %6521 = vmatprep.subr.bf16.mxu0 %v6195
  %6522 = vmatpush1.bf16.msra.mxu0 %v6194
  %6523 = vmatprep.subr.bf16.mxu0 %v6199
  %6524 = vmatpush1.bf16.msra.mxu0 %v6198
  %6525 = vmatprep.subr.bf16.mxu0 %v6203
  %6526 = vmatpush1.bf16.msra.mxu0 %v6202
  %6527 = vmatprep.subr.bf16.mxu0 %v6207
  %6528 = vmatpush1.bf16.msra.mxu0 %v6206
  %6529 = vmatprep.subr.bf16.mxu0 0
  %6530 = vmatpush1.bf16.msra.mxu0 0
  %6531 = vmatprep.subr.bf16.mxu0 0
  %6532 = vmatpush1.bf16.msra.mxu0 0
  %6533 = vmatprep.subr.bf16.mxu0 0
  %6534 = vmatpush1.bf16.msra.mxu0 0
  %6535 = vmatprep.subr.bf16.mxu0 0
  %6536 = vmatpush1.bf16.msra.mxu0 0
  %6537 = vmatprep.subr.bf16.mxu0 0
  %6538 = vmatpush1.bf16.msra.mxu0 0
  %6539 = vmatprep.subr.bf16.mxu0 0
  %6540 = vmatpush1.bf16.msra.mxu0 0
  %6541 = vmatprep.subr.bf16.mxu0 0
  %6542 = vmatpush1.bf16.msra.mxu0 0
  %6543 = vmatprep.subr.bf16.mxu0 0
  %6544 = vmatpush1.bf16.msra.mxu0 0
  %6545 = vmatprep.mubr.bf16.mxu0 0
  %6546 = vmatmul.mubr.bf16.gmra.mrb[0].mxu0 %v6471
  %v6547 = vpop.f32.mrb[0].mxu0
  %v6548 = vadd.f32 0.0, %v6547
  %v6549 = vpop.f32.mrb[0].mxu0
  %v6550 = vadd.f32 0.0, %v6549
  %v6551 = vpop.f32.mrb[0].mxu0
  %v6552 = vpop.f32.mrb[0].mxu0
  %6553 = vdwg.mxu0
  %v6554 = vadd.f32 %v6467, %v6507
  %v6555 = vadd.f32 %v6468, %v6509
  %v6556 = vadd.f32 %v6469, %v6548
  %v6557 = vadd.f32 %v6470, %v6550
  %v6558 = vxor.u32 %v6554, 2147483648
  %v6559 = vxor.u32 %v6555, 2147483648
  %v6560 = vxor.u32 %v6556, 2147483648
  %v6561 = vmul.f32 %v6558, 1.442695
  %v6562 = vpow.pop %v6561
  %v6563 = vmul.f32 %v6559, 1.442695
  %v6564 = vpow.pop %v6563
  %v6565 = vmul.f32 %v6560, 1.442695
  %v6566 = vpow.pop %v6565
  %v6567 = vadd.f32 %v6562, 1.0
  %v6568 = vadd.f32 %v6564, 1.0
  %v6569 = vadd.f32 %v6566, 1.0
  %v6570 = vrcp.pop %v6567
  %v6571 = vmul.f32 1.0, %v6570
  %v6572 = vrcp.pop %v6568
  %v6573 = vmul.f32 1.0, %v6572
  %v6574 = vrcp.pop %v6569
  %v6575 = vmul.f32 1.0, %v6574
  %v6576 = vtanh.pop %v6557
  %v6577 = vmul.f32 %v6573, %v6463
  %v6578 = vmul.f32 %v6571, %v6576
  %v6579 = vadd.f32 %v6577, %v6578
  %v6580 = vtanh.pop %v6579
  %v6581 = vmul.f32 %v6575, %v6580
  %6582 = vst [vmem:[#allocation3 + $0x18] sm:$0xff] %v6581
  %v6583 = vld [vmem:[#allocation2 + $0x80] sm:$0xff]
  %v6584 = vld [vmem:[#allocation2 + $0x88] sm:$0xff]
  %v6585 = vld [vmem:[#allocation2 + $0x90] sm:$0xff]
  %v6586 = vld [vmem:[#allocation2 + $0x98] sm:$0xff]
  %v6587 = vpack.c.bf16 %v6581, %v6581
  %6588 = vmatprep.subr.bf16.mxu0 %v6177
  %6589 = vmatpush1.bf16.msra.mxu0 %v6176
  %6590 = vmatprep.subr.bf16.mxu0 %v6181
  %6591 = vmatpush1.bf16.msra.mxu0 %v6180
  %6592 = vmatprep.subr.bf16.mxu0 %v6185
  %6593 = vmatpush1.bf16.msra.mxu0 %v6184
  %6594 = vmatprep.subr.bf16.mxu0 %v6189
  %6595 = vmatpush1.bf16.msra.mxu0 %v6188
  %6596 = vmatprep.subr.bf16.mxu0 %v6193
  %6597 = vmatpush1.bf16.msra.mxu0 %v6192
  %6598 = vmatprep.subr.bf16.mxu0 %v6197
  %6599 = vmatpush1.bf16.msra.mxu0 %v6196
  %6600 = vmatprep.subr.bf16.mxu0 %v6201
  %6601 = vmatpush1.bf16.msra.mxu0 %v6200
  %6602 = vmatprep.subr.bf16.mxu0 %v6205
  %6603 = vmatpush1.bf16.msra.mxu0 %v6204
  %6604 = vmatprep.subr.bf16.mxu0 0
  %6605 = vmatpush1.bf16.msra.mxu0 0
  %6606 = vmatprep.subr.bf16.mxu0 0
  %6607 = vmatpush1.bf16.msra.mxu0 0
  %6608 = vmatprep.subr.bf16.mxu0 0
  %6609 = vmatpush1.bf16.msra.mxu0 0
  %6610 = vmatprep.subr.bf16.mxu0 0
  %6611 = vmatpush1.bf16.msra.mxu0 0
  %6612 = vmatprep.subr.bf16.mxu0 0
  %6613 = vmatpush1.bf16.msra.mxu0 0
  %6614 = vmatprep.subr.bf16.mxu0 0
  %6615 = vmatpush1.bf16.msra.mxu0 0
  %6616 = vmatprep.subr.bf16.mxu0 0
  %6617 = vmatpush1.bf16.msra.mxu0 0
  %6618 = vmatprep.subr.bf16.mxu0 0
  %6619 = vmatpush1.bf16.msra.mxu0 0
  %6620 = vmatprep.mubr.bf16.mxu0 0
  %6621 = vmatmul.mubr.bf16.gmra.mrb[0].mxu0 %v6587
  %v6622 = vpop.f32.mrb[0].mxu0
  %v6623 = vadd.f32 0.0, %v6622
  %v6624 = vpop.f32.mrb[0].mxu0
  %v6625 = vadd.f32 0.0, %v6624
  %v6626 = vpop.f32.mrb[0].mxu0
  %v6627 = vpop.f32.mrb[0].mxu0
  %6628 = vdwg.mxu0
  %6629 = vmatprep.subr.bf16.mxu0 %v6179
  %6630 = vmatpush1.bf16.msra.mxu0 %v6178
  %6631 = vmatprep.subr.bf16.mxu0 %v6183
  %6632 = vmatpush1.bf16.msra.mxu0 %v6182
  %6633 = vmatprep.subr.bf16.mxu0 %v6187
  %6634 = vmatpush1.bf16.msra.mxu0 %v6186
  %6635 = vmatprep.subr.bf16.mxu0 %v6191
  %6636 = vmatpush1.bf16.msra.mxu0 %v6190
  %6637 = vmatprep.subr.bf16.mxu0 %v6195
  %6638 = vmatpush1.bf16.msra.mxu0 %v6194
  %6639 = vmatprep.subr.bf16.mxu0 %v6199
  %6640 = vmatpush1.bf16.msra.mxu0 %v6198
  %6641 = vmatprep.subr.bf16.mxu0 %v6203
  %6642 = vmatpush1.bf16.msra.mxu0 %v6202
  %6643 = vmatprep.subr.bf16.mxu0 %v6207
  %6644 = vmatpush1.bf16.msra.mxu0 %v6206
  %6645 = vmatprep.subr.bf16.mxu0 0
  %6646 = vmatpush1.bf16.msra.mxu0 0
  %6647 = vmatprep.subr.bf16.mxu0 0
  %6648 = vmatpush1.bf16.msra.mxu0 0
  %6649 = vmatprep.subr.bf16.mxu0 0
  %6650 = vmatpush1.bf16.msra.mxu0 0
  %6651 = vmatprep.subr.bf16.mxu0 0
  %6652 = vmatpush1.bf16.msra.mxu0 0
  %6653 = vmatprep.subr.bf16.mxu0 0
  %6654 = vmatpush1.bf16.msra.mxu0 0
  %6655 = vmatprep.subr.bf16.mxu0 0
  %6656 = vmatpush1.bf16.msra.mxu0 0
  %6657 = vmatprep.subr.bf16.mxu0 0
  %6658 = vmatpush1.bf16.msra.mxu0 0
  %6659 = vmatprep.subr.bf16.mxu0 0
  %6660 = vmatpush1.bf16.msra.mxu0 0
  %6661 = vmatprep.mubr.bf16.mxu0 0
  %6662 = vmatmul.mubr.bf16.gmra.mrb[0].mxu0 %v6587
  %v6663 = vpop.f32.mrb[0].mxu0
  %v6664 = vadd.f32 0.0, %v6663
  %v6665 = vpop.f32.mrb[0].mxu0
  %v6666 = vadd.f32 0.0, %v6665
  %v6667 = vpop.f32.mrb[0].mxu0
  %v6668 = vpop.f32.mrb[0].mxu0
  %6669 = vdwg.mxu0
  %v6670 = vadd.f32 %v6583, %v6623
  %v6671 = vadd.f32 %v6584, %v6625
  %v6672 = vadd.f32 %v6585, %v6664
  %v6673 = vadd.f32 %v6586, %v6666
  %v6674 = vxor.u32 %v6670, 2147483648
  %v6675 = vxor.u32 %v6671, 2147483648
  %v6676 = vxor.u32 %v6672, 2147483648
  %v6677 = vmul.f32 %v6674, 1.442695
  %v6678 = vpow.pop %v6677
  %v6679 = vmul.f32 %v6675, 1.442695
  %v6680 = vpow.pop %v6679
  %v6681 = vmul.f32 %v6676, 1.442695
  %v6682 = vpow.pop %v6681
  %v6683 = vadd.f32 %v6678, 1.0
  %v6684 = vadd.f32 %v6680, 1.0
  %v6685 = vadd.f32 %v6682, 1.0
  %v6686 = vrcp.pop %v6683
  %v6687 = vmul.f32 1.0, %v6686
  %v6688 = vrcp.pop %v6684
  %v6689 = vmul.f32 1.0, %v6688
  %v6690 = vrcp.pop %v6685
  %v6691 = vmul.f32 1.0, %v6690
  %v6692 = vtanh.pop %v6673
  %v6693 = vmul.f32 %v6689, %v6579
  %v6694 = vmul.f32 %v6687, %v6692
  %v6695 = vadd.f32 %v6693, %v6694
  %v6696 = vtanh.pop %v6695
  %v6697 = vmul.f32 %v6691, %v6696
  %6698 = vst [vmem:[#allocation3 + $0x20] sm:$0xff] %v6697
  %v6699 = vld [vmem:[#allocation2 + $0xa0] sm:$0xff]
  %v6700 = vld [vmem:[#allocation2 + $0xa8] sm:$0xff]
  %v6701 = vld [vmem:[#allocation2 + $0xb0] sm:$0xff]
  %v6702 = vld [vmem:[#allocation2 + $0xb8] sm:$0xff]
  %v6703 = vpack.c.bf16 %v6697, %v6697
  %6704 = vmatprep.subr.bf16.mxu0 %v6177
  %6705 = vmatpush1.bf16.msra.mxu0 %v6176
  %6706 = vmatprep.subr.bf16.mxu0 %v6181
  %6707 = vmatpush1.bf16.msra.mxu0 %v6180
  %6708 = vmatprep.subr.bf16.mxu0 %v6185
  %6709 = vmatpush1.bf16.msra.mxu0 %v6184
  %6710 = vmatprep.subr.bf16.mxu0 %v6189
  %6711 = vmatpush1.bf16.msra.mxu0 %v6188
  %6712 = vmatprep.subr.bf16.mxu0 %v6193
  %6713 = vmatpush1.bf16.msra.mxu0 %v6192
  %6714 = vmatprep.subr.bf16.mxu0 %v6197
  %6715 = vmatpush1.bf16.msra.mxu0 %v6196
  %6716 = vmatprep.subr.bf16.mxu0 %v6201
  %6717 = vmatpush1.bf16.msra.mxu0 %v6200
  %6718 = vmatprep.subr.bf16.mxu0 %v6205
  %6719 = vmatpush1.bf16.msra.mxu0 %v6204
  %6720 = vmatprep.subr.bf16.mxu0 0
  %6721 = vmatpush1.bf16.msra.mxu0 0
  %6722 = vmatprep.subr.bf16.mxu0 0
  %6723 = vmatpush1.bf16.msra.mxu0 0
  %6724 = vmatprep.subr.bf16.mxu0 0
  %6725 = vmatpush1.bf16.msra.mxu0 0
  %6726 = vmatprep.subr.bf16.mxu0 0
  %6727 = vmatpush1.bf16.msra.mxu0 0
  %6728 = vmatprep.subr.bf16.mxu0 0
  %6729 = vmatpush1.bf16.msra.mxu0 0
  %6730 = vmatprep.subr.bf16.mxu0 0
  %6731 = vmatpush1.bf16.msra.mxu0 0
  %6732 = vmatprep.subr.bf16.mxu0 0
  %6733 = vmatpush1.bf16.msra.mxu0 0
  %6734 = vmatprep.subr.bf16.mxu0 0
  %6735 = vmatpush1.bf16.msra.mxu0 0
  %6736 = vmatprep.mubr.bf16.mxu0 0
  %6737 = vmatmul.mubr.bf16.gmra.mrb[0].mxu0 %v6703
  %v6738 = vpop.f32.mrb[0].mxu0
  %v6739 = vadd.f32 0.0, %v6738
  %v6740 = vpop.f32.mrb[0].mxu0
  %v6741 = vadd.f32 0.0, %v6740
  %v6742 = vpop.f32.mrb[0].mxu0
  %v6743 = vpop.f32.mrb[0].mxu0
  %6744 = vdwg.mxu0
  %6745 = vmatprep.subr.bf16.mxu0 %v6179
  %6746 = vmatpush1.bf16.msra.mxu0 %v6178
  %6747 = vmatprep.subr.bf16.mxu0 %v6183
  %6748 = vmatpush1.bf16.msra.mxu0 %v6182
  %6749 = vmatprep.subr.bf16.mxu0 %v6187
  %6750 = vmatpush1.bf16.msra.mxu0 %v6186
  %6751 = vmatprep.subr.bf16.mxu0 %v6191
  %6752 = vmatpush1.bf16.msra.mxu0 %v6190
  %6753 = vmatprep.subr.bf16.mxu0 %v6195
  %6754 = vmatpush1.bf16.msra.mxu0 %v6194
  %6755 = vmatprep.subr.bf16.mxu0 %v6199
  %6756 = vmatpush1.bf16.msra.mxu0 %v6198
  %6757 = vmatprep.subr.bf16.mxu0 %v6203
  %6758 = vmatpush1.bf16.msra.mxu0 %v6202
  %6759 = vmatprep.subr.bf16.mxu0 %v6207
  %6760 = vmatpush1.bf16.msra.mxu0 %v6206
  %6761 = vmatprep.subr.bf16.mxu0 0
  %6762 = vmatpush1.bf16.msra.mxu0 0
  %6763 = vmatprep.subr.bf16.mxu0 0
  %6764 = vmatpush1.bf16.msra.mxu0 0
  %6765 = vmatprep.subr.bf16.mxu0 0
  %6766 = vmatpush1.bf16.msra.mxu0 0
  %6767 = vmatprep.subr.bf16.mxu0 0
  %6768 = vmatpush1.bf16.msra.mxu0 0
  %6769 = vmatprep.subr.bf16.mxu0 0
  %6770 = vmatpush1.bf16.msra.mxu0 0
  %6771 = vmatprep.subr.bf16.mxu0 0
  %6772 = vmatpush1.bf16.msra.mxu0 0
  %6773 = vmatprep.subr.bf16.mxu0 0
  %6774 = vmatpush1.bf16.msra.mxu0 0
  %6775 = vmatprep.subr.bf16.mxu0 0
  %6776 = vmatpush1.bf16.msra.mxu0 0
  %6777 = vmatprep.mubr.bf16.mxu0 0
  %6778 = vmatmul.mubr.bf16.gmra.mrb[0].mxu0 %v6703
  %v6779 = vpop.f32.mrb[0].mxu0
  %v6780 = vadd.f32 0.0, %v6779
  %v6781 = vpop.f32.mrb[0].mxu0
  %v6782 = vadd.f32 0.0, %v6781
  %v6783 = vpop.f32.mrb[0].mxu0
  %v6784 = vpop.f32.mrb[0].mxu0
  %6785 = vdwg.mxu0
  %v6786 = vadd.f32 %v6699, %v6739
  %v6787 = vadd.f32 %v6700, %v6741
  %v6788 = vadd.f32 %v6701, %v6780
  %v6789 = vadd.f32 %v6702, %v6782
  %v6790 = vxor.u32 %v6786, 2147483648
  %v6791 = vxor.u32 %v6787, 2147483648
  %v6792 = vxor.u32 %v6788, 2147483648
  %v6793 = vmul.f32 %v6790, 1.442695
  %v6794 = vpow.pop %v6793
  %v6795 = vmul.f32 %v6791, 1.442695
  %v6796 = vpow.pop %v6795
  %v6797 = vmul.f32 %v6792, 1.442695
  %v6798 = vpow.pop %v6797
  %v6799 = vadd.f32 %v6794, 1.0
  %v6800 = vadd.f32 %v6796, 1.0
  %v6801 = vadd.f32 %v6798, 1.0
  %v6802 = vrcp.pop %v6799
  %v6803 = vmul.f32 1.0, %v6802
  %v6804 = vrcp.pop %v6800
  %v6805 = vmul.f32 1.0, %v6804
  %v6806 = vrcp.pop %v6801
  %v6807 = vmul.f32 1.0, %v6806
  %v6808 = vtanh.pop %v6789
  %v6809 = vmul.f32 %v6805, %v6695
  %v6810 = vmul.f32 %v6803, %v6808
  %v6811 = vadd.f32 %v6809, %v6810
  %v6812 = vtanh.pop %v6811
  %v6813 = vmul.f32 %v6807, %v6812
  %6814 = vst [vmem:[#allocation3 + $0x28] sm:$0xff] %v6813
  %v6815 = vld [vmem:[#allocation2 + $0xc0] sm:$0xff]
  %v6816 = vld [vmem:[#allocation2 + $0xc8] sm:$0xff]
  %v6817 = vld [vmem:[#allocation2 + $0xd0] sm:$0xff]
  %v6818 = vld [vmem:[#allocation2 + $0xd8] sm:$0xff]
  %v6819 = vpack.c.bf16 %v6813, %v6813
  %6820 = vmatprep.subr.bf16.mxu0 %v6177
  %6821 = vmatpush1.bf16.msra.mxu0 %v6176
  %6822 = vmatprep.subr.bf16.mxu0 %v6181
  %6823 = vmatpush1.bf16.msra.mxu0 %v6180
  %6824 = vmatprep.subr.bf16.mxu0 %v6185
  %6825 = vmatpush1.bf16.msra.mxu0 %v6184
  %6826 = vmatprep.subr.bf16.mxu0 %v6189
  %6827 = vmatpush1.bf16.msra.mxu0 %v6188
  %6828 = vmatprep.subr.bf16.mxu0 %v6193
  %6829 = vmatpush1.bf16.msra.mxu0 %v6192
  %6830 = vmatprep.subr.bf16.mxu0 %v6197
  %6831 = vmatpush1.bf16.msra.mxu0 %v6196
  %6832 = vmatprep.subr.bf16.mxu0 %v6201
  %6833 = vmatpush1.bf16.msra.mxu0 %v6200
  %6834 = vmatprep.subr.bf16.mxu0 %v6205
  %6835 = vmatpush1.bf16.msra.mxu0 %v6204
  %6836 = vmatprep.subr.bf16.mxu0 0
  %6837 = vmatpush1.bf16.msra.mxu0 0
  %6838 = vmatprep.subr.bf16.mxu0 0
  %6839 = vmatpush1.bf16.msra.mxu0 0
  %6840 = vmatprep.subr.bf16.mxu0 0
  %6841 = vmatpush1.bf16.msra.mxu0 0
  %6842 = vmatprep.subr.bf16.mxu0 0
  %6843 = vmatpush1.bf16.msra.mxu0 0
  %6844 = vmatprep.subr.bf16.mxu0 0
  %6845 = vmatpush1.bf16.msra.mxu0 0
  %6846 = vmatprep.subr.bf16.mxu0 0
  %6847 = vmatpush1.bf16.msra.mxu0 0
  %6848 = vmatprep.subr.bf16.mxu0 0
  %6849 = vmatpush1.bf16.msra.mxu0 0
  %6850 = vmatprep.subr.bf16.mxu0 0
  %6851 = vmatpush1.bf16.msra.mxu0 0
  %6852 = vmatprep.mubr.bf16.mxu0 0
  %6853 = vmatmul.mubr.bf16.gmra.mrb[0].mxu0 %v6819
  %v6854 = vpop.f32.mrb[0].mxu0
  %v6855 = vadd.f32 0.0, %v6854
  %v6856 = vpop.f32.mrb[0].mxu0
  %v6857 = vadd.f32 0.0, %v6856
  %v6858 = vpop.f32.mrb[0].mxu0
  %v6859 = vpop.f32.mrb[0].mxu0
  %6860 = vdwg.mxu0
  %6861 = vmatprep.subr.bf16.mxu0 %v6179
  %6862 = vmatpush1.bf16.msra.mxu0 %v6178
  %6863 = vmatprep.subr.bf16.mxu0 %v6183
  %6864 = vmatpush1.bf16.msra.mxu0 %v6182
  %6865 = vmatprep.subr.bf16.mxu0 %v6187
  %6866 = vmatpush1.bf16.msra.mxu0 %v6186
  %6867 = vmatprep.subr.bf16.mxu0 %v6191
  %6868 = vmatpush1.bf16.msra.mxu0 %v6190
  %6869 = vmatprep.subr.bf16.mxu0 %v6195
  %6870 = vmatpush1.bf16.msra.mxu0 %v6194
  %6871 = vmatprep.subr.bf16.mxu0 %v6199
  %6872 = vmatpush1.bf16.msra.mxu0 %v6198
  %6873 = vmatprep.subr.bf16.mxu0 %v6203
  %6874 = vmatpush1.bf16.msra.mxu0 %v6202
  %6875 = vmatprep.subr.bf16.mxu0 %v6207
  %6876 = vmatpush1.bf16.msra.mxu0 %v6206
  %6877 = vmatprep.subr.bf16.mxu0 0
  %6878 = vmatpush1.bf16.msra.mxu0 0
  %6879 = vmatprep.subr.bf16.mxu0 0
  %6880 = vmatpush1.bf16.msra.mxu0 0
  %6881 = vmatprep.subr.bf16.mxu0 0
  %6882 = vmatpush1.bf16.msra.mxu0 0
  %6883 = vmatprep.subr.bf16.mxu0 0
  %6884 = vmatpush1.bf16.msra.mxu0 0
  %6885 = vmatprep.subr.bf16.mxu0 0
  %6886 = vmatpush1.bf16.msra.mxu0 0
  %6887 = vmatprep.subr.bf16.mxu0 0
  %6888 = vmatpush1.bf16.msra.mxu0 0
  %6889 = vmatprep.subr.bf16.mxu0 0
  %6890 = vmatpush1.bf16.msra.mxu0 0
  %6891 = vmatprep.subr.bf16.mxu0 0
  %6892 = vmatpush1.bf16.msra.mxu0 0
  %6893 = vmatprep.mubr.bf16.mxu0 0
  %6894 = vmatmul.mubr.bf16.gmra.mrb[0].mxu0 %v6819
  %v6895 = vpop.f32.mrb[0].mxu0
  %v6896 = vadd.f32 0.0, %v6895
  %v6897 = vpop.f32.mrb[0].mxu0
  %v6898 = vadd.f32 0.0, %v6897
  %v6899 = vpop.f32.mrb[0].mxu0
  %v6900 = vpop.f32.mrb[0].mxu0
  %6901 = vdwg.mxu0
  %v6902 = vadd.f32 %v6815, %v6855
  %v6903 = vadd.f32 %v6816, %v6857
  %v6904 = vadd.f32 %v6817, %v6896
  %v6905 = vadd.f32 %v6818, %v6898
  %v6906 = vxor.u32 %v6902, 2147483648
  %v6907 = vxor.u32 %v6903, 2147483648
  %v6908 = vxor.u32 %v6904, 2147483648
  %v6909 = vmul.f32 %v6906, 1.442695
  %v6910 = vpow.pop %v6909
  %v6911 = vmul.f32 %v6907, 1.442695
  %v6912 = vpow.pop %v6911
  %v6913 = vmul.f32 %v6908, 1.442695
  %v6914 = vpow.pop %v6913
  %v6915 = vadd.f32 %v6910, 1.0
  %v6916 = vadd.f32 %v6912, 1.0
  %v6917 = vadd.f32 %v6914, 1.0
  %v6918 = vrcp.pop %v6915
  %v6919 = vmul.f32 1.0, %v6918
  %v6920 = vrcp.pop %v6916
  %v6921 = vmul.f32 1.0, %v6920
  %v6922 = vrcp.pop %v6917
  %v6923 = vmul.f32 1.0, %v6922
  %v6924 = vtanh.pop %v6905
  %v6925 = vmul.f32 %v6921, %v6811
  %v6926 = vmul.f32 %v6919, %v6924
  %v6927 = vadd.f32 %v6925, %v6926
  %v6928 = vtanh.pop %v6927
  %v6929 = vmul.f32 %v6923, %v6928
  %6930 = vst [vmem:[#allocation3 + $0x30] sm:$0xff] %v6929
  %v6931 = vld [vmem:[#allocation2 + $0xe0] sm:$0xff]
  %v6932 = vld [vmem:[#allocation2 + $0xe8] sm:$0xff]
  %v6933 = vld [vmem:[#allocation2 + $0xf0] sm:$0xff]
  %v6934 = vld [vmem:[#allocation2 + $0xf8] sm:$0xff]
  %v6935 = vpack.c.bf16 %v6929, %v6929
  %6936 = vmatprep.subr.bf16.mxu0 %v6177
  %6937 = vmatpush1.bf16.msra.mxu0 %v6176
  %6938 = vmatprep.subr.bf16.mxu0 %v6181
  %6939 = vmatpush1.bf16.msra.mxu0 %v6180
  %6940 = vmatprep.subr.bf16.mxu0 %v6185
  %6941 = vmatpush1.bf16.msra.mxu0 %v6184
  %6942 = vmatprep.subr.bf16.mxu0 %v6189
  %6943 = vmatpush1.bf16.msra.mxu0 %v6188
  %6944 = vmatprep.subr.bf16.mxu0 %v6193
  %6945 = vmatpush1.bf16.msra.mxu0 %v6192
  %6946 = vmatprep.subr.bf16.mxu0 %v6197
  %6947 = vmatpush1.bf16.msra.mxu0 %v6196
  %6948 = vmatprep.subr.bf16.mxu0 %v6201
  %6949 = vmatpush1.bf16.msra.mxu0 %v6200
  %6950 = vmatprep.subr.bf16.mxu0 %v6205
  %6951 = vmatpush1.bf16.msra.mxu0 %v6204
  %6952 = vmatprep.subr.bf16.mxu0 0
  %6953 = vmatpush1.bf16.msra.mxu0 0
  %6954 = vmatprep.subr.bf16.mxu0 0
  %6955 = vmatpush1.bf16.msra.mxu0 0
  %6956 = vmatprep.subr.bf16.mxu0 0
  %6957 = vmatpush1.bf16.msra.mxu0 0
  %6958 = vmatprep.subr.bf16.mxu0 0
  %6959 = vmatpush1.bf16.msra.mxu0 0
  %6960 = vmatprep.subr.bf16.mxu0 0
  %6961 = vmatpush1.bf16.msra.mxu0 0
  %6962 = vmatprep.subr.bf16.mxu0 0
  %6963 = vmatpush1.bf16.msra.mxu0 0
  %6964 = vmatprep.subr.bf16.mxu0 0
  %6965 = vmatpush1.bf16.msra.mxu0 0
  %6966 = vmatprep.subr.bf16.mxu0 0
  %6967 = vmatpush1.bf16.msra.mxu0 0
  %6968 = vmatprep.mubr.bf16.mxu0 0
  %6969 = vmatmul.mubr.bf16.gmra.mrb[0].mxu0 %v6935
  %v6970 = vpop.f32.mrb[0].mxu0
  %v6971 = vadd.f32 0.0, %v6970
  %v6972 = vpop.f32.mrb[0].mxu0
  %v6973 = vadd.f32 0.0, %v6972
  %v6974 = vpop.f32.mrb[0].mxu0
  %v6975 = vpop.f32.mrb[0].mxu0
  %6976 = vdwg.mxu0
  %6977 = vmatprep.subr.bf16.mxu0 %v6179
  %6978 = vmatpush1.bf16.msra.mxu0 %v6178
  %6979 = vmatprep.subr.bf16.mxu0 %v6183
  %6980 = vmatpush1.bf16.msra.mxu0 %v6182
  %6981 = vmatprep.subr.bf16.mxu0 %v6187
  %6982 = vmatpush1.bf16.msra.mxu0 %v6186
  %6983 = vmatprep.subr.bf16.mxu0 %v6191
  %6984 = vmatpush1.bf16.msra.mxu0 %v6190
  %6985 = vmatprep.subr.bf16.mxu0 %v6195
  %6986 = vmatpush1.bf16.msra.mxu0 %v6194
  %6987 = vmatprep.subr.bf16.mxu0 %v6199
  %6988 = vmatpush1.bf16.msra.mxu0 %v6198
  %6989 = vmatprep.subr.bf16.mxu0 %v6203
  %6990 = vmatpush1.bf16.msra.mxu0 %v6202
  %6991 = vmatprep.subr.bf16.mxu0 %v6207
  %6992 = vmatpush1.bf16.msra.mxu0 %v6206
  %6993 = vmatprep.subr.bf16.mxu0 0
  %6994 = vmatpush1.bf16.msra.mxu0 0
  %6995 = vmatprep.subr.bf16.mxu0 0
  %6996 = vmatpush1.bf16.msra.mxu0 0
  %6997 = vmatprep.subr.bf16.mxu0 0
  %6998 = vmatpush1.bf16.msra.mxu0 0
  %6999 = vmatprep.subr.bf16.mxu0 0
  %7000 = vmatpush1.bf16.msra.mxu0 0
  %7001 = vmatprep.subr.bf16.mxu0 0
  %7002 = vmatpush1.bf16.msra.mxu0 0
  %7003 = vmatprep.subr.bf16.mxu0 0
  %7004 = vmatpush1.bf16.msra.mxu0 0
  %7005 = vmatprep.subr.bf16.mxu0 0
  %7006 = vmatpush1.bf16.msra.mxu0 0
  %7007 = vmatprep.subr.bf16.mxu0 0
  %7008 = vmatpush1.bf16.msra.mxu0 0
  %7009 = vmatprep.mubr.bf16.mxu0 0
  %7010 = vmatmul.mubr.bf16.gmra.mrb[0].mxu0 %v6935
  %v7011 = vpop.f32.mrb[0].mxu0
  %v7012 = vadd.f32 0.0, %v7011
  %v7013 = vpop.f32.mrb[0].mxu0
  %v7014 = vadd.f32 0.0, %v7013
  %v7015 = vpop.f32.mrb[0].mxu0
  %v7016 = vpop.f32.mrb[0].mxu0
  %7017 = vdwg.mxu0
  %v7018 = vadd.f32 %v6931, %v6971
  %v7019 = vadd.f32 %v6932, %v6973
  %v7020 = vadd.f32 %v6933, %v7012
  %v7021 = vadd.f32 %v6934, %v7014
  %v7022 = vxor.u32 %v7018, 2147483648
  %v7023 = vxor.u32 %v7019, 2147483648
  %v7024 = vxor.u32 %v7020, 2147483648
  %v7025 = vmul.f32 %v7022, 1.442695
  %v7026 = vpow.pop %v7025
  %v7027 = vmul.f32 %v7023, 1.442695
  %v7028 = vpow.pop %v7027
  %v7029 = vmul.f32 %v7024, 1.442695
  %v7030 = vpow.pop %v7029
  %v7031 = vadd.f32 %v7026, 1.0
  %v7032 = vadd.f32 %v7028, 1.0
  %v7033 = vadd.f32 %v7030, 1.0
  %v7034 = vrcp.pop %v7031
  %v7035 = vmul.f32 1.0, %v7034
  %v7036 = vrcp.pop %v7032
  %v7037 = vmul.f32 1.0, %v7036
  %v7038 = vrcp.pop %v7033
  %v7039 = vmul.f32 1.0, %v7038
  %v7040 = vtanh.pop %v7021
  %v7041 = vmul.f32 %v7037, %v6927
  %v7042 = vmul.f32 %v7035, %v7040
  %v7043 = vadd.f32 %v7041, %v7042
  %v7044 = vtanh.pop %v7043
  %v7045 = vmul.f32 %v7039, %v7044
  %7046 = vst [vmem:[#allocation3 + $0x38] sm:$0xff] %v7045
  %v7047 = vld [vmem:[#allocation3] sm:$0xff]
  %v7048 = vld [vmem:[#allocation3 + $0x8] sm:$0xff]
  %v7049 = vld [vmem:[#allocation3 + $0x10] sm:$0xff]
  %v7050 = vld [vmem:[#allocation3 + $0x18] sm:$0xff]
  %v7051 = vld [vmem:[#allocation3 + $0x20] sm:$0xff]
  %v7052 = vld [vmem:[#allocation3 + $0x28] sm:$0xff]
  %v7053 = vld [vmem:[#allocation3 + $0x30] sm:$0xff]
  %v7054 = vld [vmem:[#allocation3 + $0x38] sm:$0xff]
  %v7055 = vpack.c.bf16 %v7048, %v7047
  %v7056 = vpack.c.bf16 %v7050, %v7049
  %v7057 = vpack.c.bf16 %v7052, %v7051
  %v7058 = vpack.c.bf16 %v7054, %v7053
  %v7059 = vld [vmem:[%s16] sm:$0xff]
  %v7060 = vld [vmem:[%s16 + $0x8] sm:$0xff]
  %v7061 = vld [vmem:[%s16 + $0x10] sm:$0xff]
  %v7062 = vld [vmem:[%s16 + $0x18] sm:$0xff]
  %v7063 = vld [vmem:[%s16 + $0x20] sm:$0xff]
  %v7064 = vld [vmem:[%s16 + $0x28] sm:$0xff]
  %v7065 = vld [vmem:[%s16 + $0x30] sm:$0xff]
  %v7066 = vld [vmem:[%s16 + $0x38] sm:$0xff]
  %v7067 = vld [vmem:[%s16 + $0x40] sm:$0xff]
  %v7068 = vld [vmem:[%s16 + $0x48] sm:$0xff]
  %v7069 = vld [vmem:[%s16 + $0x50] sm:$0xff]
  %v7070 = vld [vmem:[%s16 + $0x58] sm:$0xff]
  %v7071 = vld [vmem:[%s16 + $0x60] sm:$0xff]
  %v7072 = vld [vmem:[%s16 + $0x68] sm:$0xff]
  %v7073 = vld [vmem:[%s16 + $0x70] sm:$0xff]
  %v7074 = vld [vmem:[%s16 + $0x78] sm:$0xff]
  %v7075 = vld [vmem:[%s16 + $0x80] sm:$0xff]
  %v7076 = vld [vmem:[%s16 + $0x88] sm:$0xff]
  %v7077 = vld [vmem:[%s16 + $0x90] sm:$0xff]
  %v7078 = vld [vmem:[%s16 + $0x98] sm:$0xff]
  %v7079 = vld [vmem:[%s16 + $0xa0] sm:$0xff]
  %v7080 = vld [vmem:[%s16 + $0xa8] sm:$0xff]
  %v7081 = vld [vmem:[%s16 + $0xb0] sm:$0xff]
  %v7082 = vld [vmem:[%s16 + $0xb8] sm:$0xff]
  %v7083 = vld [vmem:[%s16 + $0xc0] sm:$0xff]
  %v7084 = vld [vmem:[%s16 + $0xc8] sm:$0xff]
  %v7085 = vld [vmem:[%s16 + $0xd0] sm:$0xff]
  %v7086 = vld [vmem:[%s16 + $0xd8] sm:$0xff]
  %v7087 = vld [vmem:[%s16 + $0xe0] sm:$0xff]
  %v7088 = vld [vmem:[%s16 + $0xe8] sm:$0xff]
  %v7089 = vld [vmem:[%s16 + $0xf0] sm:$0xff]
  %v7090 = vld [vmem:[%s16 + $0xf8] sm:$0xff]
  %v7091 = vld [vmem:[%s18] sm:$0xf]
  %v7093 = vlaneseq
  %v7094 = vshrl.u32 %v7093, 7
  %v7095 = vsub.s32 0, %v7094
  %v7096 = vrot.slane %v7091, %v7095
  %v7097 = vlaneseq
  %v7098 = vshrl.u32 %v7097, 7
  %v7099 = vsub.s32 1, %v7098
  %v7100 = vrot.slane %v7091, %v7099
  %v7101 = vlaneseq
  %v7102 = vshrl.u32 %v7101, 7
  %v7103 = vsub.s32 2, %v7102
  %v7104 = vrot.slane %v7091, %v7103
  %v7105 = vlaneseq
  %v7106 = vshrl.u32 %v7105, 7
  %v7107 = vsub.s32 3, %v7106
  %v7108 = vrot.slane %v7091, %v7107
  %v7145 = vunpack.c.l.b16 %v7059
  %v7146 = vunpack.c.h.b16 %v7059
  %v7147 = vunpack.c.l.b16 %v7060
  %v7148 = vunpack.c.h.b16 %v7060
  %v7149 = vunpack.c.l.b16 %v7061
  %v7150 = vunpack.c.h.b16 %v7061
  %v7151 = vunpack.c.l.b16 %v7062
  %v7152 = vunpack.c.h.b16 %v7062
  %v7153 = vunpack.c.l.b16 %v7063
  %v7154 = vunpack.c.h.b16 %v7063
  %v7155 = vunpack.c.l.b16 %v7064
  %v7156 = vunpack.c.h.b16 %v7064
  %v7157 = vunpack.c.l.b16 %v7065
  %v7158 = vunpack.c.h.b16 %v7065
  %v7159 = vunpack.c.l.b16 %v7066
  %v7160 = vunpack.c.h.b16 %v7066
  %v7161 = vunpack.c.l.b16 %v7067
  %v7162 = vunpack.c.h.b16 %v7067
  %v7163 = vunpack.c.l.b16 %v7068
  %v7164 = vunpack.c.h.b16 %v7068
  %v7165 = vunpack.c.l.b16 %v7069
  %v7166 = vunpack.c.h.b16 %v7069
  %v7167 = vunpack.c.l.b16 %v7070
  %v7168 = vunpack.c.h.b16 %v7070
  %v7169 = vunpack.c.l.b16 %v7071
  %v7170 = vunpack.c.h.b16 %v7071
  %v7171 = vunpack.c.l.b16 %v7072
  %v7172 = vunpack.c.h.b16 %v7072
  %v7173 = vunpack.c.l.b16 %v7073
  %v7174 = vunpack.c.h.b16 %v7073
  %v7175 = vunpack.c.l.b16 %v7074
  %v7176 = vunpack.c.h.b16 %v7074
  %v7177 = vunpack.c.l.b16 %v7075
  %v7178 = vunpack.c.h.b16 %v7075
  %v7179 = vunpack.c.l.b16 %v7076
  %v7180 = vunpack.c.h.b16 %v7076
  %v7181 = vunpack.c.l.b16 %v7077
  %v7182 = vunpack.c.h.b16 %v7077
  %v7183 = vunpack.c.l.b16 %v7078
  %v7184 = vunpack.c.h.b16 %v7078
  %v7185 = vunpack.c.l.b16 %v7079
  %v7186 = vunpack.c.h.b16 %v7079
  %v7187 = vunpack.c.l.b16 %v7080
  %v7188 = vunpack.c.h.b16 %v7080
  %v7189 = vunpack.c.l.b16 %v7081
  %v7190 = vunpack.c.h.b16 %v7081
  %v7191 = vunpack.c.l.b16 %v7082
  %v7192 = vunpack.c.h.b16 %v7082
  %v7193 = vunpack.c.l.b16 %v7083
  %v7194 = vunpack.c.h.b16 %v7083
  %v7195 = vunpack.c.l.b16 %v7084
  %v7196 = vunpack.c.h.b16 %v7084
  %v7197 = vunpack.c.l.b16 %v7085
  %v7198 = vunpack.c.h.b16 %v7085
  %v7199 = vunpack.c.l.b16 %v7086
  %v7200 = vunpack.c.h.b16 %v7086
  %v7201 = vunpack.c.l.b16 %v7087
  %v7202 = vunpack.c.h.b16 %v7087
  %v7203 = vunpack.c.l.b16 %v7088
  %v7204 = vunpack.c.h.b16 %v7088
  %v7205 = vunpack.c.l.b16 %v7089
  %v7206 = vunpack.c.h.b16 %v7089
  %v7207 = vunpack.c.l.b16 %v7090
  %v7208 = vunpack.c.h.b16 %v7090
  %v7209 = vpack.c.b16 %v7149, %v7145
  %v7210 = vpack.c.b16 %v7150, %v7146
  %v7211 = vpack.c.b16 %v7151, %v7147
  %v7212 = vpack.c.b16 %v7152, %v7148
  %v7213 = vpack.c.b16 %v7157, %v7153
  %v7214 = vpack.c.b16 %v7158, %v7154
  %v7215 = vpack.c.b16 %v7159, %v7155
  %v7216 = vpack.c.b16 %v7160, %v7156
  %v7217 = vpack.c.b16 %v7165, %v7161
  %v7218 = vpack.c.b16 %v7166, %v7162
  %v7219 = vpack.c.b16 %v7167, %v7163
  %v7220 = vpack.c.b16 %v7168, %v7164
  %v7221 = vpack.c.b16 %v7173, %v7169
  %v7222 = vpack.c.b16 %v7174, %v7170
  %v7223 = vpack.c.b16 %v7175, %v7171
  %v7224 = vpack.c.b16 %v7176, %v7172
  %v7225 = vpack.c.b16 %v7181, %v7177
  %v7226 = vpack.c.b16 %v7182, %v7178
  %v7227 = vpack.c.b16 %v7183, %v7179
  %v7228 = vpack.c.b16 %v7184, %v7180
  %v7229 = vpack.c.b16 %v7189, %v7185
  %v7230 = vpack.c.b16 %v7190, %v7186
  %v7231 = vpack.c.b16 %v7191, %v7187
  %v7232 = vpack.c.b16 %v7192, %v7188
  %v7233 = vpack.c.b16 %v7197, %v7193
  %v7234 = vpack.c.b16 %v7198, %v7194
  %v7235 = vpack.c.b16 %v7199, %v7195
  %v7236 = vpack.c.b16 %v7200, %v7196
  %v7237 = vpack.c.b16 %v7205, %v7201
  %v7238 = vpack.c.b16 %v7206, %v7202
  %v7239 = vpack.c.b16 %v7207, %v7203
  %v7240 = vpack.c.b16 %v7208, %v7204
  %7273 = vmatprep.subr.bf16.mxu0 %v7210
  %7274 = vmatpush1.bf16.msra.mxu0 %v7209
  %7275 = vmatprep.subr.bf16.mxu0 %v7214
  %7276 = vmatpush1.bf16.msra.mxu0 %v7213
  %7277 = vmatprep.subr.bf16.mxu0 %v7218
  %7278 = vmatpush1.bf16.msra.mxu0 %v7217
  %7279 = vmatprep.subr.bf16.mxu0 %v7222
  %7280 = vmatpush1.bf16.msra.mxu0 %v7221
  %7281 = vmatprep.subr.bf16.mxu0 %v7226
  %7282 = vmatpush1.bf16.msra.mxu0 %v7225
  %7283 = vmatprep.subr.bf16.mxu0 %v7230
  %7284 = vmatpush1.bf16.msra.mxu0 %v7229
  %7285 = vmatprep.subr.bf16.mxu0 %v7234
  %7286 = vmatpush1.bf16.msra.mxu0 %v7233
  %7287 = vmatprep.subr.bf16.mxu0 %v7238
  %7288 = vmatpush1.bf16.msra.mxu0 %v7237
  %7289 = vmatprep.subr.bf16.mxu0 0
  %7290 = vmatpush1.bf16.msra.mxu0 0
  %7291 = vmatprep.subr.bf16.mxu0 0
  %7292 = vmatpush1.bf16.msra.mxu0 0
  %7293 = vmatprep.subr.bf16.mxu0 0
  %7294 = vmatpush1.bf16.msra.mxu0 0
  %7295 = vmatprep.subr.bf16.mxu0 0
  %7296 = vmatpush1.bf16.msra.mxu0 0
  %7297 = vmatprep.subr.bf16.mxu0 0
  %7298 = vmatpush1.bf16.msra.mxu0 0
  %7299 = vmatprep.subr.bf16.mxu0 0
  %7300 = vmatpush1.bf16.msra.mxu0 0
  %7301 = vmatprep.subr.bf16.mxu0 0
  %7302 = vmatpush1.bf16.msra.mxu0 0
  %7303 = vmatprep.subr.bf16.mxu0 0
  %7304 = vmatpush1.bf16.msra.mxu0 0
  %7305 = vmatprep.mubr.bf16.mxu0 0
  %7306 = vmatmul.mubr.bf16.gmra.mrb[0].mxu0 %v7055
  %v7307 = vpop.f32.mrb[0].mxu0
  %v7308 = vadd.f32 %v7096, %v7307
  %v7309 = vpop.f32.mrb[0].mxu0
  %v7310 = vadd.f32 %v7100, %v7309
  %v7311 = vpop.f32.mrb[0].mxu0
  %v7312 = vadd.f32 %v7096, %v7311
  %v7313 = vpop.f32.mrb[0].mxu0
  %v7314 = vadd.f32 %v7100, %v7313
  %7315 = vmatprep.mubr.bf16.mxu0 0
  %7316 = vmatmul.mubr.bf16.gmra.mrb[0].mxu0 %v7056
  %v7317 = vpop.f32.mrb[0].mxu0
  %v7318 = vadd.f32 %v7096, %v7317
  %v7319 = vpop.f32.mrb[0].mxu0
  %v7320 = vadd.f32 %v7100, %v7319
  %v7321 = vpop.f32.mrb[0].mxu0
  %v7322 = vadd.f32 %v7096, %v7321
  %v7323 = vpop.f32.mrb[0].mxu0
  %v7324 = vadd.f32 %v7100, %v7323
  %7325 = vmatprep.mubr.bf16.mxu0 0
  %7326 = vmatmul.mubr.bf16.gmra.mrb[0].mxu0 %v7057
  %v7327 = vpop.f32.mrb[0].mxu0
  %v7328 = vadd.f32 %v7096, %v7327
  %v7329 = vpop.f32.mrb[0].mxu0
  %v7330 = vadd.f32 %v7100, %v7329
  %v7331 = vpop.f32.mrb[0].mxu0
  %v7332 = vadd.f32 %v7096, %v7331
  %v7333 = vpop.f32.mrb[0].mxu0
  %v7334 = vadd.f32 %v7100, %v7333
  %7335 = vmatprep.mubr.bf16.mxu0 0
  %7336 = vmatmul.mubr.bf16.gmra.mrb[0].mxu0 %v7058
  %v7337 = vpop.f32.mrb[0].mxu0
  %v7338 = vadd.f32 %v7096, %v7337
  %v7339 = vpop.f32.mrb[0].mxu0
  %v7340 = vadd.f32 %v7100, %v7339
  %v7341 = vpop.f32.mrb[0].mxu0
  %v7342 = vadd.f32 %v7096, %v7341
  %v7343 = vpop.f32.mrb[0].mxu0
  %v7344 = vadd.f32 %v7100, %v7343
  %7345 = vdwg.mxu0
  %7346 = vmatprep.subr.bf16.mxu0 %v7212
  %7347 = vmatpush1.bf16.msra.mxu0 %v7211
  %7348 = vmatprep.subr.bf16.mxu0 %v7216
  %7349 = vmatpush1.bf16.msra.mxu0 %v7215
  %7350 = vmatprep.subr.bf16.mxu0 %v7220
  %7351 = vmatpush1.bf16.msra.mxu0 %v7219
  %7352 = vmatprep.subr.bf16.mxu0 %v7224
  %7353 = vmatpush1.bf16.msra.mxu0 %v7223
  %7354 = vmatprep.subr.bf16.mxu0 %v7228
  %7355 = vmatpush1.bf16.msra.mxu0 %v7227
  %7356 = vmatprep.subr.bf16.mxu0 %v7232
  %7357 = vmatpush1.bf16.msra.mxu0 %v7231
  %7358 = vmatprep.subr.bf16.mxu0 %v7236
  %7359 = vmatpush1.bf16.msra.mxu0 %v7235
  %7360 = vmatprep.subr.bf16.mxu0 %v7240
  %7361 = vmatpush1.bf16.msra.mxu0 %v7239
  %7362 = vmatprep.subr.bf16.mxu0 0
  %7363 = vmatpush1.bf16.msra.mxu0 0
  %7364 = vmatprep.subr.bf16.mxu0 0
  %7365 = vmatpush1.bf16.msra.mxu0 0
  %7366 = vmatprep.subr.bf16.mxu0 0
  %7367 = vmatpush1.bf16.msra.mxu0 0
  %7368 = vmatprep.subr.bf16.mxu0 0
  %7369 = vmatpush1.bf16.msra.mxu0 0
  %7370 = vmatprep.subr.bf16.mxu0 0
  %7371 = vmatpush1.bf16.msra.mxu0 0
  %7372 = vmatprep.subr.bf16.mxu0 0
  %7373 = vmatpush1.bf16.msra.mxu0 0
  %7374 = vmatprep.subr.bf16.mxu0 0
  %7375 = vmatpush1.bf16.msra.mxu0 0
  %7376 = vmatprep.subr.bf16.mxu0 0
  %7377 = vmatpush1.bf16.msra.mxu0 0
  %7378 = vmatprep.mubr.bf16.mxu0 0
  %7379 = vmatmul.mubr.bf16.gmra.mrb[0].mxu0 %v7055
  %v7380 = vpop.f32.mrb[0].mxu0
  %v7381 = vadd.f32 %v7104, %v7380
  %v7382 = vpop.f32.mrb[0].mxu0
  %v7383 = vadd.f32 %v7108, %v7382
  %v7384 = vpop.f32.mrb[0].mxu0
  %v7385 = vadd.f32 %v7104, %v7384
  %v7386 = vpop.f32.mrb[0].mxu0
  %v7387 = vadd.f32 %v7108, %v7386
  %7388 = vmatprep.mubr.bf16.mxu0 0
  %7389 = vmatmul.mubr.bf16.gmra.mrb[0].mxu0 %v7056
  %v7390 = vpop.f32.mrb[0].mxu0
  %v7391 = vadd.f32 %v7104, %v7390
  %v7392 = vpop.f32.mrb[0].mxu0
  %v7393 = vadd.f32 %v7108, %v7392
  %v7394 = vpop.f32.mrb[0].mxu0
  %v7395 = vadd.f32 %v7104, %v7394
  %v7396 = vpop.f32.mrb[0].mxu0
  %v7397 = vadd.f32 %v7108, %v7396
  %7398 = vmatprep.mubr.bf16.mxu0 0
  %7399 = vmatmul.mubr.bf16.gmra.mrb[0].mxu0 %v7057
  %v7400 = vpop.f32.mrb[0].mxu0
  %v7401 = vadd.f32 %v7104, %v7400
  %v7402 = vpop.f32.mrb[0].mxu0
  %v7403 = vadd.f32 %v7108, %v7402
  %v7404 = vpop.f32.mrb[0].mxu0
  %v7405 = vadd.f32 %v7104, %v7404
  %v7406 = vpop.f32.mrb[0].mxu0
  %v7407 = vadd.f32 %v7108, %v7406
  %7408 = vmatprep.mubr.bf16.mxu0 0
  %7409 = vmatmul.mubr.bf16.gmra.mrb[0].mxu0 %v7058
  %v7410 = vpop.f32.mrb[0].mxu0
  %v7411 = vadd.f32 %v7104, %v7410
  %v7412 = vpop.f32.mrb[0].mxu0
  %v7413 = vadd.f32 %v7108, %v7412
  %v7414 = vpop.f32.mrb[0].mxu0
  %v7415 = vadd.f32 %v7104, %v7414
  %v7416 = vpop.f32.mrb[0].mxu0
  %v7417 = vadd.f32 %v7108, %v7416
  %7418 = vdwg.mxu0
  %7419 = vst [vmem:[#allocation2] sm:$0xff] %v7308
  %7420 = vst [vmem:[#allocation2 + $0x8] sm:$0xff] %v7310
  %7421 = vst [vmem:[#allocation2 + $0x10] sm:$0xff] %v7381
  %7422 = vst [vmem:[#allocation2 + $0x18] sm:$0xff] %v7383
  %7423 = vst [vmem:[#allocation2 + $0x20] sm:$0xff] %v7312
  %7424 = vst [vmem:[#allocation2 + $0x28] sm:$0xff] %v7314
  %7425 = vst [vmem:[#allocation2 + $0x30] sm:$0xff] %v7385
  %7426 = vst [vmem:[#allocation2 + $0x38] sm:$0xff] %v7387
  %7427 = vst [vmem:[#allocation2 + $0x40] sm:$0xff] %v7318
  %7428 = vst [vmem:[#allocation2 + $0x48] sm:$0xff] %v7320
  %7429 = vst [vmem:[#allocation2 + $0x50] sm:$0xff] %v7391
  %7430 = vst [vmem:[#allocation2 + $0x58] sm:$0xff] %v7393
  %7431 = vst [vmem:[#allocation2 + $0x60] sm:$0xff] %v7322
  %7432 = vst [vmem:[#allocation2 + $0x68] sm:$0xff] %v7324
  %7433 = vst [vmem:[#allocation2 + $0x70] sm:$0xff] %v7395
  %7434 = vst [vmem:[#allocation2 + $0x78] sm:$0xff] %v7397
  %7435 = vst [vmem:[#allocation2 + $0x80] sm:$0xff] %v7328
  %7436 = vst [vmem:[#allocation2 + $0x88] sm:$0xff] %v7330
  %7437 = vst [vmem:[#allocation2 + $0x90] sm:$0xff] %v7401
  %7438 = vst [vmem:[#allocation2 + $0x98] sm:$0xff] %v7403
  %7439 = vst [vmem:[#allocation2 + $0xa0] sm:$0xff] %v7332
  %7440 = vst [vmem:[#allocation2 + $0xa8] sm:$0xff] %v7334
  %7441 = vst [vmem:[#allocation2 + $0xb0] sm:$0xff] %v7405
  %7442 = vst [vmem:[#allocation2 + $0xb8] sm:$0xff] %v7407
  %7443 = vst [vmem:[#allocation2 + $0xc0] sm:$0xff] %v7338
  %7444 = vst [vmem:[#allocation2 + $0xc8] sm:$0xff] %v7340
  %7445 = vst [vmem:[#allocation2 + $0xd0] sm:$0xff] %v7411
  %7446 = vst [vmem:[#allocation2 + $0xd8] sm:$0xff] %v7413
  %7447 = vst [vmem:[#allocation2 + $0xe0] sm:$0xff] %v7342
  %7448 = vst [vmem:[#allocation2 + $0xe8] sm:$0xff] %v7344
  %7449 = vst [vmem:[#allocation2 + $0xf0] sm:$0xff] %v7415
  %7450 = vst [vmem:[#allocation2 + $0xf8] sm:$0xff] %v7417
  %v7451 = vld [vmem:[%s17] sm:$0xff]
  %v7452 = vld [vmem:[%s17 + $0x8] sm:$0xff]
  %v7453 = vld [vmem:[%s17 + $0x10] sm:$0xff]
  %v7454 = vld [vmem:[%s17 + $0x18] sm:$0xff]
  %v7455 = vld [vmem:[%s17 + $0x20] sm:$0xff]
  %v7456 = vld [vmem:[%s17 + $0x28] sm:$0xff]
  %v7457 = vld [vmem:[%s17 + $0x30] sm:$0xff]
  %v7458 = vld [vmem:[%s17 + $0x38] sm:$0xff]
  %v7459 = vld [vmem:[%s17 + $0x40] sm:$0xff]
  %v7460 = vld [vmem:[%s17 + $0x48] sm:$0xff]
  %v7461 = vld [vmem:[%s17 + $0x50] sm:$0xff]
  %v7462 = vld [vmem:[%s17 + $0x58] sm:$0xff]
  %v7463 = vld [vmem:[%s17 + $0x60] sm:$0xff]
  %v7464 = vld [vmem:[%s17 + $0x68] sm:$0xff]
  %v7465 = vld [vmem:[%s17 + $0x70] sm:$0xff]
  %v7466 = vld [vmem:[%s17 + $0x78] sm:$0xff]
  %v7467 = vld [vmem:[%s17 + $0x80] sm:$0xff]
  %v7468 = vld [vmem:[%s17 + $0x88] sm:$0xff]
  %v7469 = vld [vmem:[%s17 + $0x90] sm:$0xff]
  %v7470 = vld [vmem:[%s17 + $0x98] sm:$0xff]
  %v7471 = vld [vmem:[%s17 + $0xa0] sm:$0xff]
  %v7472 = vld [vmem:[%s17 + $0xa8] sm:$0xff]
  %v7473 = vld [vmem:[%s17 + $0xb0] sm:$0xff]
  %v7474 = vld [vmem:[%s17 + $0xb8] sm:$0xff]
  %v7475 = vld [vmem:[%s17 + $0xc0] sm:$0xff]
  %v7476 = vld [vmem:[%s17 + $0xc8] sm:$0xff]
  %v7477 = vld [vmem:[%s17 + $0xd0] sm:$0xff]
  %v7478 = vld [vmem:[%s17 + $0xd8] sm:$0xff]
  %v7479 = vld [vmem:[%s17 + $0xe0] sm:$0xff]
  %v7480 = vld [vmem:[%s17 + $0xe8] sm:$0xff]
  %v7481 = vld [vmem:[%s17 + $0xf0] sm:$0xff]
  %v7482 = vld [vmem:[%s17 + $0xf8] sm:$0xff]
  %v7483 = vld [vmem:[#allocation2] sm:$0xff]
  %v7484 = vld [vmem:[#allocation2 + $0x8] sm:$0xff]
  %v7485 = vld [vmem:[#allocation2 + $0x10] sm:$0xff]
  %v7486 = vld [vmem:[#allocation2 + $0x18] sm:$0xff]
  %v7487 = vxor.u32 %v7483, 2147483648
  %v7488 = vxor.u32 %v7484, 2147483648
  %v7489 = vxor.u32 %v7485, 2147483648
  %v7490 = vmul.f32 %v7487, 1.442695
  %v7491 = vpow.pop %v7490
  %v7492 = vmul.f32 %v7488, 1.442695
  %v7493 = vpow.pop %v7492
  %v7494 = vmul.f32 %v7489, 1.442695
  %v7495 = vpow.pop %v7494
  %v7496 = vadd.f32 %v7491, 1.0
  %v7497 = vadd.f32 %v7493, 1.0
  %v7498 = vadd.f32 %v7495, 1.0
  %v7499 = vrcp.pop %v7496
  %v7500 = vmul.f32 1.0, %v7499
  %v7501 = vrcp.pop %v7497
  %v7502 = vmul.f32 1.0, %v7501
  %v7503 = vrcp.pop %v7498
  %v7504 = vmul.f32 1.0, %v7503
  %v7505 = vtanh.pop %v7486
  %v7506 = vmul.f32 %v7502, 0.0
  %v7507 = vmul.f32 %v7500, %v7505
  %v7508 = vadd.f32 %v7506, %v7507
  %v7509 = vtanh.pop %v7508
  %v7510 = vmul.f32 %v7504, %v7509
  %v7511 = vld [vmem:[#allocation2 + $0x20] sm:$0xff]
  %v7512 = vld [vmem:[#allocation2 + $0x28] sm:$0xff]
  %v7513 = vld [vmem:[#allocation2 + $0x30] sm:$0xff]
  %v7514 = vld [vmem:[#allocation2 + $0x38] sm:$0xff]
  %v7515 = vpack.c.bf16 %v7510, %v7510
  %v7548 = vunpack.c.l.b16 %v7451
  %v7549 = vunpack.c.h.b16 %v7451
  %v7550 = vunpack.c.l.b16 %v7452
  %v7551 = vunpack.c.h.b16 %v7452
  %v7552 = vunpack.c.l.b16 %v7453
  %v7553 = vunpack.c.h.b16 %v7453
  %v7554 = vunpack.c.l.b16 %v7454
  %v7555 = vunpack.c.h.b16 %v7454
  %v7556 = vunpack.c.l.b16 %v7455
  %v7557 = vunpack.c.h.b16 %v7455
  %v7558 = vunpack.c.l.b16 %v7456
  %v7559 = vunpack.c.h.b16 %v7456
  %v7560 = vunpack.c.l.b16 %v7457
  %v7561 = vunpack.c.h.b16 %v7457
  %v7562 = vunpack.c.l.b16 %v7458
  %v7563 = vunpack.c.h.b16 %v7458
  %v7564 = vunpack.c.l.b16 %v7459
  %v7565 = vunpack.c.h.b16 %v7459
  %v7566 = vunpack.c.l.b16 %v7460
  %v7567 = vunpack.c.h.b16 %v7460
  %v7568 = vunpack.c.l.b16 %v7461
  %v7569 = vunpack.c.h.b16 %v7461
  %v7570 = vunpack.c.l.b16 %v7462
  %v7571 = vunpack.c.h.b16 %v7462
  %v7572 = vunpack.c.l.b16 %v7463
  %v7573 = vunpack.c.h.b16 %v7463
  %v7574 = vunpack.c.l.b16 %v7464
  %v7575 = vunpack.c.h.b16 %v7464
  %v7576 = vunpack.c.l.b16 %v7465
  %v7577 = vunpack.c.h.b16 %v7465
  %v7578 = vunpack.c.l.b16 %v7466
  %v7579 = vunpack.c.h.b16 %v7466
  %v7580 = vunpack.c.l.b16 %v7467
  %v7581 = vunpack.c.h.b16 %v7467
  %v7582 = vunpack.c.l.b16 %v7468
  %v7583 = vunpack.c.h.b16 %v7468
  %v7584 = vunpack.c.l.b16 %v7469
  %v7585 = vunpack.c.h.b16 %v7469
  %v7586 = vunpack.c.l.b16 %v7470
  %v7587 = vunpack.c.h.b16 %v7470
  %v7588 = vunpack.c.l.b16 %v7471
  %v7589 = vunpack.c.h.b16 %v7471
  %v7590 = vunpack.c.l.b16 %v7472
  %v7591 = vunpack.c.h.b16 %v7472
  %v7592 = vunpack.c.l.b16 %v7473
  %v7593 = vunpack.c.h.b16 %v7473
  %v7594 = vunpack.c.l.b16 %v7474
  %v7595 = vunpack.c.h.b16 %v7474
  %v7596 = vunpack.c.l.b16 %v7475
  %v7597 = vunpack.c.h.b16 %v7475
  %v7598 = vunpack.c.l.b16 %v7476
  %v7599 = vunpack.c.h.b16 %v7476
  %v7600 = vunpack.c.l.b16 %v7477
  %v7601 = vunpack.c.h.b16 %v7477
  %v7602 = vunpack.c.l.b16 %v7478
  %v7603 = vunpack.c.h.b16 %v7478
  %v7604 = vunpack.c.l.b16 %v7479
  %v7605 = vunpack.c.h.b16 %v7479
  %v7606 = vunpack.c.l.b16 %v7480
  %v7607 = vunpack.c.h.b16 %v7480
  %v7608 = vunpack.c.l.b16 %v7481
  %v7609 = vunpack.c.h.b16 %v7481
  %v7610 = vunpack.c.l.b16 %v7482
  %v7611 = vunpack.c.h.b16 %v7482
  %v7612 = vpack.c.b16 %v7552, %v7548
  %v7613 = vpack.c.b16 %v7553, %v7549
  %v7614 = vpack.c.b16 %v7554, %v7550
  %v7615 = vpack.c.b16 %v7555, %v7551
  %v7616 = vpack.c.b16 %v7560, %v7556
  %v7617 = vpack.c.b16 %v7561, %v7557
  %v7618 = vpack.c.b16 %v7562, %v7558
  %v7619 = vpack.c.b16 %v7563, %v7559
  %v7620 = vpack.c.b16 %v7568, %v7564
  %v7621 = vpack.c.b16 %v7569, %v7565
  %v7622 = vpack.c.b16 %v7570, %v7566
  %v7623 = vpack.c.b16 %v7571, %v7567
  %v7624 = vpack.c.b16 %v7576, %v7572
  %v7625 = vpack.c.b16 %v7577, %v7573
  %v7626 = vpack.c.b16 %v7578, %v7574
  %v7627 = vpack.c.b16 %v7579, %v7575
  %v7628 = vpack.c.b16 %v7584, %v7580
  %v7629 = vpack.c.b16 %v7585, %v7581
  %v7630 = vpack.c.b16 %v7586, %v7582
  %v7631 = vpack.c.b16 %v7587, %v7583
  %v7632 = vpack.c.b16 %v7592, %v7588
  %v7633 = vpack.c.b16 %v7593, %v7589
  %v7634 = vpack.c.b16 %v7594, %v7590
  %v7635 = vpack.c.b16 %v7595, %v7591
  %v7636 = vpack.c.b16 %v7600, %v7596
  %v7637 = vpack.c.b16 %v7601, %v7597
  %v7638 = vpack.c.b16 %v7602, %v7598
  %v7639 = vpack.c.b16 %v7603, %v7599
  %v7640 = vpack.c.b16 %v7608, %v7604
  %v7641 = vpack.c.b16 %v7609, %v7605
  %v7642 = vpack.c.b16 %v7610, %v7606
  %v7643 = vpack.c.b16 %v7611, %v7607
  %7676 = vmatprep.subr.bf16.mxu0 %v7613
  %7677 = vmatpush1.bf16.msra.mxu0 %v7612
  %7678 = vmatprep.subr.bf16.mxu0 %v7617
  %7679 = vmatpush1.bf16.msra.mxu0 %v7616
  %7680 = vmatprep.subr.bf16.mxu0 %v7621
  %7681 = vmatpush1.bf16.msra.mxu0 %v7620
  %7682 = vmatprep.subr.bf16.mxu0 %v7625
  %7683 = vmatpush1.bf16.msra.mxu0 %v7624
  %7684 = vmatprep.subr.bf16.mxu0 %v7629
  %7685 = vmatpush1.bf16.msra.mxu0 %v7628
  %7686 = vmatprep.subr.bf16.mxu0 %v7633
  %7687 = vmatpush1.bf16.msra.mxu0 %v7632
  %7688 = vmatprep.subr.bf16.mxu0 %v7637
  %7689 = vmatpush1.bf16.msra.mxu0 %v7636
  %7690 = vmatprep.subr.bf16.mxu0 %v7641
  %7691 = vmatpush1.bf16.msra.mxu0 %v7640
  %7692 = vmatprep.subr.bf16.mxu0 0
  %7693 = vmatpush1.bf16.msra.mxu0 0
  %7694 = vmatprep.subr.bf16.mxu0 0
  %7695 = vmatpush1.bf16.msra.mxu0 0
  %7696 = vmatprep.subr.bf16.mxu0 0
  %7697 = vmatpush1.bf16.msra.mxu0 0
  %7698 = vmatprep.subr.bf16.mxu0 0
  %7699 = vmatpush1.bf16.msra.mxu0 0
  %7700 = vmatprep.subr.bf16.mxu0 0
  %7701 = vmatpush1.bf16.msra.mxu0 0
  %7702 = vmatprep.subr.bf16.mxu0 0
  %7703 = vmatpush1.bf16.msra.mxu0 0
  %7704 = vmatprep.subr.bf16.mxu0 0
  %7705 = vmatpush1.bf16.msra.mxu0 0
  %7706 = vmatprep.subr.bf16.mxu0 0
  %7707 = vmatpush1.bf16.msra.mxu0 0
  %7708 = vmatprep.mubr.bf16.mxu0 0
  %7709 = vmatmul.mubr.bf16.gmra.mrb[0].mxu0 %v7515
  %v7710 = vpop.f32.mrb[0].mxu0
  %v7711 = vadd.f32 0.0, %v7710
  %v7712 = vpop.f32.mrb[0].mxu0
  %v7713 = vadd.f32 0.0, %v7712
  %v7714 = vpop.f32.mrb[0].mxu0
  %v7715 = vpop.f32.mrb[0].mxu0
  %7716 = vdwg.mxu0
  %7717 = vmatprep.subr.bf16.mxu0 %v7615
  %7718 = vmatpush1.bf16.msra.mxu0 %v7614
  %7719 = vmatprep.subr.bf16.mxu0 %v7619
  %7720 = vmatpush1.bf16.msra.mxu0 %v7618
  %7721 = vmatprep.subr.bf16.mxu0 %v7623
  %7722 = vmatpush1.bf16.msra.mxu0 %v7622
  %7723 = vmatprep.subr.bf16.mxu0 %v7627
  %7724 = vmatpush1.bf16.msra.mxu0 %v7626
  %7725 = vmatprep.subr.bf16.mxu0 %v7631
  %7726 = vmatpush1.bf16.msra.mxu0 %v7630
  %7727 = vmatprep.subr.bf16.mxu0 %v7635
  %7728 = vmatpush1.bf16.msra.mxu0 %v7634
  %7729 = vmatprep.subr.bf16.mxu0 %v7639
  %7730 = vmatpush1.bf16.msra.mxu0 %v7638
  %7731 = vmatprep.subr.bf16.mxu0 %v7643
  %7732 = vmatpush1.bf16.msra.mxu0 %v7642
  %7733 = vmatprep.subr.bf16.mxu0 0
  %7734 = vmatpush1.bf16.msra.mxu0 0
  %7735 = vmatprep.subr.bf16.mxu0 0
  %7736 = vmatpush1.bf16.msra.mxu0 0
  %7737 = vmatprep.subr.bf16.mxu0 0
  %7738 = vmatpush1.bf16.msra.mxu0 0
  %7739 = vmatprep.subr.bf16.mxu0 0
  %7740 = vmatpush1.bf16.msra.mxu0 0
  %7741 = vmatprep.subr.bf16.mxu0 0
  %7742 = vmatpush1.bf16.msra.mxu0 0
  %7743 = vmatprep.subr.bf16.mxu0 0
  %7744 = vmatpush1.bf16.msra.mxu0 0
  %7745 = vmatprep.subr.bf16.mxu0 0
  %7746 = vmatpush1.bf16.msra.mxu0 0
  %7747 = vmatprep.subr.bf16.mxu0 0
  %7748 = vmatpush1.bf16.msra.mxu0 0
  %7749 = vmatprep.mubr.bf16.mxu0 0
  %7750 = vmatmul.mubr.bf16.gmra.mrb[0].mxu0 %v7515
  %v7751 = vpop.f32.mrb[0].mxu0
  %v7752 = vadd.f32 0.0, %v7751
  %v7753 = vpop.f32.mrb[0].mxu0
  %v7754 = vadd.f32 0.0, %v7753
  %v7755 = vpop.f32.mrb[0].mxu0
  %v7756 = vpop.f32.mrb[0].mxu0
  %7757 = vdwg.mxu0
  %v7758 = vadd.f32 %v7511, %v7711
  %v7759 = vadd.f32 %v7512, %v7713
  %v7760 = vadd.f32 %v7513, %v7752
  %v7761 = vadd.f32 %v7514, %v7754
  %v7762 = vxor.u32 %v7758, 2147483648
  %v7763 = vxor.u32 %v7759, 2147483648
  %v7764 = vxor.u32 %v7760, 2147483648
  %v7765 = vmul.f32 %v7762, 1.442695
  %v7766 = vpow.pop %v7765
  %v7767 = vmul.f32 %v7763, 1.442695
  %v7768 = vpow.pop %v7767
  %v7769 = vmul.f32 %v7764, 1.442695
  %v7770 = vpow.pop %v7769
  %v7771 = vadd.f32 %v7766, 1.0
  %v7772 = vadd.f32 %v7768, 1.0
  %v7773 = vadd.f32 %v7770, 1.0
  %v7774 = vrcp.pop %v7771
  %v7775 = vmul.f32 1.0, %v7774
  %v7776 = vrcp.pop %v7772
  %v7777 = vmul.f32 1.0, %v7776
  %v7778 = vrcp.pop %v7773
  %v7779 = vmul.f32 1.0, %v7778
  %v7780 = vtanh.pop %v7761
  %v7781 = vmul.f32 %v7777, %v7508
  %v7782 = vmul.f32 %v7775, %v7780
  %v7783 = vadd.f32 %v7781, %v7782
  %v7784 = vtanh.pop %v7783
  %v7785 = vmul.f32 %v7779, %v7784
  %v7786 = vld [vmem:[#allocation2 + $0x40] sm:$0xff]
  %v7787 = vld [vmem:[#allocation2 + $0x48] sm:$0xff]
  %v7788 = vld [vmem:[#allocation2 + $0x50] sm:$0xff]
  %v7789 = vld [vmem:[#allocation2 + $0x58] sm:$0xff]
  %v7790 = vpack.c.bf16 %v7785, %v7785
  %7791 = vmatprep.subr.bf16.mxu0 %v7613
  %7792 = vmatpush1.bf16.msra.mxu0 %v7612
  %7793 = vmatprep.subr.bf16.mxu0 %v7617
  %7794 = vmatpush1.bf16.msra.mxu0 %v7616
  %7795 = vmatprep.subr.bf16.mxu0 %v7621
  %7796 = vmatpush1.bf16.msra.mxu0 %v7620
  %7797 = vmatprep.subr.bf16.mxu0 %v7625
  %7798 = vmatpush1.bf16.msra.mxu0 %v7624
  %7799 = vmatprep.subr.bf16.mxu0 %v7629
  %7800 = vmatpush1.bf16.msra.mxu0 %v7628
  %7801 = vmatprep.subr.bf16.mxu0 %v7633
  %7802 = vmatpush1.bf16.msra.mxu0 %v7632
  %7803 = vmatprep.subr.bf16.mxu0 %v7637
  %7804 = vmatpush1.bf16.msra.mxu0 %v7636
  %7805 = vmatprep.subr.bf16.mxu0 %v7641
  %7806 = vmatpush1.bf16.msra.mxu0 %v7640
  %7807 = vmatprep.subr.bf16.mxu0 0
  %7808 = vmatpush1.bf16.msra.mxu0 0
  %7809 = vmatprep.subr.bf16.mxu0 0
  %7810 = vmatpush1.bf16.msra.mxu0 0
  %7811 = vmatprep.subr.bf16.mxu0 0
  %7812 = vmatpush1.bf16.msra.mxu0 0
  %7813 = vmatprep.subr.bf16.mxu0 0
  %7814 = vmatpush1.bf16.msra.mxu0 0
  %7815 = vmatprep.subr.bf16.mxu0 0
  %7816 = vmatpush1.bf16.msra.mxu0 0
  %7817 = vmatprep.subr.bf16.mxu0 0
  %7818 = vmatpush1.bf16.msra.mxu0 0
  %7819 = vmatprep.subr.bf16.mxu0 0
  %7820 = vmatpush1.bf16.msra.mxu0 0
  %7821 = vmatprep.subr.bf16.mxu0 0
  %7822 = vmatpush1.bf16.msra.mxu0 0
  %7823 = vmatprep.mubr.bf16.mxu0 0
  %7824 = vmatmul.mubr.bf16.gmra.mrb[0].mxu0 %v7790
  %v7825 = vpop.f32.mrb[0].mxu0
  %v7826 = vadd.f32 0.0, %v7825
  %v7827 = vpop.f32.mrb[0].mxu0
  %v7828 = vadd.f32 0.0, %v7827
  %v7829 = vpop.f32.mrb[0].mxu0
  %v7830 = vpop.f32.mrb[0].mxu0
  %7831 = vdwg.mxu0
  %7832 = vmatprep.subr.bf16.mxu0 %v7615
  %7833 = vmatpush1.bf16.msra.mxu0 %v7614
  %7834 = vmatprep.subr.bf16.mxu0 %v7619
  %7835 = vmatpush1.bf16.msra.mxu0 %v7618
  %7836 = vmatprep.subr.bf16.mxu0 %v7623
  %7837 = vmatpush1.bf16.msra.mxu0 %v7622
  %7838 = vmatprep.subr.bf16.mxu0 %v7627
  %7839 = vmatpush1.bf16.msra.mxu0 %v7626
  %7840 = vmatprep.subr.bf16.mxu0 %v7631
  %7841 = vmatpush1.bf16.msra.mxu0 %v7630
  %7842 = vmatprep.subr.bf16.mxu0 %v7635
  %7843 = vmatpush1.bf16.msra.mxu0 %v7634
  %7844 = vmatprep.subr.bf16.mxu0 %v7639
  %7845 = vmatpush1.bf16.msra.mxu0 %v7638
  %7846 = vmatprep.subr.bf16.mxu0 %v7643
  %7847 = vmatpush1.bf16.msra.mxu0 %v7642
  %7848 = vmatprep.subr.bf16.mxu0 0
  %7849 = vmatpush1.bf16.msra.mxu0 0
  %7850 = vmatprep.subr.bf16.mxu0 0
  %7851 = vmatpush1.bf16.msra.mxu0 0
  %7852 = vmatprep.subr.bf16.mxu0 0
  %7853 = vmatpush1.bf16.msra.mxu0 0
  %7854 = vmatprep.subr.bf16.mxu0 0
  %7855 = vmatpush1.bf16.msra.mxu0 0
  %7856 = vmatprep.subr.bf16.mxu0 0
  %7857 = vmatpush1.bf16.msra.mxu0 0
  %7858 = vmatprep.subr.bf16.mxu0 0
  %7859 = vmatpush1.bf16.msra.mxu0 0
  %7860 = vmatprep.subr.bf16.mxu0 0
  %7861 = vmatpush1.bf16.msra.mxu0 0
  %7862 = vmatprep.subr.bf16.mxu0 0
  %7863 = vmatpush1.bf16.msra.mxu0 0
  %7864 = vmatprep.mubr.bf16.mxu0 0
  %7865 = vmatmul.mubr.bf16.gmra.mrb[0].mxu0 %v7790
  %v7866 = vpop.f32.mrb[0].mxu0
  %v7867 = vadd.f32 0.0, %v7866
  %v7868 = vpop.f32.mrb[0].mxu0
  %v7869 = vadd.f32 0.0, %v7868
  %v7870 = vpop.f32.mrb[0].mxu0
  %v7871 = vpop.f32.mrb[0].mxu0
  %7872 = vdwg.mxu0
  %v7873 = vadd.f32 %v7786, %v7826
  %v7874 = vadd.f32 %v7787, %v7828
  %v7875 = vadd.f32 %v7788, %v7867
  %v7876 = vadd.f32 %v7789, %v7869
  %v7877 = vxor.u32 %v7873, 2147483648
  %v7878 = vxor.u32 %v7874, 2147483648
  %v7879 = vxor.u32 %v7875, 2147483648
  %v7880 = vmul.f32 %v7877, 1.442695
  %v7881 = vpow.pop %v7880
  %v7882 = vmul.f32 %v7878, 1.442695
  %v7883 = vpow.pop %v7882
  %v7884 = vmul.f32 %v7879, 1.442695
  %v7885 = vpow.pop %v7884
  %v7886 = vadd.f32 %v7881, 1.0
  %v7887 = vadd.f32 %v7883, 1.0
  %v7888 = vadd.f32 %v7885, 1.0
  %v7889 = vrcp.pop %v7886
  %v7890 = vmul.f32 1.0, %v7889
  %v7891 = vrcp.pop %v7887
  %v7892 = vmul.f32 1.0, %v7891
  %v7893 = vrcp.pop %v7888
  %v7894 = vmul.f32 1.0, %v7893
  %v7895 = vtanh.pop %v7876
  %v7896 = vmul.f32 %v7892, %v7783
  %v7897 = vmul.f32 %v7890, %v7895
  %v7898 = vadd.f32 %v7896, %v7897
  %v7899 = vtanh.pop %v7898
  %v7900 = vmul.f32 %v7894, %v7899
  %v7901 = vld [vmem:[#allocation2 + $0x60] sm:$0xff]
  %v7902 = vld [vmem:[#allocation2 + $0x68] sm:$0xff]
  %v7903 = vld [vmem:[#allocation2 + $0x70] sm:$0xff]
  %v7904 = vld [vmem:[#allocation2 + $0x78] sm:$0xff]
  %v7905 = vpack.c.bf16 %v7900, %v7900
  %7906 = vmatprep.subr.bf16.mxu0 %v7613
  %7907 = vmatpush1.bf16.msra.mxu0 %v7612
  %7908 = vmatprep.subr.bf16.mxu0 %v7617
  %7909 = vmatpush1.bf16.msra.mxu0 %v7616
  %7910 = vmatprep.subr.bf16.mxu0 %v7621
  %7911 = vmatpush1.bf16.msra.mxu0 %v7620
  %7912 = vmatprep.subr.bf16.mxu0 %v7625
  %7913 = vmatpush1.bf16.msra.mxu0 %v7624
  %7914 = vmatprep.subr.bf16.mxu0 %v7629
  %7915 = vmatpush1.bf16.msra.mxu0 %v7628
  %7916 = vmatprep.subr.bf16.mxu0 %v7633
  %7917 = vmatpush1.bf16.msra.mxu0 %v7632
  %7918 = vmatprep.subr.bf16.mxu0 %v7637
  %7919 = vmatpush1.bf16.msra.mxu0 %v7636
  %7920 = vmatprep.subr.bf16.mxu0 %v7641
  %7921 = vmatpush1.bf16.msra.mxu0 %v7640
  %7922 = vmatprep.subr.bf16.mxu0 0
  %7923 = vmatpush1.bf16.msra.mxu0 0
  %7924 = vmatprep.subr.bf16.mxu0 0
  %7925 = vmatpush1.bf16.msra.mxu0 0
  %7926 = vmatprep.subr.bf16.mxu0 0
  %7927 = vmatpush1.bf16.msra.mxu0 0
  %7928 = vmatprep.subr.bf16.mxu0 0
  %7929 = vmatpush1.bf16.msra.mxu0 0
  %7930 = vmatprep.subr.bf16.mxu0 0
  %7931 = vmatpush1.bf16.msra.mxu0 0
  %7932 = vmatprep.subr.bf16.mxu0 0
  %7933 = vmatpush1.bf16.msra.mxu0 0
  %7934 = vmatprep.subr.bf16.mxu0 0
  %7935 = vmatpush1.bf16.msra.mxu0 0
  %7936 = vmatprep.subr.bf16.mxu0 0
  %7937 = vmatpush1.bf16.msra.mxu0 0
  %7938 = vmatprep.mubr.bf16.mxu0 0
  %7939 = vmatmul.mubr.bf16.gmra.mrb[0].mxu0 %v7905
  %v7940 = vpop.f32.mrb[0].mxu0
  %v7941 = vadd.f32 0.0, %v7940
  %v7942 = vpop.f32.mrb[0].mxu0
  %v7943 = vadd.f32 0.0, %v7942
  %v7944 = vpop.f32.mrb[0].mxu0
  %v7945 = vpop.f32.mrb[0].mxu0
  %7946 = vdwg.mxu0
  %7947 = vmatprep.subr.bf16.mxu0 %v7615
  %7948 = vmatpush1.bf16.msra.mxu0 %v7614
  %7949 = vmatprep.subr.bf16.mxu0 %v7619
  %7950 = vmatpush1.bf16.msra.mxu0 %v7618
  %7951 = vmatprep.subr.bf16.mxu0 %v7623
  %7952 = vmatpush1.bf16.msra.mxu0 %v7622
  %7953 = vmatprep.subr.bf16.mxu0 %v7627
  %7954 = vmatpush1.bf16.msra.mxu0 %v7626
  %7955 = vmatprep.subr.bf16.mxu0 %v7631
  %7956 = vmatpush1.bf16.msra.mxu0 %v7630
  %7957 = vmatprep.subr.bf16.mxu0 %v7635
  %7958 = vmatpush1.bf16.msra.mxu0 %v7634
  %7959 = vmatprep.subr.bf16.mxu0 %v7639
  %7960 = vmatpush1.bf16.msra.mxu0 %v7638
  %7961 = vmatprep.subr.bf16.mxu0 %v7643
  %7962 = vmatpush1.bf16.msra.mxu0 %v7642
  %7963 = vmatprep.subr.bf16.mxu0 0
  %7964 = vmatpush1.bf16.msra.mxu0 0
  %7965 = vmatprep.subr.bf16.mxu0 0
  %7966 = vmatpush1.bf16.msra.mxu0 0
  %7967 = vmatprep.subr.bf16.mxu0 0
  %7968 = vmatpush1.bf16.msra.mxu0 0
  %7969 = vmatprep.subr.bf16.mxu0 0
  %7970 = vmatpush1.bf16.msra.mxu0 0
  %7971 = vmatprep.subr.bf16.mxu0 0
  %7972 = vmatpush1.bf16.msra.mxu0 0
  %7973 = vmatprep.subr.bf16.mxu0 0
  %7974 = vmatpush1.bf16.msra.mxu0 0
  %7975 = vmatprep.subr.bf16.mxu0 0
  %7976 = vmatpush1.bf16.msra.mxu0 0
  %7977 = vmatprep.subr.bf16.mxu0 0
  %7978 = vmatpush1.bf16.msra.mxu0 0
  %7979 = vmatprep.mubr.bf16.mxu0 0
  %7980 = vmatmul.mubr.bf16.gmra.mrb[0].mxu0 %v7905
  %v7981 = vpop.f32.mrb[0].mxu0
  %v7982 = vadd.f32 0.0, %v7981
  %v7983 = vpop.f32.mrb[0].mxu0
  %v7984 = vadd.f32 0.0, %v7983
  %v7985 = vpop.f32.mrb[0].mxu0
  %v7986 = vpop.f32.mrb[0].mxu0
  %7987 = vdwg.mxu0
  %v7988 = vadd.f32 %v7901, %v7941
  %v7989 = vadd.f32 %v7902, %v7943
  %v7990 = vadd.f32 %v7903, %v7982
  %v7991 = vadd.f32 %v7904, %v7984
  %v7992 = vxor.u32 %v7988, 2147483648
  %v7993 = vxor.u32 %v7989, 2147483648
  %v7994 = vxor.u32 %v7990, 2147483648
  %v7995 = vmul.f32 %v7992, 1.442695
  %v7996 = vpow.pop %v7995
  %v7997 = vmul.f32 %v7993, 1.442695
  %v7998 = vpow.pop %v7997
  %v7999 = vmul.f32 %v7994, 1.442695
  %v8000 = vpow.pop %v7999
  %v8001 = vadd.f32 %v7996, 1.0
  %v8002 = vadd.f32 %v7998, 1.0
  %v8003 = vadd.f32 %v8000, 1.0
  %v8004 = vrcp.pop %v8001
  %v8005 = vmul.f32 1.0, %v8004
  %v8006 = vrcp.pop %v8002
  %v8007 = vmul.f32 1.0, %v8006
  %v8008 = vrcp.pop %v8003
  %v8009 = vmul.f32 1.0, %v8008
  %v8010 = vtanh.pop %v7991
  %v8011 = vmul.f32 %v8007, %v7898
  %v8012 = vmul.f32 %v8005, %v8010
  %v8013 = vadd.f32 %v8011, %v8012
  %v8014 = vtanh.pop %v8013
  %v8015 = vmul.f32 %v8009, %v8014
  %v8016 = vld [vmem:[#allocation2 + $0x80] sm:$0xff]
  %v8017 = vld [vmem:[#allocation2 + $0x88] sm:$0xff]
  %v8018 = vld [vmem:[#allocation2 + $0x90] sm:$0xff]
  %v8019 = vld [vmem:[#allocation2 + $0x98] sm:$0xff]
  %v8020 = vpack.c.bf16 %v8015, %v8015
  %8021 = vmatprep.subr.bf16.mxu0 %v7613
  %8022 = vmatpush1.bf16.msra.mxu0 %v7612
  %8023 = vmatprep.subr.bf16.mxu0 %v7617
  %8024 = vmatpush1.bf16.msra.mxu0 %v7616
  %8025 = vmatprep.subr.bf16.mxu0 %v7621
  %8026 = vmatpush1.bf16.msra.mxu0 %v7620
  %8027 = vmatprep.subr.bf16.mxu0 %v7625
  %8028 = vmatpush1.bf16.msra.mxu0 %v7624
  %8029 = vmatprep.subr.bf16.mxu0 %v7629
  %8030 = vmatpush1.bf16.msra.mxu0 %v7628
  %8031 = vmatprep.subr.bf16.mxu0 %v7633
  %8032 = vmatpush1.bf16.msra.mxu0 %v7632
  %8033 = vmatprep.subr.bf16.mxu0 %v7637
  %8034 = vmatpush1.bf16.msra.mxu0 %v7636
  %8035 = vmatprep.subr.bf16.mxu0 %v7641
  %8036 = vmatpush1.bf16.msra.mxu0 %v7640
  %8037 = vmatprep.subr.bf16.mxu0 0
  %8038 = vmatpush1.bf16.msra.mxu0 0
  %8039 = vmatprep.subr.bf16.mxu0 0
  %8040 = vmatpush1.bf16.msra.mxu0 0
  %8041 = vmatprep.subr.bf16.mxu0 0
  %8042 = vmatpush1.bf16.msra.mxu0 0
  %8043 = vmatprep.subr.bf16.mxu0 0
  %8044 = vmatpush1.bf16.msra.mxu0 0
  %8045 = vmatprep.subr.bf16.mxu0 0
  %8046 = vmatpush1.bf16.msra.mxu0 0
  %8047 = vmatprep.subr.bf16.mxu0 0
  %8048 = vmatpush1.bf16.msra.mxu0 0
  %8049 = vmatprep.subr.bf16.mxu0 0
  %8050 = vmatpush1.bf16.msra.mxu0 0
  %8051 = vmatprep.subr.bf16.mxu0 0
  %8052 = vmatpush1.bf16.msra.mxu0 0
  %8053 = vmatprep.mubr.bf16.mxu0 0
  %8054 = vmatmul.mubr.bf16.gmra.mrb[0].mxu0 %v8020
  %v8055 = vpop.f32.mrb[0].mxu0
  %v8056 = vadd.f32 0.0, %v8055
  %v8057 = vpop.f32.mrb[0].mxu0
  %v8058 = vadd.f32 0.0, %v8057
  %v8059 = vpop.f32.mrb[0].mxu0
  %v8060 = vpop.f32.mrb[0].mxu0
  %8061 = vdwg.mxu0
  %8062 = vmatprep.subr.bf16.mxu0 %v7615
  %8063 = vmatpush1.bf16.msra.mxu0 %v7614
  %8064 = vmatprep.subr.bf16.mxu0 %v7619
  %8065 = vmatpush1.bf16.msra.mxu0 %v7618
  %8066 = vmatprep.subr.bf16.mxu0 %v7623
  %8067 = vmatpush1.bf16.msra.mxu0 %v7622
  %8068 = vmatprep.subr.bf16.mxu0 %v7627
  %8069 = vmatpush1.bf16.msra.mxu0 %v7626
  %8070 = vmatprep.subr.bf16.mxu0 %v7631
  %8071 = vmatpush1.bf16.msra.mxu0 %v7630
  %8072 = vmatprep.subr.bf16.mxu0 %v7635
  %8073 = vmatpush1.bf16.msra.mxu0 %v7634
  %8074 = vmatprep.subr.bf16.mxu0 %v7639
  %8075 = vmatpush1.bf16.msra.mxu0 %v7638
  %8076 = vmatprep.subr.bf16.mxu0 %v7643
  %8077 = vmatpush1.bf16.msra.mxu0 %v7642
  %8078 = vmatprep.subr.bf16.mxu0 0
  %8079 = vmatpush1.bf16.msra.mxu0 0
  %8080 = vmatprep.subr.bf16.mxu0 0
  %8081 = vmatpush1.bf16.msra.mxu0 0
  %8082 = vmatprep.subr.bf16.mxu0 0
  %8083 = vmatpush1.bf16.msra.mxu0 0
  %8084 = vmatprep.subr.bf16.mxu0 0
  %8085 = vmatpush1.bf16.msra.mxu0 0
  %8086 = vmatprep.subr.bf16.mxu0 0
  %8087 = vmatpush1.bf16.msra.mxu0 0
  %8088 = vmatprep.subr.bf16.mxu0 0
  %8089 = vmatpush1.bf16.msra.mxu0 0
  %8090 = vmatprep.subr.bf16.mxu0 0
  %8091 = vmatpush1.bf16.msra.mxu0 0
  %8092 = vmatprep.subr.bf16.mxu0 0
  %8093 = vmatpush1.bf16.msra.mxu0 0
  %8094 = vmatprep.mubr.bf16.mxu0 0
  %8095 = vmatmul.mubr.bf16.gmra.mrb[0].mxu0 %v8020
  %v8096 = vpop.f32.mrb[0].mxu0
  %v8097 = vadd.f32 0.0, %v8096
  %v8098 = vpop.f32.mrb[0].mxu0
  %v8099 = vadd.f32 0.0, %v8098
  %v8100 = vpop.f32.mrb[0].mxu0
  %v8101 = vpop.f32.mrb[0].mxu0
  %8102 = vdwg.mxu0
  %v8103 = vadd.f32 %v8016, %v8056
  %v8104 = vadd.f32 %v8017, %v8058
  %v8105 = vadd.f32 %v8018, %v8097
  %v8106 = vadd.f32 %v8019, %v8099
  %v8107 = vxor.u32 %v8103, 2147483648
  %v8108 = vxor.u32 %v8104, 2147483648
  %v8109 = vxor.u32 %v8105, 2147483648
  %v8110 = vmul.f32 %v8107, 1.442695
  %v8111 = vpow.pop %v8110
  %v8112 = vmul.f32 %v8108, 1.442695
  %v8113 = vpow.pop %v8112
  %v8114 = vmul.f32 %v8109, 1.442695
  %v8115 = vpow.pop %v8114
  %v8116 = vadd.f32 %v8111, 1.0
  %v8117 = vadd.f32 %v8113, 1.0
  %v8118 = vadd.f32 %v8115, 1.0
  %v8119 = vrcp.pop %v8116
  %v8120 = vmul.f32 1.0, %v8119
  %v8121 = vrcp.pop %v8117
  %v8122 = vmul.f32 1.0, %v8121
  %v8123 = vrcp.pop %v8118
  %v8124 = vmul.f32 1.0, %v8123
  %v8125 = vtanh.pop %v8106
  %v8126 = vmul.f32 %v8122, %v8013
  %v8127 = vmul.f32 %v8120, %v8125
  %v8128 = vadd.f32 %v8126, %v8127
  %v8129 = vtanh.pop %v8128
  %v8130 = vmul.f32 %v8124, %v8129
  %v8131 = vld [vmem:[#allocation2 + $0xa0] sm:$0xff]
  %v8132 = vld [vmem:[#allocation2 + $0xa8] sm:$0xff]
  %v8133 = vld [vmem:[#allocation2 + $0xb0] sm:$0xff]
  %v8134 = vld [vmem:[#allocation2 + $0xb8] sm:$0xff]
  %v8135 = vpack.c.bf16 %v8130, %v8130
  %8136 = vmatprep.subr.bf16.mxu0 %v7613
  %8137 = vmatpush1.bf16.msra.mxu0 %v7612
  %8138 = vmatprep.subr.bf16.mxu0 %v7617
  %8139 = vmatpush1.bf16.msra.mxu0 %v7616
  %8140 = vmatprep.subr.bf16.mxu0 %v7621
  %8141 = vmatpush1.bf16.msra.mxu0 %v7620
  %8142 = vmatprep.subr.bf16.mxu0 %v7625
  %8143 = vmatpush1.bf16.msra.mxu0 %v7624
  %8144 = vmatprep.subr.bf16.mxu0 %v7629
  %8145 = vmatpush1.bf16.msra.mxu0 %v7628
  %8146 = vmatprep.subr.bf16.mxu0 %v7633
  %8147 = vmatpush1.bf16.msra.mxu0 %v7632
  %8148 = vmatprep.subr.bf16.mxu0 %v7637
  %8149 = vmatpush1.bf16.msra.mxu0 %v7636
  %8150 = vmatprep.subr.bf16.mxu0 %v7641
  %8151 = vmatpush1.bf16.msra.mxu0 %v7640
  %8152 = vmatprep.subr.bf16.mxu0 0
  %8153 = vmatpush1.bf16.msra.mxu0 0
  %8154 = vmatprep.subr.bf16.mxu0 0
  %8155 = vmatpush1.bf16.msra.mxu0 0
  %8156 = vmatprep.subr.bf16.mxu0 0
  %8157 = vmatpush1.bf16.msra.mxu0 0
  %8158 = vmatprep.subr.bf16.mxu0 0
  %8159 = vmatpush1.bf16.msra.mxu0 0
  %8160 = vmatprep.subr.bf16.mxu0 0
  %8161 = vmatpush1.bf16.msra.mxu0 0
  %8162 = vmatprep.subr.bf16.mxu0 0
  %8163 = vmatpush1.bf16.msra.mxu0 0
  %8164 = vmatprep.subr.bf16.mxu0 0
  %8165 = vmatpush1.bf16.msra.mxu0 0
  %8166 = vmatprep.subr.bf16.mxu0 0
  %8167 = vmatpush1.bf16.msra.mxu0 0
  %8168 = vmatprep.mubr.bf16.mxu0 0
  %8169 = vmatmul.mubr.bf16.gmra.mrb[0].mxu0 %v8135
  %v8170 = vpop.f32.mrb[0].mxu0
  %v8171 = vadd.f32 0.0, %v8170
  %v8172 = vpop.f32.mrb[0].mxu0
  %v8173 = vadd.f32 0.0, %v8172
  %v8174 = vpop.f32.mrb[0].mxu0
  %v8175 = vpop.f32.mrb[0].mxu0
  %8176 = vdwg.mxu0
  %8177 = vmatprep.subr.bf16.mxu0 %v7615
  %8178 = vmatpush1.bf16.msra.mxu0 %v7614
  %8179 = vmatprep.subr.bf16.mxu0 %v7619
  %8180 = vmatpush1.bf16.msra.mxu0 %v7618
  %8181 = vmatprep.subr.bf16.mxu0 %v7623
  %8182 = vmatpush1.bf16.msra.mxu0 %v7622
  %8183 = vmatprep.subr.bf16.mxu0 %v7627
  %8184 = vmatpush1.bf16.msra.mxu0 %v7626
  %8185 = vmatprep.subr.bf16.mxu0 %v7631
  %8186 = vmatpush1.bf16.msra.mxu0 %v7630
  %8187 = vmatprep.subr.bf16.mxu0 %v7635
  %8188 = vmatpush1.bf16.msra.mxu0 %v7634
  %8189 = vmatprep.subr.bf16.mxu0 %v7639
  %8190 = vmatpush1.bf16.msra.mxu0 %v7638
  %8191 = vmatprep.subr.bf16.mxu0 %v7643
  %8192 = vmatpush1.bf16.msra.mxu0 %v7642
  %8193 = vmatprep.subr.bf16.mxu0 0
  %8194 = vmatpush1.bf16.msra.mxu0 0
  %8195 = vmatprep.subr.bf16.mxu0 0
  %8196 = vmatpush1.bf16.msra.mxu0 0
  %8197 = vmatprep.subr.bf16.mxu0 0
  %8198 = vmatpush1.bf16.msra.mxu0 0
  %8199 = vmatprep.subr.bf16.mxu0 0
  %8200 = vmatpush1.bf16.msra.mxu0 0
  %8201 = vmatprep.subr.bf16.mxu0 0
  %8202 = vmatpush1.bf16.msra.mxu0 0
  %8203 = vmatprep.subr.bf16.mxu0 0
  %8204 = vmatpush1.bf16.msra.mxu0 0
  %8205 = vmatprep.subr.bf16.mxu0 0
  %8206 = vmatpush1.bf16.msra.mxu0 0
  %8207 = vmatprep.subr.bf16.mxu0 0
  %8208 = vmatpush1.bf16.msra.mxu0 0
  %8209 = vmatprep.mubr.bf16.mxu0 0
  %8210 = vmatmul.mubr.bf16.gmra.mrb[0].mxu0 %v8135
  %v8211 = vpop.f32.mrb[0].mxu0
  %v8212 = vadd.f32 0.0, %v8211
  %v8213 = vpop.f32.mrb[0].mxu0
  %v8214 = vadd.f32 0.0, %v8213
  %v8215 = vpop.f32.mrb[0].mxu0
  %v8216 = vpop.f32.mrb[0].mxu0
  %8217 = vdwg.mxu0
  %v8218 = vadd.f32 %v8131, %v8171
  %v8219 = vadd.f32 %v8132, %v8173
  %v8220 = vadd.f32 %v8133, %v8212
  %v8221 = vadd.f32 %v8134, %v8214
  %v8222 = vxor.u32 %v8218, 2147483648
  %v8223 = vxor.u32 %v8219, 2147483648
  %v8224 = vxor.u32 %v8220, 2147483648
  %v8225 = vmul.f32 %v8222, 1.442695
  %v8226 = vpow.pop %v8225
  %v8227 = vmul.f32 %v8223, 1.442695
  %v8228 = vpow.pop %v8227
  %v8229 = vmul.f32 %v8224, 1.442695
  %v8230 = vpow.pop %v8229
  %v8231 = vadd.f32 %v8226, 1.0
  %v8232 = vadd.f32 %v8228, 1.0
  %v8233 = vadd.f32 %v8230, 1.0
  %v8234 = vrcp.pop %v8231
  %v8235 = vmul.f32 1.0, %v8234
  %v8236 = vrcp.pop %v8232
  %v8237 = vmul.f32 1.0, %v8236
  %v8238 = vrcp.pop %v8233
  %v8239 = vmul.f32 1.0, %v8238
  %v8240 = vtanh.pop %v8221
  %v8241 = vmul.f32 %v8237, %v8128
  %v8242 = vmul.f32 %v8235, %v8240
  %v8243 = vadd.f32 %v8241, %v8242
  %v8244 = vtanh.pop %v8243
  %v8245 = vmul.f32 %v8239, %v8244
  %v8246 = vld [vmem:[#allocation2 + $0xc0] sm:$0xff]
  %v8247 = vld [vmem:[#allocation2 + $0xc8] sm:$0xff]
  %v8248 = vld [vmem:[#allocation2 + $0xd0] sm:$0xff]
  %v8249 = vld [vmem:[#allocation2 + $0xd8] sm:$0xff]
  %v8250 = vpack.c.bf16 %v8245, %v8245
  %8251 = vmatprep.subr.bf16.mxu0 %v7613
  %8252 = vmatpush1.bf16.msra.mxu0 %v7612
  %8253 = vmatprep.subr.bf16.mxu0 %v7617
  %8254 = vmatpush1.bf16.msra.mxu0 %v7616
  %8255 = vmatprep.subr.bf16.mxu0 %v7621
  %8256 = vmatpush1.bf16.msra.mxu0 %v7620
  %8257 = vmatprep.subr.bf16.mxu0 %v7625
  %8258 = vmatpush1.bf16.msra.mxu0 %v7624
  %8259 = vmatprep.subr.bf16.mxu0 %v7629
  %8260 = vmatpush1.bf16.msra.mxu0 %v7628
  %8261 = vmatprep.subr.bf16.mxu0 %v7633
  %8262 = vmatpush1.bf16.msra.mxu0 %v7632
  %8263 = vmatprep.subr.bf16.mxu0 %v7637
  %8264 = vmatpush1.bf16.msra.mxu0 %v7636
  %8265 = vmatprep.subr.bf16.mxu0 %v7641
  %8266 = vmatpush1.bf16.msra.mxu0 %v7640
  %8267 = vmatprep.subr.bf16.mxu0 0
  %8268 = vmatpush1.bf16.msra.mxu0 0
  %8269 = vmatprep.subr.bf16.mxu0 0
  %8270 = vmatpush1.bf16.msra.mxu0 0
  %8271 = vmatprep.subr.bf16.mxu0 0
  %8272 = vmatpush1.bf16.msra.mxu0 0
  %8273 = vmatprep.subr.bf16.mxu0 0
  %8274 = vmatpush1.bf16.msra.mxu0 0
  %8275 = vmatprep.subr.bf16.mxu0 0
  %8276 = vmatpush1.bf16.msra.mxu0 0
  %8277 = vmatprep.subr.bf16.mxu0 0
  %8278 = vmatpush1.bf16.msra.mxu0 0
  %8279 = vmatprep.subr.bf16.mxu0 0
  %8280 = vmatpush1.bf16.msra.mxu0 0
  %8281 = vmatprep.subr.bf16.mxu0 0
  %8282 = vmatpush1.bf16.msra.mxu0 0
  %8283 = vmatprep.mubr.bf16.mxu0 0
  %8284 = vmatmul.mubr.bf16.gmra.mrb[0].mxu0 %v8250
  %v8285 = vpop.f32.mrb[0].mxu0
  %v8286 = vadd.f32 0.0, %v8285
  %v8287 = vpop.f32.mrb[0].mxu0
  %v8288 = vadd.f32 0.0, %v8287
  %v8289 = vpop.f32.mrb[0].mxu0
  %v8290 = vpop.f32.mrb[0].mxu0
  %8291 = vdwg.mxu0
  %8292 = vmatprep.subr.bf16.mxu0 %v7615
  %8293 = vmatpush1.bf16.msra.mxu0 %v7614
  %8294 = vmatprep.subr.bf16.mxu0 %v7619
  %8295 = vmatpush1.bf16.msra.mxu0 %v7618
  %8296 = vmatprep.subr.bf16.mxu0 %v7623
  %8297 = vmatpush1.bf16.msra.mxu0 %v7622
  %8298 = vmatprep.subr.bf16.mxu0 %v7627
  %8299 = vmatpush1.bf16.msra.mxu0 %v7626
  %8300 = vmatprep.subr.bf16.mxu0 %v7631
  %8301 = vmatpush1.bf16.msra.mxu0 %v7630
  %8302 = vmatprep.subr.bf16.mxu0 %v7635
  %8303 = vmatpush1.bf16.msra.mxu0 %v7634
  %8304 = vmatprep.subr.bf16.mxu0 %v7639
  %8305 = vmatpush1.bf16.msra.mxu0 %v7638
  %8306 = vmatprep.subr.bf16.mxu0 %v7643
  %8307 = vmatpush1.bf16.msra.mxu0 %v7642
  %8308 = vmatprep.subr.bf16.mxu0 0
  %8309 = vmatpush1.bf16.msra.mxu0 0
  %8310 = vmatprep.subr.bf16.mxu0 0
  %8311 = vmatpush1.bf16.msra.mxu0 0
  %8312 = vmatprep.subr.bf16.mxu0 0
  %8313 = vmatpush1.bf16.msra.mxu0 0
  %8314 = vmatprep.subr.bf16.mxu0 0
  %8315 = vmatpush1.bf16.msra.mxu0 0
  %8316 = vmatprep.subr.bf16.mxu0 0
  %8317 = vmatpush1.bf16.msra.mxu0 0
  %8318 = vmatprep.subr.bf16.mxu0 0
  %8319 = vmatpush1.bf16.msra.mxu0 0
  %8320 = vmatprep.subr.bf16.mxu0 0
  %8321 = vmatpush1.bf16.msra.mxu0 0
  %8322 = vmatprep.subr.bf16.mxu0 0
  %8323 = vmatpush1.bf16.msra.mxu0 0
  %8324 = vmatprep.mubr.bf16.mxu0 0
  %8325 = vmatmul.mubr.bf16.gmra.mrb[0].mxu0 %v8250
  %v8326 = vpop.f32.mrb[0].mxu0
  %v8327 = vadd.f32 0.0, %v8326
  %v8328 = vpop.f32.mrb[0].mxu0
  %v8329 = vadd.f32 0.0, %v8328
  %v8330 = vpop.f32.mrb[0].mxu0
  %v8331 = vpop.f32.mrb[0].mxu0
  %8332 = vdwg.mxu0
  %v8333 = vadd.f32 %v8246, %v8286
  %v8334 = vadd.f32 %v8247, %v8288
  %v8335 = vadd.f32 %v8248, %v8327
  %v8336 = vadd.f32 %v8249, %v8329
  %v8337 = vxor.u32 %v8333, 2147483648
  %v8338 = vxor.u32 %v8334, 2147483648
  %v8339 = vxor.u32 %v8335, 2147483648
  %v8340 = vmul.f32 %v8337, 1.442695
  %v8341 = vpow.pop %v8340
  %v8342 = vmul.f32 %v8338, 1.442695
  %v8343 = vpow.pop %v8342
  %v8344 = vmul.f32 %v8339, 1.442695
  %v8345 = vpow.pop %v8344
  %v8346 = vadd.f32 %v8341, 1.0
  %v8347 = vadd.f32 %v8343, 1.0
  %v8348 = vadd.f32 %v8345, 1.0
  %v8349 = vrcp.pop %v8346
  %v8350 = vmul.f32 1.0, %v8349
  %v8351 = vrcp.pop %v8347
  %v8352 = vmul.f32 1.0, %v8351
  %v8353 = vrcp.pop %v8348
  %v8354 = vmul.f32 1.0, %v8353
  %v8355 = vtanh.pop %v8336
  %v8356 = vmul.f32 %v8352, %v8243
  %v8357 = vmul.f32 %v8350, %v8355
  %v8358 = vadd.f32 %v8356, %v8357
  %v8359 = vtanh.pop %v8358
  %v8360 = vmul.f32 %v8354, %v8359
  %v8361 = vld [vmem:[#allocation2 + $0xe0] sm:$0xff]
  %v8362 = vld [vmem:[#allocation2 + $0xe8] sm:$0xff]
  %v8363 = vld [vmem:[#allocation2 + $0xf0] sm:$0xff]
  %v8364 = vld [vmem:[#allocation2 + $0xf8] sm:$0xff]
  %v8365 = vpack.c.bf16 %v8360, %v8360
  %8366 = vmatprep.subr.bf16.mxu0 %v7613
  %8367 = vmatpush1.bf16.msra.mxu0 %v7612
  %8368 = vmatprep.subr.bf16.mxu0 %v7617
  %8369 = vmatpush1.bf16.msra.mxu0 %v7616
  %8370 = vmatprep.subr.bf16.mxu0 %v7621
  %8371 = vmatpush1.bf16.msra.mxu0 %v7620
  %8372 = vmatprep.subr.bf16.mxu0 %v7625
  %8373 = vmatpush1.bf16.msra.mxu0 %v7624
  %8374 = vmatprep.subr.bf16.mxu0 %v7629
  %8375 = vmatpush1.bf16.msra.mxu0 %v7628
  %8376 = vmatprep.subr.bf16.mxu0 %v7633
  %8377 = vmatpush1.bf16.msra.mxu0 %v7632
  %8378 = vmatprep.subr.bf16.mxu0 %v7637
  %8379 = vmatpush1.bf16.msra.mxu0 %v7636
  %8380 = vmatprep.subr.bf16.mxu0 %v7641
  %8381 = vmatpush1.bf16.msra.mxu0 %v7640
  %8382 = vmatprep.subr.bf16.mxu0 0
  %8383 = vmatpush1.bf16.msra.mxu0 0
  %8384 = vmatprep.subr.bf16.mxu0 0
  %8385 = vmatpush1.bf16.msra.mxu0 0
  %8386 = vmatprep.subr.bf16.mxu0 0
  %8387 = vmatpush1.bf16.msra.mxu0 0
  %8388 = vmatprep.subr.bf16.mxu0 0
  %8389 = vmatpush1.bf16.msra.mxu0 0
  %8390 = vmatprep.subr.bf16.mxu0 0
  %8391 = vmatpush1.bf16.msra.mxu0 0
  %8392 = vmatprep.subr.bf16.mxu0 0
  %8393 = vmatpush1.bf16.msra.mxu0 0
  %8394 = vmatprep.subr.bf16.mxu0 0
  %8395 = vmatpush1.bf16.msra.mxu0 0
  %8396 = vmatprep.subr.bf16.mxu0 0
  %8397 = vmatpush1.bf16.msra.mxu0 0
  %8398 = vmatprep.mubr.bf16.mxu0 0
  %8399 = vmatmul.mubr.bf16.gmra.mrb[0].mxu0 %v8365
  %v8400 = vpop.f32.mrb[0].mxu0
  %v8401 = vadd.f32 0.0, %v8400
  %v8402 = vpop.f32.mrb[0].mxu0
  %v8403 = vadd.f32 0.0, %v8402
  %v8404 = vpop.f32.mrb[0].mxu0
  %v8405 = vpop.f32.mrb[0].mxu0
  %8406 = vdwg.mxu0
  %8407 = vmatprep.subr.bf16.mxu0 %v7615
  %8408 = vmatpush1.bf16.msra.mxu0 %v7614
  %8409 = vmatprep.subr.bf16.mxu0 %v7619
  %8410 = vmatpush1.bf16.msra.mxu0 %v7618
  %8411 = vmatprep.subr.bf16.mxu0 %v7623
  %8412 = vmatpush1.bf16.msra.mxu0 %v7622
  %8413 = vmatprep.subr.bf16.mxu0 %v7627
  %8414 = vmatpush1.bf16.msra.mxu0 %v7626
  %8415 = vmatprep.subr.bf16.mxu0 %v7631
  %8416 = vmatpush1.bf16.msra.mxu0 %v7630
  %8417 = vmatprep.subr.bf16.mxu0 %v7635
  %8418 = vmatpush1.bf16.msra.mxu0 %v7634
  %8419 = vmatprep.subr.bf16.mxu0 %v7639
  %8420 = vmatpush1.bf16.msra.mxu0 %v7638
  %8421 = vmatprep.subr.bf16.mxu0 %v7643
  %8422 = vmatpush1.bf16.msra.mxu0 %v7642
  %8423 = vmatprep.subr.bf16.mxu0 0
  %8424 = vmatpush1.bf16.msra.mxu0 0
  %8425 = vmatprep.subr.bf16.mxu0 0
  %8426 = vmatpush1.bf16.msra.mxu0 0
  %8427 = vmatprep.subr.bf16.mxu0 0
  %8428 = vmatpush1.bf16.msra.mxu0 0
  %8429 = vmatprep.subr.bf16.mxu0 0
  %8430 = vmatpush1.bf16.msra.mxu0 0
  %8431 = vmatprep.subr.bf16.mxu0 0
  %8432 = vmatpush1.bf16.msra.mxu0 0
  %8433 = vmatprep.subr.bf16.mxu0 0
  %8434 = vmatpush1.bf16.msra.mxu0 0
  %8435 = vmatprep.subr.bf16.mxu0 0
  %8436 = vmatpush1.bf16.msra.mxu0 0
  %8437 = vmatprep.subr.bf16.mxu0 0
  %8438 = vmatpush1.bf16.msra.mxu0 0
  %8439 = vmatprep.mubr.bf16.mxu0 0
  %8440 = vmatmul.mubr.bf16.gmra.mrb[0].mxu0 %v8365
  %v8441 = vpop.f32.mrb[0].mxu0
  %v8442 = vadd.f32 0.0, %v8441
  %v8443 = vpop.f32.mrb[0].mxu0
  %v8444 = vadd.f32 0.0, %v8443
  %v8445 = vpop.f32.mrb[0].mxu0
  %v8446 = vpop.f32.mrb[0].mxu0
  %8447 = vdwg.mxu0
  %v8448 = vadd.f32 %v8361, %v8401
  %v8449 = vadd.f32 %v8362, %v8403
  %v8450 = vadd.f32 %v8363, %v8442
  %v8451 = vadd.f32 %v8364, %v8444
  %v8452 = vxor.u32 %v8448, 2147483648
  %v8453 = vxor.u32 %v8449, 2147483648
  %v8454 = vxor.u32 %v8450, 2147483648
  %v8455 = vmul.f32 %v8452, 1.442695
  %v8456 = vpow.pop %v8455
  %v8457 = vmul.f32 %v8453, 1.442695
  %v8458 = vpow.pop %v8457
  %v8459 = vmul.f32 %v8454, 1.442695
  %v8460 = vpow.pop %v8459
  %v8461 = vadd.f32 %v8456, 1.0
  %v8462 = vadd.f32 %v8458, 1.0
  %v8463 = vadd.f32 %v8460, 1.0
  %v8464 = vrcp.pop %v8461
  %v8465 = vmul.f32 1.0, %v8464
  %v8466 = vrcp.pop %v8462
  %v8467 = vmul.f32 1.0, %v8466
  %v8468 = vrcp.pop %v8463
  %v8469 = vmul.f32 1.0, %v8468
  %v8470 = vtanh.pop %v8451
  %v8471 = vmul.f32 %v8467, %v8358
  %v8472 = vmul.f32 %v8465, %v8470
  %v8473 = vadd.f32 %v8471, %v8472
  %v8474 = vtanh.pop %v8473
  %v8475 = vmul.f32 %v8469, %v8474
  %v8476 = vpack.c.bf16 %v8475, %v8475
  %v8477 = vld [vmem:[%s19] sm:$0xf]
  %v8478 = vld [vmem:[%s19 + $0x4] sm:$0xf]
  %v8479 = vld [vmem:[%s19 + $0x8] sm:$0xf]
  %v8480 = vld [vmem:[%s19 + $0xc] sm:$0xf]
  %v8481 = vld [vmem:[%s19 + $0x10] sm:$0xf]
  %v8482 = vld [vmem:[%s19 + $0x14] sm:$0xf]
  %v8483 = vld [vmem:[%s19 + $0x18] sm:$0xf]
  %v8484 = vld [vmem:[%s19 + $0x1c] sm:$0xf]
  %v8485 = vld [vmem:[%s19 + $0x20] sm:$0xf]
  %v8486 = vld [vmem:[%s19 + $0x24] sm:$0xf]
  %v8487 = vld [vmem:[%s19 + $0x28] sm:$0xf]
  %v8488 = vld [vmem:[%s19 + $0x2c] sm:$0xf]
  %v8489 = vld [vmem:[%s19 + $0x30] sm:$0xf]
  %v8490 = vld [vmem:[%s19 + $0x34] sm:$0xf]
  %v8491 = vld [vmem:[%s19 + $0x38] sm:$0xf]
  %v8492 = vld [vmem:[%s19 + $0x3c] sm:$0xf]
  %v8493 = vld [vmem:[%s20] sm:$0xf]
  %v8494 = vld [vmem:[%s20 + $0x4] sm:$0xf]
  %v8495 = vld [vmem:[%s20 + $0x8] sm:$0xf]
  %v8496 = vld [vmem:[%s20 + $0xc] sm:$0xf]
  %v8497 = vld [vmem:[%s20 + $0x10] sm:$0xf]
  %v8498 = vld [vmem:[%s20 + $0x14] sm:$0xf]
  %v8499 = vld [vmem:[%s20 + $0x18] sm:$0xf]
  %v8500 = vld [vmem:[%s20 + $0x1c] sm:$0xf]
  %v8501 = vld [vmem:[%s20 + $0x20] sm:$0xf]
  %v8502 = vld [vmem:[%s20 + $0x24] sm:$0xf]
  %v8503 = vld [vmem:[%s20 + $0x28] sm:$0xf]
  %v8504 = vld [vmem:[%s20 + $0x2c] sm:$0xf]
  %v8505 = vld [vmem:[%s20 + $0x30] sm:$0xf]
  %v8506 = vld [vmem:[%s20 + $0x34] sm:$0xf]
  %v8507 = vld [vmem:[%s20 + $0x38] sm:$0xf]
  %v8508 = vld [vmem:[%s20 + $0x3c] sm:$0xf]
  %v8510 = vrot.slane %v8476, 1
  %v8528 = vunpack.c.l.b16 %v8493
  %v8529 = vunpack.c.l.b16 %v8494
  %v8530 = vunpack.c.l.b16 %v8495
  %v8531 = vunpack.c.l.b16 %v8496
  %v8532 = vunpack.c.l.b16 %v8497
  %v8533 = vunpack.c.l.b16 %v8498
  %v8534 = vunpack.c.l.b16 %v8499
  %v8535 = vunpack.c.l.b16 %v8500
  %v8536 = vunpack.c.l.b16 %v8501
  %v8537 = vunpack.c.l.b16 %v8502
  %v8538 = vunpack.c.l.b16 %v8503
  %v8539 = vunpack.c.l.b16 %v8504
  %v8540 = vunpack.c.l.b16 %v8505
  %v8541 = vunpack.c.l.b16 %v8506
  %v8542 = vunpack.c.l.b16 %v8507
  %v8543 = vunpack.c.l.b16 %v8508
  %v8544 = vpack.c.b16 %v8529, %v8528
  %v8545 = vpack.c.b16 %v8531, %v8530
  %v8546 = vpack.c.b16 %v8533, %v8532
  %v8547 = vpack.c.b16 %v8535, %v8534
  %v8548 = vpack.c.b16 %v8537, %v8536
  %v8549 = vpack.c.b16 %v8539, %v8538
  %v8550 = vpack.c.b16 %v8541, %v8540
  %v8551 = vpack.c.b16 %v8543, %v8542
  %8560 = vmatprep.subr.bf16.mxu0 0
  %8561 = vmatpush1.bf16.msra.mxu0 %v8544
  %8562 = vmatprep.subr.bf16.mxu0 0
  %8563 = vmatpush1.bf16.msra.mxu0 %v8545
  %8564 = vmatprep.subr.bf16.mxu0 0
  %8565 = vmatpush1.bf16.msra.mxu0 %v8546
  %8566 = vmatprep.subr.bf16.mxu0 0
  %8567 = vmatpush1.bf16.msra.mxu0 %v8547
  %8568 = vmatprep.subr.bf16.mxu0 0
  %8569 = vmatpush1.bf16.msra.mxu0 %v8548
  %8570 = vmatprep.subr.bf16.mxu0 0
  %8571 = vmatpush1.bf16.msra.mxu0 %v8549
  %8572 = vmatprep.subr.bf16.mxu0 0
  %8573 = vmatpush1.bf16.msra.mxu0 %v8550
  %8574 = vmatprep.subr.bf16.mxu0 0
  %8575 = vmatpush1.bf16.msra.mxu0 %v8551
  %8576 = vmatprep.subr.bf16.mxu0 0
  %8577 = vmatpush1.bf16.msra.mxu0 0
  %8578 = vmatprep.subr.bf16.mxu0 0
  %8579 = vmatpush1.bf16.msra.mxu0 0
  %8580 = vmatprep.subr.bf16.mxu0 0
  %8581 = vmatpush1.bf16.msra.mxu0 0
  %8582 = vmatprep.subr.bf16.mxu0 0
  %8583 = vmatpush1.bf16.msra.mxu0 0
  %8584 = vmatprep.subr.bf16.mxu0 0
  %8585 = vmatpush1.bf16.msra.mxu0 0
  %8586 = vmatprep.subr.bf16.mxu0 0
  %8587 = vmatpush1.bf16.msra.mxu0 0
  %8588 = vmatprep.subr.bf16.mxu0 0
  %8589 = vmatpush1.bf16.msra.mxu0 0
  %8590 = vmatprep.subr.bf16.mxu0 0
  %8591 = vmatpush1.bf16.msra.mxu0 0
  %8592 = vmatprep.mubr.bf16.mxu0 0
  %8593 = vmatmul.mubr.bf16.gmra.mrb[0].mxu0 %v8510
  %v8594 = vpop.f32.mrb[0].mxu0
  %v8595 = vadd.f32 0.0, %v8594
  %v8596 = vpop.f32.mrb[0].mxu0
  %v8597 = vpop.f32.mrb[0].mxu0
  %v8598 = vpop.f32.mrb[0].mxu0
  %8599 = vdwg.mxu0
  %v8616 = vunpack.c.l.b16 %v8477
  %v8617 = vunpack.c.l.b16 %v8478
  %v8618 = vunpack.c.l.b16 %v8479
  %v8619 = vunpack.c.l.b16 %v8480
  %v8620 = vunpack.c.l.b16 %v8481
  %v8621 = vunpack.c.l.b16 %v8482
  %v8622 = vunpack.c.l.b16 %v8483
  %v8623 = vunpack.c.l.b16 %v8484
  %v8624 = vunpack.c.l.b16 %v8485
  %v8625 = vunpack.c.l.b16 %v8486
  %v8626 = vunpack.c.l.b16 %v8487
  %v8627 = vunpack.c.l.b16 %v8488
  %v8628 = vunpack.c.l.b16 %v8489
  %v8629 = vunpack.c.l.b16 %v8490
  %v8630 = vunpack.c.l.b16 %v8491
  %v8631 = vunpack.c.l.b16 %v8492
  %v8632 = vpack.c.b16 %v8617, %v8616
  %v8633 = vpack.c.b16 %v8619, %v8618
  %v8634 = vpack.c.b16 %v8621, %v8620
  %v8635 = vpack.c.b16 %v8623, %v8622
  %v8636 = vpack.c.b16 %v8625, %v8624
  %v8637 = vpack.c.b16 %v8627, %v8626
  %v8638 = vpack.c.b16 %v8629, %v8628
  %v8639 = vpack.c.b16 %v8631, %v8630
  %8648 = vmatprep.subr.bf16.mxu0 0
  %8649 = vmatpush1.bf16.msra.mxu0 %v8632
  %8650 = vmatprep.subr.bf16.mxu0 0
  %8651 = vmatpush1.bf16.msra.mxu0 %v8633
  %8652 = vmatprep.subr.bf16.mxu0 0
  %8653 = vmatpush1.bf16.msra.mxu0 %v8634
  %8654 = vmatprep.subr.bf16.mxu0 0
  %8655 = vmatpush1.bf16.msra.mxu0 %v8635
  %8656 = vmatprep.subr.bf16.mxu0 0
  %8657 = vmatpush1.bf16.msra.mxu0 %v8636
  %8658 = vmatprep.subr.bf16.mxu0 0
  %8659 = vmatpush1.bf16.msra.mxu0 %v8637
  %8660 = vmatprep.subr.bf16.mxu0 0
  %8661 = vmatpush1.bf16.msra.mxu0 %v8638
  %8662 = vmatprep.subr.bf16.mxu0 0
  %8663 = vmatpush1.bf16.msra.mxu0 %v8639
  %8664 = vmatprep.subr.bf16.mxu0 0
  %8665 = vmatpush1.bf16.msra.mxu0 0
  %8666 = vmatprep.subr.bf16.mxu0 0
  %8667 = vmatpush1.bf16.msra.mxu0 0
  %8668 = vmatprep.subr.bf16.mxu0 0
  %8669 = vmatpush1.bf16.msra.mxu0 0
  %8670 = vmatprep.subr.bf16.mxu0 0
  %8671 = vmatpush1.bf16.msra.mxu0 0
  %8672 = vmatprep.subr.bf16.mxu0 0
  %8673 = vmatpush1.bf16.msra.mxu0 0
  %8674 = vmatprep.subr.bf16.mxu0 0
  %8675 = vmatpush1.bf16.msra.mxu0 0
  %8676 = vmatprep.subr.bf16.mxu0 0
  %8677 = vmatpush1.bf16.msra.mxu0 0
  %8678 = vmatprep.subr.bf16.mxu0 0
  %8679 = vmatpush1.bf16.msra.mxu0 0
  %8680 = vmatprep.mubr.bf16.mxu0 0
  %8681 = vmatmul.mubr.bf16.gmra.mrb[0].mxu0 %v8476
  %v8682 = vpop.f32.mrb[0].mxu0
  %v8683 = vadd.f32 %v8595, %v8682
  %v8684 = vpop.f32.mrb[0].mxu0
  %v8685 = vpop.f32.mrb[0].mxu0
  %v8686 = vpop.f32.mrb[0].mxu0
  %8687 = vdwg.mxu0
  %v8688 = vld [vmem:[%s21] sm:$0x1]
  %v8690 = vlaneseq
  %v8691 = vshrl.u32 %v8690, 7
  %v8692 = vsub.s32 0, %v8691
  %v8693 = vrot.slane %v8688, %v8692
  %v8695 = vadd.f32 %v8683, %v8693
  %v8696 = vmax.f32 %v8695, 0.0
  %v8697 = vpack.c.bf16 %v8696, %v8696
  %v8698 = vld [vmem:[%s22] sm:$0xf]
  %v8699 = vld [vmem:[%s22 + $0x4] sm:$0xf]
  %v8700 = vld [vmem:[%s22 + $0x8] sm:$0xf]
  %v8701 = vld [vmem:[%s22 + $0xc] sm:$0xf]
  %v8702 = vld [vmem:[%s23] sm:$0x1]
  %v8704 = vlaneseq
  %v8705 = vshrl.u32 %v8704, 7
  %v8706 = vsub.s32 0, %v8705
  %v8707 = vrot.slane %v8702, %v8706
  %v8713 = vunpack.c.l.b16 %v8698
  %v8714 = vunpack.c.l.b16 %v8699
  %v8715 = vunpack.c.l.b16 %v8700
  %v8716 = vunpack.c.l.b16 %v8701
  %v8717 = vpack.c.b16 %v8714, %v8713
  %v8718 = vpack.c.b16 %v8716, %v8715
  %vm8721 = vcmask 261120
  %v8723 = vsel %vm8721, %v8697, 0
  %8725 = vmatprep.subr.bf16.mxu0 0
  %8726 = vmatpush1.bf16.msra.mxu0 %v8717
  %8727 = vmatprep.subr.bf16.mxu0 0
  %8728 = vmatpush1.bf16.msra.mxu0 %v8718
  %8729 = vmatprep.subr.bf16.mxu0 0
  %8730 = vmatpush1.bf16.msra.mxu0 0
  %8731 = vmatprep.subr.bf16.mxu0 0
  %8732 = vmatpush1.bf16.msra.mxu0 0
  %8733 = vmatprep.subr.bf16.mxu0 0
  %8734 = vmatpush1.bf16.msra.mxu0 0
  %8735 = vmatprep.subr.bf16.mxu0 0
  %8736 = vmatpush1.bf16.msra.mxu0 0
  %8737 = vmatprep.subr.bf16.mxu0 0
  %8738 = vmatpush1.bf16.msra.mxu0 0
  %8739 = vmatprep.subr.bf16.mxu0 0
  %8740 = vmatpush1.bf16.msra.mxu0 0
  %8741 = vmatprep.subr.bf16.mxu0 0
  %8742 = vmatpush1.bf16.msra.mxu0 0
  %8743 = vmatprep.subr.bf16.mxu0 0
  %8744 = vmatpush1.bf16.msra.mxu0 0
  %8745 = vmatprep.subr.bf16.mxu0 0
  %8746 = vmatpush1.bf16.msra.mxu0 0
  %8747 = vmatprep.subr.bf16.mxu0 0
  %8748 = vmatpush1.bf16.msra.mxu0 0
  %8749 = vmatprep.subr.bf16.mxu0 0
  %8750 = vmatpush1.bf16.msra.mxu0 0
  %8751 = vmatprep.subr.bf16.mxu0 0
  %8752 = vmatpush1.bf16.msra.mxu0 0
  %8753 = vmatprep.subr.bf16.mxu0 0
  %8754 = vmatpush1.bf16.msra.mxu0 0
  %8755 = vmatprep.subr.bf16.mxu0 0
  %8756 = vmatpush1.bf16.msra.mxu0 0
  %8757 = vmatprep.mubr.bf16.mxu0 0
  %8758 = vmatmul.mubr.bf16.gmra.mrb[0].mxu0 %v8723
  %v8759 = vpop.f32.mrb[0].mxu0
  %v8760 = vadd.f32 %v8707, %v8759
  %v8761 = vpop.f32.mrb[0].mxu0
  %v8762 = vpop.f32.mrb[0].mxu0
  %v8763 = vpop.f32.mrb[0].mxu0
  %8764 = vdwg.mxu0
  %v8765 = vxor.u32 %v8760, 2147483648
  %v8766 = vmul.f32 %v8765, 1.442695
  %v8767 = vpow.pop %v8766
  %v8768 = vadd.f32 %v8767, 1.0
  %v8769 = vrcp.pop %v8768
  %v8770 = vmul.f32 1.0, %v8769
  %8771 = vst [vmem:[%s24] sm:$0x3] %v8770
  // Predicated region
  $region98: #{combined_forward.1} parent=0 // pred_check
    _
  $region99: #{combined_forward.1} parent=0 // pred_check_branch
    %8773 = sbr.rel (0) target = $region101
  $region100: #{combined_forward.1} parent=0 // pred_region
    _
  $region101: #{combined_forward.1} parent=0 // pred_fallthru
    _
  // Predicated region
  $region102: #{combined_forward.1} parent=0 // pred_check
    _
  $region103: #{combined_forward.1} parent=0 // pred_check_branch
    %8775 = sbr.rel (0) target = $region105
  $region104: #{combined_forward.1} parent=0 // pred_region
    _
  $region105: #{combined_forward.1} parent=0 // pred_fallthru
    _

</llo_original>
